<compile_context>
chip_gen: v5e
topology: v5e:2x2
jax: 0.10.0
libtpu: 0.0.40
codegen_flags: <defaults>
</compile_context>

<pallas_src>
import functools

import numpy as np

import jax
import jax.numpy as jnp
from jax.experimental import pallas as pl
from jax.experimental.pallas import tpu as pltpu


def _round_up(x, m):
    return ((x + m - 1) // m) * m


# ---------------------------------------------------------------------------
# Static "plan" of the fused network in flat-padded layout.
#   conv : ('conv', cin, cout, h, w, wp)
#   pool : ('pool', h, w, wp, hn, wn, wpn)
#   repad: ('repad', h, w, wp)            (between two consecutive convs)
# The padded image position (r, c) lives at flat row  r*wp + c  with
# wp = round_up(w+2, 8); columns c in [w+2, wp) and the guard row are zero, so
# every 3x3 tap is a contiguous row slice -> one MXU matmul per tap.
# ---------------------------------------------------------------------------
def _build_plan(blocks, h, w, in_ch):
    plan = []
    c = in_ch
    wp = _round_up(w + 2, 8)
    prev_was_conv = False
    for blk in blocks:
        if blk == "M":
            assert h % 2 == 0 and w % 2 == 0
            hn, wn = h // 2, w // 2
            wpn = _round_up(wn + 2, 8)
            plan.append(("pool", h, w, wp, hn, wn, wpn))
            h, w, wp = hn, wn, wpn
            prev_was_conv = False
        else:
            if prev_was_conv:
                plan.append(("repad", h, w, wp))
            plan.append(("conv", c, int(blk), h, w, wp))
            c = int(blk)
            prev_was_conv = True
    return plan, (h, w, wp, c)


def _pool_matrix(h, w, wp, hn, wn, wpn):
    # One-hot map: 2x2-max value at (ho, wo) -> next conv's zero-padded flat
    # row (ho+1)*wpn + (wo+1).  All-zero rows produce the padding for free.
    length = (h - 1) * wp - 1
    s = np.zeros(((hn + 3) * wpn, length), np.float32)
    for ho in range(hn):
        for wo in range(wn):
            s[(ho + 1) * wpn + (wo + 1), 2 * ho * wp + 2 * wo] = 1.0
    return jnp.asarray(s, jnp.bfloat16)


def _repad_matrix(h, w, wp):
    # Re-pad a raw conv output (h*wp rows) into padded flat layout for a
    # directly following conv (no pool in between).
    r = np.zeros(((h + 3) * wp, h * wp), np.float32)
    for hh in range(h):
        for ww in range(w):
            r[(hh + 1) * wp + (ww + 1), hh * wp + ww] = 1.0
    return jnp.asarray(r, jnp.bfloat16)


def _gap_mask(hf, wf, wpf, padded):
    rows = (hf + 3) * wpf if padded else hf * wpf
    m = np.zeros((rows, 1), np.float32)
    for hh in range(hf):
        for ww in range(wf):
            rr = (hh + 1) * wpf + (ww + 1) if padded else hh * wpf + ww
            m[rr, 0] = 1.0
    return jnp.asarray(m)


# ---------------------------------------------------------------------------
# Fused whole-network kernel (one grid step == one image).
# ---------------------------------------------------------------------------
def _make_vgg_kernel(plan, h_final, w_final):
    inv_hw = 1.0 / float(h_final * w_final)

    def kernel(*refs):
        idx = 0
        x_ref = refs[idx]
        idx += 1
        cur = x_ref[0]                            # (P0, Cin) bf16, padded flat
        for entry in plan:
            if entry[0] == "conv":
                _, _cin, cout, h, w, wp = entry
                w_ref = refs[idx]
                a_ref = refs[idx + 1]
                b_ref = refs[idx + 2]
                idx += 3
                m = h * wp
                acc = jnp.zeros((m, cout), jnp.float32)
                for dh in range(3):               # 9 whole-image bf16 matmuls
                    for dw in range(3):
                        off = dh * wp + dw
                        acc = acc + jnp.dot(
                            cur[off:off + m, :], w_ref[dh * 3 + dw],
                            preferred_element_type=jnp.float32)
                # folded eval-mode BatchNorm + ReLU (f32 epilogue)
                cur = jnp.maximum(acc * a_ref[...] + b_ref[...], 0.0)
            elif entry[0] == "pool":
                _, h, w, wp, hn, wn, wpn = entry
                s_ref = refs[idx]
                idx += 1
                vmax = jnp.maximum(cur[:(h - 1) * wp, :], cur[wp:, :])
                hmax = jnp.maximum(vmax[:-1, :], vmax[1:, :])
                cur = jnp.dot(s_ref[...], hmax.astype(jnp.bfloat16),
                              preferred_element_type=jnp.float32
                              ).astype(jnp.bfloat16)
            else:                                  # "repad"
                r_ref = refs[idx]
                idx += 1
                cur = jnp.dot(r_ref[...], cur.astype(jnp.bfloat16),
                              preferred_element_type=jnp.float32
                              ).astype(jnp.bfloat16)

        gmask_ref = refs[idx]
        fcw_ref = refs[idx + 1]
        fcb_ref = refs[idx + 2]
        o_ref = refs[idx + 3]
        # Global average pool over valid spatial positions + Linear(512, nc).
        gap = jnp.sum(cur * gmask_ref[...], axis=0, keepdims=True) * inv_hw
        logits = jnp.dot(gap.astype(jnp.bfloat16), fcw_ref[...],
                         preferred_element_type=jnp.float32) + fcb_ref[...]
        o_ref[0, :, :] = logits.astype(o_ref.dtype)

    return kernel


# ---------------------------------------------------------------------------
# Parameter init (deterministic, in-script) + model assembly
# ---------------------------------------------------------------------------
def init_vgg(key, blocks, num_classes=10, in_channels=3, height=16, width=16):
    eps = 1e-5
    plan, (hf, wf, wpf, cf) = _build_plan(blocks, height, width, in_channels)
    assert plan and plan[0][0] == "conv", "first block must be a conv"
    assert cf == 512, "classifier expects 512 features (nn.Linear(512, ...))"

    params = []        # kernel inputs after x, in kernel order
    ref_layers = []    # plain-JAX reference description
    for entry in plan:
        if entry[0] == "conv":
            _, cin, cout, _h, _w, _wp = entry
            key, kw, kb, kg, kbe, km, kv = jax.random.split(key, 7)
            std = (2.0 / (9 * cin)) ** 0.5
            wgt = std * jax.random.normal(kw, (3, 3, cin, cout), jnp.float32)
            bias = 0.1 * jax.random.normal(kb, (cout,), jnp.float32)
            gamma = 1.0 + 0.1 * jax.random.normal(kg, (cout,), jnp.float32)
            beta = 0.1 * jax.random.normal(kbe, (cout,), jnp.float32)
            rmean = 0.1 * jax.random.normal(km, (cout,), jnp.float32)
            rvar = jax.random.uniform(kv, (cout,), jnp.float32, 0.5, 1.5)
            s = gamma / jnp.sqrt(rvar + eps)          # eval-mode BN folded
            scale = s.reshape(1, cout)
            shift = ((bias - rmean) * s + beta).reshape(1, cout)
            w_bf16 = wgt.astype(jnp.bfloat16)
            params += [w_bf16.reshape(9, cin, cout), scale, shift]
            ref_layers.append(("conv", w_bf16, scale, shift))
        elif entry[0] == "pool":
            params.append(_pool_matrix(*entry[1:]))
            ref_layers.append(("pool",))
        else:   # repad: kernel-internal layout step, identity in the reference
            params.append(_repad_matrix(*entry[1:]))

    gmask = _gap_mask(hf, wf, wpf, padded=(plan[-1][0] != "conv"))
    key, kfw, kfb = jax.random.split(key, 3)
    fc_w = ((512.0 ** -0.5) * jax.random.normal(
        kfw, (512, num_classes), jnp.float32)).astype(jnp.bfloat16)
    fc_b = (0.1 * jax.random.normal(kfb, (num_classes,), jnp.float32)
            ).reshape(1, num_classes)
    params += [gmask, fc_w, fc_b]

    return dict(kernel=_make_vgg_kernel(plan, hf, wf),
                params=tuple(params), wp0=plan[0][5],
                num_classes=num_classes,
                ref_layers=ref_layers, fc_w=fc_w, fc_b=fc_b)


# ---------------------------------------------------------------------------
# Pallas wrapper
# ---------------------------------------------------------------------------
def _const_spec(shape):
    rank = len(shape)
    return pl.BlockSpec(tuple(shape), lambda i: (0,) * rank)


def _pad_input_flat(x_nhwc, wp):
    # Pad ONCE (whole fused net) into the flat padded layout, as bf16.
    n, h, w, c = x_nhwc.shape
    xp = jnp.zeros((n, h + 3, wp, c), jnp.bfloat16)
    xp = xp.at[:, 1:h + 1, 1:w + 1, :].set(x_nhwc.astype(jnp.bfloat16))
    return xp.reshape(n, (h + 3) * wp, c)


def vgg_forward_pallas(x_nchw, *params, kernel, wp0, num_classes):
    x = jnp.transpose(x_nchw, (0, 2, 3, 1))                 # NCHW -> NHWC
    n = x.shape[0]
    c = x.shape[3]
    x_flat = _pad_input_flat(x, wp0)                        # (N, P0, C) bf16
    p0 = x_flat.shape[1]
    in_specs = [pl.BlockSpec((1, p0, c), lambda i: (i, 0, 0))]
    in_specs += [_const_spec(p.shape) for p in params]
    out = pl.pallas_call(
        kernel,
        out_shape=jax.ShapeDtypeStruct((n, 1, num_classes), jnp.float32),
        grid=(n,),
        in_specs=in_specs,
        out_specs=pl.BlockSpec((1, 1, num_classes), lambda i: (i, 0, 0)),
        compiler_params=pltpu.CompilerParams(
            dimension_semantics=("parallel",)),   # v7x: one image per core
    )(x_flat, *params)
    return out.reshape(n, num_classes)


# --------------------------- plain-JAX reference ---------------------------
# Mirrors the kernel's numerics (bf16 matmul operands, f32 accumulation).
def _conv_bn_relu_ref(x, w, scale, shift):
    n, h, wd, _ = x.shape
    xp = jnp.pad(x, ((0, 0), (1, 1), (1, 1), (0, 0))).astype(jnp.bfloat16)
    acc = jnp.zeros((n, h, wd, w.shape[-1]), jnp.float32)
    for dh in range(3):
        for dw in range(3):
            acc = acc + jnp.einsum("nhwi,io->nhwo",
                                   xp[:, dh:dh + h, dw:dw + wd, :], w[dh, dw],
                                   preferred_element_type=jnp.float32)
    return jnp.maximum(acc * scale + shift, 0.0)


def vgg_forward_ref(x_nchw, model):
    x = jnp.transpose(x_nchw, (0, 2, 3, 1))
    for layer in model["ref_layers"]:
        if layer[0] == "pool":
            n, h, w, c = x.shape
            x = jnp.max(x.reshape(n, h // 2, 2, w // 2, 2, c), axis=(2, 4))
        else:
            _, w_, scale, shift = layer
            x = _conv_bn_relu_ref(x, w_, scale, shift)
    gap = jnp.mean(x, axis=(1, 2))
    return jnp.dot(gap.astype(jnp.bfloat16), model["fc_w"],
                   preferred_element_type=jnp.float32) + model["fc_b"]


if __name__ == "__main__":
    key = jax.random.PRNGKey(0)
    blocks = [16, "M", 32, "M", 512]              # small VGG-style config
    num_classes = 10

    key, sub = jax.random.split(key)
    model = init_vgg(sub, blocks, num_classes=num_classes,
                     in_channels=3, height=16, width=16)

    key, sub = jax.random.split(key)
    x = jax.random.normal(sub, (2, 3, 16, 16), jnp.float32)   # NCHW like torch

    fwd = jax.jit(functools.partial(
        vgg_forward_pallas, kernel=model["kernel"], wp0=model["wp0"],
        num_classes=model["num_classes"]))
    out = jax.block_until_ready(fwd(x, *model["params"]))

    assert out.shape == (2, num_classes) and out.dtype == jnp.float32

    ref = jax.block_until_ready(vgg_forward_ref(x, model))
    max_err = float(jnp.max(jnp.abs(out - ref)))
    assert max_err < 2e-2, f"mismatch vs reference: {max_err}"

    print("KERNEL_OK")
</pallas_src>

<mosaic_0001>
module attributes {stable_mosaic.version = 11 : i64} {
  func.func @kernel(%arg0: i32, %arg1: memref<1x456x3xbf16, #tpu.memory_space<vmem>>, %arg2: memref<9x3x16xbf16, #tpu.memory_space<vmem>>, %arg3: memref<1x16xf32, #tpu.memory_space<vmem>>, %arg4: memref<1x16xf32, #tpu.memory_space<vmem>>, %arg5: memref<176x359xbf16, #tpu.memory_space<vmem>>, %arg6: memref<9x16x32xbf16, #tpu.memory_space<vmem>>, %arg7: memref<1x32xf32, #tpu.memory_space<vmem>>, %arg8: memref<1x32xf32, #tpu.memory_space<vmem>>, %arg9: memref<56x111xbf16, #tpu.memory_space<vmem>>, %arg10: memref<9x32x512xbf16, #tpu.memory_space<vmem>>, %arg11: memref<1x512xf32, #tpu.memory_space<vmem>>, %arg12: memref<1x512xf32, #tpu.memory_space<vmem>>, %arg13: memref<32x1xf32, #tpu.memory_space<vmem>>, %arg14: memref<512x10xbf16, #tpu.memory_space<vmem>>, %arg15: memref<1x10xf32, #tpu.memory_space<vmem>>, %arg16: memref<1x1x10xf32, #tpu.memory_space<vmem>>) attributes {dimension_semantics = [#tpu.dimension_semantics<parallel>], iteration_bounds = array<i64: 2>, scalar_prefetch = 0 : i64, scratch_operands = 0 : i64, tpu.core_type = #tpu.core_type<tc>, window_params = [{transform_indices = @transform_0, window_bounds = array<i64: 1, 456, 3>}, {pipeline_mode = #tpu.pipeline_mode<synchronous>, transform_indices = @transform_1, window_bounds = array<i64: 9, 3, 16>}, {pipeline_mode = #tpu.pipeline_mode<synchronous>, transform_indices = @transform_2, window_bounds = array<i64: 1, 16>}, {pipeline_mode = #tpu.pipeline_mode<synchronous>, transform_indices = @transform_3, window_bounds = array<i64: 1, 16>}, {pipeline_mode = #tpu.pipeline_mode<synchronous>, transform_indices = @transform_4, window_bounds = array<i64: 176, 359>}, {pipeline_mode = #tpu.pipeline_mode<synchronous>, transform_indices = @transform_5, window_bounds = array<i64: 9, 16, 32>}, {pipeline_mode = #tpu.pipeline_mode<synchronous>, transform_indices = @transform_6, window_bounds = array<i64: 1, 32>}, {pipeline_mode = #tpu.pipeline_mode<synchronous>, transform_indices = @transform_7, window_bounds = array<i64: 1, 32>}, {pipeline_mode = #tpu.pipeline_mode<synchronous>, transform_indices = @transform_8, window_bounds = array<i64: 56, 111>}, {pipeline_mode = #tpu.pipeline_mode<synchronous>, transform_indices = @transform_9, window_bounds = array<i64: 9, 32, 512>}, {pipeline_mode = #tpu.pipeline_mode<synchronous>, transform_indices = @transform_10, window_bounds = array<i64: 1, 512>}, {pipeline_mode = #tpu.pipeline_mode<synchronous>, transform_indices = @transform_11, window_bounds = array<i64: 1, 512>}, {pipeline_mode = #tpu.pipeline_mode<synchronous>, transform_indices = @transform_12, window_bounds = array<i64: 32, 1>}, {pipeline_mode = #tpu.pipeline_mode<synchronous>, transform_indices = @transform_13, window_bounds = array<i64: 512, 10>}, {pipeline_mode = #tpu.pipeline_mode<synchronous>, transform_indices = @transform_14, window_bounds = array<i64: 1, 10>}, {transform_indices = @transform_15, window_bounds = array<i64: 1, 1, 10>}]} {
    %c0 = arith.constant 0 : index
    %c0_0 = arith.constant 0 : index
    %c0_1 = arith.constant 0 : index
    %0 = vector.load %arg1[%c0, %c0_0, %c0_1] : memref<1x456x3xbf16, #tpu.memory_space<vmem>>, vector<1x456x3xbf16>
    %1 = vector.shape_cast %0 : vector<1x456x3xbf16> to vector<456x3xbf16>
    %cst = arith.constant 0.000000e+00 : f32
    %2 = vector.broadcast %cst : f32 to vector<384x16xf32>
    %3 = vector.extract_strided_slice %1 {offsets = [0, 0], sizes = [384, 3], strides = [1, 1]} : vector<456x3xbf16> to vector<384x3xbf16>
    %c0_2 = arith.constant 0 : index
    %c0_3 = arith.constant 0 : index
    %c0_4 = arith.constant 0 : index
    %4 = vector.load %arg2[%c0_2, %c0_3, %c0_4] : memref<9x3x16xbf16, #tpu.memory_space<vmem>>, vector<1x3x16xbf16>
    %5 = vector.shape_cast %4 : vector<1x3x16xbf16> to vector<3x16xbf16>
    %cst_5 = arith.constant dense<0.000000e+00> : vector<384x16xf32>
    %6 = tpu.matmul %3, %5, %cst_5 {dimension_numbers = #tpu.dot_dimension_numbers<[1], [0], [0], [1], [0, 0, 1, 1], [], []>} : vector<384x3xbf16>, vector<3x16xbf16>, vector<384x16xf32> -> vector<384x16xf32>
    %7 = arith.addf %2, %6 : vector<384x16xf32>
    %8 = vector.extract_strided_slice %1 {offsets = [1, 0], sizes = [384, 3], strides = [1, 1]} : vector<456x3xbf16> to vector<384x3xbf16>
    %c1 = arith.constant 1 : index
    %c0_6 = arith.constant 0 : index
    %c0_7 = arith.constant 0 : index
    %9 = vector.load %arg2[%c1, %c0_6, %c0_7] : memref<9x3x16xbf16, #tpu.memory_space<vmem>>, vector<1x3x16xbf16>
    %10 = vector.shape_cast %9 : vector<1x3x16xbf16> to vector<3x16xbf16>
    %cst_8 = arith.constant dense<0.000000e+00> : vector<384x16xf32>
    %11 = tpu.matmul %8, %10, %cst_8 {dimension_numbers = #tpu.dot_dimension_numbers<[1], [0], [0], [1], [0, 0, 1, 1], [], []>} : vector<384x3xbf16>, vector<3x16xbf16>, vector<384x16xf32> -> vector<384x16xf32>
    %12 = arith.addf %7, %11 : vector<384x16xf32>
    %13 = vector.extract_strided_slice %1 {offsets = [2, 0], sizes = [384, 3], strides = [1, 1]} : vector<456x3xbf16> to vector<384x3xbf16>
    %c2 = arith.constant 2 : index
    %c0_9 = arith.constant 0 : index
    %c0_10 = arith.constant 0 : index
    %14 = vector.load %arg2[%c2, %c0_9, %c0_10] : memref<9x3x16xbf16, #tpu.memory_space<vmem>>, vector<1x3x16xbf16>
    %15 = vector.shape_cast %14 : vector<1x3x16xbf16> to vector<3x16xbf16>
    %cst_11 = arith.constant dense<0.000000e+00> : vector<384x16xf32>
    %16 = tpu.matmul %13, %15, %cst_11 {dimension_numbers = #tpu.dot_dimension_numbers<[1], [0], [0], [1], [0, 0, 1, 1], [], []>} : vector<384x3xbf16>, vector<3x16xbf16>, vector<384x16xf32> -> vector<384x16xf32>
    %17 = arith.addf %12, %16 : vector<384x16xf32>
    %18 = vector.extract_strided_slice %1 {offsets = [24, 0], sizes = [384, 3], strides = [1, 1]} : vector<456x3xbf16> to vector<384x3xbf16>
    %c3 = arith.constant 3 : index
    %c0_12 = arith.constant 0 : index
    %c0_13 = arith.constant 0 : index
    %19 = vector.load %arg2[%c3, %c0_12, %c0_13] : memref<9x3x16xbf16, #tpu.memory_space<vmem>>, vector<1x3x16xbf16>
    %20 = vector.shape_cast %19 : vector<1x3x16xbf16> to vector<3x16xbf16>
    %cst_14 = arith.constant dense<0.000000e+00> : vector<384x16xf32>
    %21 = tpu.matmul %18, %20, %cst_14 {dimension_numbers = #tpu.dot_dimension_numbers<[1], [0], [0], [1], [0, 0, 1, 1], [], []>} : vector<384x3xbf16>, vector<3x16xbf16>, vector<384x16xf32> -> vector<384x16xf32>
    %22 = arith.addf %17, %21 : vector<384x16xf32>
    %23 = vector.extract_strided_slice %1 {offsets = [25, 0], sizes = [384, 3], strides = [1, 1]} : vector<456x3xbf16> to vector<384x3xbf16>
    %c4 = arith.constant 4 : index
    %c0_15 = arith.constant 0 : index
    %c0_16 = arith.constant 0 : index
    %24 = vector.load %arg2[%c4, %c0_15, %c0_16] : memref<9x3x16xbf16, #tpu.memory_space<vmem>>, vector<1x3x16xbf16>
    %25 = vector.shape_cast %24 : vector<1x3x16xbf16> to vector<3x16xbf16>
    %cst_17 = arith.constant dense<0.000000e+00> : vector<384x16xf32>
    %26 = tpu.matmul %23, %25, %cst_17 {dimension_numbers = #tpu.dot_dimension_numbers<[1], [0], [0], [1], [0, 0, 1, 1], [], []>} : vector<384x3xbf16>, vector<3x16xbf16>, vector<384x16xf32> -> vector<384x16xf32>
    %27 = arith.addf %22, %26 : vector<384x16xf32>
    %28 = vector.extract_strided_slice %1 {offsets = [26, 0], sizes = [384, 3], strides = [1, 1]} : vector<456x3xbf16> to vector<384x3xbf16>
    %c5 = arith.constant 5 : index
    %c0_18 = arith.constant 0 : index
    %c0_19 = arith.constant 0 : index
    %29 = vector.load %arg2[%c5, %c0_18, %c0_19] : memref<9x3x16xbf16, #tpu.memory_space<vmem>>, vector<1x3x16xbf16>
    %30 = vector.shape_cast %29 : vector<1x3x16xbf16> to vector<3x16xbf16>
    %cst_20 = arith.constant dense<0.000000e+00> : vector<384x16xf32>
    %31 = tpu.matmul %28, %30, %cst_20 {dimension_numbers = #tpu.dot_dimension_numbers<[1], [0], [0], [1], [0, 0, 1, 1], [], []>} : vector<384x3xbf16>, vector<3x16xbf16>, vector<384x16xf32> -> vector<384x16xf32>
    %32 = arith.addf %27, %31 : vector<384x16xf32>
    %33 = vector.extract_strided_slice %1 {offsets = [48, 0], sizes = [384, 3], strides = [1, 1]} : vector<456x3xbf16> to vector<384x3xbf16>
    %c6 = arith.constant 6 : index
    %c0_21 = arith.constant 0 : index
    %c0_22 = arith.constant 0 : index
    %34 = vector.load %arg2[%c6, %c0_21, %c0_22] : memref<9x3x16xbf16, #tpu.memory_space<vmem>>, vector<1x3x16xbf16>
    %35 = vector.shape_cast %34 : vector<1x3x16xbf16> to vector<3x16xbf16>
    %cst_23 = arith.constant dense<0.000000e+00> : vector<384x16xf32>
    %36 = tpu.matmul %33, %35, %cst_23 {dimension_numbers = #tpu.dot_dimension_numbers<[1], [0], [0], [1], [0, 0, 1, 1], [], []>} : vector<384x3xbf16>, vector<3x16xbf16>, vector<384x16xf32> -> vector<384x16xf32>
    %37 = arith.addf %32, %36 : vector<384x16xf32>
    %38 = vector.extract_strided_slice %1 {offsets = [49, 0], sizes = [384, 3], strides = [1, 1]} : vector<456x3xbf16> to vector<384x3xbf16>
    %c7 = arith.constant 7 : index
    %c0_24 = arith.constant 0 : index
    %c0_25 = arith.constant 0 : index
    %39 = vector.load %arg2[%c7, %c0_24, %c0_25] : memref<9x3x16xbf16, #tpu.memory_space<vmem>>, vector<1x3x16xbf16>
    %40 = vector.shape_cast %39 : vector<1x3x16xbf16> to vector<3x16xbf16>
    %cst_26 = arith.constant dense<0.000000e+00> : vector<384x16xf32>
    %41 = tpu.matmul %38, %40, %cst_26 {dimension_numbers = #tpu.dot_dimension_numbers<[1], [0], [0], [1], [0, 0, 1, 1], [], []>} : vector<384x3xbf16>, vector<3x16xbf16>, vector<384x16xf32> -> vector<384x16xf32>
    %42 = arith.addf %37, %41 : vector<384x16xf32>
    %43 = vector.extract_strided_slice %1 {offsets = [50, 0], sizes = [384, 3], strides = [1, 1]} : vector<456x3xbf16> to vector<384x3xbf16>
    %c8 = arith.constant 8 : index
    %c0_27 = arith.constant 0 : index
    %c0_28 = arith.constant 0 : index
    %44 = vector.load %arg2[%c8, %c0_27, %c0_28] : memref<9x3x16xbf16, #tpu.memory_space<vmem>>, vector<1x3x16xbf16>
    %45 = vector.shape_cast %44 : vector<1x3x16xbf16> to vector<3x16xbf16>
    %cst_29 = arith.constant dense<0.000000e+00> : vector<384x16xf32>
    %46 = tpu.matmul %43, %45, %cst_29 {dimension_numbers = #tpu.dot_dimension_numbers<[1], [0], [0], [1], [0, 0, 1, 1], [], []>} : vector<384x3xbf16>, vector<3x16xbf16>, vector<384x16xf32> -> vector<384x16xf32>
    %47 = arith.addf %42, %46 : vector<384x16xf32>
    %c0_30 = arith.constant 0 : index
    %c0_31 = arith.constant 0 : index
    %48 = vector.load %arg3[%c0_30, %c0_31] : memref<1x16xf32, #tpu.memory_space<vmem>>, vector<1x16xf32>
    %49 = vector.broadcast %48 : vector<1x16xf32> to vector<384x16xf32>
    %50 = arith.mulf %47, %49 : vector<384x16xf32>
    %c0_32 = arith.constant 0 : index
    %c0_33 = arith.constant 0 : index
    %51 = vector.load %arg4[%c0_32, %c0_33] : memref<1x16xf32, #tpu.memory_space<vmem>>, vector<1x16xf32>
    %52 = vector.broadcast %51 : vector<1x16xf32> to vector<384x16xf32>
    %53 = arith.addf %50, %52 : vector<384x16xf32>
    %cst_34 = arith.constant 0.000000e+00 : f32
    %54 = vector.broadcast %cst_34 : f32 to vector<384x16xf32>
    %55 = arith.maximumf %53, %54 : vector<384x16xf32>
    %56 = vector.extract_strided_slice %55 {offsets = [0, 0], sizes = [360, 16], strides = [1, 1]} : vector<384x16xf32> to vector<360x16xf32>
    %57 = vector.extract_strided_slice %55 {offsets = [24, 0], sizes = [360, 16], strides = [1, 1]} : vector<384x16xf32> to vector<360x16xf32>
    %58 = arith.maximumf %56, %57 : vector<360x16xf32>
    %59 = vector.extract_strided_slice %58 {offsets = [0, 0], sizes = [359, 16], strides = [1, 1]} : vector<360x16xf32> to vector<359x16xf32>
    %60 = vector.extract_strided_slice %58 {offsets = [1, 0], sizes = [359, 16], strides = [1, 1]} : vector<360x16xf32> to vector<359x16xf32>
    %61 = arith.maximumf %59, %60 : vector<359x16xf32>
    %c0_35 = arith.constant 0 : index
    %c0_36 = arith.constant 0 : index
    %62 = vector.load %arg5[%c0_35, %c0_36] : memref<176x359xbf16, #tpu.memory_space<vmem>>, vector<176x359xbf16>
    %63 = arith.truncf %61 : vector<359x16xf32> to vector<359x16xbf16>
    %cst_37 = arith.constant dense<0.000000e+00> : vector<176x16xf32>
    %64 = tpu.matmul %62, %63, %cst_37 {dimension_numbers = #tpu.dot_dimension_numbers<[1], [0], [0], [1], [0, 0, 1, 1], [], []>} : vector<176x359xbf16>, vector<359x16xbf16>, vector<176x16xf32> -> vector<176x16xf32>
    %65 = arith.truncf %64 : vector<176x16xf32> to vector<176x16xbf16>
    %cst_38 = arith.constant 0.000000e+00 : f32
    %66 = vector.broadcast %cst_38 : f32 to vector<128x32xf32>
    %67 = vector.extract_strided_slice %65 {offsets = [0, 0], sizes = [128, 16], strides = [1, 1]} : vector<176x16xbf16> to vector<128x16xbf16>
    %c0_39 = arith.constant 0 : index
    %c0_40 = arith.constant 0 : index
    %c0_41 = arith.constant 0 : index
    %68 = vector.load %arg6[%c0_39, %c0_40, %c0_41] : memref<9x16x32xbf16, #tpu.memory_space<vmem>>, vector<1x16x32xbf16>
    %69 = vector.shape_cast %68 : vector<1x16x32xbf16> to vector<16x32xbf16>
    %cst_42 = arith.constant dense<0.000000e+00> : vector<128x32xf32>
    %70 = tpu.matmul %67, %69, %cst_42 {dimension_numbers = #tpu.dot_dimension_numbers<[1], [0], [0], [1], [0, 0, 1, 1], [], []>} : vector<128x16xbf16>, vector<16x32xbf16>, vector<128x32xf32> -> vector<128x32xf32>
    %71 = arith.addf %66, %70 : vector<128x32xf32>
    %72 = vector.extract_strided_slice %65 {offsets = [1, 0], sizes = [128, 16], strides = [1, 1]} : vector<176x16xbf16> to vector<128x16xbf16>
    %c1_43 = arith.constant 1 : index
    %c0_44 = arith.constant 0 : index
    %c0_45 = arith.constant 0 : index
    %73 = vector.load %arg6[%c1_43, %c0_44, %c0_45] : memref<9x16x32xbf16, #tpu.memory_space<vmem>>, vector<1x16x32xbf16>
    %74 = vector.shape_cast %73 : vector<1x16x32xbf16> to vector<16x32xbf16>
    %cst_46 = arith.constant dense<0.000000e+00> : vector<128x32xf32>
    %75 = tpu.matmul %72, %74, %cst_46 {dimension_numbers = #tpu.dot_dimension_numbers<[1], [0], [0], [1], [0, 0, 1, 1], [], []>} : vector<128x16xbf16>, vector<16x32xbf16>, vector<128x32xf32> -> vector<128x32xf32>
    %76 = arith.addf %71, %75 : vector<128x32xf32>
    %77 = vector.extract_strided_slice %65 {offsets = [2, 0], sizes = [128, 16], strides = [1, 1]} : vector<176x16xbf16> to vector<128x16xbf16>
    %c2_47 = arith.constant 2 : index
    %c0_48 = arith.constant 0 : index
    %c0_49 = arith.constant 0 : index
    %78 = vector.load %arg6[%c2_47, %c0_48, %c0_49] : memref<9x16x32xbf16, #tpu.memory_space<vmem>>, vector<1x16x32xbf16>
    %79 = vector.shape_cast %78 : vector<1x16x32xbf16> to vector<16x32xbf16>
    %cst_50 = arith.constant dense<0.000000e+00> : vector<128x32xf32>
    %80 = tpu.matmul %77, %79, %cst_50 {dimension_numbers = #tpu.dot_dimension_numbers<[1], [0], [0], [1], [0, 0, 1, 1], [], []>} : vector<128x16xbf16>, vector<16x32xbf16>, vector<128x32xf32> -> vector<128x32xf32>
    %81 = arith.addf %76, %80 : vector<128x32xf32>
    %82 = vector.extract_strided_slice %65 {offsets = [16, 0], sizes = [128, 16], strides = [1, 1]} : vector<176x16xbf16> to vector<128x16xbf16>
    %c3_51 = arith.constant 3 : index
    %c0_52 = arith.constant 0 : index
    %c0_53 = arith.constant 0 : index
    %83 = vector.load %arg6[%c3_51, %c0_52, %c0_53] : memref<9x16x32xbf16, #tpu.memory_space<vmem>>, vector<1x16x32xbf16>
    %84 = vector.shape_cast %83 : vector<1x16x32xbf16> to vector<16x32xbf16>
    %cst_54 = arith.constant dense<0.000000e+00> : vector<128x32xf32>
    %85 = tpu.matmul %82, %84, %cst_54 {dimension_numbers = #tpu.dot_dimension_numbers<[1], [0], [0], [1], [0, 0, 1, 1], [], []>} : vector<128x16xbf16>, vector<16x32xbf16>, vector<128x32xf32> -> vector<128x32xf32>
    %86 = arith.addf %81, %85 : vector<128x32xf32>
    %87 = vector.extract_strided_slice %65 {offsets = [17, 0], sizes = [128, 16], strides = [1, 1]} : vector<176x16xbf16> to vector<128x16xbf16>
    %c4_55 = arith.constant 4 : index
    %c0_56 = arith.constant 0 : index
    %c0_57 = arith.constant 0 : index
    %88 = vector.load %arg6[%c4_55, %c0_56, %c0_57] : memref<9x16x32xbf16, #tpu.memory_space<vmem>>, vector<1x16x32xbf16>
    %89 = vector.shape_cast %88 : vector<1x16x32xbf16> to vector<16x32xbf16>
    %cst_58 = arith.constant dense<0.000000e+00> : vector<128x32xf32>
    %90 = tpu.matmul %87, %89, %cst_58 {dimension_numbers = #tpu.dot_dimension_numbers<[1], [0], [0], [1], [0, 0, 1, 1], [], []>} : vector<128x16xbf16>, vector<16x32xbf16>, vector<128x32xf32> -> vector<128x32xf32>
    %91 = arith.addf %86, %90 : vector<128x32xf32>
    %92 = vector.extract_strided_slice %65 {offsets = [18, 0], sizes = [128, 16], strides = [1, 1]} : vector<176x16xbf16> to vector<128x16xbf16>
    %c5_59 = arith.constant 5 : index
    %c0_60 = arith.constant 0 : index
    %c0_61 = arith.constant 0 : index
    %93 = vector.load %arg6[%c5_59, %c0_60, %c0_61] : memref<9x16x32xbf16, #tpu.memory_space<vmem>>, vector<1x16x32xbf16>
    %94 = vector.shape_cast %93 : vector<1x16x32xbf16> to vector<16x32xbf16>
    %cst_62 = arith.constant dense<0.000000e+00> : vector<128x32xf32>
    %95 = tpu.matmul %92, %94, %cst_62 {dimension_numbers = #tpu.dot_dimension_numbers<[1], [0], [0], [1], [0, 0, 1, 1], [], []>} : vector<128x16xbf16>, vector<16x32xbf16>, vector<128x32xf32> -> vector<128x32xf32>
    %96 = arith.addf %91, %95 : vector<128x32xf32>
    %97 = vector.extract_strided_slice %65 {offsets = [32, 0], sizes = [128, 16], strides = [1, 1]} : vector<176x16xbf16> to vector<128x16xbf16>
    %c6_63 = arith.constant 6 : index
    %c0_64 = arith.constant 0 : index
    %c0_65 = arith.constant 0 : index
    %98 = vector.load %arg6[%c6_63, %c0_64, %c0_65] : memref<9x16x32xbf16, #tpu.memory_space<vmem>>, vector<1x16x32xbf16>
    %99 = vector.shape_cast %98 : vector<1x16x32xbf16> to vector<16x32xbf16>
    %cst_66 = arith.constant dense<0.000000e+00> : vector<128x32xf32>
    %100 = tpu.matmul %97, %99, %cst_66 {dimension_numbers = #tpu.dot_dimension_numbers<[1], [0], [0], [1], [0, 0, 1, 1], [], []>} : vector<128x16xbf16>, vector<16x32xbf16>, vector<128x32xf32> -> vector<128x32xf32>
    %101 = arith.addf %96, %100 : vector<128x32xf32>
    %102 = vector.extract_strided_slice %65 {offsets = [33, 0], sizes = [128, 16], strides = [1, 1]} : vector<176x16xbf16> to vector<128x16xbf16>
    %c7_67 = arith.constant 7 : index
    %c0_68 = arith.constant 0 : index
    %c0_69 = arith.constant 0 : index
    %103 = vector.load %arg6[%c7_67, %c0_68, %c0_69] : memref<9x16x32xbf16, #tpu.memory_space<vmem>>, vector<1x16x32xbf16>
    %104 = vector.shape_cast %103 : vector<1x16x32xbf16> to vector<16x32xbf16>
    %cst_70 = arith.constant dense<0.000000e+00> : vector<128x32xf32>
    %105 = tpu.matmul %102, %104, %cst_70 {dimension_numbers = #tpu.dot_dimension_numbers<[1], [0], [0], [1], [0, 0, 1, 1], [], []>} : vector<128x16xbf16>, vector<16x32xbf16>, vector<128x32xf32> -> vector<128x32xf32>
    %106 = arith.addf %101, %105 : vector<128x32xf32>
    %107 = vector.extract_strided_slice %65 {offsets = [34, 0], sizes = [128, 16], strides = [1, 1]} : vector<176x16xbf16> to vector<128x16xbf16>
    %c8_71 = arith.constant 8 : index
    %c0_72 = arith.constant 0 : index
    %c0_73 = arith.constant 0 : index
    %108 = vector.load %arg6[%c8_71, %c0_72, %c0_73] : memref<9x16x32xbf16, #tpu.memory_space<vmem>>, vector<1x16x32xbf16>
    %109 = vector.shape_cast %108 : vector<1x16x32xbf16> to vector<16x32xbf16>
    %cst_74 = arith.constant dense<0.000000e+00> : vector<128x32xf32>
    %110 = tpu.matmul %107, %109, %cst_74 {dimension_numbers = #tpu.dot_dimension_numbers<[1], [0], [0], [1], [0, 0, 1, 1], [], []>} : vector<128x16xbf16>, vector<16x32xbf16>, vector<128x32xf32> -> vector<128x32xf32>
    %111 = arith.addf %106, %110 : vector<128x32xf32>
    %c0_75 = arith.constant 0 : index
    %c0_76 = arith.constant 0 : index
    %112 = vector.load %arg7[%c0_75, %c0_76] : memref<1x32xf32, #tpu.memory_space<vmem>>, vector<1x32xf32>
    %113 = vector.broadcast %112 : vector<1x32xf32> to vector<128x32xf32>
    %114 = arith.mulf %111, %113 : vector<128x32xf32>
    %c0_77 = arith.constant 0 : index
    %c0_78 = arith.constant 0 : index
    %115 = vector.load %arg8[%c0_77, %c0_78] : memref<1x32xf32, #tpu.memory_space<vmem>>, vector<1x32xf32>
    %116 = vector.broadcast %115 : vector<1x32xf32> to vector<128x32xf32>
    %117 = arith.addf %114, %116 : vector<128x32xf32>
    %cst_79 = arith.constant 0.000000e+00 : f32
    %118 = vector.broadcast %cst_79 : f32 to vector<128x32xf32>
    %119 = arith.maximumf %117, %118 : vector<128x32xf32>
    %120 = vector.extract_strided_slice %119 {offsets = [0, 0], sizes = [112, 32], strides = [1, 1]} : vector<128x32xf32> to vector<112x32xf32>
    %121 = vector.extract_strided_slice %119 {offsets = [16, 0], sizes = [112, 32], strides = [1, 1]} : vector<128x32xf32> to vector<112x32xf32>
    %122 = arith.maximumf %120, %121 : vector<112x32xf32>
    %123 = vector.extract_strided_slice %122 {offsets = [0, 0], sizes = [111, 32], strides = [1, 1]} : vector<112x32xf32> to vector<111x32xf32>
    %124 = vector.extract_strided_slice %122 {offsets = [1, 0], sizes = [111, 32], strides = [1, 1]} : vector<112x32xf32> to vector<111x32xf32>
    %125 = arith.maximumf %123, %124 : vector<111x32xf32>
    %c0_80 = arith.constant 0 : index
    %c0_81 = arith.constant 0 : index
    %126 = vector.load %arg9[%c0_80, %c0_81] : memref<56x111xbf16, #tpu.memory_space<vmem>>, vector<56x111xbf16>
    %127 = arith.truncf %125 : vector<111x32xf32> to vector<111x32xbf16>
    %cst_82 = arith.constant dense<0.000000e+00> : vector<56x32xf32>
    %128 = tpu.matmul %126, %127, %cst_82 {dimension_numbers = #tpu.dot_dimension_numbers<[1], [0], [0], [1], [0, 0, 1, 1], [], []>} : vector<56x111xbf16>, vector<111x32xbf16>, vector<56x32xf32> -> vector<56x32xf32>
    %129 = arith.truncf %128 : vector<56x32xf32> to vector<56x32xbf16>
    %cst_83 = arith.constant 0.000000e+00 : f32
    %130 = vector.broadcast %cst_83 : f32 to vector<32x512xf32>
    %131 = vector.extract_strided_slice %129 {offsets = [0, 0], sizes = [32, 32], strides = [1, 1]} : vector<56x32xbf16> to vector<32x32xbf16>
    %c0_84 = arith.constant 0 : index
    %c0_85 = arith.constant 0 : index
    %c0_86 = arith.constant 0 : index
    %132 = vector.load %arg10[%c0_84, %c0_85, %c0_86] : memref<9x32x512xbf16, #tpu.memory_space<vmem>>, vector<1x32x512xbf16>
    %133 = vector.shape_cast %132 : vector<1x32x512xbf16> to vector<32x512xbf16>
    %cst_87 = arith.constant dense<0.000000e+00> : vector<32x512xf32>
    %134 = tpu.matmul %131, %133, %cst_87 {dimension_numbers = #tpu.dot_dimension_numbers<[1], [0], [0], [1], [0, 0, 1, 1], [], []>} : vector<32x32xbf16>, vector<32x512xbf16>, vector<32x512xf32> -> vector<32x512xf32>
    %135 = arith.addf %130, %134 : vector<32x512xf32>
    %136 = vector.extract_strided_slice %129 {offsets = [1, 0], sizes = [32, 32], strides = [1, 1]} : vector<56x32xbf16> to vector<32x32xbf16>
    %c1_88 = arith.constant 1 : index
    %c0_89 = arith.constant 0 : index
    %c0_90 = arith.constant 0 : index
    %137 = vector.load %arg10[%c1_88, %c0_89, %c0_90] : memref<9x32x512xbf16, #tpu.memory_space<vmem>>, vector<1x32x512xbf16>
    %138 = vector.shape_cast %137 : vector<1x32x512xbf16> to vector<32x512xbf16>
    %cst_91 = arith.constant dense<0.000000e+00> : vector<32x512xf32>
    %139 = tpu.matmul %136, %138, %cst_91 {dimension_numbers = #tpu.dot_dimension_numbers<[1], [0], [0], [1], [0, 0, 1, 1], [], []>} : vector<32x32xbf16>, vector<32x512xbf16>, vector<32x512xf32> -> vector<32x512xf32>
    %140 = arith.addf %135, %139 : vector<32x512xf32>
    %141 = vector.extract_strided_slice %129 {offsets = [2, 0], sizes = [32, 32], strides = [1, 1]} : vector<56x32xbf16> to vector<32x32xbf16>
    %c2_92 = arith.constant 2 : index
    %c0_93 = arith.constant 0 : index
    %c0_94 = arith.constant 0 : index
    %142 = vector.load %arg10[%c2_92, %c0_93, %c0_94] : memref<9x32x512xbf16, #tpu.memory_space<vmem>>, vector<1x32x512xbf16>
    %143 = vector.shape_cast %142 : vector<1x32x512xbf16> to vector<32x512xbf16>
    %cst_95 = arith.constant dense<0.000000e+00> : vector<32x512xf32>
    %144 = tpu.matmul %141, %143, %cst_95 {dimension_numbers = #tpu.dot_dimension_numbers<[1], [0], [0], [1], [0, 0, 1, 1], [], []>} : vector<32x32xbf16>, vector<32x512xbf16>, vector<32x512xf32> -> vector<32x512xf32>
    %145 = arith.addf %140, %144 : vector<32x512xf32>
    %146 = vector.extract_strided_slice %129 {offsets = [8, 0], sizes = [32, 32], strides = [1, 1]} : vector<56x32xbf16> to vector<32x32xbf16>
    %c3_96 = arith.constant 3 : index
    %c0_97 = arith.constant 0 : index
    %c0_98 = arith.constant 0 : index
    %147 = vector.load %arg10[%c3_96, %c0_97, %c0_98] : memref<9x32x512xbf16, #tpu.memory_space<vmem>>, vector<1x32x512xbf16>
    %148 = vector.shape_cast %147 : vector<1x32x512xbf16> to vector<32x512xbf16>
    %cst_99 = arith.constant dense<0.000000e+00> : vector<32x512xf32>
    %149 = tpu.matmul %146, %148, %cst_99 {dimension_numbers = #tpu.dot_dimension_numbers<[1], [0], [0], [1], [0, 0, 1, 1], [], []>} : vector<32x32xbf16>, vector<32x512xbf16>, vector<32x512xf32> -> vector<32x512xf32>
    %150 = arith.addf %145, %149 : vector<32x512xf32>
    %151 = vector.extract_strided_slice %129 {offsets = [9, 0], sizes = [32, 32], strides = [1, 1]} : vector<56x32xbf16> to vector<32x32xbf16>
    %c4_100 = arith.constant 4 : index
    %c0_101 = arith.constant 0 : index
    %c0_102 = arith.constant 0 : index
    %152 = vector.load %arg10[%c4_100, %c0_101, %c0_102] : memref<9x32x512xbf16, #tpu.memory_space<vmem>>, vector<1x32x512xbf16>
    %153 = vector.shape_cast %152 : vector<1x32x512xbf16> to vector<32x512xbf16>
    %cst_103 = arith.constant dense<0.000000e+00> : vector<32x512xf32>
    %154 = tpu.matmul %151, %153, %cst_103 {dimension_numbers = #tpu.dot_dimension_numbers<[1], [0], [0], [1], [0, 0, 1, 1], [], []>} : vector<32x32xbf16>, vector<32x512xbf16>, vector<32x512xf32> -> vector<32x512xf32>
    %155 = arith.addf %150, %154 : vector<32x512xf32>
    %156 = vector.extract_strided_slice %129 {offsets = [10, 0], sizes = [32, 32], strides = [1, 1]} : vector<56x32xbf16> to vector<32x32xbf16>
    %c5_104 = arith.constant 5 : index
    %c0_105 = arith.constant 0 : index
    %c0_106 = arith.constant 0 : index
    %157 = vector.load %arg10[%c5_104, %c0_105, %c0_106] : memref<9x32x512xbf16, #tpu.memory_space<vmem>>, vector<1x32x512xbf16>
    %158 = vector.shape_cast %157 : vector<1x32x512xbf16> to vector<32x512xbf16>
    %cst_107 = arith.constant dense<0.000000e+00> : vector<32x512xf32>
    %159 = tpu.matmul %156, %158, %cst_107 {dimension_numbers = #tpu.dot_dimension_numbers<[1], [0], [0], [1], [0, 0, 1, 1], [], []>} : vector<32x32xbf16>, vector<32x512xbf16>, vector<32x512xf32> -> vector<32x512xf32>
    %160 = arith.addf %155, %159 : vector<32x512xf32>
    %161 = vector.extract_strided_slice %129 {offsets = [16, 0], sizes = [32, 32], strides = [1, 1]} : vector<56x32xbf16> to vector<32x32xbf16>
    %c6_108 = arith.constant 6 : index
    %c0_109 = arith.constant 0 : index
    %c0_110 = arith.constant 0 : index
    %162 = vector.load %arg10[%c6_108, %c0_109, %c0_110] : memref<9x32x512xbf16, #tpu.memory_space<vmem>>, vector<1x32x512xbf16>
    %163 = vector.shape_cast %162 : vector<1x32x512xbf16> to vector<32x512xbf16>
    %cst_111 = arith.constant dense<0.000000e+00> : vector<32x512xf32>
    %164 = tpu.matmul %161, %163, %cst_111 {dimension_numbers = #tpu.dot_dimension_numbers<[1], [0], [0], [1], [0, 0, 1, 1], [], []>} : vector<32x32xbf16>, vector<32x512xbf16>, vector<32x512xf32> -> vector<32x512xf32>
    %165 = arith.addf %160, %164 : vector<32x512xf32>
    %166 = vector.extract_strided_slice %129 {offsets = [17, 0], sizes = [32, 32], strides = [1, 1]} : vector<56x32xbf16> to vector<32x32xbf16>
    %c7_112 = arith.constant 7 : index
    %c0_113 = arith.constant 0 : index
    %c0_114 = arith.constant 0 : index
    %167 = vector.load %arg10[%c7_112, %c0_113, %c0_114] : memref<9x32x512xbf16, #tpu.memory_space<vmem>>, vector<1x32x512xbf16>
    %168 = vector.shape_cast %167 : vector<1x32x512xbf16> to vector<32x512xbf16>
    %cst_115 = arith.constant dense<0.000000e+00> : vector<32x512xf32>
    %169 = tpu.matmul %166, %168, %cst_115 {dimension_numbers = #tpu.dot_dimension_numbers<[1], [0], [0], [1], [0, 0, 1, 1], [], []>} : vector<32x32xbf16>, vector<32x512xbf16>, vector<32x512xf32> -> vector<32x512xf32>
    %170 = arith.addf %165, %169 : vector<32x512xf32>
    %171 = vector.extract_strided_slice %129 {offsets = [18, 0], sizes = [32, 32], strides = [1, 1]} : vector<56x32xbf16> to vector<32x32xbf16>
    %c8_116 = arith.constant 8 : index
    %c0_117 = arith.constant 0 : index
    %c0_118 = arith.constant 0 : index
    %172 = vector.load %arg10[%c8_116, %c0_117, %c0_118] : memref<9x32x512xbf16, #tpu.memory_space<vmem>>, vector<1x32x512xbf16>
    %173 = vector.shape_cast %172 : vector<1x32x512xbf16> to vector<32x512xbf16>
    %cst_119 = arith.constant dense<0.000000e+00> : vector<32x512xf32>
    %174 = tpu.matmul %171, %173, %cst_119 {dimension_numbers = #tpu.dot_dimension_numbers<[1], [0], [0], [1], [0, 0, 1, 1], [], []>} : vector<32x32xbf16>, vector<32x512xbf16>, vector<32x512xf32> -> vector<32x512xf32>
    %175 = arith.addf %170, %174 : vector<32x512xf32>
    %c0_120 = arith.constant 0 : index
    %c0_121 = arith.constant 0 : index
    %176 = vector.load %arg11[%c0_120, %c0_121] : memref<1x512xf32, #tpu.memory_space<vmem>>, vector<1x512xf32>
    %177 = vector.broadcast %176 : vector<1x512xf32> to vector<32x512xf32>
    %178 = arith.mulf %175, %177 : vector<32x512xf32>
    %c0_122 = arith.constant 0 : index
    %c0_123 = arith.constant 0 : index
    %179 = vector.load %arg12[%c0_122, %c0_123] : memref<1x512xf32, #tpu.memory_space<vmem>>, vector<1x512xf32>
    %180 = vector.broadcast %179 : vector<1x512xf32> to vector<32x512xf32>
    %181 = arith.addf %178, %180 : vector<32x512xf32>
    %cst_124 = arith.constant 0.000000e+00 : f32
    %182 = vector.broadcast %cst_124 : f32 to vector<32x512xf32>
    %183 = arith.maximumf %181, %182 : vector<32x512xf32>
    %c0_125 = arith.constant 0 : index
    %c0_126 = arith.constant 0 : index
    %184 = vector.load %arg13[%c0_125, %c0_126] : memref<32x1xf32, #tpu.memory_space<vmem>>, vector<32x1xf32>
    %185 = vector.broadcast %184 : vector<32x1xf32> to vector<32x512xf32>
    %186 = arith.mulf %183, %185 : vector<32x512xf32>
    %cst_127 = arith.constant dense<0.000000e+00> : vector<512xf32>
    %187 = vector.multi_reduction <add>, %186, %cst_127 [0] : vector<32x512xf32> to vector<512xf32>
    %188 = vector.shape_cast %187 : vector<512xf32> to vector<1x512xf32>
    %cst_128 = arith.constant 6.250000e-02 : f32
    %189 = vector.broadcast %cst_128 : f32 to vector<1x512xf32>
    %190 = arith.mulf %188, %189 : vector<1x512xf32>
    %191 = arith.truncf %190 : vector<1x512xf32> to vector<1x512xbf16>
    %c0_129 = arith.constant 0 : index
    %c0_130 = arith.constant 0 : index
    %192 = vector.load %arg14[%c0_129, %c0_130] : memref<512x10xbf16, #tpu.memory_space<vmem>>, vector<512x10xbf16>
    %cst_131 = arith.constant dense<0.000000e+00> : vector<1x10xf32>
    %193 = tpu.matmul %191, %192, %cst_131 {dimension_numbers = #tpu.dot_dimension_numbers<[1], [0], [0], [1], [0, 0, 1, 1], [], []>} : vector<1x512xbf16>, vector<512x10xbf16>, vector<1x10xf32> -> vector<1x10xf32>
    %c0_132 = arith.constant 0 : index
    %c0_133 = arith.constant 0 : index
    %194 = vector.load %arg15[%c0_132, %c0_133] : memref<1x10xf32, #tpu.memory_space<vmem>>, vector<1x10xf32>
    %195 = arith.addf %193, %194 : vector<1x10xf32>
    %c0_134 = arith.constant 0 : index
    %c0_135 = arith.constant 0 : index
    %c0_136 = arith.constant 0 : index
    %196 = vector.load %arg16[%c0_134, %c0_135, %c0_136] : memref<1x1x10xf32, #tpu.memory_space<vmem>>, vector<1x1x10xf32>
    %197 = vector.shape_cast %196 : vector<1x1x10xf32> to vector<1x10xf32>
    %198 = vector.shape_cast %195 : vector<1x10xf32> to vector<1x1x10xf32>
    tpu.vector_store %arg16[%c0_134, %c0_135, %c0_136], %198 {strides = array<i32>} : memref<1x1x10xf32, #tpu.memory_space<vmem>>, vector<1x1x10xf32>,
    return
  }
  func.func @transform_0(%arg0: i32) -> (i32, i32, i32) {
    %c0_i32 = arith.constant 0 : i32
    %c0_i32_0 = arith.constant 0 : i32
    %c0_i32_1 = arith.constant 0 : i32
    return %arg0, %c0_i32, %c0_i32_0 : i32, i32, i32
  }
  func.func @transform_1(%arg0: i32) -> (i32, i32, i32) {
    %c0_i32 = arith.constant 0 : i32
    %c0_i32_0 = arith.constant 0 : i32
    %c0_i32_1 = arith.constant 0 : i32
    %c0_i32_2 = arith.constant 0 : i32
    return %c0_i32, %c0_i32_0, %c0_i32_1 : i32, i32, i32
  }
  func.func @transform_2(%arg0: i32) -> (i32, i32) {
    %c0_i32 = arith.constant 0 : i32
    %c0_i32_0 = arith.constant 0 : i32
    %c0_i32_1 = arith.constant 0 : i32
    return %c0_i32, %c0_i32_0 : i32, i32
  }
  func.func @transform_3(%arg0: i32) -> (i32, i32) {
    %c0_i32 = arith.constant 0 : i32
    %c0_i32_0 = arith.constant 0 : i32
    %c0_i32_1 = arith.constant 0 : i32
    return %c0_i32, %c0_i32_0 : i32, i32
  }
  func.func @transform_4(%arg0: i32) -> (i32, i32) {
    %c0_i32 = arith.constant 0 : i32
    %c0_i32_0 = arith.constant 0 : i32
    %c0_i32_1 = arith.constant 0 : i32
    return %c0_i32, %c0_i32_0 : i32, i32
  }
  func.func @transform_5(%arg0: i32) -> (i32, i32, i32) {
    %c0_i32 = arith.constant 0 : i32
    %c0_i32_0 = arith.constant 0 : i32
    %c0_i32_1 = arith.constant 0 : i32
    %c0_i32_2 = arith.constant 0 : i32
    return %c0_i32, %c0_i32_0, %c0_i32_1 : i32, i32, i32
  }
  func.func @transform_6(%arg0: i32) -> (i32, i32) {
    %c0_i32 = arith.constant 0 : i32
    %c0_i32_0 = arith.constant 0 : i32
    %c0_i32_1 = arith.constant 0 : i32
    return %c0_i32, %c0_i32_0 : i32, i32
  }
  func.func @transform_7(%arg0: i32) -> (i32, i32) {
    %c0_i32 = arith.constant 0 : i32
    %c0_i32_0 = arith.constant 0 : i32
    %c0_i32_1 = arith.constant 0 : i32
    return %c0_i32, %c0_i32_0 : i32, i32
  }
  func.func @transform_8(%arg0: i32) -> (i32, i32) {
    %c0_i32 = arith.constant 0 : i32
    %c0_i32_0 = arith.constant 0 : i32
    %c0_i32_1 = arith.constant 0 : i32
    return %c0_i32, %c0_i32_0 : i32, i32
  }
  func.func @transform_9(%arg0: i32) -> (i32, i32, i32) {
    %c0_i32 = arith.constant 0 : i32
    %c0_i32_0 = arith.constant 0 : i32
    %c0_i32_1 = arith.constant 0 : i32
    %c0_i32_2 = arith.constant 0 : i32
    return %c0_i32, %c0_i32_0, %c0_i32_1 : i32, i32, i32
  }
  func.func @transform_10(%arg0: i32) -> (i32, i32) {
    %c0_i32 = arith.constant 0 : i32
    %c0_i32_0 = arith.constant 0 : i32
    %c0_i32_1 = arith.constant 0 : i32
    return %c0_i32, %c0_i32_0 : i32, i32
  }
  func.func @transform_11(%arg0: i32) -> (i32, i32) {
    %c0_i32 = arith.constant 0 : i32
    %c0_i32_0 = arith.constant 0 : i32
    %c0_i32_1 = arith.constant 0 : i32
    return %c0_i32, %c0_i32_0 : i32, i32
  }
  func.func @transform_12(%arg0: i32) -> (i32, i32) {
    %c0_i32 = arith.constant 0 : i32
    %c0_i32_0 = arith.constant 0 : i32
    %c0_i32_1 = arith.constant 0 : i32
    return %c0_i32, %c0_i32_0 : i32, i32
  }
  func.func @transform_13(%arg0: i32) -> (i32, i32) {
    %c0_i32 = arith.constant 0 : i32
    %c0_i32_0 = arith.constant 0 : i32
    %c0_i32_1 = arith.constant 0 : i32
    return %c0_i32, %c0_i32_0 : i32, i32
  }
  func.func @transform_14(%arg0: i32) -> (i32, i32) {
    %c0_i32 = arith.constant 0 : i32
    %c0_i32_0 = arith.constant 0 : i32
    %c0_i32_1 = arith.constant 0 : i32
    return %c0_i32, %c0_i32_0 : i32, i32
  }
  func.func @transform_15(%arg0: i32) -> (i32, i32, i32) {
    %c0_i32 = arith.constant 0 : i32
    %c0_i32_0 = arith.constant 0 : i32
    %c0_i32_1 = arith.constant 0 : i32
    return %arg0, %c0_i32, %c0_i32_0 : i32, i32, i32
  }
}

</mosaic_0001>

<llo_original>
// kernel: vgg_forward_pallas.1
$region0: #{vgg_forward_pallas.1}
  #allocation0 [shape = 'u32[]', space=smem, size = 0x4, offset = 0x4, fixed_abs, tag = 'smem constant byte address 0x4 - core index']
  #allocation1 [shape = 'u32[72,128]{1,0:T(1,128)}', space=vmem, size = 0x9000, scoped, tag = 'internal scratch']
  %s0 = inlined_call_operand.vmem [shape: bf16[2,456,3], index: 0, kind: input, shape index: {}]
  %s1 = inlined_call_operand.vmem [shape: bf16[9,3,16], index: 1, kind: input, shape index: {}]
  %s2 = inlined_call_operand.vmem [shape: f32[1,16], index: 2, kind: input, shape index: {}]
  %s3 = inlined_call_operand.vmem [shape: f32[1,16], index: 3, kind: input, shape index: {}]
  %s4 = inlined_call_operand.vmem [shape: bf16[176,359], index: 4, kind: input, shape index: {}]
  %s5 = inlined_call_operand.vmem [shape: bf16[9,16,32], index: 5, kind: input, shape index: {}]
  %s6 = inlined_call_operand.vmem [shape: f32[1,32], index: 6, kind: input, shape index: {}]
  %s7 = inlined_call_operand.vmem [shape: f32[1,32], index: 7, kind: input, shape index: {}]
  %s8 = inlined_call_operand.vmem [shape: bf16[56,111], index: 8, kind: input, shape index: {}]
  %s9 = inlined_call_operand.vmem [shape: bf16[9,32,512], index: 9, kind: input, shape index: {}]
  %s10 = inlined_call_operand.vmem [shape: f32[1,512], index: 10, kind: input, shape index: {}]
  %s11 = inlined_call_operand.vmem [shape: f32[1,512], index: 11, kind: input, shape index: {}]
  %s12 = inlined_call_operand.vmem [shape: f32[32,1], index: 12, kind: input, shape index: {}]
  %s13 = inlined_call_operand.vmem [shape: bf16[512,10], index: 13, kind: input, shape index: {}]
  %s14 = inlined_call_operand.vmem [shape: f32[1,10], index: 14, kind: input, shape index: {}]
  %s15 = inlined_call_operand.hbm [shape: f32[2,1,10], index: 15, kind: output, shape index: {}]
  %s16 = sld [smem:[#allocation0]]
  $region93: #{vgg_forward_pallas.1} parent=0
    _
  %s18 = ssub.s32 1, %s16
  %s19 = scalar_select 0, %s18, %s16
  $region1: #{vgg_forward_pallas.1} parent=0
    #allocation2 [shape = 'u8[1024]{0}', space=vmem, size = 0x400, scoped, tag = 'output window, operand 0']
    #allocation3 [shape = 's32[2]{0}', space=sflag, size = 0x8, scoped, tag = 'scoped memory for vgg_forward_pallas.1']
    %20 = vsyncpa [#allocation3], 0
    %s21 = scalar_lea.sflag [#allocation3], 1
    %22 = vsyncpa %s21, 0
    loop: start=0, step=1, limit=4
    $region2: #{vgg_forward_pallas.1} parent=1 // loop_pre_header
      _
    $region3: #{vgg_forward_pallas.1} parent=1 // loop_header
      %s24 = sphi 0, %s28
      %p25 = scmp.ge.s32.totalorder %s24, 4
      %s34 = sphi 0, %s36
      %s37 = sphi 0, %s34
      %s38 = sphi 0, %s37
      %s54 = sphi 0, %s38
      %s58 = sphi 0, %s58
      %s60 = sphi 0, %s58
      %s61 = sphi 0, %s60
      %s75 = sphi 0, %s61
      %s79 = sphi 0, %s79
      %s81 = sphi 0, %s79
      %s82 = sphi 0, %s81
      %s96 = sphi 0, %s82
      %s100 = sphi 0, %s100
      %s102 = sphi 0, %s100
      %s103 = sphi 0, %s102
      %s117 = sphi 0, %s103
      %s121 = sphi 0, %s121
      %s123 = sphi 0, %s121
      %s124 = sphi 0, %s123
      %s138 = sphi 0, %s124
      %s142 = sphi 0, %s142
      %s144 = sphi 0, %s142
      %s145 = sphi 0, %s144
      %s159 = sphi 0, %s145
      %s163 = sphi 0, %s163
      %s165 = sphi 0, %s163
      %s166 = sphi 0, %s165
      %s180 = sphi 0, %s166
      %s184 = sphi 0, %s184
      %s186 = sphi 0, %s184
      %s187 = sphi 0, %s186
      %s201 = sphi 0, %s187
      %s205 = sphi 0, %s205
      %s207 = sphi 0, %s205
      %s208 = sphi 0, %s207
      %s222 = sphi 0, %s208
      %s226 = sphi 0, %s226
      %s228 = sphi 0, %s226
      %s229 = sphi 0, %s228
      %s243 = sphi 0, %s229
      %s247 = sphi 0, %s247
      %s249 = sphi 0, %s247
      %s250 = sphi 0, %s249
      %s264 = sphi 0, %s250
      %s268 = sphi 0, %s268
      %s270 = sphi 0, %s268
      %s271 = sphi 0, %s270
      %s285 = sphi 0, %s271
      %s289 = sphi 0, %s289
      %s291 = sphi 0, %s289
      %s292 = sphi 0, %s291
      %s306 = sphi 0, %s292
      %s310 = sphi 0, %s310
      %s312 = sphi 0, %s310
      %s313 = sphi 0, %s312
      %s327 = sphi 0, %s313
      %s331 = sphi 0, %s331
      %s333 = sphi 0, %s331
      %s334 = sphi 0, %s333
      %s348 = sphi 0, %s334
      %s354 = sphi 0, %s356
      %s357 = sphi 0, %s354
      %s358 = sphi 0, %s357
      %s374 = sphi 0, %s358
    $region4: #{vgg_forward_pallas.1} parent=1 // loop_header_branch
      %27 = sbr.rel (%p25) target = $region8
    $region5: #{vgg_forward_pallas.1} parent=1 // loop_body
      %s29 = ssub.s32 %s24, 1
      %s30 = ssub.s32 %s24, 2
      %s31 = sadd.s32 %s24, 1
      %s32 = ssub.s32 %s24, %s31
      %p33 = scmp.eq.s32.totalorder %s32, 0
      %s35 = sadd.s32 %s34, 1
      %s36 = scalar_select %p33, %s34, %s35
      %p39 = pneg %p33
      %p40 = scmp.eq.s32.totalorder %s24, 1
      %p41 = por %p39, %p40
      %p42 = scmp.ne.s32.totalorder %s34, %s37
      %p43 = scmp.eq.s32.totalorder %s24, 0
      %p44 = por %p42, %p43
      %p45 = scmp.ne.s32.totalorder %s34, %s37
      %p46 = scmp.eq.s32.totalorder %s29, 1
      %p47 = por %p45, %p46
      %p48 = scmp.ne.s32.totalorder %s37, %s38
      %p49 = scmp.eq.s32.totalorder %s29, 0
      %p50 = por %p48, %p49
      %p51 = scmp.ne.s32.totalorder %s37, %s38
      %p52 = scmp.eq.s32.totalorder %s30, 1
      %p53 = por %p51, %p52
      %p55 = scmp.ne.s32.totalorder %s38, %s54
      %p56 = scmp.eq.s32.totalorder %s30, 0
      %p57 = por %p55, %p56
      %s59 = sadd.s32 %s58, 1
      %p62 = scmp.eq.s32.totalorder %s24, 1
      %p63 = scmp.ne.s32.totalorder %s58, %s60
      %p64 = scmp.eq.s32.totalorder %s24, 0
      %p65 = por %p63, %p64
      %p66 = scmp.ne.s32.totalorder %s58, %s60
      %p67 = scmp.eq.s32.totalorder %s29, 1
      %p68 = por %p66, %p67
      %p69 = scmp.ne.s32.totalorder %s60, %s61
      %p70 = scmp.eq.s32.totalorder %s29, 0
      %p71 = por %p69, %p70
      %p72 = scmp.ne.s32.totalorder %s60, %s61
      %p73 = scmp.eq.s32.totalorder %s30, 1
      %p74 = por %p72, %p73
      %p76 = scmp.ne.s32.totalorder %s61, %s75
      %p77 = scmp.eq.s32.totalorder %s30, 0
      %p78 = por %p76, %p77
      %s80 = sadd.s32 %s79, 1
      %p83 = scmp.eq.s32.totalorder %s24, 1
      %p84 = scmp.ne.s32.totalorder %s79, %s81
      %p85 = scmp.eq.s32.totalorder %s24, 0
      %p86 = por %p84, %p85
      %p87 = scmp.ne.s32.totalorder %s79, %s81
      %p88 = scmp.eq.s32.totalorder %s29, 1
      %p89 = por %p87, %p88
      %p90 = scmp.ne.s32.totalorder %s81, %s82
      %p91 = scmp.eq.s32.totalorder %s29, 0
      %p92 = por %p90, %p91
      %p93 = scmp.ne.s32.totalorder %s81, %s82
      %p94 = scmp.eq.s32.totalorder %s30, 1
      %p95 = por %p93, %p94
      %p97 = scmp.ne.s32.totalorder %s82, %s96
      %p98 = scmp.eq.s32.totalorder %s30, 0
      %p99 = por %p97, %p98
      %s101 = sadd.s32 %s100, 1
      %p104 = scmp.eq.s32.totalorder %s24, 1
      %p105 = scmp.ne.s32.totalorder %s100, %s102
      %p106 = scmp.eq.s32.totalorder %s24, 0
      %p107 = por %p105, %p106
      %p108 = scmp.ne.s32.totalorder %s100, %s102
      %p109 = scmp.eq.s32.totalorder %s29, 1
      %p110 = por %p108, %p109
      %p111 = scmp.ne.s32.totalorder %s102, %s103
      %p112 = scmp.eq.s32.totalorder %s29, 0
      %p113 = por %p111, %p112
      %p114 = scmp.ne.s32.totalorder %s102, %s103
      %p115 = scmp.eq.s32.totalorder %s30, 1
      %p116 = por %p114, %p115
      %p118 = scmp.ne.s32.totalorder %s103, %s117
      %p119 = scmp.eq.s32.totalorder %s30, 0
      %p120 = por %p118, %p119
      %s122 = sadd.s32 %s121, 1
      %p125 = scmp.eq.s32.totalorder %s24, 1
      %p126 = scmp.ne.s32.totalorder %s121, %s123
      %p127 = scmp.eq.s32.totalorder %s24, 0
      %p128 = por %p126, %p127
      %p129 = scmp.ne.s32.totalorder %s121, %s123
      %p130 = scmp.eq.s32.totalorder %s29, 1
      %p131 = por %p129, %p130
      %p132 = scmp.ne.s32.totalorder %s123, %s124
      %p133 = scmp.eq.s32.totalorder %s29, 0
      %p134 = por %p132, %p133
      %p135 = scmp.ne.s32.totalorder %s123, %s124
      %p136 = scmp.eq.s32.totalorder %s30, 1
      %p137 = por %p135, %p136
      %p139 = scmp.ne.s32.totalorder %s124, %s138
      %p140 = scmp.eq.s32.totalorder %s30, 0
      %p141 = por %p139, %p140
      %s143 = sadd.s32 %s142, 1
      %p146 = scmp.eq.s32.totalorder %s24, 1
      %p147 = scmp.ne.s32.totalorder %s142, %s144
      %p148 = scmp.eq.s32.totalorder %s24, 0
      %p149 = por %p147, %p148
      %p150 = scmp.ne.s32.totalorder %s142, %s144
      %p151 = scmp.eq.s32.totalorder %s29, 1
      %p152 = por %p150, %p151
      %p153 = scmp.ne.s32.totalorder %s144, %s145
      %p154 = scmp.eq.s32.totalorder %s29, 0
      %p155 = por %p153, %p154
      %p156 = scmp.ne.s32.totalorder %s144, %s145
      %p157 = scmp.eq.s32.totalorder %s30, 1
      %p158 = por %p156, %p157
      %p160 = scmp.ne.s32.totalorder %s145, %s159
      %p161 = scmp.eq.s32.totalorder %s30, 0
      %p162 = por %p160, %p161
      %s164 = sadd.s32 %s163, 1
      %p167 = scmp.eq.s32.totalorder %s24, 1
      %p168 = scmp.ne.s32.totalorder %s163, %s165
      %p169 = scmp.eq.s32.totalorder %s24, 0
      %p170 = por %p168, %p169
      %p171 = scmp.ne.s32.totalorder %s163, %s165
      %p172 = scmp.eq.s32.totalorder %s29, 1
      %p173 = por %p171, %p172
      %p174 = scmp.ne.s32.totalorder %s165, %s166
      %p175 = scmp.eq.s32.totalorder %s29, 0
      %p176 = por %p174, %p175
      %p177 = scmp.ne.s32.totalorder %s165, %s166
      %p178 = scmp.eq.s32.totalorder %s30, 1
      %p179 = por %p177, %p178
      %p181 = scmp.ne.s32.totalorder %s166, %s180
      %p182 = scmp.eq.s32.totalorder %s30, 0
      %p183 = por %p181, %p182
      %s185 = sadd.s32 %s184, 1
      %p188 = scmp.eq.s32.totalorder %s24, 1
      %p189 = scmp.ne.s32.totalorder %s184, %s186
      %p190 = scmp.eq.s32.totalorder %s24, 0
      %p191 = por %p189, %p190
      %p192 = scmp.ne.s32.totalorder %s184, %s186
      %p193 = scmp.eq.s32.totalorder %s29, 1
      %p194 = por %p192, %p193
      %p195 = scmp.ne.s32.totalorder %s186, %s187
      %p196 = scmp.eq.s32.totalorder %s29, 0
      %p197 = por %p195, %p196
      %p198 = scmp.ne.s32.totalorder %s186, %s187
      %p199 = scmp.eq.s32.totalorder %s30, 1
      %p200 = por %p198, %p199
      %p202 = scmp.ne.s32.totalorder %s187, %s201
      %p203 = scmp.eq.s32.totalorder %s30, 0
      %p204 = por %p202, %p203
      %s206 = sadd.s32 %s205, 1
      %p209 = scmp.eq.s32.totalorder %s24, 1
      %p210 = scmp.ne.s32.totalorder %s205, %s207
      %p211 = scmp.eq.s32.totalorder %s24, 0
      %p212 = por %p210, %p211
      %p213 = scmp.ne.s32.totalorder %s205, %s207
      %p214 = scmp.eq.s32.totalorder %s29, 1
      %p215 = por %p213, %p214
      %p216 = scmp.ne.s32.totalorder %s207, %s208
      %p217 = scmp.eq.s32.totalorder %s29, 0
      %p218 = por %p216, %p217
      %p219 = scmp.ne.s32.totalorder %s207, %s208
      %p220 = scmp.eq.s32.totalorder %s30, 1
      %p221 = por %p219, %p220
      %p223 = scmp.ne.s32.totalorder %s208, %s222
      %p224 = scmp.eq.s32.totalorder %s30, 0
      %p225 = por %p223, %p224
      %s227 = sadd.s32 %s226, 1
      %p230 = scmp.eq.s32.totalorder %s24, 1
      %p231 = scmp.ne.s32.totalorder %s226, %s228
      %p232 = scmp.eq.s32.totalorder %s24, 0
      %p233 = por %p231, %p232
      %p234 = scmp.ne.s32.totalorder %s226, %s228
      %p235 = scmp.eq.s32.totalorder %s29, 1
      %p236 = por %p234, %p235
      %p237 = scmp.ne.s32.totalorder %s228, %s229
      %p238 = scmp.eq.s32.totalorder %s29, 0
      %p239 = por %p237, %p238
      %p240 = scmp.ne.s32.totalorder %s228, %s229
      %p241 = scmp.eq.s32.totalorder %s30, 1
      %p242 = por %p240, %p241
      %p244 = scmp.ne.s32.totalorder %s229, %s243
      %p245 = scmp.eq.s32.totalorder %s30, 0
      %p246 = por %p244, %p245
      %s248 = sadd.s32 %s247, 1
      %p251 = scmp.eq.s32.totalorder %s24, 1
      %p252 = scmp.ne.s32.totalorder %s247, %s249
      %p253 = scmp.eq.s32.totalorder %s24, 0
      %p254 = por %p252, %p253
      %p255 = scmp.ne.s32.totalorder %s247, %s249
      %p256 = scmp.eq.s32.totalorder %s29, 1
      %p257 = por %p255, %p256
      %p258 = scmp.ne.s32.totalorder %s249, %s250
      %p259 = scmp.eq.s32.totalorder %s29, 0
      %p260 = por %p258, %p259
      %p261 = scmp.ne.s32.totalorder %s249, %s250
      %p262 = scmp.eq.s32.totalorder %s30, 1
      %p263 = por %p261, %p262
      %p265 = scmp.ne.s32.totalorder %s250, %s264
      %p266 = scmp.eq.s32.totalorder %s30, 0
      %p267 = por %p265, %p266
      %s269 = sadd.s32 %s268, 1
      %p272 = scmp.eq.s32.totalorder %s24, 1
      %p273 = scmp.ne.s32.totalorder %s268, %s270
      %p274 = scmp.eq.s32.totalorder %s24, 0
      %p275 = por %p273, %p274
      %p276 = scmp.ne.s32.totalorder %s268, %s270
      %p277 = scmp.eq.s32.totalorder %s29, 1
      %p278 = por %p276, %p277
      %p279 = scmp.ne.s32.totalorder %s270, %s271
      %p280 = scmp.eq.s32.totalorder %s29, 0
      %p281 = por %p279, %p280
      %p282 = scmp.ne.s32.totalorder %s270, %s271
      %p283 = scmp.eq.s32.totalorder %s30, 1
      %p284 = por %p282, %p283
      %p286 = scmp.ne.s32.totalorder %s271, %s285
      %p287 = scmp.eq.s32.totalorder %s30, 0
      %p288 = por %p286, %p287
      %s290 = sadd.s32 %s289, 1
      %p293 = scmp.eq.s32.totalorder %s24, 1
      %p294 = scmp.ne.s32.totalorder %s289, %s291
      %p295 = scmp.eq.s32.totalorder %s24, 0
      %p296 = por %p294, %p295
      %p297 = scmp.ne.s32.totalorder %s289, %s291
      %p298 = scmp.eq.s32.totalorder %s29, 1
      %p299 = por %p297, %p298
      %p300 = scmp.ne.s32.totalorder %s291, %s292
      %p301 = scmp.eq.s32.totalorder %s29, 0
      %p302 = por %p300, %p301
      %p303 = scmp.ne.s32.totalorder %s291, %s292
      %p304 = scmp.eq.s32.totalorder %s30, 1
      %p305 = por %p303, %p304
      %p307 = scmp.ne.s32.totalorder %s292, %s306
      %p308 = scmp.eq.s32.totalorder %s30, 0
      %p309 = por %p307, %p308
      %s311 = sadd.s32 %s310, 1
      %p314 = scmp.eq.s32.totalorder %s24, 1
      %p315 = scmp.ne.s32.totalorder %s310, %s312
      %p316 = scmp.eq.s32.totalorder %s24, 0
      %p317 = por %p315, %p316
      %p318 = scmp.ne.s32.totalorder %s310, %s312
      %p319 = scmp.eq.s32.totalorder %s29, 1
      %p320 = por %p318, %p319
      %p321 = scmp.ne.s32.totalorder %s312, %s313
      %p322 = scmp.eq.s32.totalorder %s29, 0
      %p323 = por %p321, %p322
      %p324 = scmp.ne.s32.totalorder %s312, %s313
      %p325 = scmp.eq.s32.totalorder %s30, 1
      %p326 = por %p324, %p325
      %p328 = scmp.ne.s32.totalorder %s313, %s327
      %p329 = scmp.eq.s32.totalorder %s30, 0
      %p330 = por %p328, %p329
      %s332 = sadd.s32 %s331, 1
      %p335 = scmp.eq.s32.totalorder %s24, 1
      %p336 = scmp.ne.s32.totalorder %s331, %s333
      %p337 = scmp.eq.s32.totalorder %s24, 0
      %p338 = por %p336, %p337
      %p339 = scmp.ne.s32.totalorder %s331, %s333
      %p340 = scmp.eq.s32.totalorder %s29, 1
      %p341 = por %p339, %p340
      %p342 = scmp.ne.s32.totalorder %s333, %s334
      %p343 = scmp.eq.s32.totalorder %s29, 0
      %p344 = por %p342, %p343
      %p345 = scmp.ne.s32.totalorder %s333, %s334
      %p346 = scmp.eq.s32.totalorder %s30, 1
      %p347 = por %p345, %p346
      %p349 = scmp.ne.s32.totalorder %s334, %s348
      %p350 = scmp.eq.s32.totalorder %s30, 0
      %p351 = por %p349, %p350
      %s352 = ssub.s32 %s24, %s31
      %p353 = scmp.eq.s32.totalorder %s352, 0
      %s355 = sadd.s32 %s354, 1
      %s356 = scalar_select %p353, %s354, %s355
      %p359 = pneg %p353
      %p360 = scmp.eq.s32.totalorder %s24, 1
      %p361 = por %p359, %p360
      %p362 = scmp.ne.s32.totalorder %s354, %s357
      %p363 = scmp.eq.s32.totalorder %s24, 0
      %p364 = por %p362, %p363
      %p365 = scmp.ne.s32.totalorder %s354, %s357
      %p366 = scmp.eq.s32.totalorder %s29, 1
      %p367 = por %p365, %p366
      %p368 = scmp.ne.s32.totalorder %s357, %s358
      %p369 = scmp.eq.s32.totalorder %s29, 0
      %p370 = por %p368, %p369
      %p371 = scmp.ne.s32.totalorder %s357, %s358
      %p372 = scmp.eq.s32.totalorder %s30, 1
      %p373 = por %p371, %p372
      %p375 = scmp.ne.s32.totalorder %s358, %s374
      %p376 = scmp.eq.s32.totalorder %s30, 0
      %p377 = por %p375, %p376
      %p378 = scmp.le.s32.totalorder 1, %s24
      %p379 = scmp.lt.s32.totalorder %s24, 3
      %p380 = pnand %p378, %p379
      %p381 = pneg %p380
      // Predicated region
      $region9: #{vgg_forward_pallas.1} parent=5 // pred_check
        _
      $region10: #{vgg_forward_pallas.1} parent=5 // pred_check_branch
        %383 = sbr.rel (%p380) target = $region12
      $region11: #{vgg_forward_pallas.1} parent=5 // pred_region
        %s384 = ssub.s32 %s24, 1
        // Predicated region
        $region13: #{vgg_forward_pallas.1} parent=11 // pred_check
          %p385 = pneg %p71
        $region14: #{vgg_forward_pallas.1} parent=11 // pred_check_branch
          %387 = sbr.rel (%p385) target = $region16
        $region15: #{vgg_forward_pallas.1} parent=11 // pred_region
          _
        $region16: #{vgg_forward_pallas.1} parent=11 // pred_fallthru
          _
        // Predicated region
        $region17: #{vgg_forward_pallas.1} parent=11 // pred_check
          %p388 = pneg %p92
        $region18: #{vgg_forward_pallas.1} parent=11 // pred_check_branch
          %390 = sbr.rel (%p388) target = $region20
        $region19: #{vgg_forward_pallas.1} parent=11 // pred_region
          _
        $region20: #{vgg_forward_pallas.1} parent=11 // pred_fallthru
          _
        // Predicated region
        $region21: #{vgg_forward_pallas.1} parent=11 // pred_check
          %p391 = pneg %p113
        $region22: #{vgg_forward_pallas.1} parent=11 // pred_check_branch
          %393 = sbr.rel (%p391) target = $region24
        $region23: #{vgg_forward_pallas.1} parent=11 // pred_region
          _
        $region24: #{vgg_forward_pallas.1} parent=11 // pred_fallthru
          _
        // Predicated region
        $region25: #{vgg_forward_pallas.1} parent=11 // pred_check
          %p394 = pneg %p134
        $region26: #{vgg_forward_pallas.1} parent=11 // pred_check_branch
          %396 = sbr.rel (%p394) target = $region28
        $region27: #{vgg_forward_pallas.1} parent=11 // pred_region
          _
        $region28: #{vgg_forward_pallas.1} parent=11 // pred_fallthru
          _
        // Predicated region
        $region29: #{vgg_forward_pallas.1} parent=11 // pred_check
          %p397 = pneg %p155
        $region30: #{vgg_forward_pallas.1} parent=11 // pred_check_branch
          %399 = sbr.rel (%p397) target = $region32
        $region31: #{vgg_forward_pallas.1} parent=11 // pred_region
          _
        $region32: #{vgg_forward_pallas.1} parent=11 // pred_fallthru
          _
        // Predicated region
        $region33: #{vgg_forward_pallas.1} parent=11 // pred_check
          %p400 = pneg %p176
        $region34: #{vgg_forward_pallas.1} parent=11 // pred_check_branch
          %402 = sbr.rel (%p400) target = $region36
        $region35: #{vgg_forward_pallas.1} parent=11 // pred_region
          _
        $region36: #{vgg_forward_pallas.1} parent=11 // pred_fallthru
          _
        // Predicated region
        $region37: #{vgg_forward_pallas.1} parent=11 // pred_check
          %p403 = pneg %p197
        $region38: #{vgg_forward_pallas.1} parent=11 // pred_check_branch
          %405 = sbr.rel (%p403) target = $region40
        $region39: #{vgg_forward_pallas.1} parent=11 // pred_region
          _
        $region40: #{vgg_forward_pallas.1} parent=11 // pred_fallthru
          _
        // Predicated region
        $region41: #{vgg_forward_pallas.1} parent=11 // pred_check
          %p406 = pneg %p218
        $region42: #{vgg_forward_pallas.1} parent=11 // pred_check_branch
          %408 = sbr.rel (%p406) target = $region44
        $region43: #{vgg_forward_pallas.1} parent=11 // pred_region
          _
        $region44: #{vgg_forward_pallas.1} parent=11 // pred_fallthru
          _
        // Predicated region
        $region45: #{vgg_forward_pallas.1} parent=11 // pred_check
          %p409 = pneg %p239
        $region46: #{vgg_forward_pallas.1} parent=11 // pred_check_branch
          %411 = sbr.rel (%p409) target = $region48
        $region47: #{vgg_forward_pallas.1} parent=11 // pred_region
          _
        $region48: #{vgg_forward_pallas.1} parent=11 // pred_fallthru
          _
        // Predicated region
        $region49: #{vgg_forward_pallas.1} parent=11 // pred_check
          %p412 = pneg %p260
        $region50: #{vgg_forward_pallas.1} parent=11 // pred_check_branch
          %414 = sbr.rel (%p412) target = $region52
        $region51: #{vgg_forward_pallas.1} parent=11 // pred_region
          _
        $region52: #{vgg_forward_pallas.1} parent=11 // pred_fallthru
          _
        // Predicated region
        $region53: #{vgg_forward_pallas.1} parent=11 // pred_check
          %p415 = pneg %p281
        $region54: #{vgg_forward_pallas.1} parent=11 // pred_check_branch
          %417 = sbr.rel (%p415) target = $region56
        $region55: #{vgg_forward_pallas.1} parent=11 // pred_region
          _
        $region56: #{vgg_forward_pallas.1} parent=11 // pred_fallthru
          _
        // Predicated region
        $region57: #{vgg_forward_pallas.1} parent=11 // pred_check
          %p418 = pneg %p302
        $region58: #{vgg_forward_pallas.1} parent=11 // pred_check_branch
          %420 = sbr.rel (%p418) target = $region60
        $region59: #{vgg_forward_pallas.1} parent=11 // pred_region
          _
        $region60: #{vgg_forward_pallas.1} parent=11 // pred_fallthru
          _
        // Predicated region
        $region61: #{vgg_forward_pallas.1} parent=11 // pred_check
          %p421 = pneg %p323
        $region62: #{vgg_forward_pallas.1} parent=11 // pred_check_branch
          %423 = sbr.rel (%p421) target = $region64
        $region63: #{vgg_forward_pallas.1} parent=11 // pred_region
          _
        $region64: #{vgg_forward_pallas.1} parent=11 // pred_fallthru
          _
        // Predicated region
        $region65: #{vgg_forward_pallas.1} parent=11 // pred_check
          %p424 = pneg %p344
        $region66: #{vgg_forward_pallas.1} parent=11 // pred_check_branch
          %426 = sbr.rel (%p424) target = $region68
        $region67: #{vgg_forward_pallas.1} parent=11 // pred_region
          _
        $region68: #{vgg_forward_pallas.1} parent=11 // pred_fallthru
          _
      $region12: #{vgg_forward_pallas.1} parent=5 // pred_fallthru
        _
      %p427 = scmp.lt.s32.totalorder %s24, 2
      // Predicated region
      $region69: #{vgg_forward_pallas.1} parent=5 // pred_check
        %p428 = pneg %p427
      $region70: #{vgg_forward_pallas.1} parent=5 // pred_check_branch
        %430 = sbr.rel (%p428) target = $region72
      $region71: #{vgg_forward_pallas.1} parent=5 // pred_region
        // Predicated region
        $region73: #{vgg_forward_pallas.1} parent=71 // pred_check
          %p431 = pneg %p44
        $region74: #{vgg_forward_pallas.1} parent=71 // pred_check_branch
          %433 = sbr.rel (%p431) target = $region76
        $region75: #{vgg_forward_pallas.1} parent=71 // pred_region
          %p434 = scmp.lt.s32.totalorder %s24, 1
          %s435 = scalar_select %p434, %s24, 1
          %s436 = smul.addr %s435, 57
          %s437 = smul.addr %s436, 4
          %s438 = scalar_lea.vmem %s0, %s437
        $region76: #{vgg_forward_pallas.1} parent=71 // pred_fallthru
          _
      $region72: #{vgg_forward_pallas.1} parent=5 // pred_fallthru
        _
      %p439 = scmp.le.s32.totalorder 1, %s24
      %p440 = scmp.lt.s32.totalorder %s24, 3
      %p441 = pnand %p439, %p440
      %p442 = pneg %p441
      // Predicated region
      $region77: #{vgg_forward_pallas.1} parent=5 // pred_check
        _
      $region78: #{vgg_forward_pallas.1} parent=5 // pred_check_branch
        %444 = sbr.rel (%p441) target = $region80
      $region79: #{vgg_forward_pallas.1} parent=5 // pred_region
        %s445 = ssub.s32 %s24, 1
        %p446 = scmp.lt.s32.totalorder %s29, 1
        %s447 = scalar_select %p446, %s29, 1
        %s448 = smul.addr %s447, 57
        %s449 = smul.addr %s448, 4
        %s450 = scalar_lea.vmem %s0, %s449
        %p451 = pneg %p50
        %p452 = pneg %p47
        %p453 = pneg %p71
        %p454 = pneg %p68
        %p455 = pneg %p92
        %p456 = pneg %p89
        %p457 = pneg %p113
        %p458 = pneg %p110
        %p459 = pneg %p134
        %p460 = pneg %p131
        %p461 = pneg %p155
        %p462 = pneg %p152
        %p463 = pneg %p176
        %p464 = pneg %p173
        %p465 = pneg %p197
        %p466 = pneg %p194
        %p467 = pneg %p218
        %p468 = pneg %p215
        %p469 = pneg %p239
        %p470 = pneg %p236
        %p471 = pneg %p260
        %p472 = pneg %p257
        %p473 = pneg %p281
        %p474 = pneg %p278
        %p475 = pneg %p302
        %p476 = pneg %p299
        %p477 = pneg %p323
        %p478 = pneg %p320
        %p479 = pneg %p344
        %p480 = pneg %p341
        %p481 = pneg %p370
        %p482 = pneg %p367
        %s483 = sand.u32 %s357, 1
        %s484 = scalar_lea.sflag [#allocation3], %s483
        %s485 = sand.u32 %s357, 1
        %s486 = scalar_lea.vmem [#allocation2], %s485
        %p487 = scmp.lt.s32.totalorder %s29, 1
        %s488 = scalar_select %p487, %s29, 1
        %s489 = smul.addr %s488, 57
        %s490 = smul.addr %s489, 4
        %s491 = scalar_lea.vmem %s0, %s490
        %v493 = vld [vmem:[%s491] sm:$0xf]
        %v494 = vld [vmem:[%s491 + $0x4] sm:$0xf]
        %v495 = vld [vmem:[%s491 + $0x8] sm:$0xf]
        %v496 = vld [vmem:[%s491 + $0xc] sm:$0xf]
        %v497 = vld [vmem:[%s491 + $0x10] sm:$0xf]
        %v498 = vld [vmem:[%s491 + $0x14] sm:$0xf]
        %v499 = vld [vmem:[%s491 + $0x18] sm:$0xf]
        %v500 = vld [vmem:[%s491 + $0x1c] sm:$0xf]
        %v501 = vld [vmem:[%s491 + $0x20] sm:$0xf]
        %v502 = vld [vmem:[%s491 + $0x24] sm:$0xf]
        %v503 = vld [vmem:[%s491 + $0x28] sm:$0xf]
        %v504 = vld [vmem:[%s491 + $0x2c] sm:$0xf]
        %v505 = vld [vmem:[%s491 + $0x30] sm:$0xf]
        %v506 = vld [vmem:[%s491 + $0x34] sm:$0xf]
        %v507 = vld [vmem:[%s491 + $0x38] sm:$0xf]
        %v508 = vld [vmem:[%s491 + $0x3c] sm:$0xf]
        %v509 = vld [vmem:[%s491 + $0x40] sm:$0xf]
        %v510 = vld [vmem:[%s491 + $0x44] sm:$0xf]
        %v511 = vld [vmem:[%s491 + $0x48] sm:$0xf]
        %v512 = vld [vmem:[%s491 + $0x4c] sm:$0xf]
        %v513 = vld [vmem:[%s491 + $0x50] sm:$0xf]
        %v514 = vld [vmem:[%s491 + $0x54] sm:$0xf]
        %v515 = vld [vmem:[%s491 + $0x58] sm:$0xf]
        %v516 = vld [vmem:[%s491 + $0x5c] sm:$0xf]
        %v517 = vld [vmem:[%s491 + $0x60] sm:$0xf]
        %v518 = vld [vmem:[%s491 + $0x64] sm:$0xf]
        %v519 = vld [vmem:[%s491 + $0x68] sm:$0xf]
        %v520 = vld [vmem:[%s491 + $0x6c] sm:$0xf]
        %v521 = vld [vmem:[%s491 + $0x70] sm:$0xf]
        %v522 = vld [vmem:[%s491 + $0x74] sm:$0xf]
        %v523 = vld [vmem:[%s491 + $0x78] sm:$0xf]
        %v524 = vld [vmem:[%s491 + $0x7c] sm:$0xf]
        %v525 = vld [vmem:[%s491 + $0x80] sm:$0xf]
        %v526 = vld [vmem:[%s491 + $0x84] sm:$0xf]
        %v527 = vld [vmem:[%s491 + $0x88] sm:$0xf]
        %v528 = vld [vmem:[%s491 + $0x8c] sm:$0xf]
        %v529 = vld [vmem:[%s491 + $0x90] sm:$0xf]
        %v530 = vld [vmem:[%s491 + $0x94] sm:$0xf]
        %v531 = vld [vmem:[%s491 + $0x98] sm:$0xf]
        %v532 = vld [vmem:[%s491 + $0x9c] sm:$0xf]
        %v533 = vld [vmem:[%s491 + $0xa0] sm:$0xf]
        %v534 = vld [vmem:[%s491 + $0xa4] sm:$0xf]
        %v535 = vld [vmem:[%s491 + $0xa8] sm:$0xf]
        %v536 = vld [vmem:[%s491 + $0xac] sm:$0xf]
        %v537 = vld [vmem:[%s491 + $0xb0] sm:$0xf]
        %v538 = vld [vmem:[%s491 + $0xb4] sm:$0xf]
        %v539 = vld [vmem:[%s491 + $0xb8] sm:$0xf]
        %v540 = vld [vmem:[%s491 + $0xbc] sm:$0xf]
        %v541 = vld [vmem:[%s491 + $0xc0] sm:$0xf]
        %v542 = vld [vmem:[%s491 + $0xc4] sm:$0xf]
        %v543 = vld [vmem:[%s491 + $0xc8] sm:$0xf]
        %v544 = vld [vmem:[%s491 + $0xcc] sm:$0xf]
        %v545 = vld [vmem:[%s491 + $0xd0] sm:$0xf]
        %v546 = vld [vmem:[%s491 + $0xd4] sm:$0xf]
        %v547 = vld [vmem:[%s491 + $0xd8] sm:$0xf]
        %v548 = vld [vmem:[%s1] sm:$0x3]
        %s549 = scalar_lea.vmem %s1, 2
        %v550 = vld [vmem:[%s549] sm:$0x3]
        %v600 = vunpack.c.l.b16 %v493
        %v601 = vunpack.c.l.b16 %v494
        %v602 = vunpack.c.l.b16 %v495
        %v603 = vunpack.c.l.b16 %v496
        %v604 = vunpack.c.l.b16 %v497
        %v605 = vunpack.c.l.b16 %v498
        %v606 = vunpack.c.l.b16 %v499
        %v607 = vunpack.c.l.b16 %v500
        %v608 = vunpack.c.l.b16 %v501
        %v609 = vunpack.c.l.b16 %v502
        %v610 = vunpack.c.l.b16 %v503
        %v611 = vunpack.c.l.b16 %v504
        %v612 = vunpack.c.l.b16 %v505
        %v613 = vunpack.c.l.b16 %v506
        %v614 = vunpack.c.l.b16 %v507
        %v615 = vunpack.c.l.b16 %v508
        %v616 = vunpack.c.l.b16 %v509
        %v617 = vunpack.c.l.b16 %v510
        %v618 = vunpack.c.l.b16 %v511
        %v619 = vunpack.c.l.b16 %v512
        %v620 = vunpack.c.l.b16 %v513
        %v621 = vunpack.c.l.b16 %v514
        %v622 = vunpack.c.l.b16 %v515
        %v623 = vunpack.c.l.b16 %v516
        %v624 = vunpack.c.l.b16 %v517
        %v625 = vunpack.c.l.b16 %v518
        %v626 = vunpack.c.l.b16 %v519
        %v627 = vunpack.c.l.b16 %v520
        %v628 = vunpack.c.l.b16 %v521
        %v629 = vunpack.c.l.b16 %v522
        %v630 = vunpack.c.l.b16 %v523
        %v631 = vunpack.c.l.b16 %v524
        %v632 = vunpack.c.l.b16 %v525
        %v633 = vunpack.c.l.b16 %v526
        %v634 = vunpack.c.l.b16 %v527
        %v635 = vunpack.c.l.b16 %v528
        %v636 = vunpack.c.l.b16 %v529
        %v637 = vunpack.c.l.b16 %v530
        %v638 = vunpack.c.l.b16 %v531
        %v639 = vunpack.c.l.b16 %v532
        %v640 = vunpack.c.l.b16 %v533
        %v641 = vunpack.c.l.b16 %v534
        %v642 = vunpack.c.l.b16 %v535
        %v643 = vunpack.c.l.b16 %v536
        %v644 = vunpack.c.l.b16 %v537
        %v645 = vunpack.c.l.b16 %v538
        %v646 = vunpack.c.l.b16 %v539
        %v647 = vunpack.c.l.b16 %v540
        %v648 = vunpack.c.l.b16 %v541
        %v649 = vpack.c.b16 %v601, %v600
        %v650 = vpack.c.b16 %v603, %v602
        %v651 = vpack.c.b16 %v605, %v604
        %v652 = vpack.c.b16 %v607, %v606
        %v653 = vpack.c.b16 %v609, %v608
        %v654 = vpack.c.b16 %v611, %v610
        %v655 = vpack.c.b16 %v613, %v612
        %v656 = vpack.c.b16 %v615, %v614
        %v657 = vpack.c.b16 %v617, %v616
        %v658 = vpack.c.b16 %v619, %v618
        %v659 = vpack.c.b16 %v621, %v620
        %v660 = vpack.c.b16 %v623, %v622
        %v661 = vpack.c.b16 %v625, %v624
        %v662 = vpack.c.b16 %v627, %v626
        %v663 = vpack.c.b16 %v629, %v628
        %v664 = vpack.c.b16 %v631, %v630
        %v665 = vpack.c.b16 %v633, %v632
        %v666 = vpack.c.b16 %v635, %v634
        %v667 = vpack.c.b16 %v637, %v636
        %v668 = vpack.c.b16 %v639, %v638
        %v669 = vpack.c.b16 %v641, %v640
        %v670 = vpack.c.b16 %v643, %v642
        %v671 = vpack.c.b16 %v645, %v644
        %v672 = vpack.c.b16 %v647, %v646
        %v673 = vpack.c.b16 %v648, %v648
        %vm674 = vsmask.f32 7424
        %v676 = vshrl.u32 %v649, 16
        %v678 = vshll.u32 %v649, 16
        %v680 = vrot.slane %v678, 1
        %v681 = vor.u32 %v676, %v680
        %v683 = vshll.u32 %v650, 16
        %v685 = vrot.slane %v683, 1
        %v686 = vsel %vm674, %v681, %v685
        %v687 = vshrl.u32 %v650, 16
        %v689 = vor.u32 %v687, %v685
        %v691 = vshll.u32 %v651, 16
        %v693 = vrot.slane %v691, 1
        %v694 = vsel %vm674, %v689, %v693
        %v695 = vshrl.u32 %v651, 16
        %v697 = vor.u32 %v695, %v693
        %v699 = vshll.u32 %v652, 16
        %v701 = vrot.slane %v699, 1
        %v702 = vsel %vm674, %v697, %v701
        %v703 = vshrl.u32 %v652, 16
        %v705 = vor.u32 %v703, %v701
        %v707 = vshll.u32 %v653, 16
        %v709 = vrot.slane %v707, 1
        %v710 = vsel %vm674, %v705, %v709
        %v711 = vshrl.u32 %v653, 16
        %v713 = vor.u32 %v711, %v709
        %v715 = vshll.u32 %v654, 16
        %v717 = vrot.slane %v715, 1
        %v718 = vsel %vm674, %v713, %v717
        %v719 = vshrl.u32 %v654, 16
        %v721 = vor.u32 %v719, %v717
        %v723 = vshll.u32 %v655, 16
        %v725 = vrot.slane %v723, 1
        %v726 = vsel %vm674, %v721, %v725
        %v727 = vshrl.u32 %v655, 16
        %v729 = vor.u32 %v727, %v725
        %v731 = vshll.u32 %v656, 16
        %v733 = vrot.slane %v731, 1
        %v734 = vsel %vm674, %v729, %v733
        %v735 = vshrl.u32 %v656, 16
        %v737 = vor.u32 %v735, %v733
        %v739 = vshll.u32 %v657, 16
        %v741 = vrot.slane %v739, 1
        %v742 = vsel %vm674, %v737, %v741
        %v743 = vshrl.u32 %v657, 16
        %v745 = vor.u32 %v743, %v741
        %v747 = vshll.u32 %v658, 16
        %v749 = vrot.slane %v747, 1
        %v750 = vsel %vm674, %v745, %v749
        %v751 = vshrl.u32 %v658, 16
        %v753 = vor.u32 %v751, %v749
        %v755 = vshll.u32 %v659, 16
        %v757 = vrot.slane %v755, 1
        %v758 = vsel %vm674, %v753, %v757
        %v759 = vshrl.u32 %v659, 16
        %v761 = vor.u32 %v759, %v757
        %v763 = vshll.u32 %v660, 16
        %v765 = vrot.slane %v763, 1
        %v766 = vsel %vm674, %v761, %v765
        %v767 = vshrl.u32 %v660, 16
        %v769 = vor.u32 %v767, %v765
        %v771 = vshll.u32 %v661, 16
        %v773 = vrot.slane %v771, 1
        %v774 = vsel %vm674, %v769, %v773
        %v775 = vshrl.u32 %v661, 16
        %v777 = vor.u32 %v775, %v773
        %v779 = vshll.u32 %v662, 16
        %v781 = vrot.slane %v779, 1
        %v782 = vsel %vm674, %v777, %v781
        %v783 = vshrl.u32 %v662, 16
        %v785 = vor.u32 %v783, %v781
        %v787 = vshll.u32 %v663, 16
        %v789 = vrot.slane %v787, 1
        %v790 = vsel %vm674, %v785, %v789
        %v791 = vshrl.u32 %v663, 16
        %v793 = vor.u32 %v791, %v789
        %v795 = vshll.u32 %v664, 16
        %v797 = vrot.slane %v795, 1
        %v798 = vsel %vm674, %v793, %v797
        %v799 = vshrl.u32 %v664, 16
        %v801 = vor.u32 %v799, %v797
        %v803 = vshll.u32 %v665, 16
        %v805 = vrot.slane %v803, 1
        %v806 = vsel %vm674, %v801, %v805
        %v807 = vshrl.u32 %v665, 16
        %v809 = vor.u32 %v807, %v805
        %v811 = vshll.u32 %v666, 16
        %v813 = vrot.slane %v811, 1
        %v814 = vsel %vm674, %v809, %v813
        %v815 = vshrl.u32 %v666, 16
        %v817 = vor.u32 %v815, %v813
        %v819 = vshll.u32 %v667, 16
        %v821 = vrot.slane %v819, 1
        %v822 = vsel %vm674, %v817, %v821
        %v823 = vshrl.u32 %v667, 16
        %v825 = vor.u32 %v823, %v821
        %v827 = vshll.u32 %v668, 16
        %v829 = vrot.slane %v827, 1
        %v830 = vsel %vm674, %v825, %v829
        %v831 = vshrl.u32 %v668, 16
        %v833 = vor.u32 %v831, %v829
        %v835 = vshll.u32 %v669, 16
        %v837 = vrot.slane %v835, 1
        %v838 = vsel %vm674, %v833, %v837
        %v839 = vshrl.u32 %v669, 16
        %v841 = vor.u32 %v839, %v837
        %v843 = vshll.u32 %v670, 16
        %v845 = vrot.slane %v843, 1
        %v846 = vsel %vm674, %v841, %v845
        %v847 = vshrl.u32 %v670, 16
        %v849 = vor.u32 %v847, %v845
        %v851 = vshll.u32 %v671, 16
        %v853 = vrot.slane %v851, 1
        %v854 = vsel %vm674, %v849, %v853
        %v855 = vshrl.u32 %v671, 16
        %v857 = vor.u32 %v855, %v853
        %v859 = vshll.u32 %v672, 16
        %v861 = vrot.slane %v859, 1
        %v862 = vsel %vm674, %v857, %v861
        %v863 = vshrl.u32 %v672, 16
        %v865 = vor.u32 %v863, %v861
        %v867 = vshll.u32 %v673, 16
        %v869 = vrot.slane %v867, 1
        %v870 = vsel %vm674, %v865, %v869
        %vm871 = vcmask 23552
        %v873 = vsel %vm871, %v686, 0
        %v876 = vsel %vm871, %v694, 0
        %v879 = vsel %vm871, %v702, 0
        %v882 = vsel %vm871, %v710, 0
        %v885 = vsel %vm871, %v718, 0
        %v888 = vsel %vm871, %v726, 0
        %v891 = vsel %vm871, %v734, 0
        %v894 = vsel %vm871, %v742, 0
        %v897 = vsel %vm871, %v750, 0
        %v900 = vsel %vm871, %v758, 0
        %v903 = vsel %vm871, %v766, 0
        %v906 = vsel %vm871, %v774, 0
        %v909 = vsel %vm871, %v782, 0
        %v912 = vsel %vm871, %v790, 0
        %v915 = vsel %vm871, %v798, 0
        %v918 = vsel %vm871, %v806, 0
        %v921 = vsel %vm871, %v814, 0
        %v924 = vsel %vm871, %v822, 0
        %v927 = vsel %vm871, %v830, 0
        %v930 = vsel %vm871, %v838, 0
        %v933 = vsel %vm871, %v846, 0
        %v936 = vsel %vm871, %v854, 0
        %v939 = vsel %vm871, %v862, 0
        %v942 = vsel %vm871, %v870, 0
        %vm944 = vcmask 1040384
        %vm945 = vcmask 1041408
        %v946 = vsel %vm944, 4294967295, 65535
        %v947 = vsel %vm945, %v946, 0
        %v949 = vand.u32 %v550, %v947
        %951 = vmatpush.bf16.msra.mxu0 0
        %952 = vmatpush.bf16.msra.mxu0 0
        %953 = vmatpush.bf16.msra.mxu0 0
        %954 = vmatpush.bf16.msra.mxu0 0
        %955 = vmatpush.bf16.msra.mxu0 0
        %956 = vmatpush.bf16.msra.mxu0 0
        %957 = vmatpush.bf16.msra.mxu0 0
        %958 = vmatpush.bf16.msra.mxu0 %v949
        %959 = vmatmul.bf16.gmra.mxu0 %v873
        %v960 = vpop.f32.mrf.mxu0
        %v961 = vadd.f32 0.0, %v960
        %v962 = vpop.f32.mrf.mxu0
        %v963 = vadd.f32 0.0, %v962
        %964 = vmatmul.bf16.gmra.mxu0 %v876
        %v965 = vpop.f32.mrf.mxu0
        %v966 = vadd.f32 0.0, %v965
        %v967 = vpop.f32.mrf.mxu0
        %v968 = vadd.f32 0.0, %v967
        %969 = vmatmul.bf16.gmra.mxu0 %v879
        %v970 = vpop.f32.mrf.mxu0
        %v971 = vadd.f32 0.0, %v970
        %v972 = vpop.f32.mrf.mxu0
        %v973 = vadd.f32 0.0, %v972
        %974 = vmatmul.bf16.gmra.mxu0 %v882
        %v975 = vpop.f32.mrf.mxu0
        %v976 = vadd.f32 0.0, %v975
        %v977 = vpop.f32.mrf.mxu0
        %v978 = vadd.f32 0.0, %v977
        %979 = vmatmul.bf16.gmra.mxu0 %v885
        %v980 = vpop.f32.mrf.mxu0
        %v981 = vadd.f32 0.0, %v980
        %v982 = vpop.f32.mrf.mxu0
        %v983 = vadd.f32 0.0, %v982
        %984 = vmatmul.bf16.gmra.mxu0 %v888
        %v985 = vpop.f32.mrf.mxu0
        %v986 = vadd.f32 0.0, %v985
        %v987 = vpop.f32.mrf.mxu0
        %v988 = vadd.f32 0.0, %v987
        %989 = vmatmul.bf16.gmra.mxu0 %v891
        %v990 = vpop.f32.mrf.mxu0
        %v991 = vadd.f32 0.0, %v990
        %v992 = vpop.f32.mrf.mxu0
        %v993 = vadd.f32 0.0, %v992
        %994 = vmatmul.bf16.gmra.mxu0 %v894
        %v995 = vpop.f32.mrf.mxu0
        %v996 = vadd.f32 0.0, %v995
        %v997 = vpop.f32.mrf.mxu0
        %v998 = vadd.f32 0.0, %v997
        %999 = vmatmul.bf16.gmra.mxu0 %v897
        %v1000 = vpop.f32.mrf.mxu0
        %v1001 = vadd.f32 0.0, %v1000
        %v1002 = vpop.f32.mrf.mxu0
        %v1003 = vadd.f32 0.0, %v1002
        %1004 = vmatmul.bf16.gmra.mxu0 %v900
        %v1005 = vpop.f32.mrf.mxu0
        %v1006 = vadd.f32 0.0, %v1005
        %v1007 = vpop.f32.mrf.mxu0
        %v1008 = vadd.f32 0.0, %v1007
        %1009 = vmatmul.bf16.gmra.mxu0 %v903
        %v1010 = vpop.f32.mrf.mxu0
        %v1011 = vadd.f32 0.0, %v1010
        %v1012 = vpop.f32.mrf.mxu0
        %v1013 = vadd.f32 0.0, %v1012
        %1014 = vmatmul.bf16.gmra.mxu0 %v906
        %v1015 = vpop.f32.mrf.mxu0
        %v1016 = vadd.f32 0.0, %v1015
        %v1017 = vpop.f32.mrf.mxu0
        %v1018 = vadd.f32 0.0, %v1017
        %1019 = vmatmul.bf16.gmra.mxu0 %v909
        %v1020 = vpop.f32.mrf.mxu0
        %v1021 = vadd.f32 0.0, %v1020
        %v1022 = vpop.f32.mrf.mxu0
        %v1023 = vadd.f32 0.0, %v1022
        %1024 = vmatmul.bf16.gmra.mxu0 %v912
        %v1025 = vpop.f32.mrf.mxu0
        %v1026 = vadd.f32 0.0, %v1025
        %v1027 = vpop.f32.mrf.mxu0
        %v1028 = vadd.f32 0.0, %v1027
        %1029 = vmatmul.bf16.gmra.mxu0 %v915
        %v1030 = vpop.f32.mrf.mxu0
        %v1031 = vadd.f32 0.0, %v1030
        %v1032 = vpop.f32.mrf.mxu0
        %v1033 = vadd.f32 0.0, %v1032
        %1034 = vmatmul.bf16.gmra.mxu0 %v918
        %v1035 = vpop.f32.mrf.mxu0
        %v1036 = vadd.f32 0.0, %v1035
        %v1037 = vpop.f32.mrf.mxu0
        %v1038 = vadd.f32 0.0, %v1037
        %1039 = vmatmul.bf16.gmra.mxu0 %v921
        %v1040 = vpop.f32.mrf.mxu0
        %v1041 = vadd.f32 0.0, %v1040
        %v1042 = vpop.f32.mrf.mxu0
        %v1043 = vadd.f32 0.0, %v1042
        %1044 = vmatmul.bf16.gmra.mxu0 %v924
        %v1045 = vpop.f32.mrf.mxu0
        %v1046 = vadd.f32 0.0, %v1045
        %v1047 = vpop.f32.mrf.mxu0
        %v1048 = vadd.f32 0.0, %v1047
        %1049 = vmatmul.bf16.gmra.mxu0 %v927
        %v1050 = vpop.f32.mrf.mxu0
        %v1051 = vadd.f32 0.0, %v1050
        %v1052 = vpop.f32.mrf.mxu0
        %v1053 = vadd.f32 0.0, %v1052
        %1054 = vmatmul.bf16.gmra.mxu0 %v930
        %v1055 = vpop.f32.mrf.mxu0
        %v1056 = vadd.f32 0.0, %v1055
        %v1057 = vpop.f32.mrf.mxu0
        %v1058 = vadd.f32 0.0, %v1057
        %1059 = vmatmul.bf16.gmra.mxu0 %v933
        %v1060 = vpop.f32.mrf.mxu0
        %v1061 = vadd.f32 0.0, %v1060
        %v1062 = vpop.f32.mrf.mxu0
        %v1063 = vadd.f32 0.0, %v1062
        %1064 = vmatmul.bf16.gmra.mxu0 %v936
        %v1065 = vpop.f32.mrf.mxu0
        %v1066 = vadd.f32 0.0, %v1065
        %v1067 = vpop.f32.mrf.mxu0
        %v1068 = vadd.f32 0.0, %v1067
        %1069 = vmatmul.bf16.gmra.mxu0 %v939
        %v1070 = vpop.f32.mrf.mxu0
        %v1071 = vadd.f32 0.0, %v1070
        %v1072 = vpop.f32.mrf.mxu0
        %v1073 = vadd.f32 0.0, %v1072
        %1074 = vmatmul.bf16.gmra.mxu0 %v942
        %v1075 = vpop.f32.mrf.mxu0
        %v1076 = vadd.f32 0.0, %v1075
        %v1077 = vpop.f32.mrf.mxu0
        %v1078 = vadd.f32 0.0, %v1077
        %1079 = vdwg.mxu0
        %v1080 = vsel %vm871, %v649, 0
        %v1082 = vsel %vm871, %v650, 0
        %v1084 = vsel %vm871, %v651, 0
        %v1086 = vsel %vm871, %v652, 0
        %v1088 = vsel %vm871, %v653, 0
        %v1090 = vsel %vm871, %v654, 0
        %v1092 = vsel %vm871, %v655, 0
        %v1094 = vsel %vm871, %v656, 0
        %v1096 = vsel %vm871, %v657, 0
        %v1098 = vsel %vm871, %v658, 0
        %v1100 = vsel %vm871, %v659, 0
        %v1102 = vsel %vm871, %v660, 0
        %v1104 = vsel %vm871, %v661, 0
        %v1106 = vsel %vm871, %v662, 0
        %v1108 = vsel %vm871, %v663, 0
        %v1110 = vsel %vm871, %v664, 0
        %v1112 = vsel %vm871, %v665, 0
        %v1114 = vsel %vm871, %v666, 0
        %v1116 = vsel %vm871, %v667, 0
        %v1118 = vsel %vm871, %v668, 0
        %v1120 = vsel %vm871, %v669, 0
        %v1122 = vsel %vm871, %v670, 0
        %v1124 = vsel %vm871, %v671, 0
        %v1126 = vsel %vm871, %v672, 0
        %v1129 = vand.u32 %v548, %v947
        %1131 = vmatpush.bf16.msra.mxu0 0
        %1132 = vmatpush.bf16.msra.mxu0 0
        %1133 = vmatpush.bf16.msra.mxu0 0
        %1134 = vmatpush.bf16.msra.mxu0 0
        %1135 = vmatpush.bf16.msra.mxu0 0
        %1136 = vmatpush.bf16.msra.mxu0 0
        %1137 = vmatpush.bf16.msra.mxu0 0
        %1138 = vmatpush.bf16.msra.mxu0 %v1129
        %1139 = vmatmul.bf16.gmra.mxu0 %v1080
        %v1140 = vpop.f32.mrf.mxu0
        %v1141 = vadd.f32 %v961, %v1140
        %v1142 = vpop.f32.mrf.mxu0
        %v1143 = vadd.f32 %v963, %v1142
        %1144 = vmatmul.bf16.gmra.mxu0 %v1082
        %v1145 = vpop.f32.mrf.mxu0
        %v1146 = vadd.f32 %v966, %v1145
        %v1147 = vpop.f32.mrf.mxu0
        %v1148 = vadd.f32 %v968, %v1147
        %1149 = vmatmul.bf16.gmra.mxu0 %v1084
        %v1150 = vpop.f32.mrf.mxu0
        %v1151 = vadd.f32 %v971, %v1150
        %v1152 = vpop.f32.mrf.mxu0
        %v1153 = vadd.f32 %v973, %v1152
        %1154 = vmatmul.bf16.gmra.mxu0 %v1086
        %v1155 = vpop.f32.mrf.mxu0
        %v1156 = vadd.f32 %v976, %v1155
        %v1157 = vpop.f32.mrf.mxu0
        %v1158 = vadd.f32 %v978, %v1157
        %1159 = vmatmul.bf16.gmra.mxu0 %v1088
        %v1160 = vpop.f32.mrf.mxu0
        %v1161 = vadd.f32 %v981, %v1160
        %v1162 = vpop.f32.mrf.mxu0
        %v1163 = vadd.f32 %v983, %v1162
        %1164 = vmatmul.bf16.gmra.mxu0 %v1090
        %v1165 = vpop.f32.mrf.mxu0
        %v1166 = vadd.f32 %v986, %v1165
        %v1167 = vpop.f32.mrf.mxu0
        %v1168 = vadd.f32 %v988, %v1167
        %1169 = vmatmul.bf16.gmra.mxu0 %v1092
        %v1170 = vpop.f32.mrf.mxu0
        %v1171 = vadd.f32 %v991, %v1170
        %v1172 = vpop.f32.mrf.mxu0
        %v1173 = vadd.f32 %v993, %v1172
        %1174 = vmatmul.bf16.gmra.mxu0 %v1094
        %v1175 = vpop.f32.mrf.mxu0
        %v1176 = vadd.f32 %v996, %v1175
        %v1177 = vpop.f32.mrf.mxu0
        %v1178 = vadd.f32 %v998, %v1177
        %1179 = vmatmul.bf16.gmra.mxu0 %v1096
        %v1180 = vpop.f32.mrf.mxu0
        %v1181 = vadd.f32 %v1001, %v1180
        %v1182 = vpop.f32.mrf.mxu0
        %v1183 = vadd.f32 %v1003, %v1182
        %1184 = vmatmul.bf16.gmra.mxu0 %v1098
        %v1185 = vpop.f32.mrf.mxu0
        %v1186 = vadd.f32 %v1006, %v1185
        %v1187 = vpop.f32.mrf.mxu0
        %v1188 = vadd.f32 %v1008, %v1187
        %1189 = vmatmul.bf16.gmra.mxu0 %v1100
        %v1190 = vpop.f32.mrf.mxu0
        %v1191 = vadd.f32 %v1011, %v1190
        %v1192 = vpop.f32.mrf.mxu0
        %v1193 = vadd.f32 %v1013, %v1192
        %1194 = vmatmul.bf16.gmra.mxu0 %v1102
        %v1195 = vpop.f32.mrf.mxu0
        %v1196 = vadd.f32 %v1016, %v1195
        %v1197 = vpop.f32.mrf.mxu0
        %v1198 = vadd.f32 %v1018, %v1197
        %1199 = vmatmul.bf16.gmra.mxu0 %v1104
        %v1200 = vpop.f32.mrf.mxu0
        %v1201 = vadd.f32 %v1021, %v1200
        %v1202 = vpop.f32.mrf.mxu0
        %v1203 = vadd.f32 %v1023, %v1202
        %1204 = vmatmul.bf16.gmra.mxu0 %v1106
        %v1205 = vpop.f32.mrf.mxu0
        %v1206 = vadd.f32 %v1026, %v1205
        %v1207 = vpop.f32.mrf.mxu0
        %v1208 = vadd.f32 %v1028, %v1207
        %1209 = vmatmul.bf16.gmra.mxu0 %v1108
        %v1210 = vpop.f32.mrf.mxu0
        %v1211 = vadd.f32 %v1031, %v1210
        %v1212 = vpop.f32.mrf.mxu0
        %v1213 = vadd.f32 %v1033, %v1212
        %1214 = vmatmul.bf16.gmra.mxu0 %v1110
        %v1215 = vpop.f32.mrf.mxu0
        %v1216 = vadd.f32 %v1036, %v1215
        %v1217 = vpop.f32.mrf.mxu0
        %v1218 = vadd.f32 %v1038, %v1217
        %1219 = vmatmul.bf16.gmra.mxu0 %v1112
        %v1220 = vpop.f32.mrf.mxu0
        %v1221 = vadd.f32 %v1041, %v1220
        %v1222 = vpop.f32.mrf.mxu0
        %v1223 = vadd.f32 %v1043, %v1222
        %1224 = vmatmul.bf16.gmra.mxu0 %v1114
        %v1225 = vpop.f32.mrf.mxu0
        %v1226 = vadd.f32 %v1046, %v1225
        %v1227 = vpop.f32.mrf.mxu0
        %v1228 = vadd.f32 %v1048, %v1227
        %1229 = vmatmul.bf16.gmra.mxu0 %v1116
        %v1230 = vpop.f32.mrf.mxu0
        %v1231 = vadd.f32 %v1051, %v1230
        %v1232 = vpop.f32.mrf.mxu0
        %v1233 = vadd.f32 %v1053, %v1232
        %1234 = vmatmul.bf16.gmra.mxu0 %v1118
        %v1235 = vpop.f32.mrf.mxu0
        %v1236 = vadd.f32 %v1056, %v1235
        %v1237 = vpop.f32.mrf.mxu0
        %v1238 = vadd.f32 %v1058, %v1237
        %1239 = vmatmul.bf16.gmra.mxu0 %v1120
        %v1240 = vpop.f32.mrf.mxu0
        %v1241 = vadd.f32 %v1061, %v1240
        %v1242 = vpop.f32.mrf.mxu0
        %v1243 = vadd.f32 %v1063, %v1242
        %1244 = vmatmul.bf16.gmra.mxu0 %v1122
        %v1245 = vpop.f32.mrf.mxu0
        %v1246 = vadd.f32 %v1066, %v1245
        %v1247 = vpop.f32.mrf.mxu0
        %v1248 = vadd.f32 %v1068, %v1247
        %1249 = vmatmul.bf16.gmra.mxu0 %v1124
        %v1250 = vpop.f32.mrf.mxu0
        %v1251 = vadd.f32 %v1071, %v1250
        %v1252 = vpop.f32.mrf.mxu0
        %v1253 = vadd.f32 %v1073, %v1252
        %1254 = vmatmul.bf16.gmra.mxu0 %v1126
        %v1255 = vpop.f32.mrf.mxu0
        %v1256 = vadd.f32 %v1076, %v1255
        %v1257 = vpop.f32.mrf.mxu0
        %v1258 = vadd.f32 %v1078, %v1257
        %1259 = vdwg.mxu0
        %s1260 = scalar_lea.vmem %s1, 4
        %v1261 = vld [vmem:[%s1260] sm:$0x3]
        %vm1262 = vcmask 1046528
        %v1263 = vrot.slane %v649, 1
        %v1264 = vrot.slane %v650, 1
        %v1265 = vsel %vm1262, %v1263, %v1264
        %v1266 = vrot.slane %v651, 1
        %v1267 = vsel %vm1262, %v1264, %v1266
        %v1268 = vrot.slane %v652, 1
        %v1269 = vsel %vm1262, %v1266, %v1268
        %v1270 = vrot.slane %v653, 1
        %v1271 = vsel %vm1262, %v1268, %v1270
        %v1272 = vrot.slane %v654, 1
        %v1273 = vsel %vm1262, %v1270, %v1272
        %v1274 = vrot.slane %v655, 1
        %v1275 = vsel %vm1262, %v1272, %v1274
        %v1276 = vrot.slane %v656, 1
        %v1277 = vsel %vm1262, %v1274, %v1276
        %v1278 = vrot.slane %v657, 1
        %v1279 = vsel %vm1262, %v1276, %v1278
        %v1280 = vrot.slane %v658, 1
        %v1281 = vsel %vm1262, %v1278, %v1280
        %v1282 = vrot.slane %v659, 1
        %v1283 = vsel %vm1262, %v1280, %v1282
        %v1284 = vrot.slane %v660, 1
        %v1285 = vsel %vm1262, %v1282, %v1284
        %v1286 = vrot.slane %v661, 1
        %v1287 = vsel %vm1262, %v1284, %v1286
        %v1288 = vrot.slane %v662, 1
        %v1289 = vsel %vm1262, %v1286, %v1288
        %v1290 = vrot.slane %v663, 1
        %v1291 = vsel %vm1262, %v1288, %v1290
        %v1292 = vrot.slane %v664, 1
        %v1293 = vsel %vm1262, %v1290, %v1292
        %v1294 = vrot.slane %v665, 1
        %v1295 = vsel %vm1262, %v1292, %v1294
        %v1296 = vrot.slane %v666, 1
        %v1297 = vsel %vm1262, %v1294, %v1296
        %v1298 = vrot.slane %v667, 1
        %v1299 = vsel %vm1262, %v1296, %v1298
        %v1300 = vrot.slane %v668, 1
        %v1301 = vsel %vm1262, %v1298, %v1300
        %v1302 = vrot.slane %v669, 1
        %v1303 = vsel %vm1262, %v1300, %v1302
        %v1304 = vrot.slane %v670, 1
        %v1305 = vsel %vm1262, %v1302, %v1304
        %v1306 = vrot.slane %v671, 1
        %v1307 = vsel %vm1262, %v1304, %v1306
        %v1308 = vrot.slane %v672, 1
        %v1309 = vsel %vm1262, %v1306, %v1308
        %v1310 = vrot.slane %v673, 1
        %v1311 = vsel %vm1262, %v1308, %v1310
        %v1313 = vsel %vm871, %v1265, 0
        %v1316 = vsel %vm871, %v1267, 0
        %v1319 = vsel %vm871, %v1269, 0
        %v1322 = vsel %vm871, %v1271, 0
        %v1325 = vsel %vm871, %v1273, 0
        %v1328 = vsel %vm871, %v1275, 0
        %v1331 = vsel %vm871, %v1277, 0
        %v1334 = vsel %vm871, %v1279, 0
        %v1337 = vsel %vm871, %v1281, 0
        %v1340 = vsel %vm871, %v1283, 0
        %v1343 = vsel %vm871, %v1285, 0
        %v1346 = vsel %vm871, %v1287, 0
        %v1349 = vsel %vm871, %v1289, 0
        %v1352 = vsel %vm871, %v1291, 0
        %v1355 = vsel %vm871, %v1293, 0
        %v1358 = vsel %vm871, %v1295, 0
        %v1361 = vsel %vm871, %v1297, 0
        %v1364 = vsel %vm871, %v1299, 0
        %v1367 = vsel %vm871, %v1301, 0
        %v1370 = vsel %vm871, %v1303, 0
        %v1373 = vsel %vm871, %v1305, 0
        %v1376 = vsel %vm871, %v1307, 0
        %v1379 = vsel %vm871, %v1309, 0
        %v1382 = vsel %vm871, %v1311, 0
        %v1385 = vand.u32 %v1261, %v947
        %1387 = vmatpush.bf16.msra.mxu0 0
        %1388 = vmatpush.bf16.msra.mxu0 0
        %1389 = vmatpush.bf16.msra.mxu0 0
        %1390 = vmatpush.bf16.msra.mxu0 0
        %1391 = vmatpush.bf16.msra.mxu0 0
        %1392 = vmatpush.bf16.msra.mxu0 0
        %1393 = vmatpush.bf16.msra.mxu0 0
        %1394 = vmatpush.bf16.msra.mxu0 %v1385
        %1395 = vmatmul.bf16.gmra.mxu0 %v1313
        %v1396 = vpop.f32.mrf.mxu0
        %v1397 = vadd.f32 0.0, %v1396
        %v1398 = vpop.f32.mrf.mxu0
        %v1399 = vadd.f32 0.0, %v1398
        %1400 = vmatmul.bf16.gmra.mxu0 %v1316
        %v1401 = vpop.f32.mrf.mxu0
        %v1402 = vadd.f32 0.0, %v1401
        %v1403 = vpop.f32.mrf.mxu0
        %v1404 = vadd.f32 0.0, %v1403
        %1405 = vmatmul.bf16.gmra.mxu0 %v1319
        %v1406 = vpop.f32.mrf.mxu0
        %v1407 = vadd.f32 0.0, %v1406
        %v1408 = vpop.f32.mrf.mxu0
        %v1409 = vadd.f32 0.0, %v1408
        %1410 = vmatmul.bf16.gmra.mxu0 %v1322
        %v1411 = vpop.f32.mrf.mxu0
        %v1412 = vadd.f32 0.0, %v1411
        %v1413 = vpop.f32.mrf.mxu0
        %v1414 = vadd.f32 0.0, %v1413
        %1415 = vmatmul.bf16.gmra.mxu0 %v1325
        %v1416 = vpop.f32.mrf.mxu0
        %v1417 = vadd.f32 0.0, %v1416
        %v1418 = vpop.f32.mrf.mxu0
        %v1419 = vadd.f32 0.0, %v1418
        %1420 = vmatmul.bf16.gmra.mxu0 %v1328
        %v1421 = vpop.f32.mrf.mxu0
        %v1422 = vadd.f32 0.0, %v1421
        %v1423 = vpop.f32.mrf.mxu0
        %v1424 = vadd.f32 0.0, %v1423
        %1425 = vmatmul.bf16.gmra.mxu0 %v1331
        %v1426 = vpop.f32.mrf.mxu0
        %v1427 = vadd.f32 0.0, %v1426
        %v1428 = vpop.f32.mrf.mxu0
        %v1429 = vadd.f32 0.0, %v1428
        %1430 = vmatmul.bf16.gmra.mxu0 %v1334
        %v1431 = vpop.f32.mrf.mxu0
        %v1432 = vadd.f32 0.0, %v1431
        %v1433 = vpop.f32.mrf.mxu0
        %v1434 = vadd.f32 0.0, %v1433
        %1435 = vmatmul.bf16.gmra.mxu0 %v1337
        %v1436 = vpop.f32.mrf.mxu0
        %v1437 = vadd.f32 0.0, %v1436
        %v1438 = vpop.f32.mrf.mxu0
        %v1439 = vadd.f32 0.0, %v1438
        %1440 = vmatmul.bf16.gmra.mxu0 %v1340
        %v1441 = vpop.f32.mrf.mxu0
        %v1442 = vadd.f32 0.0, %v1441
        %v1443 = vpop.f32.mrf.mxu0
        %v1444 = vadd.f32 0.0, %v1443
        %1445 = vmatmul.bf16.gmra.mxu0 %v1343
        %v1446 = vpop.f32.mrf.mxu0
        %v1447 = vadd.f32 0.0, %v1446
        %v1448 = vpop.f32.mrf.mxu0
        %v1449 = vadd.f32 0.0, %v1448
        %1450 = vmatmul.bf16.gmra.mxu0 %v1346
        %v1451 = vpop.f32.mrf.mxu0
        %v1452 = vadd.f32 0.0, %v1451
        %v1453 = vpop.f32.mrf.mxu0
        %v1454 = vadd.f32 0.0, %v1453
        %1455 = vmatmul.bf16.gmra.mxu0 %v1349
        %v1456 = vpop.f32.mrf.mxu0
        %v1457 = vadd.f32 0.0, %v1456
        %v1458 = vpop.f32.mrf.mxu0
        %v1459 = vadd.f32 0.0, %v1458
        %1460 = vmatmul.bf16.gmra.mxu0 %v1352
        %v1461 = vpop.f32.mrf.mxu0
        %v1462 = vadd.f32 0.0, %v1461
        %v1463 = vpop.f32.mrf.mxu0
        %v1464 = vadd.f32 0.0, %v1463
        %1465 = vmatmul.bf16.gmra.mxu0 %v1355
        %v1466 = vpop.f32.mrf.mxu0
        %v1467 = vadd.f32 0.0, %v1466
        %v1468 = vpop.f32.mrf.mxu0
        %v1469 = vadd.f32 0.0, %v1468
        %1470 = vmatmul.bf16.gmra.mxu0 %v1358
        %v1471 = vpop.f32.mrf.mxu0
        %v1472 = vadd.f32 0.0, %v1471
        %v1473 = vpop.f32.mrf.mxu0
        %v1474 = vadd.f32 0.0, %v1473
        %1475 = vmatmul.bf16.gmra.mxu0 %v1361
        %v1476 = vpop.f32.mrf.mxu0
        %v1477 = vadd.f32 0.0, %v1476
        %v1478 = vpop.f32.mrf.mxu0
        %v1479 = vadd.f32 0.0, %v1478
        %1480 = vmatmul.bf16.gmra.mxu0 %v1364
        %v1481 = vpop.f32.mrf.mxu0
        %v1482 = vadd.f32 0.0, %v1481
        %v1483 = vpop.f32.mrf.mxu0
        %v1484 = vadd.f32 0.0, %v1483
        %1485 = vmatmul.bf16.gmra.mxu0 %v1367
        %v1486 = vpop.f32.mrf.mxu0
        %v1487 = vadd.f32 0.0, %v1486
        %v1488 = vpop.f32.mrf.mxu0
        %v1489 = vadd.f32 0.0, %v1488
        %1490 = vmatmul.bf16.gmra.mxu0 %v1370
        %v1491 = vpop.f32.mrf.mxu0
        %v1492 = vadd.f32 0.0, %v1491
        %v1493 = vpop.f32.mrf.mxu0
        %v1494 = vadd.f32 0.0, %v1493
        %1495 = vmatmul.bf16.gmra.mxu0 %v1373
        %v1496 = vpop.f32.mrf.mxu0
        %v1497 = vadd.f32 0.0, %v1496
        %v1498 = vpop.f32.mrf.mxu0
        %v1499 = vadd.f32 0.0, %v1498
        %1500 = vmatmul.bf16.gmra.mxu0 %v1376
        %v1501 = vpop.f32.mrf.mxu0
        %v1502 = vadd.f32 0.0, %v1501
        %v1503 = vpop.f32.mrf.mxu0
        %v1504 = vadd.f32 0.0, %v1503
        %1505 = vmatmul.bf16.gmra.mxu0 %v1379
        %v1506 = vpop.f32.mrf.mxu0
        %v1507 = vadd.f32 0.0, %v1506
        %v1508 = vpop.f32.mrf.mxu0
        %v1509 = vadd.f32 0.0, %v1508
        %1510 = vmatmul.bf16.gmra.mxu0 %v1382
        %v1511 = vpop.f32.mrf.mxu0
        %v1512 = vadd.f32 0.0, %v1511
        %v1513 = vpop.f32.mrf.mxu0
        %v1514 = vadd.f32 0.0, %v1513
        %1515 = vdwg.mxu0
        %v1516 = vadd.f32 %v1141, %v1397
        %v1517 = vadd.f32 %v1143, %v1399
        %v1518 = vadd.f32 %v1146, %v1402
        %v1519 = vadd.f32 %v1148, %v1404
        %v1520 = vadd.f32 %v1151, %v1407
        %v1521 = vadd.f32 %v1153, %v1409
        %v1522 = vadd.f32 %v1156, %v1412
        %v1523 = vadd.f32 %v1158, %v1414
        %v1524 = vadd.f32 %v1161, %v1417
        %v1525 = vadd.f32 %v1163, %v1419
        %v1526 = vadd.f32 %v1166, %v1422
        %v1527 = vadd.f32 %v1168, %v1424
        %v1528 = vadd.f32 %v1171, %v1427
        %v1529 = vadd.f32 %v1173, %v1429
        %v1530 = vadd.f32 %v1176, %v1432
        %v1531 = vadd.f32 %v1178, %v1434
        %v1532 = vadd.f32 %v1181, %v1437
        %v1533 = vadd.f32 %v1183, %v1439
        %v1534 = vadd.f32 %v1186, %v1442
        %v1535 = vadd.f32 %v1188, %v1444
        %v1536 = vadd.f32 %v1191, %v1447
        %v1537 = vadd.f32 %v1193, %v1449
        %v1538 = vadd.f32 %v1196, %v1452
        %v1539 = vadd.f32 %v1198, %v1454
        %v1540 = vadd.f32 %v1201, %v1457
        %v1541 = vadd.f32 %v1203, %v1459
        %v1542 = vadd.f32 %v1206, %v1462
        %v1543 = vadd.f32 %v1208, %v1464
        %v1544 = vadd.f32 %v1211, %v1467
        %v1545 = vadd.f32 %v1213, %v1469
        %v1546 = vadd.f32 %v1216, %v1472
        %v1547 = vadd.f32 %v1218, %v1474
        %v1548 = vadd.f32 %v1221, %v1477
        %v1549 = vadd.f32 %v1223, %v1479
        %v1550 = vadd.f32 %v1226, %v1482
        %v1551 = vadd.f32 %v1228, %v1484
        %v1552 = vadd.f32 %v1231, %v1487
        %v1553 = vadd.f32 %v1233, %v1489
        %v1554 = vadd.f32 %v1236, %v1492
        %v1555 = vadd.f32 %v1238, %v1494
        %v1556 = vadd.f32 %v1241, %v1497
        %v1557 = vadd.f32 %v1243, %v1499
        %v1558 = vadd.f32 %v1246, %v1502
        %v1559 = vadd.f32 %v1248, %v1504
        %v1560 = vadd.f32 %v1251, %v1507
        %v1561 = vadd.f32 %v1253, %v1509
        %v1562 = vadd.f32 %v1256, %v1512
        %v1563 = vadd.f32 %v1258, %v1514
        %s1564 = scalar_lea.vmem %s1, 6
        %v1565 = vld [vmem:[%s1564] sm:$0x3]
        %v1568 = vunpack.c.l.b16 %v542
        %v1569 = vunpack.c.l.b16 %v543
        %v1570 = vpack.c.b16 %v604, %v603
        %v1571 = vpack.c.b16 %v606, %v605
        %v1572 = vpack.c.b16 %v608, %v607
        %v1573 = vpack.c.b16 %v610, %v609
        %v1574 = vpack.c.b16 %v612, %v611
        %v1575 = vpack.c.b16 %v614, %v613
        %v1576 = vpack.c.b16 %v616, %v615
        %v1577 = vpack.c.b16 %v618, %v617
        %v1578 = vpack.c.b16 %v620, %v619
        %v1579 = vpack.c.b16 %v622, %v621
        %v1580 = vpack.c.b16 %v624, %v623
        %v1581 = vpack.c.b16 %v626, %v625
        %v1582 = vpack.c.b16 %v628, %v627
        %v1583 = vpack.c.b16 %v630, %v629
        %v1584 = vpack.c.b16 %v632, %v631
        %v1585 = vpack.c.b16 %v634, %v633
        %v1586 = vpack.c.b16 %v636, %v635
        %v1587 = vpack.c.b16 %v638, %v637
        %v1588 = vpack.c.b16 %v640, %v639
        %v1589 = vpack.c.b16 %v642, %v641
        %v1590 = vpack.c.b16 %v644, %v643
        %v1591 = vpack.c.b16 %v646, %v645
        %v1592 = vpack.c.b16 %v648, %v647
        %v1593 = vpack.c.b16 %v1569, %v1568
        %v1595 = vsel %vm871, %v1570, 0
        %v1598 = vsel %vm871, %v1571, 0
        %v1601 = vsel %vm871, %v1572, 0
        %v1604 = vsel %vm871, %v1573, 0
        %v1607 = vsel %vm871, %v1574, 0
        %v1610 = vsel %vm871, %v1575, 0
        %v1613 = vsel %vm871, %v1576, 0
        %v1616 = vsel %vm871, %v1577, 0
        %v1619 = vsel %vm871, %v1578, 0
        %v1622 = vsel %vm871, %v1579, 0
        %v1625 = vsel %vm871, %v1580, 0
        %v1628 = vsel %vm871, %v1581, 0
        %v1631 = vsel %vm871, %v1582, 0
        %v1634 = vsel %vm871, %v1583, 0
        %v1637 = vsel %vm871, %v1584, 0
        %v1640 = vsel %vm871, %v1585, 0
        %v1643 = vsel %vm871, %v1586, 0
        %v1646 = vsel %vm871, %v1587, 0
        %v1649 = vsel %vm871, %v1588, 0
        %v1652 = vsel %vm871, %v1589, 0
        %v1655 = vsel %vm871, %v1590, 0
        %v1658 = vsel %vm871, %v1591, 0
        %v1661 = vsel %vm871, %v1592, 0
        %v1664 = vsel %vm871, %v1593, 0
        %v1667 = vand.u32 %v1565, %v947
        %1669 = vmatpush.bf16.msra.mxu0 0
        %1670 = vmatpush.bf16.msra.mxu0 0
        %1671 = vmatpush.bf16.msra.mxu0 0
        %1672 = vmatpush.bf16.msra.mxu0 0
        %1673 = vmatpush.bf16.msra.mxu0 0
        %1674 = vmatpush.bf16.msra.mxu0 0
        %1675 = vmatpush.bf16.msra.mxu0 0
        %1676 = vmatpush.bf16.msra.mxu0 %v1667
        %1677 = vmatmul.bf16.gmra.mxu0 %v1595
        %v1678 = vpop.f32.mrf.mxu0
        %v1679 = vadd.f32 0.0, %v1678
        %v1680 = vpop.f32.mrf.mxu0
        %v1681 = vadd.f32 0.0, %v1680
        %1682 = vmatmul.bf16.gmra.mxu0 %v1598
        %v1683 = vpop.f32.mrf.mxu0
        %v1684 = vadd.f32 0.0, %v1683
        %v1685 = vpop.f32.mrf.mxu0
        %v1686 = vadd.f32 0.0, %v1685
        %1687 = vmatmul.bf16.gmra.mxu0 %v1601
        %v1688 = vpop.f32.mrf.mxu0
        %v1689 = vadd.f32 0.0, %v1688
        %v1690 = vpop.f32.mrf.mxu0
        %v1691 = vadd.f32 0.0, %v1690
        %1692 = vmatmul.bf16.gmra.mxu0 %v1604
        %v1693 = vpop.f32.mrf.mxu0
        %v1694 = vadd.f32 0.0, %v1693
        %v1695 = vpop.f32.mrf.mxu0
        %v1696 = vadd.f32 0.0, %v1695
        %1697 = vmatmul.bf16.gmra.mxu0 %v1607
        %v1698 = vpop.f32.mrf.mxu0
        %v1699 = vadd.f32 0.0, %v1698
        %v1700 = vpop.f32.mrf.mxu0
        %v1701 = vadd.f32 0.0, %v1700
        %1702 = vmatmul.bf16.gmra.mxu0 %v1610
        %v1703 = vpop.f32.mrf.mxu0
        %v1704 = vadd.f32 0.0, %v1703
        %v1705 = vpop.f32.mrf.mxu0
        %v1706 = vadd.f32 0.0, %v1705
        %1707 = vmatmul.bf16.gmra.mxu0 %v1613
        %v1708 = vpop.f32.mrf.mxu0
        %v1709 = vadd.f32 0.0, %v1708
        %v1710 = vpop.f32.mrf.mxu0
        %v1711 = vadd.f32 0.0, %v1710
        %1712 = vmatmul.bf16.gmra.mxu0 %v1616
        %v1713 = vpop.f32.mrf.mxu0
        %v1714 = vadd.f32 0.0, %v1713
        %v1715 = vpop.f32.mrf.mxu0
        %v1716 = vadd.f32 0.0, %v1715
        %1717 = vmatmul.bf16.gmra.mxu0 %v1619
        %v1718 = vpop.f32.mrf.mxu0
        %v1719 = vadd.f32 0.0, %v1718
        %v1720 = vpop.f32.mrf.mxu0
        %v1721 = vadd.f32 0.0, %v1720
        %1722 = vmatmul.bf16.gmra.mxu0 %v1622
        %v1723 = vpop.f32.mrf.mxu0
        %v1724 = vadd.f32 0.0, %v1723
        %v1725 = vpop.f32.mrf.mxu0
        %v1726 = vadd.f32 0.0, %v1725
        %1727 = vmatmul.bf16.gmra.mxu0 %v1625
        %v1728 = vpop.f32.mrf.mxu0
        %v1729 = vadd.f32 0.0, %v1728
        %v1730 = vpop.f32.mrf.mxu0
        %v1731 = vadd.f32 0.0, %v1730
        %1732 = vmatmul.bf16.gmra.mxu0 %v1628
        %v1733 = vpop.f32.mrf.mxu0
        %v1734 = vadd.f32 0.0, %v1733
        %v1735 = vpop.f32.mrf.mxu0
        %v1736 = vadd.f32 0.0, %v1735
        %1737 = vmatmul.bf16.gmra.mxu0 %v1631
        %v1738 = vpop.f32.mrf.mxu0
        %v1739 = vadd.f32 0.0, %v1738
        %v1740 = vpop.f32.mrf.mxu0
        %v1741 = vadd.f32 0.0, %v1740
        %1742 = vmatmul.bf16.gmra.mxu0 %v1634
        %v1743 = vpop.f32.mrf.mxu0
        %v1744 = vadd.f32 0.0, %v1743
        %v1745 = vpop.f32.mrf.mxu0
        %v1746 = vadd.f32 0.0, %v1745
        %1747 = vmatmul.bf16.gmra.mxu0 %v1637
        %v1748 = vpop.f32.mrf.mxu0
        %v1749 = vadd.f32 0.0, %v1748
        %v1750 = vpop.f32.mrf.mxu0
        %v1751 = vadd.f32 0.0, %v1750
        %1752 = vmatmul.bf16.gmra.mxu0 %v1640
        %v1753 = vpop.f32.mrf.mxu0
        %v1754 = vadd.f32 0.0, %v1753
        %v1755 = vpop.f32.mrf.mxu0
        %v1756 = vadd.f32 0.0, %v1755
        %1757 = vmatmul.bf16.gmra.mxu0 %v1643
        %v1758 = vpop.f32.mrf.mxu0
        %v1759 = vadd.f32 0.0, %v1758
        %v1760 = vpop.f32.mrf.mxu0
        %v1761 = vadd.f32 0.0, %v1760
        %1762 = vmatmul.bf16.gmra.mxu0 %v1646
        %v1763 = vpop.f32.mrf.mxu0
        %v1764 = vadd.f32 0.0, %v1763
        %v1765 = vpop.f32.mrf.mxu0
        %v1766 = vadd.f32 0.0, %v1765
        %1767 = vmatmul.bf16.gmra.mxu0 %v1649
        %v1768 = vpop.f32.mrf.mxu0
        %v1769 = vadd.f32 0.0, %v1768
        %v1770 = vpop.f32.mrf.mxu0
        %v1771 = vadd.f32 0.0, %v1770
        %1772 = vmatmul.bf16.gmra.mxu0 %v1652
        %v1773 = vpop.f32.mrf.mxu0
        %v1774 = vadd.f32 0.0, %v1773
        %v1775 = vpop.f32.mrf.mxu0
        %v1776 = vadd.f32 0.0, %v1775
        %1777 = vmatmul.bf16.gmra.mxu0 %v1655
        %v1778 = vpop.f32.mrf.mxu0
        %v1779 = vadd.f32 0.0, %v1778
        %v1780 = vpop.f32.mrf.mxu0
        %v1781 = vadd.f32 0.0, %v1780
        %1782 = vmatmul.bf16.gmra.mxu0 %v1658
        %v1783 = vpop.f32.mrf.mxu0
        %v1784 = vadd.f32 0.0, %v1783
        %v1785 = vpop.f32.mrf.mxu0
        %v1786 = vadd.f32 0.0, %v1785
        %1787 = vmatmul.bf16.gmra.mxu0 %v1661
        %v1788 = vpop.f32.mrf.mxu0
        %v1789 = vadd.f32 0.0, %v1788
        %v1790 = vpop.f32.mrf.mxu0
        %v1791 = vadd.f32 0.0, %v1790
        %1792 = vmatmul.bf16.gmra.mxu0 %v1664
        %v1793 = vpop.f32.mrf.mxu0
        %v1794 = vadd.f32 0.0, %v1793
        %v1795 = vpop.f32.mrf.mxu0
        %v1796 = vadd.f32 0.0, %v1795
        %1797 = vdwg.mxu0
        %v1798 = vadd.f32 %v1516, %v1679
        %v1799 = vadd.f32 %v1517, %v1681
        %v1800 = vadd.f32 %v1518, %v1684
        %v1801 = vadd.f32 %v1519, %v1686
        %v1802 = vadd.f32 %v1520, %v1689
        %v1803 = vadd.f32 %v1521, %v1691
        %v1804 = vadd.f32 %v1522, %v1694
        %v1805 = vadd.f32 %v1523, %v1696
        %v1806 = vadd.f32 %v1524, %v1699
        %v1807 = vadd.f32 %v1525, %v1701
        %v1808 = vadd.f32 %v1526, %v1704
        %v1809 = vadd.f32 %v1527, %v1706
        %v1810 = vadd.f32 %v1528, %v1709
        %v1811 = vadd.f32 %v1529, %v1711
        %v1812 = vadd.f32 %v1530, %v1714
        %v1813 = vadd.f32 %v1531, %v1716
        %v1814 = vadd.f32 %v1532, %v1719
        %v1815 = vadd.f32 %v1533, %v1721
        %v1816 = vadd.f32 %v1534, %v1724
        %v1817 = vadd.f32 %v1535, %v1726
        %v1818 = vadd.f32 %v1536, %v1729
        %v1819 = vadd.f32 %v1537, %v1731
        %v1820 = vadd.f32 %v1538, %v1734
        %v1821 = vadd.f32 %v1539, %v1736
        %v1822 = vadd.f32 %v1540, %v1739
        %v1823 = vadd.f32 %v1541, %v1741
        %v1824 = vadd.f32 %v1542, %v1744
        %v1825 = vadd.f32 %v1543, %v1746
        %v1826 = vadd.f32 %v1544, %v1749
        %v1827 = vadd.f32 %v1545, %v1751
        %v1828 = vadd.f32 %v1546, %v1754
        %v1829 = vadd.f32 %v1547, %v1756
        %v1830 = vadd.f32 %v1548, %v1759
        %v1831 = vadd.f32 %v1549, %v1761
        %v1832 = vadd.f32 %v1550, %v1764
        %v1833 = vadd.f32 %v1551, %v1766
        %v1834 = vadd.f32 %v1552, %v1769
        %v1835 = vadd.f32 %v1553, %v1771
        %v1836 = vadd.f32 %v1554, %v1774
        %v1837 = vadd.f32 %v1555, %v1776
        %v1838 = vadd.f32 %v1556, %v1779
        %v1839 = vadd.f32 %v1557, %v1781
        %v1840 = vadd.f32 %v1558, %v1784
        %v1841 = vadd.f32 %v1559, %v1786
        %v1842 = vadd.f32 %v1560, %v1789
        %v1843 = vadd.f32 %v1561, %v1791
        %v1844 = vadd.f32 %v1562, %v1794
        %v1845 = vadd.f32 %v1563, %v1796
        %s1846 = scalar_lea.vmem %s1, 8
        %v1847 = vld [vmem:[%s1846] sm:$0x3]
        %v1849 = vunpack.c.l.b16 %v544
        %v1850 = vpack.c.b16 %v1849, %v1849
        %v1851 = vshrl.u32 %v1570, 16
        %v1853 = vshll.u32 %v1570, 16
        %v1855 = vrot.slane %v1853, 1
        %v1856 = vor.u32 %v1851, %v1855
        %v1857 = vshll.u32 %v1571, 16
        %v1859 = vrot.slane %v1857, 1
        %v1860 = vsel %vm674, %v1856, %v1859
        %v1861 = vshrl.u32 %v1571, 16
        %v1863 = vor.u32 %v1861, %v1859
        %v1864 = vshll.u32 %v1572, 16
        %v1866 = vrot.slane %v1864, 1
        %v1867 = vsel %vm674, %v1863, %v1866
        %v1868 = vshrl.u32 %v1572, 16
        %v1870 = vor.u32 %v1868, %v1866
        %v1871 = vshll.u32 %v1573, 16
        %v1873 = vrot.slane %v1871, 1
        %v1874 = vsel %vm674, %v1870, %v1873
        %v1875 = vshrl.u32 %v1573, 16
        %v1877 = vor.u32 %v1875, %v1873
        %v1878 = vshll.u32 %v1574, 16
        %v1880 = vrot.slane %v1878, 1
        %v1881 = vsel %vm674, %v1877, %v1880
        %v1882 = vshrl.u32 %v1574, 16
        %v1884 = vor.u32 %v1882, %v1880
        %v1885 = vshll.u32 %v1575, 16
        %v1887 = vrot.slane %v1885, 1
        %v1888 = vsel %vm674, %v1884, %v1887
        %v1889 = vshrl.u32 %v1575, 16
        %v1891 = vor.u32 %v1889, %v1887
        %v1892 = vshll.u32 %v1576, 16
        %v1894 = vrot.slane %v1892, 1
        %v1895 = vsel %vm674, %v1891, %v1894
        %v1896 = vshrl.u32 %v1576, 16
        %v1898 = vor.u32 %v1896, %v1894
        %v1899 = vshll.u32 %v1577, 16
        %v1901 = vrot.slane %v1899, 1
        %v1902 = vsel %vm674, %v1898, %v1901
        %v1903 = vshrl.u32 %v1577, 16
        %v1905 = vor.u32 %v1903, %v1901
        %v1906 = vshll.u32 %v1578, 16
        %v1908 = vrot.slane %v1906, 1
        %v1909 = vsel %vm674, %v1905, %v1908
        %v1910 = vshrl.u32 %v1578, 16
        %v1912 = vor.u32 %v1910, %v1908
        %v1913 = vshll.u32 %v1579, 16
        %v1915 = vrot.slane %v1913, 1
        %v1916 = vsel %vm674, %v1912, %v1915
        %v1917 = vshrl.u32 %v1579, 16
        %v1919 = vor.u32 %v1917, %v1915
        %v1920 = vshll.u32 %v1580, 16
        %v1922 = vrot.slane %v1920, 1
        %v1923 = vsel %vm674, %v1919, %v1922
        %v1924 = vshrl.u32 %v1580, 16
        %v1926 = vor.u32 %v1924, %v1922
        %v1927 = vshll.u32 %v1581, 16
        %v1929 = vrot.slane %v1927, 1
        %v1930 = vsel %vm674, %v1926, %v1929
        %v1931 = vshrl.u32 %v1581, 16
        %v1933 = vor.u32 %v1931, %v1929
        %v1934 = vshll.u32 %v1582, 16
        %v1936 = vrot.slane %v1934, 1
        %v1937 = vsel %vm674, %v1933, %v1936
        %v1938 = vshrl.u32 %v1582, 16
        %v1940 = vor.u32 %v1938, %v1936
        %v1941 = vshll.u32 %v1583, 16
        %v1943 = vrot.slane %v1941, 1
        %v1944 = vsel %vm674, %v1940, %v1943
        %v1945 = vshrl.u32 %v1583, 16
        %v1947 = vor.u32 %v1945, %v1943
        %v1948 = vshll.u32 %v1584, 16
        %v1950 = vrot.slane %v1948, 1
        %v1951 = vsel %vm674, %v1947, %v1950
        %v1952 = vshrl.u32 %v1584, 16
        %v1954 = vor.u32 %v1952, %v1950
        %v1955 = vshll.u32 %v1585, 16
        %v1957 = vrot.slane %v1955, 1
        %v1958 = vsel %vm674, %v1954, %v1957
        %v1959 = vshrl.u32 %v1585, 16
        %v1961 = vor.u32 %v1959, %v1957
        %v1962 = vshll.u32 %v1586, 16
        %v1964 = vrot.slane %v1962, 1
        %v1965 = vsel %vm674, %v1961, %v1964
        %v1966 = vshrl.u32 %v1586, 16
        %v1968 = vor.u32 %v1966, %v1964
        %v1969 = vshll.u32 %v1587, 16
        %v1971 = vrot.slane %v1969, 1
        %v1972 = vsel %vm674, %v1968, %v1971
        %v1973 = vshrl.u32 %v1587, 16
        %v1975 = vor.u32 %v1973, %v1971
        %v1976 = vshll.u32 %v1588, 16
        %v1978 = vrot.slane %v1976, 1
        %v1979 = vsel %vm674, %v1975, %v1978
        %v1980 = vshrl.u32 %v1588, 16
        %v1982 = vor.u32 %v1980, %v1978
        %v1983 = vshll.u32 %v1589, 16
        %v1985 = vrot.slane %v1983, 1
        %v1986 = vsel %vm674, %v1982, %v1985
        %v1987 = vshrl.u32 %v1589, 16
        %v1989 = vor.u32 %v1987, %v1985
        %v1990 = vshll.u32 %v1590, 16
        %v1992 = vrot.slane %v1990, 1
        %v1993 = vsel %vm674, %v1989, %v1992
        %v1994 = vshrl.u32 %v1590, 16
        %v1996 = vor.u32 %v1994, %v1992
        %v1997 = vshll.u32 %v1591, 16
        %v1999 = vrot.slane %v1997, 1
        %v2000 = vsel %vm674, %v1996, %v1999
        %v2001 = vshrl.u32 %v1591, 16
        %v2003 = vor.u32 %v2001, %v1999
        %v2004 = vshll.u32 %v1592, 16
        %v2006 = vrot.slane %v2004, 1
        %v2007 = vsel %vm674, %v2003, %v2006
        %v2008 = vshrl.u32 %v1592, 16
        %v2010 = vor.u32 %v2008, %v2006
        %v2011 = vshll.u32 %v1593, 16
        %v2013 = vrot.slane %v2011, 1
        %v2014 = vsel %vm674, %v2010, %v2013
        %v2015 = vshrl.u32 %v1593, 16
        %v2017 = vor.u32 %v2015, %v2013
        %v2019 = vshll.u32 %v1850, 16
        %v2021 = vrot.slane %v2019, 1
        %v2022 = vsel %vm674, %v2017, %v2021
        %v2024 = vsel %vm871, %v1860, 0
        %v2027 = vsel %vm871, %v1867, 0
        %v2030 = vsel %vm871, %v1874, 0
        %v2033 = vsel %vm871, %v1881, 0
        %v2036 = vsel %vm871, %v1888, 0
        %v2039 = vsel %vm871, %v1895, 0
        %v2042 = vsel %vm871, %v1902, 0
        %v2045 = vsel %vm871, %v1909, 0
        %v2048 = vsel %vm871, %v1916, 0
        %v2051 = vsel %vm871, %v1923, 0
        %v2054 = vsel %vm871, %v1930, 0
        %v2057 = vsel %vm871, %v1937, 0
        %v2060 = vsel %vm871, %v1944, 0
        %v2063 = vsel %vm871, %v1951, 0
        %v2066 = vsel %vm871, %v1958, 0
        %v2069 = vsel %vm871, %v1965, 0
        %v2072 = vsel %vm871, %v1972, 0
        %v2075 = vsel %vm871, %v1979, 0
        %v2078 = vsel %vm871, %v1986, 0
        %v2081 = vsel %vm871, %v1993, 0
        %v2084 = vsel %vm871, %v2000, 0
        %v2087 = vsel %vm871, %v2007, 0
        %v2090 = vsel %vm871, %v2014, 0
        %v2093 = vsel %vm871, %v2022, 0
        %v2096 = vand.u32 %v1847, %v947
        %2098 = vmatpush.bf16.msra.mxu0 0
        %2099 = vmatpush.bf16.msra.mxu0 0
        %2100 = vmatpush.bf16.msra.mxu0 0
        %2101 = vmatpush.bf16.msra.mxu0 0
        %2102 = vmatpush.bf16.msra.mxu0 0
        %2103 = vmatpush.bf16.msra.mxu0 0
        %2104 = vmatpush.bf16.msra.mxu0 0
        %2105 = vmatpush.bf16.msra.mxu0 %v2096
        %2106 = vmatmul.bf16.gmra.mxu0 %v2024
        %v2107 = vpop.f32.mrf.mxu0
        %v2108 = vadd.f32 0.0, %v2107
        %v2109 = vpop.f32.mrf.mxu0
        %v2110 = vadd.f32 0.0, %v2109
        %2111 = vmatmul.bf16.gmra.mxu0 %v2027
        %v2112 = vpop.f32.mrf.mxu0
        %v2113 = vadd.f32 0.0, %v2112
        %v2114 = vpop.f32.mrf.mxu0
        %v2115 = vadd.f32 0.0, %v2114
        %2116 = vmatmul.bf16.gmra.mxu0 %v2030
        %v2117 = vpop.f32.mrf.mxu0
        %v2118 = vadd.f32 0.0, %v2117
        %v2119 = vpop.f32.mrf.mxu0
        %v2120 = vadd.f32 0.0, %v2119
        %2121 = vmatmul.bf16.gmra.mxu0 %v2033
        %v2122 = vpop.f32.mrf.mxu0
        %v2123 = vadd.f32 0.0, %v2122
        %v2124 = vpop.f32.mrf.mxu0
        %v2125 = vadd.f32 0.0, %v2124
        %2126 = vmatmul.bf16.gmra.mxu0 %v2036
        %v2127 = vpop.f32.mrf.mxu0
        %v2128 = vadd.f32 0.0, %v2127
        %v2129 = vpop.f32.mrf.mxu0
        %v2130 = vadd.f32 0.0, %v2129
        %2131 = vmatmul.bf16.gmra.mxu0 %v2039
        %v2132 = vpop.f32.mrf.mxu0
        %v2133 = vadd.f32 0.0, %v2132
        %v2134 = vpop.f32.mrf.mxu0
        %v2135 = vadd.f32 0.0, %v2134
        %2136 = vmatmul.bf16.gmra.mxu0 %v2042
        %v2137 = vpop.f32.mrf.mxu0
        %v2138 = vadd.f32 0.0, %v2137
        %v2139 = vpop.f32.mrf.mxu0
        %v2140 = vadd.f32 0.0, %v2139
        %2141 = vmatmul.bf16.gmra.mxu0 %v2045
        %v2142 = vpop.f32.mrf.mxu0
        %v2143 = vadd.f32 0.0, %v2142
        %v2144 = vpop.f32.mrf.mxu0
        %v2145 = vadd.f32 0.0, %v2144
        %2146 = vmatmul.bf16.gmra.mxu0 %v2048
        %v2147 = vpop.f32.mrf.mxu0
        %v2148 = vadd.f32 0.0, %v2147
        %v2149 = vpop.f32.mrf.mxu0
        %v2150 = vadd.f32 0.0, %v2149
        %2151 = vmatmul.bf16.gmra.mxu0 %v2051
        %v2152 = vpop.f32.mrf.mxu0
        %v2153 = vadd.f32 0.0, %v2152
        %v2154 = vpop.f32.mrf.mxu0
        %v2155 = vadd.f32 0.0, %v2154
        %2156 = vmatmul.bf16.gmra.mxu0 %v2054
        %v2157 = vpop.f32.mrf.mxu0
        %v2158 = vadd.f32 0.0, %v2157
        %v2159 = vpop.f32.mrf.mxu0
        %v2160 = vadd.f32 0.0, %v2159
        %2161 = vmatmul.bf16.gmra.mxu0 %v2057
        %v2162 = vpop.f32.mrf.mxu0
        %v2163 = vadd.f32 0.0, %v2162
        %v2164 = vpop.f32.mrf.mxu0
        %v2165 = vadd.f32 0.0, %v2164
        %2166 = vmatmul.bf16.gmra.mxu0 %v2060
        %v2167 = vpop.f32.mrf.mxu0
        %v2168 = vadd.f32 0.0, %v2167
        %v2169 = vpop.f32.mrf.mxu0
        %v2170 = vadd.f32 0.0, %v2169
        %2171 = vmatmul.bf16.gmra.mxu0 %v2063
        %v2172 = vpop.f32.mrf.mxu0
        %v2173 = vadd.f32 0.0, %v2172
        %v2174 = vpop.f32.mrf.mxu0
        %v2175 = vadd.f32 0.0, %v2174
        %2176 = vmatmul.bf16.gmra.mxu0 %v2066
        %v2177 = vpop.f32.mrf.mxu0
        %v2178 = vadd.f32 0.0, %v2177
        %v2179 = vpop.f32.mrf.mxu0
        %v2180 = vadd.f32 0.0, %v2179
        %2181 = vmatmul.bf16.gmra.mxu0 %v2069
        %v2182 = vpop.f32.mrf.mxu0
        %v2183 = vadd.f32 0.0, %v2182
        %v2184 = vpop.f32.mrf.mxu0
        %v2185 = vadd.f32 0.0, %v2184
        %2186 = vmatmul.bf16.gmra.mxu0 %v2072
        %v2187 = vpop.f32.mrf.mxu0
        %v2188 = vadd.f32 0.0, %v2187
        %v2189 = vpop.f32.mrf.mxu0
        %v2190 = vadd.f32 0.0, %v2189
        %2191 = vmatmul.bf16.gmra.mxu0 %v2075
        %v2192 = vpop.f32.mrf.mxu0
        %v2193 = vadd.f32 0.0, %v2192
        %v2194 = vpop.f32.mrf.mxu0
        %v2195 = vadd.f32 0.0, %v2194
        %2196 = vmatmul.bf16.gmra.mxu0 %v2078
        %v2197 = vpop.f32.mrf.mxu0
        %v2198 = vadd.f32 0.0, %v2197
        %v2199 = vpop.f32.mrf.mxu0
        %v2200 = vadd.f32 0.0, %v2199
        %2201 = vmatmul.bf16.gmra.mxu0 %v2081
        %v2202 = vpop.f32.mrf.mxu0
        %v2203 = vadd.f32 0.0, %v2202
        %v2204 = vpop.f32.mrf.mxu0
        %v2205 = vadd.f32 0.0, %v2204
        %2206 = vmatmul.bf16.gmra.mxu0 %v2084
        %v2207 = vpop.f32.mrf.mxu0
        %v2208 = vadd.f32 0.0, %v2207
        %v2209 = vpop.f32.mrf.mxu0
        %v2210 = vadd.f32 0.0, %v2209
        %2211 = vmatmul.bf16.gmra.mxu0 %v2087
        %v2212 = vpop.f32.mrf.mxu0
        %v2213 = vadd.f32 0.0, %v2212
        %v2214 = vpop.f32.mrf.mxu0
        %v2215 = vadd.f32 0.0, %v2214
        %2216 = vmatmul.bf16.gmra.mxu0 %v2090
        %v2217 = vpop.f32.mrf.mxu0
        %v2218 = vadd.f32 0.0, %v2217
        %v2219 = vpop.f32.mrf.mxu0
        %v2220 = vadd.f32 0.0, %v2219
        %2221 = vmatmul.bf16.gmra.mxu0 %v2093
        %v2222 = vpop.f32.mrf.mxu0
        %v2223 = vadd.f32 0.0, %v2222
        %v2224 = vpop.f32.mrf.mxu0
        %v2225 = vadd.f32 0.0, %v2224
        %2226 = vdwg.mxu0
        %v2227 = vadd.f32 %v1798, %v2108
        %v2228 = vadd.f32 %v1799, %v2110
        %v2229 = vadd.f32 %v1800, %v2113
        %v2230 = vadd.f32 %v1801, %v2115
        %v2231 = vadd.f32 %v1802, %v2118
        %v2232 = vadd.f32 %v1803, %v2120
        %v2233 = vadd.f32 %v1804, %v2123
        %v2234 = vadd.f32 %v1805, %v2125
        %v2235 = vadd.f32 %v1806, %v2128
        %v2236 = vadd.f32 %v1807, %v2130
        %v2237 = vadd.f32 %v1808, %v2133
        %v2238 = vadd.f32 %v1809, %v2135
        %v2239 = vadd.f32 %v1810, %v2138
        %v2240 = vadd.f32 %v1811, %v2140
        %v2241 = vadd.f32 %v1812, %v2143
        %v2242 = vadd.f32 %v1813, %v2145
        %v2243 = vadd.f32 %v1814, %v2148
        %v2244 = vadd.f32 %v1815, %v2150
        %v2245 = vadd.f32 %v1816, %v2153
        %v2246 = vadd.f32 %v1817, %v2155
        %v2247 = vadd.f32 %v1818, %v2158
        %v2248 = vadd.f32 %v1819, %v2160
        %v2249 = vadd.f32 %v1820, %v2163
        %v2250 = vadd.f32 %v1821, %v2165
        %v2251 = vadd.f32 %v1822, %v2168
        %v2252 = vadd.f32 %v1823, %v2170
        %v2253 = vadd.f32 %v1824, %v2173
        %v2254 = vadd.f32 %v1825, %v2175
        %v2255 = vadd.f32 %v1826, %v2178
        %v2256 = vadd.f32 %v1827, %v2180
        %v2257 = vadd.f32 %v1828, %v2183
        %v2258 = vadd.f32 %v1829, %v2185
        %v2259 = vadd.f32 %v1830, %v2188
        %v2260 = vadd.f32 %v1831, %v2190
        %v2261 = vadd.f32 %v1832, %v2193
        %v2262 = vadd.f32 %v1833, %v2195
        %v2263 = vadd.f32 %v1834, %v2198
        %v2264 = vadd.f32 %v1835, %v2200
        %v2265 = vadd.f32 %v1836, %v2203
        %v2266 = vadd.f32 %v1837, %v2205
        %v2267 = vadd.f32 %v1838, %v2208
        %v2268 = vadd.f32 %v1839, %v2210
        %v2269 = vadd.f32 %v1840, %v2213
        %v2270 = vadd.f32 %v1841, %v2215
        %v2271 = vadd.f32 %v1842, %v2218
        %v2272 = vadd.f32 %v1843, %v2220
        %v2273 = vadd.f32 %v1844, %v2223
        %v2274 = vadd.f32 %v1845, %v2225
        %s2275 = scalar_lea.vmem %s1, 10
        %v2276 = vld [vmem:[%s2275] sm:$0x3]
        %v2277 = vrot.slane %v1570, 1
        %v2278 = vrot.slane %v1571, 1
        %v2279 = vsel %vm1262, %v2277, %v2278
        %v2280 = vrot.slane %v1572, 1
        %v2281 = vsel %vm1262, %v2278, %v2280
        %v2282 = vrot.slane %v1573, 1
        %v2283 = vsel %vm1262, %v2280, %v2282
        %v2284 = vrot.slane %v1574, 1
        %v2285 = vsel %vm1262, %v2282, %v2284
        %v2286 = vrot.slane %v1575, 1
        %v2287 = vsel %vm1262, %v2284, %v2286
        %v2288 = vrot.slane %v1576, 1
        %v2289 = vsel %vm1262, %v2286, %v2288
        %v2290 = vrot.slane %v1577, 1
        %v2291 = vsel %vm1262, %v2288, %v2290
        %v2292 = vrot.slane %v1578, 1
        %v2293 = vsel %vm1262, %v2290, %v2292
        %v2294 = vrot.slane %v1579, 1
        %v2295 = vsel %vm1262, %v2292, %v2294
        %v2296 = vrot.slane %v1580, 1
        %v2297 = vsel %vm1262, %v2294, %v2296
        %v2298 = vrot.slane %v1581, 1
        %v2299 = vsel %vm1262, %v2296, %v2298
        %v2300 = vrot.slane %v1582, 1
        %v2301 = vsel %vm1262, %v2298, %v2300
        %v2302 = vrot.slane %v1583, 1
        %v2303 = vsel %vm1262, %v2300, %v2302
        %v2304 = vrot.slane %v1584, 1
        %v2305 = vsel %vm1262, %v2302, %v2304
        %v2306 = vrot.slane %v1585, 1
        %v2307 = vsel %vm1262, %v2304, %v2306
        %v2308 = vrot.slane %v1586, 1
        %v2309 = vsel %vm1262, %v2306, %v2308
        %v2310 = vrot.slane %v1587, 1
        %v2311 = vsel %vm1262, %v2308, %v2310
        %v2312 = vrot.slane %v1588, 1
        %v2313 = vsel %vm1262, %v2310, %v2312
        %v2314 = vrot.slane %v1589, 1
        %v2315 = vsel %vm1262, %v2312, %v2314
        %v2316 = vrot.slane %v1590, 1
        %v2317 = vsel %vm1262, %v2314, %v2316
        %v2318 = vrot.slane %v1591, 1
        %v2319 = vsel %vm1262, %v2316, %v2318
        %v2320 = vrot.slane %v1592, 1
        %v2321 = vsel %vm1262, %v2318, %v2320
        %v2322 = vrot.slane %v1593, 1
        %v2323 = vsel %vm1262, %v2320, %v2322
        %v2324 = vrot.slane %v1850, 1
        %v2325 = vsel %vm1262, %v2322, %v2324
        %v2327 = vsel %vm871, %v2279, 0
        %v2330 = vsel %vm871, %v2281, 0
        %v2333 = vsel %vm871, %v2283, 0
        %v2336 = vsel %vm871, %v2285, 0
        %v2339 = vsel %vm871, %v2287, 0
        %v2342 = vsel %vm871, %v2289, 0
        %v2345 = vsel %vm871, %v2291, 0
        %v2348 = vsel %vm871, %v2293, 0
        %v2351 = vsel %vm871, %v2295, 0
        %v2354 = vsel %vm871, %v2297, 0
        %v2357 = vsel %vm871, %v2299, 0
        %v2360 = vsel %vm871, %v2301, 0
        %v2363 = vsel %vm871, %v2303, 0
        %v2366 = vsel %vm871, %v2305, 0
        %v2369 = vsel %vm871, %v2307, 0
        %v2372 = vsel %vm871, %v2309, 0
        %v2375 = vsel %vm871, %v2311, 0
        %v2378 = vsel %vm871, %v2313, 0
        %v2381 = vsel %vm871, %v2315, 0
        %v2384 = vsel %vm871, %v2317, 0
        %v2387 = vsel %vm871, %v2319, 0
        %v2390 = vsel %vm871, %v2321, 0
        %v2393 = vsel %vm871, %v2323, 0
        %v2396 = vsel %vm871, %v2325, 0
        %v2399 = vand.u32 %v2276, %v947
        %2401 = vmatpush.bf16.msra.mxu0 0
        %2402 = vmatpush.bf16.msra.mxu0 0
        %2403 = vmatpush.bf16.msra.mxu0 0
        %2404 = vmatpush.bf16.msra.mxu0 0
        %2405 = vmatpush.bf16.msra.mxu0 0
        %2406 = vmatpush.bf16.msra.mxu0 0
        %2407 = vmatpush.bf16.msra.mxu0 0
        %2408 = vmatpush.bf16.msra.mxu0 %v2399
        %2409 = vmatmul.bf16.gmra.mxu0 %v2327
        %v2410 = vpop.f32.mrf.mxu0
        %v2411 = vadd.f32 0.0, %v2410
        %v2412 = vpop.f32.mrf.mxu0
        %v2413 = vadd.f32 0.0, %v2412
        %2414 = vmatmul.bf16.gmra.mxu0 %v2330
        %v2415 = vpop.f32.mrf.mxu0
        %v2416 = vadd.f32 0.0, %v2415
        %v2417 = vpop.f32.mrf.mxu0
        %v2418 = vadd.f32 0.0, %v2417
        %2419 = vmatmul.bf16.gmra.mxu0 %v2333
        %v2420 = vpop.f32.mrf.mxu0
        %v2421 = vadd.f32 0.0, %v2420
        %v2422 = vpop.f32.mrf.mxu0
        %v2423 = vadd.f32 0.0, %v2422
        %2424 = vmatmul.bf16.gmra.mxu0 %v2336
        %v2425 = vpop.f32.mrf.mxu0
        %v2426 = vadd.f32 0.0, %v2425
        %v2427 = vpop.f32.mrf.mxu0
        %v2428 = vadd.f32 0.0, %v2427
        %2429 = vmatmul.bf16.gmra.mxu0 %v2339
        %v2430 = vpop.f32.mrf.mxu0
        %v2431 = vadd.f32 0.0, %v2430
        %v2432 = vpop.f32.mrf.mxu0
        %v2433 = vadd.f32 0.0, %v2432
        %2434 = vmatmul.bf16.gmra.mxu0 %v2342
        %v2435 = vpop.f32.mrf.mxu0
        %v2436 = vadd.f32 0.0, %v2435
        %v2437 = vpop.f32.mrf.mxu0
        %v2438 = vadd.f32 0.0, %v2437
        %2439 = vmatmul.bf16.gmra.mxu0 %v2345
        %v2440 = vpop.f32.mrf.mxu0
        %v2441 = vadd.f32 0.0, %v2440
        %v2442 = vpop.f32.mrf.mxu0
        %v2443 = vadd.f32 0.0, %v2442
        %2444 = vmatmul.bf16.gmra.mxu0 %v2348
        %v2445 = vpop.f32.mrf.mxu0
        %v2446 = vadd.f32 0.0, %v2445
        %v2447 = vpop.f32.mrf.mxu0
        %v2448 = vadd.f32 0.0, %v2447
        %2449 = vmatmul.bf16.gmra.mxu0 %v2351
        %v2450 = vpop.f32.mrf.mxu0
        %v2451 = vadd.f32 0.0, %v2450
        %v2452 = vpop.f32.mrf.mxu0
        %v2453 = vadd.f32 0.0, %v2452
        %2454 = vmatmul.bf16.gmra.mxu0 %v2354
        %v2455 = vpop.f32.mrf.mxu0
        %v2456 = vadd.f32 0.0, %v2455
        %v2457 = vpop.f32.mrf.mxu0
        %v2458 = vadd.f32 0.0, %v2457
        %2459 = vmatmul.bf16.gmra.mxu0 %v2357
        %v2460 = vpop.f32.mrf.mxu0
        %v2461 = vadd.f32 0.0, %v2460
        %v2462 = vpop.f32.mrf.mxu0
        %v2463 = vadd.f32 0.0, %v2462
        %2464 = vmatmul.bf16.gmra.mxu0 %v2360
        %v2465 = vpop.f32.mrf.mxu0
        %v2466 = vadd.f32 0.0, %v2465
        %v2467 = vpop.f32.mrf.mxu0
        %v2468 = vadd.f32 0.0, %v2467
        %2469 = vmatmul.bf16.gmra.mxu0 %v2363
        %v2470 = vpop.f32.mrf.mxu0
        %v2471 = vadd.f32 0.0, %v2470
        %v2472 = vpop.f32.mrf.mxu0
        %v2473 = vadd.f32 0.0, %v2472
        %2474 = vmatmul.bf16.gmra.mxu0 %v2366
        %v2475 = vpop.f32.mrf.mxu0
        %v2476 = vadd.f32 0.0, %v2475
        %v2477 = vpop.f32.mrf.mxu0
        %v2478 = vadd.f32 0.0, %v2477
        %2479 = vmatmul.bf16.gmra.mxu0 %v2369
        %v2480 = vpop.f32.mrf.mxu0
        %v2481 = vadd.f32 0.0, %v2480
        %v2482 = vpop.f32.mrf.mxu0
        %v2483 = vadd.f32 0.0, %v2482
        %2484 = vmatmul.bf16.gmra.mxu0 %v2372
        %v2485 = vpop.f32.mrf.mxu0
        %v2486 = vadd.f32 0.0, %v2485
        %v2487 = vpop.f32.mrf.mxu0
        %v2488 = vadd.f32 0.0, %v2487
        %2489 = vmatmul.bf16.gmra.mxu0 %v2375
        %v2490 = vpop.f32.mrf.mxu0
        %v2491 = vadd.f32 0.0, %v2490
        %v2492 = vpop.f32.mrf.mxu0
        %v2493 = vadd.f32 0.0, %v2492
        %2494 = vmatmul.bf16.gmra.mxu0 %v2378
        %v2495 = vpop.f32.mrf.mxu0
        %v2496 = vadd.f32 0.0, %v2495
        %v2497 = vpop.f32.mrf.mxu0
        %v2498 = vadd.f32 0.0, %v2497
        %2499 = vmatmul.bf16.gmra.mxu0 %v2381
        %v2500 = vpop.f32.mrf.mxu0
        %v2501 = vadd.f32 0.0, %v2500
        %v2502 = vpop.f32.mrf.mxu0
        %v2503 = vadd.f32 0.0, %v2502
        %2504 = vmatmul.bf16.gmra.mxu0 %v2384
        %v2505 = vpop.f32.mrf.mxu0
        %v2506 = vadd.f32 0.0, %v2505
        %v2507 = vpop.f32.mrf.mxu0
        %v2508 = vadd.f32 0.0, %v2507
        %2509 = vmatmul.bf16.gmra.mxu0 %v2387
        %v2510 = vpop.f32.mrf.mxu0
        %v2511 = vadd.f32 0.0, %v2510
        %v2512 = vpop.f32.mrf.mxu0
        %v2513 = vadd.f32 0.0, %v2512
        %2514 = vmatmul.bf16.gmra.mxu0 %v2390
        %v2515 = vpop.f32.mrf.mxu0
        %v2516 = vadd.f32 0.0, %v2515
        %v2517 = vpop.f32.mrf.mxu0
        %v2518 = vadd.f32 0.0, %v2517
        %2519 = vmatmul.bf16.gmra.mxu0 %v2393
        %v2520 = vpop.f32.mrf.mxu0
        %v2521 = vadd.f32 0.0, %v2520
        %v2522 = vpop.f32.mrf.mxu0
        %v2523 = vadd.f32 0.0, %v2522
        %2524 = vmatmul.bf16.gmra.mxu0 %v2396
        %v2525 = vpop.f32.mrf.mxu0
        %v2526 = vadd.f32 0.0, %v2525
        %v2527 = vpop.f32.mrf.mxu0
        %v2528 = vadd.f32 0.0, %v2527
        %2529 = vdwg.mxu0
        %v2530 = vadd.f32 %v2227, %v2411
        %v2531 = vadd.f32 %v2228, %v2413
        %v2532 = vadd.f32 %v2229, %v2416
        %v2533 = vadd.f32 %v2230, %v2418
        %v2534 = vadd.f32 %v2231, %v2421
        %v2535 = vadd.f32 %v2232, %v2423
        %v2536 = vadd.f32 %v2233, %v2426
        %v2537 = vadd.f32 %v2234, %v2428
        %v2538 = vadd.f32 %v2235, %v2431
        %v2539 = vadd.f32 %v2236, %v2433
        %v2540 = vadd.f32 %v2237, %v2436
        %v2541 = vadd.f32 %v2238, %v2438
        %v2542 = vadd.f32 %v2239, %v2441
        %v2543 = vadd.f32 %v2240, %v2443
        %v2544 = vadd.f32 %v2241, %v2446
        %v2545 = vadd.f32 %v2242, %v2448
        %v2546 = vadd.f32 %v2243, %v2451
        %v2547 = vadd.f32 %v2244, %v2453
        %v2548 = vadd.f32 %v2245, %v2456
        %v2549 = vadd.f32 %v2246, %v2458
        %v2550 = vadd.f32 %v2247, %v2461
        %v2551 = vadd.f32 %v2248, %v2463
        %v2552 = vadd.f32 %v2249, %v2466
        %v2553 = vadd.f32 %v2250, %v2468
        %v2554 = vadd.f32 %v2251, %v2471
        %v2555 = vadd.f32 %v2252, %v2473
        %v2556 = vadd.f32 %v2253, %v2476
        %v2557 = vadd.f32 %v2254, %v2478
        %v2558 = vadd.f32 %v2255, %v2481
        %v2559 = vadd.f32 %v2256, %v2483
        %v2560 = vadd.f32 %v2257, %v2486
        %v2561 = vadd.f32 %v2258, %v2488
        %v2562 = vadd.f32 %v2259, %v2491
        %v2563 = vadd.f32 %v2260, %v2493
        %v2564 = vadd.f32 %v2261, %v2496
        %v2565 = vadd.f32 %v2262, %v2498
        %v2566 = vadd.f32 %v2263, %v2501
        %v2567 = vadd.f32 %v2264, %v2503
        %v2568 = vadd.f32 %v2265, %v2506
        %v2569 = vadd.f32 %v2266, %v2508
        %v2570 = vadd.f32 %v2267, %v2511
        %v2571 = vadd.f32 %v2268, %v2513
        %v2572 = vadd.f32 %v2269, %v2516
        %v2573 = vadd.f32 %v2270, %v2518
        %v2574 = vadd.f32 %v2271, %v2521
        %v2575 = vadd.f32 %v2272, %v2523
        %v2576 = vadd.f32 %v2273, %v2526
        %v2577 = vadd.f32 %v2274, %v2528
        %s2578 = scalar_lea.vmem %s1, 12
        %v2579 = vld [vmem:[%s2578] sm:$0x3]
        %v2582 = vunpack.c.l.b16 %v545
        %v2583 = vunpack.c.l.b16 %v546
        %v2584 = vpack.c.b16 %v1568, %v648
        %v2585 = vpack.c.b16 %v1849, %v1569
        %v2586 = vpack.c.b16 %v2583, %v2582
        %v2588 = vsel %vm871, %v2584, 0
        %v2591 = vsel %vm871, %v2585, 0
        %v2594 = vsel %vm871, %v2586, 0
        %v2597 = vand.u32 %v2579, %v947
        %2599 = vmatpush.bf16.msra.mxu0 0
        %2600 = vmatpush.bf16.msra.mxu0 0
        %2601 = vmatpush.bf16.msra.mxu0 0
        %2602 = vmatpush.bf16.msra.mxu0 0
        %2603 = vmatpush.bf16.msra.mxu0 0
        %2604 = vmatpush.bf16.msra.mxu0 0
        %2605 = vmatpush.bf16.msra.mxu0 0
        %2606 = vmatpush.bf16.msra.mxu0 %v2597
        %2607 = vmatmul.bf16.gmra.mxu0 %v1086
        %v2608 = vpop.f32.mrf.mxu0
        %v2609 = vadd.f32 0.0, %v2608
        %v2610 = vpop.f32.mrf.mxu0
        %v2611 = vadd.f32 0.0, %v2610
        %2612 = vmatmul.bf16.gmra.mxu0 %v1088
        %v2613 = vpop.f32.mrf.mxu0
        %v2614 = vadd.f32 0.0, %v2613
        %v2615 = vpop.f32.mrf.mxu0
        %v2616 = vadd.f32 0.0, %v2615
        %2617 = vmatmul.bf16.gmra.mxu0 %v1090
        %v2618 = vpop.f32.mrf.mxu0
        %v2619 = vadd.f32 0.0, %v2618
        %v2620 = vpop.f32.mrf.mxu0
        %v2621 = vadd.f32 0.0, %v2620
        %2622 = vmatmul.bf16.gmra.mxu0 %v1092
        %v2623 = vpop.f32.mrf.mxu0
        %v2624 = vadd.f32 0.0, %v2623
        %v2625 = vpop.f32.mrf.mxu0
        %v2626 = vadd.f32 0.0, %v2625
        %2627 = vmatmul.bf16.gmra.mxu0 %v1094
        %v2628 = vpop.f32.mrf.mxu0
        %v2629 = vadd.f32 0.0, %v2628
        %v2630 = vpop.f32.mrf.mxu0
        %v2631 = vadd.f32 0.0, %v2630
        %2632 = vmatmul.bf16.gmra.mxu0 %v1096
        %v2633 = vpop.f32.mrf.mxu0
        %v2634 = vadd.f32 0.0, %v2633
        %v2635 = vpop.f32.mrf.mxu0
        %v2636 = vadd.f32 0.0, %v2635
        %2637 = vmatmul.bf16.gmra.mxu0 %v1098
        %v2638 = vpop.f32.mrf.mxu0
        %v2639 = vadd.f32 0.0, %v2638
        %v2640 = vpop.f32.mrf.mxu0
        %v2641 = vadd.f32 0.0, %v2640
        %2642 = vmatmul.bf16.gmra.mxu0 %v1100
        %v2643 = vpop.f32.mrf.mxu0
        %v2644 = vadd.f32 0.0, %v2643
        %v2645 = vpop.f32.mrf.mxu0
        %v2646 = vadd.f32 0.0, %v2645
        %2647 = vmatmul.bf16.gmra.mxu0 %v1102
        %v2648 = vpop.f32.mrf.mxu0
        %v2649 = vadd.f32 0.0, %v2648
        %v2650 = vpop.f32.mrf.mxu0
        %v2651 = vadd.f32 0.0, %v2650
        %2652 = vmatmul.bf16.gmra.mxu0 %v1104
        %v2653 = vpop.f32.mrf.mxu0
        %v2654 = vadd.f32 0.0, %v2653
        %v2655 = vpop.f32.mrf.mxu0
        %v2656 = vadd.f32 0.0, %v2655
        %2657 = vmatmul.bf16.gmra.mxu0 %v1106
        %v2658 = vpop.f32.mrf.mxu0
        %v2659 = vadd.f32 0.0, %v2658
        %v2660 = vpop.f32.mrf.mxu0
        %v2661 = vadd.f32 0.0, %v2660
        %2662 = vmatmul.bf16.gmra.mxu0 %v1108
        %v2663 = vpop.f32.mrf.mxu0
        %v2664 = vadd.f32 0.0, %v2663
        %v2665 = vpop.f32.mrf.mxu0
        %v2666 = vadd.f32 0.0, %v2665
        %2667 = vmatmul.bf16.gmra.mxu0 %v1110
        %v2668 = vpop.f32.mrf.mxu0
        %v2669 = vadd.f32 0.0, %v2668
        %v2670 = vpop.f32.mrf.mxu0
        %v2671 = vadd.f32 0.0, %v2670
        %2672 = vmatmul.bf16.gmra.mxu0 %v1112
        %v2673 = vpop.f32.mrf.mxu0
        %v2674 = vadd.f32 0.0, %v2673
        %v2675 = vpop.f32.mrf.mxu0
        %v2676 = vadd.f32 0.0, %v2675
        %2677 = vmatmul.bf16.gmra.mxu0 %v1114
        %v2678 = vpop.f32.mrf.mxu0
        %v2679 = vadd.f32 0.0, %v2678
        %v2680 = vpop.f32.mrf.mxu0
        %v2681 = vadd.f32 0.0, %v2680
        %2682 = vmatmul.bf16.gmra.mxu0 %v1116
        %v2683 = vpop.f32.mrf.mxu0
        %v2684 = vadd.f32 0.0, %v2683
        %v2685 = vpop.f32.mrf.mxu0
        %v2686 = vadd.f32 0.0, %v2685
        %2687 = vmatmul.bf16.gmra.mxu0 %v1118
        %v2688 = vpop.f32.mrf.mxu0
        %v2689 = vadd.f32 0.0, %v2688
        %v2690 = vpop.f32.mrf.mxu0
        %v2691 = vadd.f32 0.0, %v2690
        %2692 = vmatmul.bf16.gmra.mxu0 %v1120
        %v2693 = vpop.f32.mrf.mxu0
        %v2694 = vadd.f32 0.0, %v2693
        %v2695 = vpop.f32.mrf.mxu0
        %v2696 = vadd.f32 0.0, %v2695
        %2697 = vmatmul.bf16.gmra.mxu0 %v1122
        %v2698 = vpop.f32.mrf.mxu0
        %v2699 = vadd.f32 0.0, %v2698
        %v2700 = vpop.f32.mrf.mxu0
        %v2701 = vadd.f32 0.0, %v2700
        %2702 = vmatmul.bf16.gmra.mxu0 %v1124
        %v2703 = vpop.f32.mrf.mxu0
        %v2704 = vadd.f32 0.0, %v2703
        %v2705 = vpop.f32.mrf.mxu0
        %v2706 = vadd.f32 0.0, %v2705
        %2707 = vmatmul.bf16.gmra.mxu0 %v1126
        %v2708 = vpop.f32.mrf.mxu0
        %v2709 = vadd.f32 0.0, %v2708
        %v2710 = vpop.f32.mrf.mxu0
        %v2711 = vadd.f32 0.0, %v2710
        %2712 = vmatmul.bf16.gmra.mxu0 %v2588
        %v2713 = vpop.f32.mrf.mxu0
        %v2714 = vadd.f32 0.0, %v2713
        %v2715 = vpop.f32.mrf.mxu0
        %v2716 = vadd.f32 0.0, %v2715
        %2717 = vmatmul.bf16.gmra.mxu0 %v2591
        %v2718 = vpop.f32.mrf.mxu0
        %v2719 = vadd.f32 0.0, %v2718
        %v2720 = vpop.f32.mrf.mxu0
        %v2721 = vadd.f32 0.0, %v2720
        %2722 = vmatmul.bf16.gmra.mxu0 %v2594
        %v2723 = vpop.f32.mrf.mxu0
        %v2724 = vadd.f32 0.0, %v2723
        %v2725 = vpop.f32.mrf.mxu0
        %v2726 = vadd.f32 0.0, %v2725
        %2727 = vdwg.mxu0
        %v2728 = vadd.f32 %v2530, %v2609
        %v2729 = vadd.f32 %v2531, %v2611
        %v2730 = vadd.f32 %v2532, %v2614
        %v2731 = vadd.f32 %v2533, %v2616
        %v2732 = vadd.f32 %v2534, %v2619
        %v2733 = vadd.f32 %v2535, %v2621
        %v2734 = vadd.f32 %v2536, %v2624
        %v2735 = vadd.f32 %v2537, %v2626
        %v2736 = vadd.f32 %v2538, %v2629
        %v2737 = vadd.f32 %v2539, %v2631
        %v2738 = vadd.f32 %v2540, %v2634
        %v2739 = vadd.f32 %v2541, %v2636
        %v2740 = vadd.f32 %v2542, %v2639
        %v2741 = vadd.f32 %v2543, %v2641
        %v2742 = vadd.f32 %v2544, %v2644
        %v2743 = vadd.f32 %v2545, %v2646
        %v2744 = vadd.f32 %v2546, %v2649
        %v2745 = vadd.f32 %v2547, %v2651
        %v2746 = vadd.f32 %v2548, %v2654
        %v2747 = vadd.f32 %v2549, %v2656
        %v2748 = vadd.f32 %v2550, %v2659
        %v2749 = vadd.f32 %v2551, %v2661
        %v2750 = vadd.f32 %v2552, %v2664
        %v2751 = vadd.f32 %v2553, %v2666
        %v2752 = vadd.f32 %v2554, %v2669
        %v2753 = vadd.f32 %v2555, %v2671
        %v2754 = vadd.f32 %v2556, %v2674
        %v2755 = vadd.f32 %v2557, %v2676
        %v2756 = vadd.f32 %v2558, %v2679
        %v2757 = vadd.f32 %v2559, %v2681
        %v2758 = vadd.f32 %v2560, %v2684
        %v2759 = vadd.f32 %v2561, %v2686
        %v2760 = vadd.f32 %v2562, %v2689
        %v2761 = vadd.f32 %v2563, %v2691
        %v2762 = vadd.f32 %v2564, %v2694
        %v2763 = vadd.f32 %v2565, %v2696
        %v2764 = vadd.f32 %v2566, %v2699
        %v2765 = vadd.f32 %v2567, %v2701
        %v2766 = vadd.f32 %v2568, %v2704
        %v2767 = vadd.f32 %v2569, %v2706
        %v2768 = vadd.f32 %v2570, %v2709
        %v2769 = vadd.f32 %v2571, %v2711
        %v2770 = vadd.f32 %v2572, %v2714
        %v2771 = vadd.f32 %v2573, %v2716
        %v2772 = vadd.f32 %v2574, %v2719
        %v2773 = vadd.f32 %v2575, %v2721
        %v2774 = vadd.f32 %v2576, %v2724
        %v2775 = vadd.f32 %v2577, %v2726
        %s2776 = scalar_lea.vmem %s1, 14
        %v2777 = vld [vmem:[%s2776] sm:$0x3]
        %v2779 = vunpack.c.l.b16 %v547
        %v2780 = vpack.c.b16 %v2779, %v2779
        %v2781 = vshll.u32 %v2584, 16
        %v2783 = vrot.slane %v2781, 1
        %v2784 = vsel %vm674, %v865, %v2783
        %v2785 = vshrl.u32 %v2584, 16
        %v2787 = vor.u32 %v2785, %v2783
        %v2788 = vshll.u32 %v2585, 16
        %v2790 = vrot.slane %v2788, 1
        %v2791 = vsel %vm674, %v2787, %v2790
        %v2792 = vshrl.u32 %v2585, 16
        %v2794 = vor.u32 %v2792, %v2790
        %v2795 = vshll.u32 %v2586, 16
        %v2797 = vrot.slane %v2795, 1
        %v2798 = vsel %vm674, %v2794, %v2797
        %v2799 = vshrl.u32 %v2586, 16
        %v2801 = vor.u32 %v2799, %v2797
        %v2803 = vshll.u32 %v2780, 16
        %v2805 = vrot.slane %v2803, 1
        %v2806 = vsel %vm674, %v2801, %v2805
        %v2808 = vsel %vm871, %v2784, 0
        %v2811 = vsel %vm871, %v2791, 0
        %v2814 = vsel %vm871, %v2798, 0
        %v2817 = vsel %vm871, %v2806, 0
        %v2820 = vand.u32 %v2777, %v947
        %2822 = vmatpush.bf16.msra.mxu0 0
        %2823 = vmatpush.bf16.msra.mxu0 0
        %2824 = vmatpush.bf16.msra.mxu0 0
        %2825 = vmatpush.bf16.msra.mxu0 0
        %2826 = vmatpush.bf16.msra.mxu0 0
        %2827 = vmatpush.bf16.msra.mxu0 0
        %2828 = vmatpush.bf16.msra.mxu0 0
        %2829 = vmatpush.bf16.msra.mxu0 %v2820
        %2830 = vmatmul.bf16.gmra.mxu0 %v882
        %v2831 = vpop.f32.mrf.mxu0
        %v2832 = vadd.f32 0.0, %v2831
        %v2833 = vpop.f32.mrf.mxu0
        %v2834 = vadd.f32 0.0, %v2833
        %2835 = vmatmul.bf16.gmra.mxu0 %v885
        %v2836 = vpop.f32.mrf.mxu0
        %v2837 = vadd.f32 0.0, %v2836
        %v2838 = vpop.f32.mrf.mxu0
        %v2839 = vadd.f32 0.0, %v2838
        %2840 = vmatmul.bf16.gmra.mxu0 %v888
        %v2841 = vpop.f32.mrf.mxu0
        %v2842 = vadd.f32 0.0, %v2841
        %v2843 = vpop.f32.mrf.mxu0
        %v2844 = vadd.f32 0.0, %v2843
        %2845 = vmatmul.bf16.gmra.mxu0 %v891
        %v2846 = vpop.f32.mrf.mxu0
        %v2847 = vadd.f32 0.0, %v2846
        %v2848 = vpop.f32.mrf.mxu0
        %v2849 = vadd.f32 0.0, %v2848
        %2850 = vmatmul.bf16.gmra.mxu0 %v894
        %v2851 = vpop.f32.mrf.mxu0
        %v2852 = vadd.f32 0.0, %v2851
        %v2853 = vpop.f32.mrf.mxu0
        %v2854 = vadd.f32 0.0, %v2853
        %2855 = vmatmul.bf16.gmra.mxu0 %v897
        %v2856 = vpop.f32.mrf.mxu0
        %v2857 = vadd.f32 0.0, %v2856
        %v2858 = vpop.f32.mrf.mxu0
        %v2859 = vadd.f32 0.0, %v2858
        %2860 = vmatmul.bf16.gmra.mxu0 %v900
        %v2861 = vpop.f32.mrf.mxu0
        %v2862 = vadd.f32 0.0, %v2861
        %v2863 = vpop.f32.mrf.mxu0
        %v2864 = vadd.f32 0.0, %v2863
        %2865 = vmatmul.bf16.gmra.mxu0 %v903
        %v2866 = vpop.f32.mrf.mxu0
        %v2867 = vadd.f32 0.0, %v2866
        %v2868 = vpop.f32.mrf.mxu0
        %v2869 = vadd.f32 0.0, %v2868
        %2870 = vmatmul.bf16.gmra.mxu0 %v906
        %v2871 = vpop.f32.mrf.mxu0
        %v2872 = vadd.f32 0.0, %v2871
        %v2873 = vpop.f32.mrf.mxu0
        %v2874 = vadd.f32 0.0, %v2873
        %2875 = vmatmul.bf16.gmra.mxu0 %v909
        %v2876 = vpop.f32.mrf.mxu0
        %v2877 = vadd.f32 0.0, %v2876
        %v2878 = vpop.f32.mrf.mxu0
        %v2879 = vadd.f32 0.0, %v2878
        %2880 = vmatmul.bf16.gmra.mxu0 %v912
        %v2881 = vpop.f32.mrf.mxu0
        %v2882 = vadd.f32 0.0, %v2881
        %v2883 = vpop.f32.mrf.mxu0
        %v2884 = vadd.f32 0.0, %v2883
        %2885 = vmatmul.bf16.gmra.mxu0 %v915
        %v2886 = vpop.f32.mrf.mxu0
        %v2887 = vadd.f32 0.0, %v2886
        %v2888 = vpop.f32.mrf.mxu0
        %v2889 = vadd.f32 0.0, %v2888
        %2890 = vmatmul.bf16.gmra.mxu0 %v918
        %v2891 = vpop.f32.mrf.mxu0
        %v2892 = vadd.f32 0.0, %v2891
        %v2893 = vpop.f32.mrf.mxu0
        %v2894 = vadd.f32 0.0, %v2893
        %2895 = vmatmul.bf16.gmra.mxu0 %v921
        %v2896 = vpop.f32.mrf.mxu0
        %v2897 = vadd.f32 0.0, %v2896
        %v2898 = vpop.f32.mrf.mxu0
        %v2899 = vadd.f32 0.0, %v2898
        %2900 = vmatmul.bf16.gmra.mxu0 %v924
        %v2901 = vpop.f32.mrf.mxu0
        %v2902 = vadd.f32 0.0, %v2901
        %v2903 = vpop.f32.mrf.mxu0
        %v2904 = vadd.f32 0.0, %v2903
        %2905 = vmatmul.bf16.gmra.mxu0 %v927
        %v2906 = vpop.f32.mrf.mxu0
        %v2907 = vadd.f32 0.0, %v2906
        %v2908 = vpop.f32.mrf.mxu0
        %v2909 = vadd.f32 0.0, %v2908
        %2910 = vmatmul.bf16.gmra.mxu0 %v930
        %v2911 = vpop.f32.mrf.mxu0
        %v2912 = vadd.f32 0.0, %v2911
        %v2913 = vpop.f32.mrf.mxu0
        %v2914 = vadd.f32 0.0, %v2913
        %2915 = vmatmul.bf16.gmra.mxu0 %v933
        %v2916 = vpop.f32.mrf.mxu0
        %v2917 = vadd.f32 0.0, %v2916
        %v2918 = vpop.f32.mrf.mxu0
        %v2919 = vadd.f32 0.0, %v2918
        %2920 = vmatmul.bf16.gmra.mxu0 %v936
        %v2921 = vpop.f32.mrf.mxu0
        %v2922 = vadd.f32 0.0, %v2921
        %v2923 = vpop.f32.mrf.mxu0
        %v2924 = vadd.f32 0.0, %v2923
        %2925 = vmatmul.bf16.gmra.mxu0 %v939
        %v2926 = vpop.f32.mrf.mxu0
        %v2927 = vadd.f32 0.0, %v2926
        %v2928 = vpop.f32.mrf.mxu0
        %v2929 = vadd.f32 0.0, %v2928
        %2930 = vmatmul.bf16.gmra.mxu0 %v2808
        %v2931 = vpop.f32.mrf.mxu0
        %v2932 = vadd.f32 0.0, %v2931
        %v2933 = vpop.f32.mrf.mxu0
        %v2934 = vadd.f32 0.0, %v2933
        %2935 = vmatmul.bf16.gmra.mxu0 %v2811
        %v2936 = vpop.f32.mrf.mxu0
        %v2937 = vadd.f32 0.0, %v2936
        %v2938 = vpop.f32.mrf.mxu0
        %v2939 = vadd.f32 0.0, %v2938
        %2940 = vmatmul.bf16.gmra.mxu0 %v2814
        %v2941 = vpop.f32.mrf.mxu0
        %v2942 = vadd.f32 0.0, %v2941
        %v2943 = vpop.f32.mrf.mxu0
        %v2944 = vadd.f32 0.0, %v2943
        %2945 = vmatmul.bf16.gmra.mxu0 %v2817
        %v2946 = vpop.f32.mrf.mxu0
        %v2947 = vadd.f32 0.0, %v2946
        %v2948 = vpop.f32.mrf.mxu0
        %v2949 = vadd.f32 0.0, %v2948
        %2950 = vdwg.mxu0
        %v2951 = vadd.f32 %v2728, %v2832
        %v2952 = vadd.f32 %v2729, %v2834
        %v2953 = vadd.f32 %v2730, %v2837
        %v2954 = vadd.f32 %v2731, %v2839
        %v2955 = vadd.f32 %v2732, %v2842
        %v2956 = vadd.f32 %v2733, %v2844
        %v2957 = vadd.f32 %v2734, %v2847
        %v2958 = vadd.f32 %v2735, %v2849
        %v2959 = vadd.f32 %v2736, %v2852
        %v2960 = vadd.f32 %v2737, %v2854
        %v2961 = vadd.f32 %v2738, %v2857
        %v2962 = vadd.f32 %v2739, %v2859
        %v2963 = vadd.f32 %v2740, %v2862
        %v2964 = vadd.f32 %v2741, %v2864
        %v2965 = vadd.f32 %v2742, %v2867
        %v2966 = vadd.f32 %v2743, %v2869
        %v2967 = vadd.f32 %v2744, %v2872
        %v2968 = vadd.f32 %v2745, %v2874
        %v2969 = vadd.f32 %v2746, %v2877
        %v2970 = vadd.f32 %v2747, %v2879
        %v2971 = vadd.f32 %v2748, %v2882
        %v2972 = vadd.f32 %v2749, %v2884
        %v2973 = vadd.f32 %v2750, %v2887
        %v2974 = vadd.f32 %v2751, %v2889
        %v2975 = vadd.f32 %v2752, %v2892
        %v2976 = vadd.f32 %v2753, %v2894
        %v2977 = vadd.f32 %v2754, %v2897
        %v2978 = vadd.f32 %v2755, %v2899
        %v2979 = vadd.f32 %v2756, %v2902
        %v2980 = vadd.f32 %v2757, %v2904
        %v2981 = vadd.f32 %v2758, %v2907
        %v2982 = vadd.f32 %v2759, %v2909
        %v2983 = vadd.f32 %v2760, %v2912
        %v2984 = vadd.f32 %v2761, %v2914
        %v2985 = vadd.f32 %v2762, %v2917
        %v2986 = vadd.f32 %v2763, %v2919
        %v2987 = vadd.f32 %v2764, %v2922
        %v2988 = vadd.f32 %v2765, %v2924
        %v2989 = vadd.f32 %v2766, %v2927
        %v2990 = vadd.f32 %v2767, %v2929
        %v2991 = vadd.f32 %v2768, %v2932
        %v2992 = vadd.f32 %v2769, %v2934
        %v2993 = vadd.f32 %v2770, %v2937
        %v2994 = vadd.f32 %v2771, %v2939
        %v2995 = vadd.f32 %v2772, %v2942
        %v2996 = vadd.f32 %v2773, %v2944
        %v2997 = vadd.f32 %v2774, %v2947
        %v2998 = vadd.f32 %v2775, %v2949
        %s2999 = scalar_lea.vmem %s1, 16
        %v3000 = vld [vmem:[%s2999] sm:$0x3]
        %v3001 = vrot.slane %v2584, 1
        %v3002 = vsel %vm1262, %v1308, %v3001
        %v3003 = vrot.slane %v2585, 1
        %v3004 = vsel %vm1262, %v3001, %v3003
        %v3005 = vrot.slane %v2586, 1
        %v3006 = vsel %vm1262, %v3003, %v3005
        %v3007 = vrot.slane %v2780, 1
        %v3008 = vsel %vm1262, %v3005, %v3007
        %v3010 = vsel %vm871, %v3002, 0
        %v3013 = vsel %vm871, %v3004, 0
        %v3016 = vsel %vm871, %v3006, 0
        %v3019 = vsel %vm871, %v3008, 0
        %v3022 = vand.u32 %v3000, %v947
        %3024 = vmatpush.bf16.msra.mxu0 0
        %3025 = vmatpush.bf16.msra.mxu0 0
        %3026 = vmatpush.bf16.msra.mxu0 0
        %3027 = vmatpush.bf16.msra.mxu0 0
        %3028 = vmatpush.bf16.msra.mxu0 0
        %3029 = vmatpush.bf16.msra.mxu0 0
        %3030 = vmatpush.bf16.msra.mxu0 0
        %3031 = vmatpush.bf16.msra.mxu0 %v3022
        %3032 = vmatmul.bf16.gmra.mxu0 %v1322
        %v3033 = vpop.f32.mrf.mxu0
        %v3034 = vadd.f32 0.0, %v3033
        %v3035 = vpop.f32.mrf.mxu0
        %v3036 = vadd.f32 0.0, %v3035
        %3037 = vmatmul.bf16.gmra.mxu0 %v1325
        %v3038 = vpop.f32.mrf.mxu0
        %v3039 = vadd.f32 0.0, %v3038
        %v3040 = vpop.f32.mrf.mxu0
        %v3041 = vadd.f32 0.0, %v3040
        %3042 = vmatmul.bf16.gmra.mxu0 %v1328
        %v3043 = vpop.f32.mrf.mxu0
        %v3044 = vadd.f32 0.0, %v3043
        %v3045 = vpop.f32.mrf.mxu0
        %v3046 = vadd.f32 0.0, %v3045
        %3047 = vmatmul.bf16.gmra.mxu0 %v1331
        %v3048 = vpop.f32.mrf.mxu0
        %v3049 = vadd.f32 0.0, %v3048
        %v3050 = vpop.f32.mrf.mxu0
        %v3051 = vadd.f32 0.0, %v3050
        %3052 = vmatmul.bf16.gmra.mxu0 %v1334
        %v3053 = vpop.f32.mrf.mxu0
        %v3054 = vadd.f32 0.0, %v3053
        %v3055 = vpop.f32.mrf.mxu0
        %v3056 = vadd.f32 0.0, %v3055
        %3057 = vmatmul.bf16.gmra.mxu0 %v1337
        %v3058 = vpop.f32.mrf.mxu0
        %v3059 = vadd.f32 0.0, %v3058
        %v3060 = vpop.f32.mrf.mxu0
        %v3061 = vadd.f32 0.0, %v3060
        %3062 = vmatmul.bf16.gmra.mxu0 %v1340
        %v3063 = vpop.f32.mrf.mxu0
        %v3064 = vadd.f32 0.0, %v3063
        %v3065 = vpop.f32.mrf.mxu0
        %v3066 = vadd.f32 0.0, %v3065
        %3067 = vmatmul.bf16.gmra.mxu0 %v1343
        %v3068 = vpop.f32.mrf.mxu0
        %v3069 = vadd.f32 0.0, %v3068
        %v3070 = vpop.f32.mrf.mxu0
        %v3071 = vadd.f32 0.0, %v3070
        %3072 = vmatmul.bf16.gmra.mxu0 %v1346
        %v3073 = vpop.f32.mrf.mxu0
        %v3074 = vadd.f32 0.0, %v3073
        %v3075 = vpop.f32.mrf.mxu0
        %v3076 = vadd.f32 0.0, %v3075
        %3077 = vmatmul.bf16.gmra.mxu0 %v1349
        %v3078 = vpop.f32.mrf.mxu0
        %v3079 = vadd.f32 0.0, %v3078
        %v3080 = vpop.f32.mrf.mxu0
        %v3081 = vadd.f32 0.0, %v3080
        %3082 = vmatmul.bf16.gmra.mxu0 %v1352
        %v3083 = vpop.f32.mrf.mxu0
        %v3084 = vadd.f32 0.0, %v3083
        %v3085 = vpop.f32.mrf.mxu0
        %v3086 = vadd.f32 0.0, %v3085
        %3087 = vmatmul.bf16.gmra.mxu0 %v1355
        %v3088 = vpop.f32.mrf.mxu0
        %v3089 = vadd.f32 0.0, %v3088
        %v3090 = vpop.f32.mrf.mxu0
        %v3091 = vadd.f32 0.0, %v3090
        %3092 = vmatmul.bf16.gmra.mxu0 %v1358
        %v3093 = vpop.f32.mrf.mxu0
        %v3094 = vadd.f32 0.0, %v3093
        %v3095 = vpop.f32.mrf.mxu0
        %v3096 = vadd.f32 0.0, %v3095
        %3097 = vmatmul.bf16.gmra.mxu0 %v1361
        %v3098 = vpop.f32.mrf.mxu0
        %v3099 = vadd.f32 0.0, %v3098
        %v3100 = vpop.f32.mrf.mxu0
        %v3101 = vadd.f32 0.0, %v3100
        %3102 = vmatmul.bf16.gmra.mxu0 %v1364
        %v3103 = vpop.f32.mrf.mxu0
        %v3104 = vadd.f32 0.0, %v3103
        %v3105 = vpop.f32.mrf.mxu0
        %v3106 = vadd.f32 0.0, %v3105
        %3107 = vmatmul.bf16.gmra.mxu0 %v1367
        %v3108 = vpop.f32.mrf.mxu0
        %v3109 = vadd.f32 0.0, %v3108
        %v3110 = vpop.f32.mrf.mxu0
        %v3111 = vadd.f32 0.0, %v3110
        %3112 = vmatmul.bf16.gmra.mxu0 %v1370
        %v3113 = vpop.f32.mrf.mxu0
        %v3114 = vadd.f32 0.0, %v3113
        %v3115 = vpop.f32.mrf.mxu0
        %v3116 = vadd.f32 0.0, %v3115
        %3117 = vmatmul.bf16.gmra.mxu0 %v1373
        %v3118 = vpop.f32.mrf.mxu0
        %v3119 = vadd.f32 0.0, %v3118
        %v3120 = vpop.f32.mrf.mxu0
        %v3121 = vadd.f32 0.0, %v3120
        %3122 = vmatmul.bf16.gmra.mxu0 %v1376
        %v3123 = vpop.f32.mrf.mxu0
        %v3124 = vadd.f32 0.0, %v3123
        %v3125 = vpop.f32.mrf.mxu0
        %v3126 = vadd.f32 0.0, %v3125
        %3127 = vmatmul.bf16.gmra.mxu0 %v1379
        %v3128 = vpop.f32.mrf.mxu0
        %v3129 = vadd.f32 0.0, %v3128
        %v3130 = vpop.f32.mrf.mxu0
        %v3131 = vadd.f32 0.0, %v3130
        %3132 = vmatmul.bf16.gmra.mxu0 %v3010
        %v3133 = vpop.f32.mrf.mxu0
        %v3134 = vadd.f32 0.0, %v3133
        %v3135 = vpop.f32.mrf.mxu0
        %v3136 = vadd.f32 0.0, %v3135
        %3137 = vmatmul.bf16.gmra.mxu0 %v3013
        %v3138 = vpop.f32.mrf.mxu0
        %v3139 = vadd.f32 0.0, %v3138
        %v3140 = vpop.f32.mrf.mxu0
        %v3141 = vadd.f32 0.0, %v3140
        %3142 = vmatmul.bf16.gmra.mxu0 %v3016
        %v3143 = vpop.f32.mrf.mxu0
        %v3144 = vadd.f32 0.0, %v3143
        %v3145 = vpop.f32.mrf.mxu0
        %v3146 = vadd.f32 0.0, %v3145
        %3147 = vmatmul.bf16.gmra.mxu0 %v3019
        %v3148 = vpop.f32.mrf.mxu0
        %v3149 = vadd.f32 0.0, %v3148
        %v3150 = vpop.f32.mrf.mxu0
        %v3151 = vadd.f32 0.0, %v3150
        %3152 = vdwg.mxu0
        %v3153 = vadd.f32 %v2951, %v3034
        %v3154 = vadd.f32 %v2952, %v3036
        %v3155 = vadd.f32 %v2953, %v3039
        %v3156 = vadd.f32 %v2954, %v3041
        %v3157 = vadd.f32 %v2955, %v3044
        %v3158 = vadd.f32 %v2956, %v3046
        %v3159 = vadd.f32 %v2957, %v3049
        %v3160 = vadd.f32 %v2958, %v3051
        %v3161 = vadd.f32 %v2959, %v3054
        %v3162 = vadd.f32 %v2960, %v3056
        %v3163 = vadd.f32 %v2961, %v3059
        %v3164 = vadd.f32 %v2962, %v3061
        %v3165 = vadd.f32 %v2963, %v3064
        %v3166 = vadd.f32 %v2964, %v3066
        %v3167 = vadd.f32 %v2965, %v3069
        %v3168 = vadd.f32 %v2966, %v3071
        %v3169 = vadd.f32 %v2967, %v3074
        %v3170 = vadd.f32 %v2968, %v3076
        %v3171 = vadd.f32 %v2969, %v3079
        %v3172 = vadd.f32 %v2970, %v3081
        %v3173 = vadd.f32 %v2971, %v3084
        %v3174 = vadd.f32 %v2972, %v3086
        %v3175 = vadd.f32 %v2973, %v3089
        %v3176 = vadd.f32 %v2974, %v3091
        %v3177 = vadd.f32 %v2975, %v3094
        %v3178 = vadd.f32 %v2976, %v3096
        %v3179 = vadd.f32 %v2977, %v3099
        %v3180 = vadd.f32 %v2978, %v3101
        %v3181 = vadd.f32 %v2979, %v3104
        %v3182 = vadd.f32 %v2980, %v3106
        %v3183 = vadd.f32 %v2981, %v3109
        %v3184 = vadd.f32 %v2982, %v3111
        %v3185 = vadd.f32 %v2983, %v3114
        %v3186 = vadd.f32 %v2984, %v3116
        %v3187 = vadd.f32 %v2985, %v3119
        %v3188 = vadd.f32 %v2986, %v3121
        %v3189 = vadd.f32 %v2987, %v3124
        %v3190 = vadd.f32 %v2988, %v3126
        %v3191 = vadd.f32 %v2989, %v3129
        %v3192 = vadd.f32 %v2990, %v3131
        %v3193 = vadd.f32 %v2991, %v3134
        %v3194 = vadd.f32 %v2992, %v3136
        %v3195 = vadd.f32 %v2993, %v3139
        %v3196 = vadd.f32 %v2994, %v3141
        %v3197 = vadd.f32 %v2995, %v3144
        %v3198 = vadd.f32 %v2996, %v3146
        %v3199 = vadd.f32 %v2997, %v3149
        %v3200 = vadd.f32 %v2998, %v3151
        %v3201 = vld [vmem:[%s2] sm:$0x1]
        %v3203 = vperm.slane %v3201, 0
        %v3205 = vmul.f32 %v3153, %v3203
        %v3206 = vmul.f32 %v3154, %v3203
        %v3207 = vmul.f32 %v3155, %v3203
        %v3208 = vmul.f32 %v3156, %v3203
        %v3209 = vmul.f32 %v3157, %v3203
        %v3210 = vmul.f32 %v3158, %v3203
        %v3211 = vmul.f32 %v3159, %v3203
        %v3212 = vmul.f32 %v3160, %v3203
        %v3213 = vmul.f32 %v3161, %v3203
        %v3214 = vmul.f32 %v3162, %v3203
        %v3215 = vmul.f32 %v3163, %v3203
        %v3216 = vmul.f32 %v3164, %v3203
        %v3217 = vmul.f32 %v3165, %v3203
        %v3218 = vmul.f32 %v3166, %v3203
        %v3219 = vmul.f32 %v3167, %v3203
        %v3220 = vmul.f32 %v3168, %v3203
        %v3221 = vmul.f32 %v3169, %v3203
        %v3222 = vmul.f32 %v3170, %v3203
        %v3223 = vmul.f32 %v3171, %v3203
        %v3224 = vmul.f32 %v3172, %v3203
        %v3225 = vmul.f32 %v3173, %v3203
        %v3226 = vmul.f32 %v3174, %v3203
        %v3227 = vmul.f32 %v3175, %v3203
        %v3228 = vmul.f32 %v3176, %v3203
        %v3229 = vmul.f32 %v3177, %v3203
        %v3230 = vmul.f32 %v3178, %v3203
        %v3231 = vmul.f32 %v3179, %v3203
        %v3232 = vmul.f32 %v3180, %v3203
        %v3233 = vmul.f32 %v3181, %v3203
        %v3234 = vmul.f32 %v3182, %v3203
        %v3235 = vmul.f32 %v3183, %v3203
        %v3236 = vmul.f32 %v3184, %v3203
        %v3237 = vmul.f32 %v3185, %v3203
        %v3238 = vmul.f32 %v3186, %v3203
        %v3239 = vmul.f32 %v3187, %v3203
        %v3240 = vmul.f32 %v3188, %v3203
        %v3241 = vmul.f32 %v3189, %v3203
        %v3242 = vmul.f32 %v3190, %v3203
        %v3243 = vmul.f32 %v3191, %v3203
        %v3244 = vmul.f32 %v3192, %v3203
        %v3245 = vmul.f32 %v3193, %v3203
        %v3246 = vmul.f32 %v3194, %v3203
        %v3247 = vmul.f32 %v3195, %v3203
        %v3248 = vmul.f32 %v3196, %v3203
        %v3249 = vmul.f32 %v3197, %v3203
        %v3250 = vmul.f32 %v3198, %v3203
        %v3251 = vmul.f32 %v3199, %v3203
        %v3252 = vmul.f32 %v3200, %v3203
        %v3253 = vld [vmem:[%s3] sm:$0x1]
        %v3255 = vperm.slane %v3253, 0
        %v3257 = vadd.f32 %v3205, %v3255
        %v3258 = vadd.f32 %v3206, %v3255
        %v3259 = vadd.f32 %v3207, %v3255
        %v3260 = vadd.f32 %v3208, %v3255
        %v3261 = vadd.f32 %v3209, %v3255
        %v3262 = vadd.f32 %v3210, %v3255
        %v3263 = vadd.f32 %v3211, %v3255
        %v3264 = vadd.f32 %v3212, %v3255
        %v3265 = vadd.f32 %v3213, %v3255
        %v3266 = vadd.f32 %v3214, %v3255
        %v3267 = vadd.f32 %v3215, %v3255
        %v3268 = vadd.f32 %v3216, %v3255
        %v3269 = vadd.f32 %v3217, %v3255
        %v3270 = vadd.f32 %v3218, %v3255
        %v3271 = vadd.f32 %v3219, %v3255
        %v3272 = vadd.f32 %v3220, %v3255
        %v3273 = vadd.f32 %v3221, %v3255
        %v3274 = vadd.f32 %v3222, %v3255
        %v3275 = vadd.f32 %v3223, %v3255
        %v3276 = vadd.f32 %v3224, %v3255
        %v3277 = vadd.f32 %v3225, %v3255
        %v3278 = vadd.f32 %v3226, %v3255
        %v3279 = vadd.f32 %v3227, %v3255
        %v3280 = vadd.f32 %v3228, %v3255
        %v3281 = vadd.f32 %v3229, %v3255
        %v3282 = vadd.f32 %v3230, %v3255
        %v3283 = vadd.f32 %v3231, %v3255
        %v3284 = vadd.f32 %v3232, %v3255
        %v3285 = vadd.f32 %v3233, %v3255
        %v3286 = vadd.f32 %v3234, %v3255
        %v3287 = vadd.f32 %v3235, %v3255
        %v3288 = vadd.f32 %v3236, %v3255
        %v3289 = vadd.f32 %v3237, %v3255
        %v3290 = vadd.f32 %v3238, %v3255
        %v3291 = vadd.f32 %v3239, %v3255
        %v3292 = vadd.f32 %v3240, %v3255
        %v3293 = vadd.f32 %v3241, %v3255
        %v3294 = vadd.f32 %v3242, %v3255
        %v3295 = vadd.f32 %v3243, %v3255
        %v3296 = vadd.f32 %v3244, %v3255
        %v3297 = vadd.f32 %v3245, %v3255
        %v3298 = vadd.f32 %v3246, %v3255
        %v3299 = vadd.f32 %v3247, %v3255
        %v3300 = vadd.f32 %v3248, %v3255
        %v3301 = vadd.f32 %v3249, %v3255
        %v3302 = vadd.f32 %v3250, %v3255
        %v3303 = vadd.f32 %v3251, %v3255
        %v3304 = vadd.f32 %v3252, %v3255
        %v3305 = vmax.f32 %v3257, 0.0
        %v3306 = vmax.f32 %v3258, 0.0
        %v3307 = vmax.f32 %v3259, 0.0
        %v3308 = vmax.f32 %v3260, 0.0
        %v3309 = vmax.f32 %v3261, 0.0
        %v3310 = vmax.f32 %v3262, 0.0
        %v3311 = vmax.f32 %v3263, 0.0
        %v3312 = vmax.f32 %v3264, 0.0
        %v3313 = vmax.f32 %v3265, 0.0
        %v3314 = vmax.f32 %v3266, 0.0
        %v3315 = vmax.f32 %v3267, 0.0
        %v3316 = vmax.f32 %v3268, 0.0
        %v3317 = vmax.f32 %v3269, 0.0
        %v3318 = vmax.f32 %v3270, 0.0
        %v3319 = vmax.f32 %v3271, 0.0
        %v3320 = vmax.f32 %v3272, 0.0
        %v3321 = vmax.f32 %v3273, 0.0
        %v3322 = vmax.f32 %v3274, 0.0
        %v3323 = vmax.f32 %v3275, 0.0
        %v3324 = vmax.f32 %v3276, 0.0
        %v3325 = vmax.f32 %v3277, 0.0
        %v3326 = vmax.f32 %v3278, 0.0
        %v3327 = vmax.f32 %v3279, 0.0
        %v3328 = vmax.f32 %v3280, 0.0
        %v3329 = vmax.f32 %v3281, 0.0
        %v3330 = vmax.f32 %v3282, 0.0
        %v3331 = vmax.f32 %v3283, 0.0
        %v3332 = vmax.f32 %v3284, 0.0
        %v3333 = vmax.f32 %v3285, 0.0
        %v3334 = vmax.f32 %v3286, 0.0
        %v3335 = vmax.f32 %v3287, 0.0
        %v3336 = vmax.f32 %v3288, 0.0
        %v3337 = vmax.f32 %v3289, 0.0
        %v3338 = vmax.f32 %v3290, 0.0
        %v3339 = vmax.f32 %v3291, 0.0
        %v3340 = vmax.f32 %v3292, 0.0
        %v3341 = vmax.f32 %v3293, 0.0
        %v3342 = vmax.f32 %v3294, 0.0
        %v3343 = vmax.f32 %v3295, 0.0
        %v3344 = vmax.f32 %v3296, 0.0
        %v3345 = vmax.f32 %v3297, 0.0
        %v3346 = vmax.f32 %v3298, 0.0
        %v3347 = vmax.f32 %v3299, 0.0
        %v3348 = vmax.f32 %v3300, 0.0
        %v3349 = vmax.f32 %v3301, 0.0
        %v3350 = vmax.f32 %v3302, 0.0
        %v3351 = vmax.f32 %v3303, 0.0
        %v3352 = vmax.f32 %v3304, 0.0
        %v3353 = vmax.f32 %v3305, %v3308
        %v3354 = vmax.f32 %v3306, %v3309
        %v3355 = vmax.f32 %v3307, %v3310
        %v3356 = vmax.f32 %v3308, %v3311
        %v3357 = vmax.f32 %v3309, %v3312
        %v3358 = vmax.f32 %v3310, %v3313
        %v3359 = vmax.f32 %v3311, %v3314
        %v3360 = vmax.f32 %v3312, %v3315
        %v3361 = vmax.f32 %v3313, %v3316
        %v3362 = vmax.f32 %v3314, %v3317
        %v3363 = vmax.f32 %v3315, %v3318
        %v3364 = vmax.f32 %v3316, %v3319
        %v3365 = vmax.f32 %v3317, %v3320
        %v3366 = vmax.f32 %v3318, %v3321
        %v3367 = vmax.f32 %v3319, %v3322
        %v3368 = vmax.f32 %v3320, %v3323
        %v3369 = vmax.f32 %v3321, %v3324
        %v3370 = vmax.f32 %v3322, %v3325
        %v3371 = vmax.f32 %v3323, %v3326
        %v3372 = vmax.f32 %v3324, %v3327
        %v3373 = vmax.f32 %v3325, %v3328
        %v3374 = vmax.f32 %v3326, %v3329
        %v3375 = vmax.f32 %v3327, %v3330
        %v3376 = vmax.f32 %v3328, %v3331
        %v3377 = vmax.f32 %v3329, %v3332
        %v3378 = vmax.f32 %v3330, %v3333
        %v3379 = vmax.f32 %v3331, %v3334
        %v3380 = vmax.f32 %v3332, %v3335
        %v3381 = vmax.f32 %v3333, %v3336
        %v3382 = vmax.f32 %v3334, %v3337
        %v3383 = vmax.f32 %v3335, %v3338
        %v3384 = vmax.f32 %v3336, %v3339
        %v3385 = vmax.f32 %v3337, %v3340
        %v3386 = vmax.f32 %v3338, %v3341
        %v3387 = vmax.f32 %v3339, %v3342
        %v3388 = vmax.f32 %v3340, %v3343
        %v3389 = vmax.f32 %v3341, %v3344
        %v3390 = vmax.f32 %v3342, %v3345
        %v3391 = vmax.f32 %v3343, %v3346
        %v3392 = vmax.f32 %v3344, %v3347
        %v3393 = vmax.f32 %v3345, %v3348
        %v3394 = vmax.f32 %v3346, %v3349
        %v3395 = vmax.f32 %v3347, %v3350
        %v3396 = vmax.f32 %v3348, %v3351
        %v3397 = vmax.f32 %v3349, %v3352
        %vm3443 = vcmask 1046528
        %v3444 = vrot.slane %v3353, 1
        %v3445 = vrot.slane %v3354, 1
        %v3446 = vsel %vm3443, %v3444, %v3445
        %v3447 = vrot.slane %v3355, 1
        %v3448 = vsel %vm3443, %v3445, %v3447
        %v3449 = vrot.slane %v3356, 1
        %v3450 = vsel %vm3443, %v3447, %v3449
        %v3451 = vrot.slane %v3357, 1
        %v3452 = vsel %vm3443, %v3449, %v3451
        %v3453 = vrot.slane %v3358, 1
        %v3454 = vsel %vm3443, %v3451, %v3453
        %v3455 = vrot.slane %v3359, 1
        %v3456 = vsel %vm3443, %v3453, %v3455
        %v3457 = vrot.slane %v3360, 1
        %v3458 = vsel %vm3443, %v3455, %v3457
        %v3459 = vrot.slane %v3361, 1
        %v3460 = vsel %vm3443, %v3457, %v3459
        %v3461 = vrot.slane %v3362, 1
        %v3462 = vsel %vm3443, %v3459, %v3461
        %v3463 = vrot.slane %v3363, 1
        %v3464 = vsel %vm3443, %v3461, %v3463
        %v3465 = vrot.slane %v3364, 1
        %v3466 = vsel %vm3443, %v3463, %v3465
        %v3467 = vrot.slane %v3365, 1
        %v3468 = vsel %vm3443, %v3465, %v3467
        %v3469 = vrot.slane %v3366, 1
        %v3470 = vsel %vm3443, %v3467, %v3469
        %v3471 = vrot.slane %v3367, 1
        %v3472 = vsel %vm3443, %v3469, %v3471
        %v3473 = vrot.slane %v3368, 1
        %v3474 = vsel %vm3443, %v3471, %v3473
        %v3475 = vrot.slane %v3369, 1
        %v3476 = vsel %vm3443, %v3473, %v3475
        %v3477 = vrot.slane %v3370, 1
        %v3478 = vsel %vm3443, %v3475, %v3477
        %v3479 = vrot.slane %v3371, 1
        %v3480 = vsel %vm3443, %v3477, %v3479
        %v3481 = vrot.slane %v3372, 1
        %v3482 = vsel %vm3443, %v3479, %v3481
        %v3483 = vrot.slane %v3373, 1
        %v3484 = vsel %vm3443, %v3481, %v3483
        %v3485 = vrot.slane %v3374, 1
        %v3486 = vsel %vm3443, %v3483, %v3485
        %v3487 = vrot.slane %v3375, 1
        %v3488 = vsel %vm3443, %v3485, %v3487
        %v3489 = vrot.slane %v3376, 1
        %v3490 = vsel %vm3443, %v3487, %v3489
        %v3491 = vrot.slane %v3377, 1
        %v3492 = vsel %vm3443, %v3489, %v3491
        %v3493 = vrot.slane %v3378, 1
        %v3494 = vsel %vm3443, %v3491, %v3493
        %v3495 = vrot.slane %v3379, 1
        %v3496 = vsel %vm3443, %v3493, %v3495
        %v3497 = vrot.slane %v3380, 1
        %v3498 = vsel %vm3443, %v3495, %v3497
        %v3499 = vrot.slane %v3381, 1
        %v3500 = vsel %vm3443, %v3497, %v3499
        %v3501 = vrot.slane %v3382, 1
        %v3502 = vsel %vm3443, %v3499, %v3501
        %v3503 = vrot.slane %v3383, 1
        %v3504 = vsel %vm3443, %v3501, %v3503
        %v3505 = vrot.slane %v3384, 1
        %v3506 = vsel %vm3443, %v3503, %v3505
        %v3507 = vrot.slane %v3385, 1
        %v3508 = vsel %vm3443, %v3505, %v3507
        %v3509 = vrot.slane %v3386, 1
        %v3510 = vsel %vm3443, %v3507, %v3509
        %v3511 = vrot.slane %v3387, 1
        %v3512 = vsel %vm3443, %v3509, %v3511
        %v3513 = vrot.slane %v3388, 1
        %v3514 = vsel %vm3443, %v3511, %v3513
        %v3515 = vrot.slane %v3389, 1
        %v3516 = vsel %vm3443, %v3513, %v3515
        %v3517 = vrot.slane %v3390, 1
        %v3518 = vsel %vm3443, %v3515, %v3517
        %v3519 = vrot.slane %v3391, 1
        %v3520 = vsel %vm3443, %v3517, %v3519
        %v3521 = vrot.slane %v3392, 1
        %v3522 = vsel %vm3443, %v3519, %v3521
        %v3523 = vrot.slane %v3393, 1
        %v3524 = vsel %vm3443, %v3521, %v3523
        %v3525 = vrot.slane %v3394, 1
        %v3526 = vsel %vm3443, %v3523, %v3525
        %v3527 = vrot.slane %v3395, 1
        %v3528 = vsel %vm3443, %v3525, %v3527
        %v3529 = vrot.slane %v3396, 1
        %v3530 = vsel %vm3443, %v3527, %v3529
        %v3531 = vrot.slane %v3397, 1
        %v3532 = vsel %vm3443, %v3529, %v3531
        %v3578 = vmax.f32 %v3353, %v3446
        %v3579 = vmax.f32 %v3354, %v3448
        %v3580 = vmax.f32 %v3355, %v3450
        %v3581 = vmax.f32 %v3356, %v3452
        %v3582 = vmax.f32 %v3357, %v3454
        %v3583 = vmax.f32 %v3358, %v3456
        %v3584 = vmax.f32 %v3359, %v3458
        %v3585 = vmax.f32 %v3360, %v3460
        %v3586 = vmax.f32 %v3361, %v3462
        %v3587 = vmax.f32 %v3362, %v3464
        %v3588 = vmax.f32 %v3363, %v3466
        %v3589 = vmax.f32 %v3364, %v3468
        %v3590 = vmax.f32 %v3365, %v3470
        %v3591 = vmax.f32 %v3366, %v3472
        %v3592 = vmax.f32 %v3367, %v3474
        %v3593 = vmax.f32 %v3368, %v3476
        %v3594 = vmax.f32 %v3369, %v3478
        %v3595 = vmax.f32 %v3370, %v3480
        %v3596 = vmax.f32 %v3371, %v3482
        %v3597 = vmax.f32 %v3372, %v3484
        %v3598 = vmax.f32 %v3373, %v3486
        %v3599 = vmax.f32 %v3374, %v3488
        %v3600 = vmax.f32 %v3375, %v3490
        %v3601 = vmax.f32 %v3376, %v3492
        %v3602 = vmax.f32 %v3377, %v3494
        %v3603 = vmax.f32 %v3378, %v3496
        %v3604 = vmax.f32 %v3379, %v3498
        %v3605 = vmax.f32 %v3380, %v3500
        %v3606 = vmax.f32 %v3381, %v3502
        %v3607 = vmax.f32 %v3382, %v3504
        %v3608 = vmax.f32 %v3383, %v3506
        %v3609 = vmax.f32 %v3384, %v3508
        %v3610 = vmax.f32 %v3385, %v3510
        %v3611 = vmax.f32 %v3386, %v3512
        %v3612 = vmax.f32 %v3387, %v3514
        %v3613 = vmax.f32 %v3388, %v3516
        %v3614 = vmax.f32 %v3389, %v3518
        %v3615 = vmax.f32 %v3390, %v3520
        %v3616 = vmax.f32 %v3391, %v3522
        %v3617 = vmax.f32 %v3392, %v3524
        %v3618 = vmax.f32 %v3393, %v3526
        %v3619 = vmax.f32 %v3394, %v3528
        %v3620 = vmax.f32 %v3395, %v3530
        %v3621 = vmax.f32 %v3396, %v3532
        %v3622 = vmax.f32 %v3397, %v3531
        %v3623 = vld [vmem:[%s4] sm:$0xff]
        %v3624 = vld [vmem:[%s4 + $0x8] sm:$0xf]
        %v3625 = vld [vmem:[%s4 + $0xc] sm:$0xff]
        %v3626 = vld [vmem:[%s4 + $0x14] sm:$0xf]
        %v3627 = vld [vmem:[%s4 + $0x18] sm:$0xff]
        %v3628 = vld [vmem:[%s4 + $0x20] sm:$0xf]
        %v3629 = vld [vmem:[%s4 + $0x24] sm:$0xff]
        %v3630 = vld [vmem:[%s4 + $0x2c] sm:$0xf]
        %v3631 = vld [vmem:[%s4 + $0x30] sm:$0xff]
        %v3632 = vld [vmem:[%s4 + $0x38] sm:$0xf]
        %v3633 = vld [vmem:[%s4 + $0x3c] sm:$0xff]
        %v3634 = vld [vmem:[%s4 + $0x44] sm:$0xf]
        %v3635 = vld [vmem:[%s4 + $0x48] sm:$0xff]
        %v3636 = vld [vmem:[%s4 + $0x50] sm:$0xf]
        %v3637 = vld [vmem:[%s4 + $0x54] sm:$0xff]
        %v3638 = vld [vmem:[%s4 + $0x5c] sm:$0xf]
        %v3639 = vld [vmem:[%s4 + $0x60] sm:$0xff]
        %v3640 = vld [vmem:[%s4 + $0x68] sm:$0xf]
        %v3641 = vld [vmem:[%s4 + $0x6c] sm:$0xff]
        %v3642 = vld [vmem:[%s4 + $0x74] sm:$0xf]
        %v3643 = vld [vmem:[%s4 + $0x78] sm:$0xff]
        %v3644 = vld [vmem:[%s4 + $0x80] sm:$0xf]
        %v3645 = vld [vmem:[%s4 + $0x84] sm:$0xff]
        %v3646 = vld [vmem:[%s4 + $0x8c] sm:$0xf]
        %v3647 = vld [vmem:[%s4 + $0x90] sm:$0xff]
        %v3648 = vld [vmem:[%s4 + $0x98] sm:$0xf]
        %v3649 = vld [vmem:[%s4 + $0x9c] sm:$0xff]
        %v3650 = vld [vmem:[%s4 + $0xa4] sm:$0xf]
        %v3651 = vld [vmem:[%s4 + $0xa8] sm:$0xff]
        %v3652 = vld [vmem:[%s4 + $0xb0] sm:$0xf]
        %v3653 = vld [vmem:[%s4 + $0xb4] sm:$0xff]
        %v3654 = vld [vmem:[%s4 + $0xbc] sm:$0xf]
        %v3655 = vld [vmem:[%s4 + $0xc0] sm:$0xff]
        %v3656 = vld [vmem:[%s4 + $0xc8] sm:$0xf]
        %v3657 = vld [vmem:[%s4 + $0xcc] sm:$0xff]
        %v3658 = vld [vmem:[%s4 + $0xd4] sm:$0xf]
        %v3659 = vld [vmem:[%s4 + $0xd8] sm:$0xff]
        %v3660 = vld [vmem:[%s4 + $0xe0] sm:$0xf]
        %v3661 = vld [vmem:[%s4 + $0xe4] sm:$0xff]
        %v3662 = vld [vmem:[%s4 + $0xec] sm:$0xf]
        %v3663 = vld [vmem:[%s4 + $0xf0] sm:$0xff]
        %v3664 = vld [vmem:[%s4 + $0xf8] sm:$0xf]
        %v3665 = vld [vmem:[%s4 + $0xfc] sm:$0xff]
        %v3666 = vld [vmem:[%s4 + $0x104] sm:$0xf]
        %v3667 = vpack.c.bf16 %v3579, %v3578
        %v3668 = vpack.c.bf16 %v3581, %v3580
        %v3669 = vpack.c.bf16 %v3583, %v3582
        %v3670 = vpack.c.bf16 %v3585, %v3584
        %v3671 = vpack.c.bf16 %v3587, %v3586
        %v3672 = vpack.c.bf16 %v3589, %v3588
        %v3673 = vpack.c.bf16 %v3591, %v3590
        %v3674 = vpack.c.bf16 %v3593, %v3592
        %v3675 = vpack.c.bf16 %v3595, %v3594
        %v3676 = vpack.c.bf16 %v3597, %v3596
        %v3677 = vpack.c.bf16 %v3599, %v3598
        %v3678 = vpack.c.bf16 %v3601, %v3600
        %v3679 = vpack.c.bf16 %v3603, %v3602
        %v3680 = vpack.c.bf16 %v3605, %v3604
        %v3681 = vpack.c.bf16 %v3607, %v3606
        %v3682 = vpack.c.bf16 %v3609, %v3608
        %v3683 = vpack.c.bf16 %v3611, %v3610
        %v3684 = vpack.c.bf16 %v3613, %v3612
        %v3685 = vpack.c.bf16 %v3615, %v3614
        %v3686 = vpack.c.bf16 %v3617, %v3616
        %v3687 = vpack.c.bf16 %v3619, %v3618
        %v3688 = vpack.c.bf16 %v3621, %v3620
        %v3689 = vpack.c.bf16 %v3622, %v3622
        %v3734 = vunpack.c.l.b16 %v3623
        %v3735 = vunpack.c.h.b16 %v3623
        %v3736 = vunpack.c.l.b16 %v3624
        %v3737 = vunpack.c.l.b16 %v3625
        %v3738 = vunpack.c.h.b16 %v3625
        %v3739 = vunpack.c.l.b16 %v3626
        %v3740 = vunpack.c.l.b16 %v3627
        %v3741 = vunpack.c.h.b16 %v3627
        %v3742 = vunpack.c.l.b16 %v3628
        %v3743 = vunpack.c.l.b16 %v3629
        %v3744 = vunpack.c.h.b16 %v3629
        %v3745 = vunpack.c.l.b16 %v3630
        %v3746 = vunpack.c.l.b16 %v3631
        %v3747 = vunpack.c.h.b16 %v3631
        %v3748 = vunpack.c.l.b16 %v3632
        %v3749 = vunpack.c.l.b16 %v3633
        %v3750 = vunpack.c.h.b16 %v3633
        %v3751 = vunpack.c.l.b16 %v3634
        %v3752 = vunpack.c.l.b16 %v3635
        %v3753 = vunpack.c.h.b16 %v3635
        %v3754 = vunpack.c.l.b16 %v3636
        %v3755 = vunpack.c.l.b16 %v3637
        %v3756 = vunpack.c.h.b16 %v3637
        %v3757 = vunpack.c.l.b16 %v3638
        %v3758 = vunpack.c.l.b16 %v3639
        %v3759 = vunpack.c.h.b16 %v3639
        %v3760 = vunpack.c.l.b16 %v3640
        %v3761 = vunpack.c.l.b16 %v3641
        %v3762 = vunpack.c.h.b16 %v3641
        %v3763 = vunpack.c.l.b16 %v3642
        %v3764 = vunpack.c.l.b16 %v3643
        %v3765 = vunpack.c.h.b16 %v3643
        %v3766 = vunpack.c.l.b16 %v3644
        %v3767 = vunpack.c.l.b16 %v3645
        %v3768 = vunpack.c.h.b16 %v3645
        %v3769 = vunpack.c.l.b16 %v3646
        %v3770 = vunpack.c.l.b16 %v3647
        %v3771 = vunpack.c.h.b16 %v3647
        %v3772 = vunpack.c.l.b16 %v3648
        %v3773 = vunpack.c.l.b16 %v3649
        %v3774 = vunpack.c.h.b16 %v3649
        %v3775 = vunpack.c.l.b16 %v3650
        %v3776 = vunpack.c.l.b16 %v3651
        %v3777 = vunpack.c.h.b16 %v3651
        %v3778 = vunpack.c.l.b16 %v3652
        %v3779 = vunpack.c.l.b16 %v3653
        %v3780 = vunpack.c.h.b16 %v3653
        %v3781 = vunpack.c.l.b16 %v3654
        %v3782 = vunpack.c.l.b16 %v3655
        %v3783 = vunpack.c.h.b16 %v3655
        %v3784 = vunpack.c.l.b16 %v3656
        %v3785 = vunpack.c.l.b16 %v3657
        %v3786 = vunpack.c.h.b16 %v3657
        %v3787 = vunpack.c.l.b16 %v3658
        %v3788 = vunpack.c.l.b16 %v3659
        %v3789 = vunpack.c.h.b16 %v3659
        %v3790 = vunpack.c.l.b16 %v3660
        %v3791 = vunpack.c.l.b16 %v3661
        %v3792 = vunpack.c.h.b16 %v3661
        %v3793 = vunpack.c.l.b16 %v3662
        %v3794 = vunpack.c.l.b16 %v3663
        %v3795 = vunpack.c.h.b16 %v3663
        %v3796 = vunpack.c.l.b16 %v3664
        %v3797 = vunpack.c.l.b16 %v3665
        %v3798 = vunpack.c.h.b16 %v3665
        %v3799 = vunpack.c.l.b16 %v3666
        %v3800 = vpack.c.b16 %v3737, %v3734
        %v3801 = vpack.c.b16 %v3738, %v3735
        %v3802 = vpack.c.b16 %v3739, %v3736
        %v3803 = vpack.c.b16 %v3743, %v3740
        %v3804 = vpack.c.b16 %v3744, %v3741
        %v3805 = vpack.c.b16 %v3745, %v3742
        %v3806 = vpack.c.b16 %v3749, %v3746
        %v3807 = vpack.c.b16 %v3750, %v3747
        %v3808 = vpack.c.b16 %v3751, %v3748
        %v3809 = vpack.c.b16 %v3755, %v3752
        %v3810 = vpack.c.b16 %v3756, %v3753
        %v3811 = vpack.c.b16 %v3757, %v3754
        %v3812 = vpack.c.b16 %v3761, %v3758
        %v3813 = vpack.c.b16 %v3762, %v3759
        %v3814 = vpack.c.b16 %v3763, %v3760
        %v3815 = vpack.c.b16 %v3767, %v3764
        %v3816 = vpack.c.b16 %v3768, %v3765
        %v3817 = vpack.c.b16 %v3769, %v3766
        %v3818 = vpack.c.b16 %v3773, %v3770
        %v3819 = vpack.c.b16 %v3774, %v3771
        %v3820 = vpack.c.b16 %v3775, %v3772
        %v3821 = vpack.c.b16 %v3779, %v3776
        %v3822 = vpack.c.b16 %v3780, %v3777
        %v3823 = vpack.c.b16 %v3781, %v3778
        %v3824 = vpack.c.b16 %v3785, %v3782
        %v3825 = vpack.c.b16 %v3786, %v3783
        %v3826 = vpack.c.b16 %v3787, %v3784
        %v3827 = vpack.c.b16 %v3791, %v3788
        %v3828 = vpack.c.b16 %v3792, %v3789
        %v3829 = vpack.c.b16 %v3793, %v3790
        %v3830 = vpack.c.b16 %v3797, %v3794
        %v3831 = vpack.c.b16 %v3798, %v3795
        %v3832 = vpack.c.b16 %v3799, %v3796
        %vm3855 = vcmask 842752
        %v3857 = vsel %vm3855, %v3802, 0
        %v3860 = vsel %vm3855, %v3805, 0
        %v3863 = vsel %vm3855, %v3808, 0
        %v3866 = vsel %vm3855, %v3811, 0
        %v3869 = vsel %vm3855, %v3814, 0
        %v3872 = vsel %vm3855, %v3817, 0
        %v3875 = vsel %vm3855, %v3820, 0
        %v3878 = vsel %vm3855, %v3823, 0
        %v3881 = vsel %vm3855, %v3826, 0
        %v3884 = vsel %vm3855, %v3829, 0
        %v3887 = vsel %vm3855, %v3832, 0
        %vm3889 = vcmask 1042432
        %vm3890 = vcmask 1043456
        %v3891 = vsel %vm3889, 4294967295, 65535
        %v3892 = vsel %vm3890, %v3891, 0
        %v3894 = vand.u32 %v3689, %v3892
        %3896 = vmatpush.bf16.msra.mxu0 %v3674
        %3897 = vmatpush.bf16.msra.mxu0 %v3673
        %3898 = vmatpush.bf16.msra.mxu0 %v3672
        %3899 = vmatpush.bf16.msra.mxu0 %v3671
        %3900 = vmatpush.bf16.msra.mxu0 %v3670
        %3901 = vmatpush.bf16.msra.mxu0 %v3669
        %3902 = vmatpush.bf16.msra.mxu0 %v3668
        %3903 = vmatpush.bf16.msra.mxu0 %v3667
        %3904 = vmatmul.bf16.gmra.mxu0 %v3800
        %v3905 = vpop.f32.mrf.mxu0
        %v3906 = vadd.f32 0.0, %v3905
        %v3907 = vpop.f32.mrf.mxu0
        %v3908 = vadd.f32 0.0, %v3907
        %3909 = vmatmul.bf16.gmra.mxu0 %v3803
        %v3910 = vpop.f32.mrf.mxu0
        %v3911 = vadd.f32 0.0, %v3910
        %v3912 = vpop.f32.mrf.mxu0
        %v3913 = vadd.f32 0.0, %v3912
        %3914 = vmatmul.bf16.gmra.mxu0 %v3806
        %v3915 = vpop.f32.mrf.mxu0
        %v3916 = vadd.f32 0.0, %v3915
        %v3917 = vpop.f32.mrf.mxu0
        %v3918 = vadd.f32 0.0, %v3917
        %3919 = vmatmul.bf16.gmra.mxu0 %v3809
        %v3920 = vpop.f32.mrf.mxu0
        %v3921 = vadd.f32 0.0, %v3920
        %v3922 = vpop.f32.mrf.mxu0
        %v3923 = vadd.f32 0.0, %v3922
        %3924 = vmatmul.bf16.gmra.mxu0 %v3812
        %v3925 = vpop.f32.mrf.mxu0
        %v3926 = vadd.f32 0.0, %v3925
        %v3927 = vpop.f32.mrf.mxu0
        %v3928 = vadd.f32 0.0, %v3927
        %3929 = vmatmul.bf16.gmra.mxu0 %v3815
        %v3930 = vpop.f32.mrf.mxu0
        %v3931 = vadd.f32 0.0, %v3930
        %v3932 = vpop.f32.mrf.mxu0
        %v3933 = vadd.f32 0.0, %v3932
        %3934 = vmatmul.bf16.gmra.mxu0 %v3818
        %v3935 = vpop.f32.mrf.mxu0
        %v3936 = vadd.f32 0.0, %v3935
        %v3937 = vpop.f32.mrf.mxu0
        %v3938 = vadd.f32 0.0, %v3937
        %3939 = vmatmul.bf16.gmra.mxu0 %v3821
        %v3940 = vpop.f32.mrf.mxu0
        %v3941 = vadd.f32 0.0, %v3940
        %v3942 = vpop.f32.mrf.mxu0
        %v3943 = vadd.f32 0.0, %v3942
        %3944 = vmatmul.bf16.gmra.mxu0 %v3824
        %v3945 = vpop.f32.mrf.mxu0
        %v3946 = vadd.f32 0.0, %v3945
        %v3947 = vpop.f32.mrf.mxu0
        %v3948 = vadd.f32 0.0, %v3947
        %3949 = vmatmul.bf16.gmra.mxu0 %v3827
        %v3950 = vpop.f32.mrf.mxu0
        %v3951 = vadd.f32 0.0, %v3950
        %v3952 = vpop.f32.mrf.mxu0
        %v3953 = vadd.f32 0.0, %v3952
        %3954 = vmatmul.bf16.gmra.mxu0 %v3830
        %v3955 = vpop.f32.mrf.mxu0
        %v3956 = vadd.f32 0.0, %v3955
        %v3957 = vpop.f32.mrf.mxu0
        %3958 = vdwg.mxu0
        %3959 = vmatpush.bf16.msra.mxu0 %v3682
        %3960 = vmatpush.bf16.msra.mxu0 %v3681
        %3961 = vmatpush.bf16.msra.mxu0 %v3680
        %3962 = vmatpush.bf16.msra.mxu0 %v3679
        %3963 = vmatpush.bf16.msra.mxu0 %v3678
        %3964 = vmatpush.bf16.msra.mxu0 %v3677
        %3965 = vmatpush.bf16.msra.mxu0 %v3676
        %3966 = vmatpush.bf16.msra.mxu0 %v3675
        %3967 = vmatmul.bf16.gmra.mxu0 %v3801
        %v3968 = vpop.f32.mrf.mxu0
        %v3969 = vadd.f32 %v3906, %v3968
        %v3970 = vpop.f32.mrf.mxu0
        %v3971 = vadd.f32 %v3908, %v3970
        %3972 = vmatmul.bf16.gmra.mxu0 %v3804
        %v3973 = vpop.f32.mrf.mxu0
        %v3974 = vadd.f32 %v3911, %v3973
        %v3975 = vpop.f32.mrf.mxu0
        %v3976 = vadd.f32 %v3913, %v3975
        %3977 = vmatmul.bf16.gmra.mxu0 %v3807
        %v3978 = vpop.f32.mrf.mxu0
        %v3979 = vadd.f32 %v3916, %v3978
        %v3980 = vpop.f32.mrf.mxu0
        %v3981 = vadd.f32 %v3918, %v3980
        %3982 = vmatmul.bf16.gmra.mxu0 %v3810
        %v3983 = vpop.f32.mrf.mxu0
        %v3984 = vadd.f32 %v3921, %v3983
        %v3985 = vpop.f32.mrf.mxu0
        %v3986 = vadd.f32 %v3923, %v3985
        %3987 = vmatmul.bf16.gmra.mxu0 %v3813
        %v3988 = vpop.f32.mrf.mxu0
        %v3989 = vadd.f32 %v3926, %v3988
        %v3990 = vpop.f32.mrf.mxu0
        %v3991 = vadd.f32 %v3928, %v3990
        %3992 = vmatmul.bf16.gmra.mxu0 %v3816
        %v3993 = vpop.f32.mrf.mxu0
        %v3994 = vadd.f32 %v3931, %v3993
        %v3995 = vpop.f32.mrf.mxu0
        %v3996 = vadd.f32 %v3933, %v3995
        %3997 = vmatmul.bf16.gmra.mxu0 %v3819
        %v3998 = vpop.f32.mrf.mxu0
        %v3999 = vadd.f32 %v3936, %v3998
        %v4000 = vpop.f32.mrf.mxu0
        %v4001 = vadd.f32 %v3938, %v4000
        %4002 = vmatmul.bf16.gmra.mxu0 %v3822
        %v4003 = vpop.f32.mrf.mxu0
        %v4004 = vadd.f32 %v3941, %v4003
        %v4005 = vpop.f32.mrf.mxu0
        %v4006 = vadd.f32 %v3943, %v4005
        %4007 = vmatmul.bf16.gmra.mxu0 %v3825
        %v4008 = vpop.f32.mrf.mxu0
        %v4009 = vadd.f32 %v3946, %v4008
        %v4010 = vpop.f32.mrf.mxu0
        %v4011 = vadd.f32 %v3948, %v4010
        %4012 = vmatmul.bf16.gmra.mxu0 %v3828
        %v4013 = vpop.f32.mrf.mxu0
        %v4014 = vadd.f32 %v3951, %v4013
        %v4015 = vpop.f32.mrf.mxu0
        %v4016 = vadd.f32 %v3953, %v4015
        %4017 = vmatmul.bf16.gmra.mxu0 %v3831
        %v4018 = vpop.f32.mrf.mxu0
        %v4019 = vadd.f32 %v3956, %v4018
        %v4020 = vpop.f32.mrf.mxu0
        %4021 = vdwg.mxu0
        %4022 = vmatpush.bf16.msra.mxu0 0
        %4023 = vmatpush.bf16.msra.mxu0 %v3894
        %4024 = vmatpush.bf16.msra.mxu0 %v3688
        %4025 = vmatpush.bf16.msra.mxu0 %v3687
        %4026 = vmatpush.bf16.msra.mxu0 %v3686
        %4027 = vmatpush.bf16.msra.mxu0 %v3685
        %4028 = vmatpush.bf16.msra.mxu0 %v3684
        %4029 = vmatpush.bf16.msra.mxu0 %v3683
        %4030 = vmatmul.bf16.gmra.mxu0 %v3857
        %v4031 = vpop.f32.mrf.mxu0
        %v4032 = vadd.f32 %v3969, %v4031
        %v4033 = vpop.f32.mrf.mxu0
        %v4034 = vadd.f32 %v3971, %v4033
        %4035 = vmatmul.bf16.gmra.mxu0 %v3860
        %v4036 = vpop.f32.mrf.mxu0
        %v4037 = vadd.f32 %v3974, %v4036
        %v4038 = vpop.f32.mrf.mxu0
        %v4039 = vadd.f32 %v3976, %v4038
        %4040 = vmatmul.bf16.gmra.mxu0 %v3863
        %v4041 = vpop.f32.mrf.mxu0
        %v4042 = vadd.f32 %v3979, %v4041
        %v4043 = vpop.f32.mrf.mxu0
        %v4044 = vadd.f32 %v3981, %v4043
        %4045 = vmatmul.bf16.gmra.mxu0 %v3866
        %v4046 = vpop.f32.mrf.mxu0
        %v4047 = vadd.f32 %v3984, %v4046
        %v4048 = vpop.f32.mrf.mxu0
        %v4049 = vadd.f32 %v3986, %v4048
        %4050 = vmatmul.bf16.gmra.mxu0 %v3869
        %v4051 = vpop.f32.mrf.mxu0
        %v4052 = vadd.f32 %v3989, %v4051
        %v4053 = vpop.f32.mrf.mxu0
        %v4054 = vadd.f32 %v3991, %v4053
        %4055 = vmatmul.bf16.gmra.mxu0 %v3872
        %v4056 = vpop.f32.mrf.mxu0
        %v4057 = vadd.f32 %v3994, %v4056
        %v4058 = vpop.f32.mrf.mxu0
        %v4059 = vadd.f32 %v3996, %v4058
        %4060 = vmatmul.bf16.gmra.mxu0 %v3875
        %v4061 = vpop.f32.mrf.mxu0
        %v4062 = vadd.f32 %v3999, %v4061
        %v4063 = vpop.f32.mrf.mxu0
        %v4064 = vadd.f32 %v4001, %v4063
        %4065 = vmatmul.bf16.gmra.mxu0 %v3878
        %v4066 = vpop.f32.mrf.mxu0
        %v4067 = vadd.f32 %v4004, %v4066
        %v4068 = vpop.f32.mrf.mxu0
        %v4069 = vadd.f32 %v4006, %v4068
        %4070 = vmatmul.bf16.gmra.mxu0 %v3881
        %v4071 = vpop.f32.mrf.mxu0
        %v4072 = vadd.f32 %v4009, %v4071
        %v4073 = vpop.f32.mrf.mxu0
        %v4074 = vadd.f32 %v4011, %v4073
        %4075 = vmatmul.bf16.gmra.mxu0 %v3884
        %v4076 = vpop.f32.mrf.mxu0
        %v4077 = vadd.f32 %v4014, %v4076
        %v4078 = vpop.f32.mrf.mxu0
        %v4079 = vadd.f32 %v4016, %v4078
        %4080 = vmatmul.bf16.gmra.mxu0 %v3887
        %v4081 = vpop.f32.mrf.mxu0
        %v4082 = vadd.f32 %v4019, %v4081
        %v4083 = vpop.f32.mrf.mxu0
        %4084 = vdwg.mxu0
        %v4085 = vpack.c.bf16 %v4032, %v4032
        %v4086 = vpack.c.bf16 %v4034, %v4034
        %v4087 = vpack.c.bf16 %v4037, %v4037
        %v4088 = vpack.c.bf16 %v4039, %v4039
        %v4089 = vpack.c.bf16 %v4042, %v4042
        %v4090 = vpack.c.bf16 %v4044, %v4044
        %v4091 = vpack.c.bf16 %v4047, %v4047
        %v4092 = vpack.c.bf16 %v4049, %v4049
        %v4093 = vpack.c.bf16 %v4052, %v4052
        %v4094 = vpack.c.bf16 %v4054, %v4054
        %v4095 = vpack.c.bf16 %v4057, %v4057
        %v4096 = vpack.c.bf16 %v4059, %v4059
        %v4097 = vpack.c.bf16 %v4062, %v4062
        %v4098 = vpack.c.bf16 %v4064, %v4064
        %v4099 = vpack.c.bf16 %v4067, %v4067
        %v4100 = vpack.c.bf16 %v4069, %v4069
        %v4101 = vpack.c.bf16 %v4072, %v4072
        %v4102 = vpack.c.bf16 %v4074, %v4074
        %v4103 = vpack.c.bf16 %v4077, %v4077
        %v4104 = vpack.c.bf16 %v4079, %v4079
        %v4105 = vpack.c.bf16 %v4082, %v4082
        %v4106 = vld [vmem:[%s5] sm:$0xf]
        %v4107 = vld [vmem:[%s5 + $0x4] sm:$0xf]
        %s4108 = scalar_lea.vmem %s5, 8
        %v4109 = vld [vmem:[%s4108] sm:$0xf]
        %v4110 = vld [vmem:[%s4108 + $0x4] sm:$0xf]
        %v4128 = vunpack.c.l.b16 %v4085
        %v4129 = vunpack.c.l.b16 %v4086
        %v4130 = vunpack.c.l.b16 %v4087
        %v4131 = vunpack.c.l.b16 %v4088
        %v4132 = vunpack.c.l.b16 %v4089
        %v4133 = vunpack.c.l.b16 %v4090
        %v4134 = vunpack.c.l.b16 %v4091
        %v4135 = vunpack.c.l.b16 %v4092
        %v4136 = vunpack.c.l.b16 %v4093
        %v4137 = vunpack.c.l.b16 %v4094
        %v4138 = vunpack.c.l.b16 %v4095
        %v4139 = vunpack.c.l.b16 %v4096
        %v4140 = vunpack.c.l.b16 %v4097
        %v4141 = vunpack.c.l.b16 %v4098
        %v4142 = vunpack.c.l.b16 %v4099
        %v4143 = vunpack.c.l.b16 %v4100
        %v4144 = vunpack.c.l.b16 %v4101
        %v4145 = vpack.c.b16 %v4129, %v4128
        %v4146 = vpack.c.b16 %v4131, %v4130
        %v4147 = vpack.c.b16 %v4133, %v4132
        %v4148 = vpack.c.b16 %v4135, %v4134
        %v4149 = vpack.c.b16 %v4137, %v4136
        %v4150 = vpack.c.b16 %v4139, %v4138
        %v4151 = vpack.c.b16 %v4141, %v4140
        %v4152 = vpack.c.b16 %v4143, %v4142
        %v4153 = vpack.c.b16 %v4144, %v4144
        %v4155 = vshrl.u32 %v4145, 16
        %v4157 = vshll.u32 %v4145, 16
        %v4159 = vrot.slane %v4157, 1
        %v4160 = vor.u32 %v4155, %v4159
        %v4162 = vshll.u32 %v4146, 16
        %v4164 = vrot.slane %v4162, 1
        %v4165 = vsel %vm674, %v4160, %v4164
        %v4166 = vshrl.u32 %v4146, 16
        %v4168 = vor.u32 %v4166, %v4164
        %v4170 = vshll.u32 %v4147, 16
        %v4172 = vrot.slane %v4170, 1
        %v4173 = vsel %vm674, %v4168, %v4172
        %v4174 = vshrl.u32 %v4147, 16
        %v4176 = vor.u32 %v4174, %v4172
        %v4178 = vshll.u32 %v4148, 16
        %v4180 = vrot.slane %v4178, 1
        %v4181 = vsel %vm674, %v4176, %v4180
        %v4182 = vshrl.u32 %v4148, 16
        %v4184 = vor.u32 %v4182, %v4180
        %v4186 = vshll.u32 %v4149, 16
        %v4188 = vrot.slane %v4186, 1
        %v4189 = vsel %vm674, %v4184, %v4188
        %v4190 = vshrl.u32 %v4149, 16
        %v4192 = vor.u32 %v4190, %v4188
        %v4194 = vshll.u32 %v4150, 16
        %v4196 = vrot.slane %v4194, 1
        %v4197 = vsel %vm674, %v4192, %v4196
        %v4198 = vshrl.u32 %v4150, 16
        %v4200 = vor.u32 %v4198, %v4196
        %v4202 = vshll.u32 %v4151, 16
        %v4204 = vrot.slane %v4202, 1
        %v4205 = vsel %vm674, %v4200, %v4204
        %v4206 = vshrl.u32 %v4151, 16
        %v4208 = vor.u32 %v4206, %v4204
        %v4210 = vshll.u32 %v4152, 16
        %v4212 = vrot.slane %v4210, 1
        %v4213 = vsel %vm674, %v4208, %v4212
        %v4214 = vshrl.u32 %v4152, 16
        %v4216 = vor.u32 %v4214, %v4212
        %v4218 = vshll.u32 %v4153, 16
        %v4220 = vrot.slane %v4218, 1
        %v4221 = vsel %vm674, %v4216, %v4220
        %v4224 = vunpack.c.l.b16 %v4109
        %v4225 = vunpack.c.l.b16 %v4110
        %v4226 = vpack.c.b16 %v4225, %v4224
        %vm4228 = vcmask 130048
        %v4230 = vsel %vm4228, %v4165, 0
        %v4233 = vsel %vm4228, %v4173, 0
        %v4236 = vsel %vm4228, %v4181, 0
        %v4239 = vsel %vm4228, %v4189, 0
        %v4242 = vsel %vm4228, %v4197, 0
        %v4245 = vsel %vm4228, %v4205, 0
        %v4248 = vsel %vm4228, %v4213, 0
        %v4251 = vsel %vm4228, %v4221, 0
        %4253 = vmatpush.bf16.msra.mxu0 0
        %4254 = vmatpush.bf16.msra.mxu0 0
        %4255 = vmatpush.bf16.msra.mxu0 0
        %4256 = vmatpush.bf16.msra.mxu0 0
        %4257 = vmatpush.bf16.msra.mxu0 0
        %4258 = vmatpush.bf16.msra.mxu0 0
        %4259 = vmatpush.bf16.msra.mxu0 0
        %4260 = vmatpush.bf16.msra.mxu0 %v4226
        %4261 = vmatmul.bf16.gmra.mxu0 %v4230
        %v4262 = vpop.f32.mrf.mxu0
        %v4263 = vadd.f32 0.0, %v4262
        %v4264 = vpop.f32.mrf.mxu0
        %v4265 = vadd.f32 0.0, %v4264
        %4266 = vmatmul.bf16.gmra.mxu0 %v4233
        %v4267 = vpop.f32.mrf.mxu0
        %v4268 = vadd.f32 0.0, %v4267
        %v4269 = vpop.f32.mrf.mxu0
        %v4270 = vadd.f32 0.0, %v4269
        %4271 = vmatmul.bf16.gmra.mxu0 %v4236
        %v4272 = vpop.f32.mrf.mxu0
        %v4273 = vadd.f32 0.0, %v4272
        %v4274 = vpop.f32.mrf.mxu0
        %v4275 = vadd.f32 0.0, %v4274
        %4276 = vmatmul.bf16.gmra.mxu0 %v4239
        %v4277 = vpop.f32.mrf.mxu0
        %v4278 = vadd.f32 0.0, %v4277
        %v4279 = vpop.f32.mrf.mxu0
        %v4280 = vadd.f32 0.0, %v4279
        %4281 = vmatmul.bf16.gmra.mxu0 %v4242
        %v4282 = vpop.f32.mrf.mxu0
        %v4283 = vadd.f32 0.0, %v4282
        %v4284 = vpop.f32.mrf.mxu0
        %v4285 = vadd.f32 0.0, %v4284
        %4286 = vmatmul.bf16.gmra.mxu0 %v4245
        %v4287 = vpop.f32.mrf.mxu0
        %v4288 = vadd.f32 0.0, %v4287
        %v4289 = vpop.f32.mrf.mxu0
        %v4290 = vadd.f32 0.0, %v4289
        %4291 = vmatmul.bf16.gmra.mxu0 %v4248
        %v4292 = vpop.f32.mrf.mxu0
        %v4293 = vadd.f32 0.0, %v4292
        %v4294 = vpop.f32.mrf.mxu0
        %v4295 = vadd.f32 0.0, %v4294
        %4296 = vmatmul.bf16.gmra.mxu0 %v4251
        %v4297 = vpop.f32.mrf.mxu0
        %v4298 = vadd.f32 0.0, %v4297
        %v4299 = vpop.f32.mrf.mxu0
        %v4300 = vadd.f32 0.0, %v4299
        %4301 = vdwg.mxu0
        %v4304 = vunpack.c.l.b16 %v4106
        %v4305 = vunpack.c.l.b16 %v4107
        %v4306 = vpack.c.b16 %v4305, %v4304
        %v4308 = vsel %vm4228, %v4145, 0
        %v4310 = vsel %vm4228, %v4146, 0
        %v4312 = vsel %vm4228, %v4147, 0
        %v4314 = vsel %vm4228, %v4148, 0
        %v4316 = vsel %vm4228, %v4149, 0
        %v4318 = vsel %vm4228, %v4150, 0
        %v4320 = vsel %vm4228, %v4151, 0
        %v4322 = vsel %vm4228, %v4152, 0
        %4324 = vmatpush.bf16.msra.mxu0 0
        %4325 = vmatpush.bf16.msra.mxu0 0
        %4326 = vmatpush.bf16.msra.mxu0 0
        %4327 = vmatpush.bf16.msra.mxu0 0
        %4328 = vmatpush.bf16.msra.mxu0 0
        %4329 = vmatpush.bf16.msra.mxu0 0
        %4330 = vmatpush.bf16.msra.mxu0 0
        %4331 = vmatpush.bf16.msra.mxu0 %v4306
        %4332 = vmatmul.bf16.gmra.mxu0 %v4308
        %v4333 = vpop.f32.mrf.mxu0
        %v4334 = vadd.f32 %v4263, %v4333
        %v4335 = vpop.f32.mrf.mxu0
        %v4336 = vadd.f32 %v4265, %v4335
        %4337 = vmatmul.bf16.gmra.mxu0 %v4310
        %v4338 = vpop.f32.mrf.mxu0
        %v4339 = vadd.f32 %v4268, %v4338
        %v4340 = vpop.f32.mrf.mxu0
        %v4341 = vadd.f32 %v4270, %v4340
        %4342 = vmatmul.bf16.gmra.mxu0 %v4312
        %v4343 = vpop.f32.mrf.mxu0
        %v4344 = vadd.f32 %v4273, %v4343
        %v4345 = vpop.f32.mrf.mxu0
        %v4346 = vadd.f32 %v4275, %v4345
        %4347 = vmatmul.bf16.gmra.mxu0 %v4314
        %v4348 = vpop.f32.mrf.mxu0
        %v4349 = vadd.f32 %v4278, %v4348
        %v4350 = vpop.f32.mrf.mxu0
        %v4351 = vadd.f32 %v4280, %v4350
        %4352 = vmatmul.bf16.gmra.mxu0 %v4316
        %v4353 = vpop.f32.mrf.mxu0
        %v4354 = vadd.f32 %v4283, %v4353
        %v4355 = vpop.f32.mrf.mxu0
        %v4356 = vadd.f32 %v4285, %v4355
        %4357 = vmatmul.bf16.gmra.mxu0 %v4318
        %v4358 = vpop.f32.mrf.mxu0
        %v4359 = vadd.f32 %v4288, %v4358
        %v4360 = vpop.f32.mrf.mxu0
        %v4361 = vadd.f32 %v4290, %v4360
        %4362 = vmatmul.bf16.gmra.mxu0 %v4320
        %v4363 = vpop.f32.mrf.mxu0
        %v4364 = vadd.f32 %v4293, %v4363
        %v4365 = vpop.f32.mrf.mxu0
        %v4366 = vadd.f32 %v4295, %v4365
        %4367 = vmatmul.bf16.gmra.mxu0 %v4322
        %v4368 = vpop.f32.mrf.mxu0
        %v4369 = vadd.f32 %v4298, %v4368
        %v4370 = vpop.f32.mrf.mxu0
        %v4371 = vadd.f32 %v4300, %v4370
        %4372 = vdwg.mxu0
        %s4373 = scalar_lea.vmem %s5, 16
        %v4374 = vld [vmem:[%s4373] sm:$0xf]
        %v4375 = vld [vmem:[%s4373 + $0x4] sm:$0xf]
        %v4376 = vrot.slane %v4145, 1
        %v4377 = vrot.slane %v4146, 1
        %v4378 = vsel %vm1262, %v4376, %v4377
        %v4379 = vrot.slane %v4147, 1
        %v4380 = vsel %vm1262, %v4377, %v4379
        %v4381 = vrot.slane %v4148, 1
        %v4382 = vsel %vm1262, %v4379, %v4381
        %v4383 = vrot.slane %v4149, 1
        %v4384 = vsel %vm1262, %v4381, %v4383
        %v4385 = vrot.slane %v4150, 1
        %v4386 = vsel %vm1262, %v4383, %v4385
        %v4387 = vrot.slane %v4151, 1
        %v4388 = vsel %vm1262, %v4385, %v4387
        %v4389 = vrot.slane %v4152, 1
        %v4390 = vsel %vm1262, %v4387, %v4389
        %v4391 = vrot.slane %v4153, 1
        %v4392 = vsel %vm1262, %v4389, %v4391
        %v4395 = vunpack.c.l.b16 %v4374
        %v4396 = vunpack.c.l.b16 %v4375
        %v4397 = vpack.c.b16 %v4396, %v4395
        %v4400 = vsel %vm4228, %v4378, 0
        %v4403 = vsel %vm4228, %v4380, 0
        %v4406 = vsel %vm4228, %v4382, 0
        %v4409 = vsel %vm4228, %v4384, 0
        %v4412 = vsel %vm4228, %v4386, 0
        %v4415 = vsel %vm4228, %v4388, 0
        %v4418 = vsel %vm4228, %v4390, 0
        %v4421 = vsel %vm4228, %v4392, 0
        %4423 = vmatpush.bf16.msra.mxu0 0
        %4424 = vmatpush.bf16.msra.mxu0 0
        %4425 = vmatpush.bf16.msra.mxu0 0
        %4426 = vmatpush.bf16.msra.mxu0 0
        %4427 = vmatpush.bf16.msra.mxu0 0
        %4428 = vmatpush.bf16.msra.mxu0 0
        %4429 = vmatpush.bf16.msra.mxu0 0
        %4430 = vmatpush.bf16.msra.mxu0 %v4397
        %4431 = vmatmul.bf16.gmra.mxu0 %v4400
        %v4432 = vpop.f32.mrf.mxu0
        %v4433 = vadd.f32 0.0, %v4432
        %v4434 = vpop.f32.mrf.mxu0
        %v4435 = vadd.f32 0.0, %v4434
        %4436 = vmatmul.bf16.gmra.mxu0 %v4403
        %v4437 = vpop.f32.mrf.mxu0
        %v4438 = vadd.f32 0.0, %v4437
        %v4439 = vpop.f32.mrf.mxu0
        %v4440 = vadd.f32 0.0, %v4439
        %4441 = vmatmul.bf16.gmra.mxu0 %v4406
        %v4442 = vpop.f32.mrf.mxu0
        %v4443 = vadd.f32 0.0, %v4442
        %v4444 = vpop.f32.mrf.mxu0
        %v4445 = vadd.f32 0.0, %v4444
        %4446 = vmatmul.bf16.gmra.mxu0 %v4409
        %v4447 = vpop.f32.mrf.mxu0
        %v4448 = vadd.f32 0.0, %v4447
        %v4449 = vpop.f32.mrf.mxu0
        %v4450 = vadd.f32 0.0, %v4449
        %4451 = vmatmul.bf16.gmra.mxu0 %v4412
        %v4452 = vpop.f32.mrf.mxu0
        %v4453 = vadd.f32 0.0, %v4452
        %v4454 = vpop.f32.mrf.mxu0
        %v4455 = vadd.f32 0.0, %v4454
        %4456 = vmatmul.bf16.gmra.mxu0 %v4415
        %v4457 = vpop.f32.mrf.mxu0
        %v4458 = vadd.f32 0.0, %v4457
        %v4459 = vpop.f32.mrf.mxu0
        %v4460 = vadd.f32 0.0, %v4459
        %4461 = vmatmul.bf16.gmra.mxu0 %v4418
        %v4462 = vpop.f32.mrf.mxu0
        %v4463 = vadd.f32 0.0, %v4462
        %v4464 = vpop.f32.mrf.mxu0
        %v4465 = vadd.f32 0.0, %v4464
        %4466 = vmatmul.bf16.gmra.mxu0 %v4421
        %v4467 = vpop.f32.mrf.mxu0
        %v4468 = vadd.f32 0.0, %v4467
        %v4469 = vpop.f32.mrf.mxu0
        %v4470 = vadd.f32 0.0, %v4469
        %4471 = vdwg.mxu0
        %v4472 = vadd.f32 %v4334, %v4433
        %v4473 = vadd.f32 %v4336, %v4435
        %v4474 = vadd.f32 %v4339, %v4438
        %v4475 = vadd.f32 %v4341, %v4440
        %v4476 = vadd.f32 %v4344, %v4443
        %v4477 = vadd.f32 %v4346, %v4445
        %v4478 = vadd.f32 %v4349, %v4448
        %v4479 = vadd.f32 %v4351, %v4450
        %v4480 = vadd.f32 %v4354, %v4453
        %v4481 = vadd.f32 %v4356, %v4455
        %v4482 = vadd.f32 %v4359, %v4458
        %v4483 = vadd.f32 %v4361, %v4460
        %v4484 = vadd.f32 %v4364, %v4463
        %v4485 = vadd.f32 %v4366, %v4465
        %v4486 = vadd.f32 %v4369, %v4468
        %v4487 = vadd.f32 %v4371, %v4470
        %s4488 = scalar_lea.vmem %s5, 24
        %v4489 = vld [vmem:[%s4488] sm:$0xf]
        %v4490 = vld [vmem:[%s4488 + $0x4] sm:$0xf]
        %v4492 = vunpack.c.l.b16 %v4102
        %v4493 = vpack.c.b16 %v4492, %v4144
        %v4496 = vunpack.c.l.b16 %v4489
        %v4497 = vunpack.c.l.b16 %v4490
        %v4498 = vpack.c.b16 %v4497, %v4496
        %v4501 = vsel %vm4228, %v4493, 0
        %4503 = vmatpush.bf16.msra.mxu0 0
        %4504 = vmatpush.bf16.msra.mxu0 0
        %4505 = vmatpush.bf16.msra.mxu0 0
        %4506 = vmatpush.bf16.msra.mxu0 0
        %4507 = vmatpush.bf16.msra.mxu0 0
        %4508 = vmatpush.bf16.msra.mxu0 0
        %4509 = vmatpush.bf16.msra.mxu0 0
        %4510 = vmatpush.bf16.msra.mxu0 %v4498
        %4511 = vmatmul.bf16.gmra.mxu0 %v4310
        %v4512 = vpop.f32.mrf.mxu0
        %v4513 = vadd.f32 0.0, %v4512
        %v4514 = vpop.f32.mrf.mxu0
        %v4515 = vadd.f32 0.0, %v4514
        %4516 = vmatmul.bf16.gmra.mxu0 %v4312
        %v4517 = vpop.f32.mrf.mxu0
        %v4518 = vadd.f32 0.0, %v4517
        %v4519 = vpop.f32.mrf.mxu0
        %v4520 = vadd.f32 0.0, %v4519
        %4521 = vmatmul.bf16.gmra.mxu0 %v4314
        %v4522 = vpop.f32.mrf.mxu0
        %v4523 = vadd.f32 0.0, %v4522
        %v4524 = vpop.f32.mrf.mxu0
        %v4525 = vadd.f32 0.0, %v4524
        %4526 = vmatmul.bf16.gmra.mxu0 %v4316
        %v4527 = vpop.f32.mrf.mxu0
        %v4528 = vadd.f32 0.0, %v4527
        %v4529 = vpop.f32.mrf.mxu0
        %v4530 = vadd.f32 0.0, %v4529
        %4531 = vmatmul.bf16.gmra.mxu0 %v4318
        %v4532 = vpop.f32.mrf.mxu0
        %v4533 = vadd.f32 0.0, %v4532
        %v4534 = vpop.f32.mrf.mxu0
        %v4535 = vadd.f32 0.0, %v4534
        %4536 = vmatmul.bf16.gmra.mxu0 %v4320
        %v4537 = vpop.f32.mrf.mxu0
        %v4538 = vadd.f32 0.0, %v4537
        %v4539 = vpop.f32.mrf.mxu0
        %v4540 = vadd.f32 0.0, %v4539
        %4541 = vmatmul.bf16.gmra.mxu0 %v4322
        %v4542 = vpop.f32.mrf.mxu0
        %v4543 = vadd.f32 0.0, %v4542
        %v4544 = vpop.f32.mrf.mxu0
        %v4545 = vadd.f32 0.0, %v4544
        %4546 = vmatmul.bf16.gmra.mxu0 %v4501
        %v4547 = vpop.f32.mrf.mxu0
        %v4548 = vadd.f32 0.0, %v4547
        %v4549 = vpop.f32.mrf.mxu0
        %v4550 = vadd.f32 0.0, %v4549
        %4551 = vdwg.mxu0
        %v4552 = vadd.f32 %v4472, %v4513
        %v4553 = vadd.f32 %v4473, %v4515
        %v4554 = vadd.f32 %v4474, %v4518
        %v4555 = vadd.f32 %v4475, %v4520
        %v4556 = vadd.f32 %v4476, %v4523
        %v4557 = vadd.f32 %v4477, %v4525
        %v4558 = vadd.f32 %v4478, %v4528
        %v4559 = vadd.f32 %v4479, %v4530
        %v4560 = vadd.f32 %v4480, %v4533
        %v4561 = vadd.f32 %v4481, %v4535
        %v4562 = vadd.f32 %v4482, %v4538
        %v4563 = vadd.f32 %v4483, %v4540
        %v4564 = vadd.f32 %v4484, %v4543
        %v4565 = vadd.f32 %v4485, %v4545
        %v4566 = vadd.f32 %v4486, %v4548
        %v4567 = vadd.f32 %v4487, %v4550
        %s4568 = scalar_lea.vmem %s5, 32
        %v4569 = vld [vmem:[%s4568] sm:$0xf]
        %v4570 = vld [vmem:[%s4568 + $0x4] sm:$0xf]
        %v4572 = vunpack.c.l.b16 %v4103
        %v4573 = vpack.c.b16 %v4572, %v4572
        %v4574 = vshll.u32 %v4493, 16
        %v4576 = vrot.slane %v4574, 1
        %v4577 = vsel %vm674, %v4216, %v4576
        %v4578 = vshrl.u32 %v4493, 16
        %v4580 = vor.u32 %v4578, %v4576
        %v4582 = vshll.u32 %v4573, 16
        %v4584 = vrot.slane %v4582, 1
        %v4585 = vsel %vm674, %v4580, %v4584
        %v4588 = vunpack.c.l.b16 %v4569
        %v4589 = vunpack.c.l.b16 %v4570
        %v4590 = vpack.c.b16 %v4589, %v4588
        %v4593 = vsel %vm4228, %v4577, 0
        %v4596 = vsel %vm4228, %v4585, 0
        %4598 = vmatpush.bf16.msra.mxu0 0
        %4599 = vmatpush.bf16.msra.mxu0 0
        %4600 = vmatpush.bf16.msra.mxu0 0
        %4601 = vmatpush.bf16.msra.mxu0 0
        %4602 = vmatpush.bf16.msra.mxu0 0
        %4603 = vmatpush.bf16.msra.mxu0 0
        %4604 = vmatpush.bf16.msra.mxu0 0
        %4605 = vmatpush.bf16.msra.mxu0 %v4590
        %4606 = vmatmul.bf16.gmra.mxu0 %v4233
        %v4607 = vpop.f32.mrf.mxu0
        %v4608 = vadd.f32 0.0, %v4607
        %v4609 = vpop.f32.mrf.mxu0
        %v4610 = vadd.f32 0.0, %v4609
        %4611 = vmatmul.bf16.gmra.mxu0 %v4236
        %v4612 = vpop.f32.mrf.mxu0
        %v4613 = vadd.f32 0.0, %v4612
        %v4614 = vpop.f32.mrf.mxu0
        %v4615 = vadd.f32 0.0, %v4614
        %4616 = vmatmul.bf16.gmra.mxu0 %v4239
        %v4617 = vpop.f32.mrf.mxu0
        %v4618 = vadd.f32 0.0, %v4617
        %v4619 = vpop.f32.mrf.mxu0
        %v4620 = vadd.f32 0.0, %v4619
        %4621 = vmatmul.bf16.gmra.mxu0 %v4242
        %v4622 = vpop.f32.mrf.mxu0
        %v4623 = vadd.f32 0.0, %v4622
        %v4624 = vpop.f32.mrf.mxu0
        %v4625 = vadd.f32 0.0, %v4624
        %4626 = vmatmul.bf16.gmra.mxu0 %v4245
        %v4627 = vpop.f32.mrf.mxu0
        %v4628 = vadd.f32 0.0, %v4627
        %v4629 = vpop.f32.mrf.mxu0
        %v4630 = vadd.f32 0.0, %v4629
        %4631 = vmatmul.bf16.gmra.mxu0 %v4248
        %v4632 = vpop.f32.mrf.mxu0
        %v4633 = vadd.f32 0.0, %v4632
        %v4634 = vpop.f32.mrf.mxu0
        %v4635 = vadd.f32 0.0, %v4634
        %4636 = vmatmul.bf16.gmra.mxu0 %v4593
        %v4637 = vpop.f32.mrf.mxu0
        %v4638 = vadd.f32 0.0, %v4637
        %v4639 = vpop.f32.mrf.mxu0
        %v4640 = vadd.f32 0.0, %v4639
        %4641 = vmatmul.bf16.gmra.mxu0 %v4596
        %v4642 = vpop.f32.mrf.mxu0
        %v4643 = vadd.f32 0.0, %v4642
        %v4644 = vpop.f32.mrf.mxu0
        %v4645 = vadd.f32 0.0, %v4644
        %4646 = vdwg.mxu0
        %v4647 = vadd.f32 %v4552, %v4608
        %v4648 = vadd.f32 %v4553, %v4610
        %v4649 = vadd.f32 %v4554, %v4613
        %v4650 = vadd.f32 %v4555, %v4615
        %v4651 = vadd.f32 %v4556, %v4618
        %v4652 = vadd.f32 %v4557, %v4620
        %v4653 = vadd.f32 %v4558, %v4623
        %v4654 = vadd.f32 %v4559, %v4625
        %v4655 = vadd.f32 %v4560, %v4628
        %v4656 = vadd.f32 %v4561, %v4630
        %v4657 = vadd.f32 %v4562, %v4633
        %v4658 = vadd.f32 %v4563, %v4635
        %v4659 = vadd.f32 %v4564, %v4638
        %v4660 = vadd.f32 %v4565, %v4640
        %v4661 = vadd.f32 %v4566, %v4643
        %v4662 = vadd.f32 %v4567, %v4645
        %s4663 = scalar_lea.vmem %s5, 40
        %v4664 = vld [vmem:[%s4663] sm:$0xf]
        %v4665 = vld [vmem:[%s4663 + $0x4] sm:$0xf]
        %v4666 = vrot.slane %v4493, 1
        %v4667 = vsel %vm1262, %v4389, %v4666
        %v4668 = vrot.slane %v4573, 1
        %v4669 = vsel %vm1262, %v4666, %v4668
        %v4672 = vunpack.c.l.b16 %v4664
        %v4673 = vunpack.c.l.b16 %v4665
        %v4674 = vpack.c.b16 %v4673, %v4672
        %v4677 = vsel %vm4228, %v4667, 0
        %v4680 = vsel %vm4228, %v4669, 0
        %4682 = vmatpush.bf16.msra.mxu0 0
        %4683 = vmatpush.bf16.msra.mxu0 0
        %4684 = vmatpush.bf16.msra.mxu0 0
        %4685 = vmatpush.bf16.msra.mxu0 0
        %4686 = vmatpush.bf16.msra.mxu0 0
        %4687 = vmatpush.bf16.msra.mxu0 0
        %4688 = vmatpush.bf16.msra.mxu0 0
        %4689 = vmatpush.bf16.msra.mxu0 %v4674
        %4690 = vmatmul.bf16.gmra.mxu0 %v4403
        %v4691 = vpop.f32.mrf.mxu0
        %v4692 = vadd.f32 0.0, %v4691
        %v4693 = vpop.f32.mrf.mxu0
        %v4694 = vadd.f32 0.0, %v4693
        %4695 = vmatmul.bf16.gmra.mxu0 %v4406
        %v4696 = vpop.f32.mrf.mxu0
        %v4697 = vadd.f32 0.0, %v4696
        %v4698 = vpop.f32.mrf.mxu0
        %v4699 = vadd.f32 0.0, %v4698
        %4700 = vmatmul.bf16.gmra.mxu0 %v4409
        %v4701 = vpop.f32.mrf.mxu0
        %v4702 = vadd.f32 0.0, %v4701
        %v4703 = vpop.f32.mrf.mxu0
        %v4704 = vadd.f32 0.0, %v4703
        %4705 = vmatmul.bf16.gmra.mxu0 %v4412
        %v4706 = vpop.f32.mrf.mxu0
        %v4707 = vadd.f32 0.0, %v4706
        %v4708 = vpop.f32.mrf.mxu0
        %v4709 = vadd.f32 0.0, %v4708
        %4710 = vmatmul.bf16.gmra.mxu0 %v4415
        %v4711 = vpop.f32.mrf.mxu0
        %v4712 = vadd.f32 0.0, %v4711
        %v4713 = vpop.f32.mrf.mxu0
        %v4714 = vadd.f32 0.0, %v4713
        %4715 = vmatmul.bf16.gmra.mxu0 %v4418
        %v4716 = vpop.f32.mrf.mxu0
        %v4717 = vadd.f32 0.0, %v4716
        %v4718 = vpop.f32.mrf.mxu0
        %v4719 = vadd.f32 0.0, %v4718
        %4720 = vmatmul.bf16.gmra.mxu0 %v4677
        %v4721 = vpop.f32.mrf.mxu0
        %v4722 = vadd.f32 0.0, %v4721
        %v4723 = vpop.f32.mrf.mxu0
        %v4724 = vadd.f32 0.0, %v4723
        %4725 = vmatmul.bf16.gmra.mxu0 %v4680
        %v4726 = vpop.f32.mrf.mxu0
        %v4727 = vadd.f32 0.0, %v4726
        %v4728 = vpop.f32.mrf.mxu0
        %v4729 = vadd.f32 0.0, %v4728
        %4730 = vdwg.mxu0
        %v4731 = vadd.f32 %v4647, %v4692
        %v4732 = vadd.f32 %v4648, %v4694
        %v4733 = vadd.f32 %v4649, %v4697
        %v4734 = vadd.f32 %v4650, %v4699
        %v4735 = vadd.f32 %v4651, %v4702
        %v4736 = vadd.f32 %v4652, %v4704
        %v4737 = vadd.f32 %v4653, %v4707
        %v4738 = vadd.f32 %v4654, %v4709
        %v4739 = vadd.f32 %v4655, %v4712
        %v4740 = vadd.f32 %v4656, %v4714
        %v4741 = vadd.f32 %v4657, %v4717
        %v4742 = vadd.f32 %v4658, %v4719
        %v4743 = vadd.f32 %v4659, %v4722
        %v4744 = vadd.f32 %v4660, %v4724
        %v4745 = vadd.f32 %v4661, %v4727
        %v4746 = vadd.f32 %v4662, %v4729
        %s4747 = scalar_lea.vmem %s5, 48
        %v4748 = vld [vmem:[%s4747] sm:$0xf]
        %v4749 = vld [vmem:[%s4747 + $0x4] sm:$0xf]
        %v4751 = vunpack.c.l.b16 %v4104
        %v4752 = vpack.c.b16 %v4751, %v4572
        %v4755 = vunpack.c.l.b16 %v4748
        %v4756 = vunpack.c.l.b16 %v4749
        %v4757 = vpack.c.b16 %v4756, %v4755
        %v4760 = vsel %vm4228, %v4752, 0
        %4762 = vmatpush.bf16.msra.mxu0 0
        %4763 = vmatpush.bf16.msra.mxu0 0
        %4764 = vmatpush.bf16.msra.mxu0 0
        %4765 = vmatpush.bf16.msra.mxu0 0
        %4766 = vmatpush.bf16.msra.mxu0 0
        %4767 = vmatpush.bf16.msra.mxu0 0
        %4768 = vmatpush.bf16.msra.mxu0 0
        %4769 = vmatpush.bf16.msra.mxu0 %v4757
        %4770 = vmatmul.bf16.gmra.mxu0 %v4312
        %v4771 = vpop.f32.mrf.mxu0
        %v4772 = vadd.f32 0.0, %v4771
        %v4773 = vpop.f32.mrf.mxu0
        %v4774 = vadd.f32 0.0, %v4773
        %4775 = vmatmul.bf16.gmra.mxu0 %v4314
        %v4776 = vpop.f32.mrf.mxu0
        %v4777 = vadd.f32 0.0, %v4776
        %v4778 = vpop.f32.mrf.mxu0
        %v4779 = vadd.f32 0.0, %v4778
        %4780 = vmatmul.bf16.gmra.mxu0 %v4316
        %v4781 = vpop.f32.mrf.mxu0
        %v4782 = vadd.f32 0.0, %v4781
        %v4783 = vpop.f32.mrf.mxu0
        %v4784 = vadd.f32 0.0, %v4783
        %4785 = vmatmul.bf16.gmra.mxu0 %v4318
        %v4786 = vpop.f32.mrf.mxu0
        %v4787 = vadd.f32 0.0, %v4786
        %v4788 = vpop.f32.mrf.mxu0
        %v4789 = vadd.f32 0.0, %v4788
        %4790 = vmatmul.bf16.gmra.mxu0 %v4320
        %v4791 = vpop.f32.mrf.mxu0
        %v4792 = vadd.f32 0.0, %v4791
        %v4793 = vpop.f32.mrf.mxu0
        %v4794 = vadd.f32 0.0, %v4793
        %4795 = vmatmul.bf16.gmra.mxu0 %v4322
        %v4796 = vpop.f32.mrf.mxu0
        %v4797 = vadd.f32 0.0, %v4796
        %v4798 = vpop.f32.mrf.mxu0
        %v4799 = vadd.f32 0.0, %v4798
        %4800 = vmatmul.bf16.gmra.mxu0 %v4501
        %v4801 = vpop.f32.mrf.mxu0
        %v4802 = vadd.f32 0.0, %v4801
        %v4803 = vpop.f32.mrf.mxu0
        %v4804 = vadd.f32 0.0, %v4803
        %4805 = vmatmul.bf16.gmra.mxu0 %v4760
        %v4806 = vpop.f32.mrf.mxu0
        %v4807 = vadd.f32 0.0, %v4806
        %v4808 = vpop.f32.mrf.mxu0
        %v4809 = vadd.f32 0.0, %v4808
        %4810 = vdwg.mxu0
        %v4811 = vadd.f32 %v4731, %v4772
        %v4812 = vadd.f32 %v4732, %v4774
        %v4813 = vadd.f32 %v4733, %v4777
        %v4814 = vadd.f32 %v4734, %v4779
        %v4815 = vadd.f32 %v4735, %v4782
        %v4816 = vadd.f32 %v4736, %v4784
        %v4817 = vadd.f32 %v4737, %v4787
        %v4818 = vadd.f32 %v4738, %v4789
        %v4819 = vadd.f32 %v4739, %v4792
        %v4820 = vadd.f32 %v4740, %v4794
        %v4821 = vadd.f32 %v4741, %v4797
        %v4822 = vadd.f32 %v4742, %v4799
        %v4823 = vadd.f32 %v4743, %v4802
        %v4824 = vadd.f32 %v4744, %v4804
        %v4825 = vadd.f32 %v4745, %v4807
        %v4826 = vadd.f32 %v4746, %v4809
        %s4827 = scalar_lea.vmem %s5, 56
        %v4828 = vld [vmem:[%s4827] sm:$0xf]
        %v4829 = vld [vmem:[%s4827 + $0x4] sm:$0xf]
        %v4831 = vunpack.c.l.b16 %v4105
        %v4832 = vpack.c.b16 %v4831, %v4831
        %v4833 = vshll.u32 %v4752, 16
        %v4835 = vrot.slane %v4833, 1
        %v4836 = vsel %vm674, %v4580, %v4835
        %v4837 = vshrl.u32 %v4752, 16
        %v4839 = vor.u32 %v4837, %v4835
        %v4841 = vshll.u32 %v4832, 16
        %v4843 = vrot.slane %v4841, 1
        %v4844 = vsel %vm674, %v4839, %v4843
        %v4847 = vunpack.c.l.b16 %v4828
        %v4848 = vunpack.c.l.b16 %v4829
        %v4849 = vpack.c.b16 %v4848, %v4847
        %v4852 = vsel %vm4228, %v4836, 0
        %v4855 = vsel %vm4228, %v4844, 0
        %4857 = vmatpush.bf16.msra.mxu0 0
        %4858 = vmatpush.bf16.msra.mxu0 0
        %4859 = vmatpush.bf16.msra.mxu0 0
        %4860 = vmatpush.bf16.msra.mxu0 0
        %4861 = vmatpush.bf16.msra.mxu0 0
        %4862 = vmatpush.bf16.msra.mxu0 0
        %4863 = vmatpush.bf16.msra.mxu0 0
        %4864 = vmatpush.bf16.msra.mxu0 %v4849
        %4865 = vmatmul.bf16.gmra.mxu0 %v4236
        %v4866 = vpop.f32.mrf.mxu0
        %v4867 = vadd.f32 0.0, %v4866
        %v4868 = vpop.f32.mrf.mxu0
        %v4869 = vadd.f32 0.0, %v4868
        %4870 = vmatmul.bf16.gmra.mxu0 %v4239
        %v4871 = vpop.f32.mrf.mxu0
        %v4872 = vadd.f32 0.0, %v4871
        %v4873 = vpop.f32.mrf.mxu0
        %v4874 = vadd.f32 0.0, %v4873
        %4875 = vmatmul.bf16.gmra.mxu0 %v4242
        %v4876 = vpop.f32.mrf.mxu0
        %v4877 = vadd.f32 0.0, %v4876
        %v4878 = vpop.f32.mrf.mxu0
        %v4879 = vadd.f32 0.0, %v4878
        %4880 = vmatmul.bf16.gmra.mxu0 %v4245
        %v4881 = vpop.f32.mrf.mxu0
        %v4882 = vadd.f32 0.0, %v4881
        %v4883 = vpop.f32.mrf.mxu0
        %v4884 = vadd.f32 0.0, %v4883
        %4885 = vmatmul.bf16.gmra.mxu0 %v4248
        %v4886 = vpop.f32.mrf.mxu0
        %v4887 = vadd.f32 0.0, %v4886
        %v4888 = vpop.f32.mrf.mxu0
        %v4889 = vadd.f32 0.0, %v4888
        %4890 = vmatmul.bf16.gmra.mxu0 %v4593
        %v4891 = vpop.f32.mrf.mxu0
        %v4892 = vadd.f32 0.0, %v4891
        %v4893 = vpop.f32.mrf.mxu0
        %v4894 = vadd.f32 0.0, %v4893
        %4895 = vmatmul.bf16.gmra.mxu0 %v4852
        %v4896 = vpop.f32.mrf.mxu0
        %v4897 = vadd.f32 0.0, %v4896
        %v4898 = vpop.f32.mrf.mxu0
        %v4899 = vadd.f32 0.0, %v4898
        %4900 = vmatmul.bf16.gmra.mxu0 %v4855
        %v4901 = vpop.f32.mrf.mxu0
        %v4902 = vadd.f32 0.0, %v4901
        %v4903 = vpop.f32.mrf.mxu0
        %v4904 = vadd.f32 0.0, %v4903
        %4905 = vdwg.mxu0
        %v4906 = vadd.f32 %v4811, %v4867
        %v4907 = vadd.f32 %v4812, %v4869
        %v4908 = vadd.f32 %v4813, %v4872
        %v4909 = vadd.f32 %v4814, %v4874
        %v4910 = vadd.f32 %v4815, %v4877
        %v4911 = vadd.f32 %v4816, %v4879
        %v4912 = vadd.f32 %v4817, %v4882
        %v4913 = vadd.f32 %v4818, %v4884
        %v4914 = vadd.f32 %v4819, %v4887
        %v4915 = vadd.f32 %v4820, %v4889
        %v4916 = vadd.f32 %v4821, %v4892
        %v4917 = vadd.f32 %v4822, %v4894
        %v4918 = vadd.f32 %v4823, %v4897
        %v4919 = vadd.f32 %v4824, %v4899
        %v4920 = vadd.f32 %v4825, %v4902
        %v4921 = vadd.f32 %v4826, %v4904
        %s4922 = scalar_lea.vmem %s5, 64
        %v4923 = vld [vmem:[%s4922] sm:$0xf]
        %v4924 = vld [vmem:[%s4922 + $0x4] sm:$0xf]
        %v4925 = vrot.slane %v4752, 1
        %v4926 = vsel %vm1262, %v4666, %v4925
        %v4927 = vrot.slane %v4832, 1
        %v4928 = vsel %vm1262, %v4925, %v4927
        %v4931 = vunpack.c.l.b16 %v4923
        %v4932 = vunpack.c.l.b16 %v4924
        %v4933 = vpack.c.b16 %v4932, %v4931
        %v4936 = vsel %vm4228, %v4926, 0
        %v4939 = vsel %vm4228, %v4928, 0
        %4941 = vmatpush.bf16.msra.mxu0 0
        %4942 = vmatpush.bf16.msra.mxu0 0
        %4943 = vmatpush.bf16.msra.mxu0 0
        %4944 = vmatpush.bf16.msra.mxu0 0
        %4945 = vmatpush.bf16.msra.mxu0 0
        %4946 = vmatpush.bf16.msra.mxu0 0
        %4947 = vmatpush.bf16.msra.mxu0 0
        %4948 = vmatpush.bf16.msra.mxu0 %v4933
        %4949 = vmatmul.bf16.gmra.mxu0 %v4406
        %v4950 = vpop.f32.mrf.mxu0
        %v4951 = vadd.f32 0.0, %v4950
        %v4952 = vpop.f32.mrf.mxu0
        %v4953 = vadd.f32 0.0, %v4952
        %4954 = vmatmul.bf16.gmra.mxu0 %v4409
        %v4955 = vpop.f32.mrf.mxu0
        %v4956 = vadd.f32 0.0, %v4955
        %v4957 = vpop.f32.mrf.mxu0
        %v4958 = vadd.f32 0.0, %v4957
        %4959 = vmatmul.bf16.gmra.mxu0 %v4412
        %v4960 = vpop.f32.mrf.mxu0
        %v4961 = vadd.f32 0.0, %v4960
        %v4962 = vpop.f32.mrf.mxu0
        %v4963 = vadd.f32 0.0, %v4962
        %4964 = vmatmul.bf16.gmra.mxu0 %v4415
        %v4965 = vpop.f32.mrf.mxu0
        %v4966 = vadd.f32 0.0, %v4965
        %v4967 = vpop.f32.mrf.mxu0
        %v4968 = vadd.f32 0.0, %v4967
        %4969 = vmatmul.bf16.gmra.mxu0 %v4418
        %v4970 = vpop.f32.mrf.mxu0
        %v4971 = vadd.f32 0.0, %v4970
        %v4972 = vpop.f32.mrf.mxu0
        %v4973 = vadd.f32 0.0, %v4972
        %4974 = vmatmul.bf16.gmra.mxu0 %v4677
        %v4975 = vpop.f32.mrf.mxu0
        %v4976 = vadd.f32 0.0, %v4975
        %v4977 = vpop.f32.mrf.mxu0
        %v4978 = vadd.f32 0.0, %v4977
        %4979 = vmatmul.bf16.gmra.mxu0 %v4936
        %v4980 = vpop.f32.mrf.mxu0
        %v4981 = vadd.f32 0.0, %v4980
        %v4982 = vpop.f32.mrf.mxu0
        %v4983 = vadd.f32 0.0, %v4982
        %4984 = vmatmul.bf16.gmra.mxu0 %v4939
        %v4985 = vpop.f32.mrf.mxu0
        %v4986 = vadd.f32 0.0, %v4985
        %v4987 = vpop.f32.mrf.mxu0
        %v4988 = vadd.f32 0.0, %v4987
        %4989 = vdwg.mxu0
        %v4990 = vadd.f32 %v4906, %v4951
        %v4991 = vadd.f32 %v4907, %v4953
        %v4992 = vadd.f32 %v4908, %v4956
        %v4993 = vadd.f32 %v4909, %v4958
        %v4994 = vadd.f32 %v4910, %v4961
        %v4995 = vadd.f32 %v4911, %v4963
        %v4996 = vadd.f32 %v4912, %v4966
        %v4997 = vadd.f32 %v4913, %v4968
        %v4998 = vadd.f32 %v4914, %v4971
        %v4999 = vadd.f32 %v4915, %v4973
        %v5000 = vadd.f32 %v4916, %v4976
        %v5001 = vadd.f32 %v4917, %v4978
        %v5002 = vadd.f32 %v4918, %v4981
        %v5003 = vadd.f32 %v4919, %v4983
        %v5004 = vadd.f32 %v4920, %v4986
        %v5005 = vadd.f32 %v4921, %v4988
        %v5006 = vld [vmem:[%s6] sm:$0x1]
        %v5008 = vperm.slane %v5006, 0
        %v5010 = vmul.f32 %v4990, %v5008
        %v5011 = vmul.f32 %v4991, %v5008
        %v5012 = vmul.f32 %v4992, %v5008
        %v5013 = vmul.f32 %v4993, %v5008
        %v5014 = vmul.f32 %v4994, %v5008
        %v5015 = vmul.f32 %v4995, %v5008
        %v5016 = vmul.f32 %v4996, %v5008
        %v5017 = vmul.f32 %v4997, %v5008
        %v5018 = vmul.f32 %v4998, %v5008
        %v5019 = vmul.f32 %v4999, %v5008
        %v5020 = vmul.f32 %v5000, %v5008
        %v5021 = vmul.f32 %v5001, %v5008
        %v5022 = vmul.f32 %v5002, %v5008
        %v5023 = vmul.f32 %v5003, %v5008
        %v5024 = vmul.f32 %v5004, %v5008
        %v5025 = vmul.f32 %v5005, %v5008
        %v5026 = vld [vmem:[%s7] sm:$0x1]
        %v5028 = vperm.slane %v5026, 0
        %v5030 = vadd.f32 %v5010, %v5028
        %v5031 = vadd.f32 %v5011, %v5028
        %v5032 = vadd.f32 %v5012, %v5028
        %v5033 = vadd.f32 %v5013, %v5028
        %v5034 = vadd.f32 %v5014, %v5028
        %v5035 = vadd.f32 %v5015, %v5028
        %v5036 = vadd.f32 %v5016, %v5028
        %v5037 = vadd.f32 %v5017, %v5028
        %v5038 = vadd.f32 %v5018, %v5028
        %v5039 = vadd.f32 %v5019, %v5028
        %v5040 = vadd.f32 %v5020, %v5028
        %v5041 = vadd.f32 %v5021, %v5028
        %v5042 = vadd.f32 %v5022, %v5028
        %v5043 = vadd.f32 %v5023, %v5028
        %v5044 = vadd.f32 %v5024, %v5028
        %v5045 = vadd.f32 %v5025, %v5028
        %v5046 = vmax.f32 %v5030, 0.0
        %v5047 = vmax.f32 %v5031, 0.0
        %v5048 = vmax.f32 %v5032, 0.0
        %v5049 = vmax.f32 %v5033, 0.0
        %v5050 = vmax.f32 %v5034, 0.0
        %v5051 = vmax.f32 %v5035, 0.0
        %v5052 = vmax.f32 %v5036, 0.0
        %v5053 = vmax.f32 %v5037, 0.0
        %v5054 = vmax.f32 %v5038, 0.0
        %v5055 = vmax.f32 %v5039, 0.0
        %v5056 = vmax.f32 %v5040, 0.0
        %v5057 = vmax.f32 %v5041, 0.0
        %v5058 = vmax.f32 %v5042, 0.0
        %v5059 = vmax.f32 %v5043, 0.0
        %v5060 = vmax.f32 %v5044, 0.0
        %v5061 = vmax.f32 %v5045, 0.0
        %v5062 = vmax.f32 %v5046, %v5048
        %v5063 = vmax.f32 %v5047, %v5049
        %v5064 = vmax.f32 %v5048, %v5050
        %v5065 = vmax.f32 %v5049, %v5051
        %v5066 = vmax.f32 %v5050, %v5052
        %v5067 = vmax.f32 %v5051, %v5053
        %v5068 = vmax.f32 %v5052, %v5054
        %v5069 = vmax.f32 %v5053, %v5055
        %v5070 = vmax.f32 %v5054, %v5056
        %v5071 = vmax.f32 %v5055, %v5057
        %v5072 = vmax.f32 %v5056, %v5058
        %v5073 = vmax.f32 %v5057, %v5059
        %v5074 = vmax.f32 %v5058, %v5060
        %v5075 = vmax.f32 %v5059, %v5061
        %v5090 = vrot.slane %v5062, 1
        %v5091 = vrot.slane %v5063, 1
        %v5092 = vsel %vm3443, %v5090, %v5091
        %v5093 = vrot.slane %v5064, 1
        %v5094 = vsel %vm3443, %v5091, %v5093
        %v5095 = vrot.slane %v5065, 1
        %v5096 = vsel %vm3443, %v5093, %v5095
        %v5097 = vrot.slane %v5066, 1
        %v5098 = vsel %vm3443, %v5095, %v5097
        %v5099 = vrot.slane %v5067, 1
        %v5100 = vsel %vm3443, %v5097, %v5099
        %v5101 = vrot.slane %v5068, 1
        %v5102 = vsel %vm3443, %v5099, %v5101
        %v5103 = vrot.slane %v5069, 1
        %v5104 = vsel %vm3443, %v5101, %v5103
        %v5105 = vrot.slane %v5070, 1
        %v5106 = vsel %vm3443, %v5103, %v5105
        %v5107 = vrot.slane %v5071, 1
        %v5108 = vsel %vm3443, %v5105, %v5107
        %v5109 = vrot.slane %v5072, 1
        %v5110 = vsel %vm3443, %v5107, %v5109
        %v5111 = vrot.slane %v5073, 1
        %v5112 = vsel %vm3443, %v5109, %v5111
        %v5113 = vrot.slane %v5074, 1
        %v5114 = vsel %vm3443, %v5111, %v5113
        %v5115 = vrot.slane %v5075, 1
        %v5116 = vsel %vm3443, %v5113, %v5115
        %v5131 = vmax.f32 %v5062, %v5092
        %v5132 = vmax.f32 %v5063, %v5094
        %v5133 = vmax.f32 %v5064, %v5096
        %v5134 = vmax.f32 %v5065, %v5098
        %v5135 = vmax.f32 %v5066, %v5100
        %v5136 = vmax.f32 %v5067, %v5102
        %v5137 = vmax.f32 %v5068, %v5104
        %v5138 = vmax.f32 %v5069, %v5106
        %v5139 = vmax.f32 %v5070, %v5108
        %v5140 = vmax.f32 %v5071, %v5110
        %v5141 = vmax.f32 %v5072, %v5112
        %v5142 = vmax.f32 %v5073, %v5114
        %v5143 = vmax.f32 %v5074, %v5116
        %v5144 = vmax.f32 %v5075, %v5115
        %v5145 = vld [vmem:[%s8] sm:$0xf]
        %v5146 = vld [vmem:[%s8 + $0x4] sm:$0xf]
        %v5147 = vld [vmem:[%s8 + $0x8] sm:$0xf]
        %v5148 = vld [vmem:[%s8 + $0xc] sm:$0xf]
        %v5149 = vld [vmem:[%s8 + $0x10] sm:$0xf]
        %v5150 = vld [vmem:[%s8 + $0x14] sm:$0xf]
        %v5151 = vld [vmem:[%s8 + $0x18] sm:$0xf]
        %v5152 = vpack.c.bf16 %v5132, %v5131
        %v5153 = vpack.c.bf16 %v5134, %v5133
        %v5154 = vpack.c.bf16 %v5136, %v5135
        %v5155 = vpack.c.bf16 %v5138, %v5137
        %v5156 = vpack.c.bf16 %v5140, %v5139
        %v5157 = vpack.c.bf16 %v5142, %v5141
        %v5158 = vpack.c.bf16 %v5144, %v5143
        %v5166 = vunpack.c.l.b16 %v5145
        %v5167 = vunpack.c.l.b16 %v5146
        %v5168 = vunpack.c.l.b16 %v5147
        %v5169 = vunpack.c.l.b16 %v5148
        %v5170 = vunpack.c.l.b16 %v5149
        %v5171 = vunpack.c.l.b16 %v5150
        %v5172 = vunpack.c.l.b16 %v5151
        %v5173 = vpack.c.b16 %v5167, %v5166
        %v5174 = vpack.c.b16 %v5169, %v5168
        %v5175 = vpack.c.b16 %v5171, %v5170
        %v5176 = vpack.c.b16 %v5172, %v5172
        %vm5177 = vcmask 908288
        %v5179 = vsel %vm5177, %v5173, 0
        %v5182 = vsel %vm5177, %v5174, 0
        %v5185 = vsel %vm5177, %v5175, 0
        %v5188 = vsel %vm5177, %v5176, 0
        %vm5190 = vcmask 1047552
        %v5191 = vsel %vm3443, 4294967295, 65535
        %v5192 = vsel %vm5190, %v5191, 0
        %v5194 = vand.u32 %v5158, %v5192
        %5196 = vmatpush.bf16.msra.mxu0 0
        %5197 = vmatpush.bf16.msra.mxu0 %v5194
        %5198 = vmatpush.bf16.msra.mxu0 %v5157
        %5199 = vmatpush.bf16.msra.mxu0 %v5156
        %5200 = vmatpush.bf16.msra.mxu0 %v5155
        %5201 = vmatpush.bf16.msra.mxu0 %v5154
        %5202 = vmatpush.bf16.msra.mxu0 %v5153
        %5203 = vmatpush.bf16.msra.mxu0 %v5152
        %5204 = vmatmul.bf16.gmra.mxu0 %v5179
        %v5205 = vpop.f32.mrf.mxu0
        %v5206 = vadd.f32 0.0, %v5205
        %v5207 = vpop.f32.mrf.mxu0
        %v5208 = vadd.f32 0.0, %v5207
        %5209 = vmatmul.bf16.gmra.mxu0 %v5182
        %v5210 = vpop.f32.mrf.mxu0
        %v5211 = vadd.f32 0.0, %v5210
        %v5212 = vpop.f32.mrf.mxu0
        %v5213 = vadd.f32 0.0, %v5212
        %5214 = vmatmul.bf16.gmra.mxu0 %v5185
        %v5215 = vpop.f32.mrf.mxu0
        %v5216 = vadd.f32 0.0, %v5215
        %v5217 = vpop.f32.mrf.mxu0
        %v5218 = vadd.f32 0.0, %v5217
        %5219 = vmatmul.bf16.gmra.mxu0 %v5188
        %v5220 = vpop.f32.mrf.mxu0
        %v5221 = vadd.f32 0.0, %v5220
        %v5222 = vpop.f32.mrf.mxu0
        %5223 = vdwg.mxu0
        %v5224 = vpack.c.bf16 %v5206, %v5206
        %v5225 = vpack.c.bf16 %v5208, %v5208
        %v5226 = vpack.c.bf16 %v5211, %v5211
        %v5227 = vpack.c.bf16 %v5213, %v5213
        %v5228 = vpack.c.bf16 %v5216, %v5216
        %v5229 = vpack.c.bf16 %v5218, %v5218
        %v5230 = vpack.c.bf16 %v5221, %v5221
        %v5231 = vld [vmem:[%s9] sm:$0xff]
        %v5232 = vld [vmem:[%s9 + $0x8] sm:$0xff]
        %v5233 = vld [vmem:[%s9 + $0x10] sm:$0xff]
        %v5234 = vld [vmem:[%s9 + $0x18] sm:$0xff]
        %v5235 = vld [vmem:[%s9 + $0x20] sm:$0xff]
        %v5236 = vld [vmem:[%s9 + $0x28] sm:$0xff]
        %v5237 = vld [vmem:[%s9 + $0x30] sm:$0xff]
        %v5238 = vld [vmem:[%s9 + $0x38] sm:$0xff]
        %s5239 = scalar_lea.vmem %s9, 64
        %v5240 = vld [vmem:[%s5239] sm:$0xff]
        %v5241 = vld [vmem:[%s5239 + $0x8] sm:$0xff]
        %v5242 = vld [vmem:[%s5239 + $0x10] sm:$0xff]
        %v5243 = vld [vmem:[%s5239 + $0x18] sm:$0xff]
        %v5244 = vld [vmem:[%s5239 + $0x20] sm:$0xff]
        %v5245 = vld [vmem:[%s5239 + $0x28] sm:$0xff]
        %v5246 = vld [vmem:[%s5239 + $0x30] sm:$0xff]
        %v5247 = vld [vmem:[%s5239 + $0x38] sm:$0xff]
        %v5253 = vunpack.c.l.b16 %v5224
        %v5254 = vunpack.c.l.b16 %v5225
        %v5255 = vunpack.c.l.b16 %v5226
        %v5256 = vunpack.c.l.b16 %v5227
        %v5257 = vunpack.c.l.b16 %v5228
        %v5258 = vpack.c.b16 %v5254, %v5253
        %v5259 = vpack.c.b16 %v5256, %v5255
        %v5260 = vpack.c.b16 %v5257, %v5257
        %v5262 = vshrl.u32 %v5258, 16
        %v5264 = vshll.u32 %v5258, 16
        %v5266 = vrot.slane %v5264, 1
        %v5267 = vor.u32 %v5262, %v5266
        %v5269 = vshll.u32 %v5259, 16
        %v5271 = vrot.slane %v5269, 1
        %v5272 = vsel %vm674, %v5267, %v5271
        %v5273 = vshrl.u32 %v5259, 16
        %v5275 = vor.u32 %v5273, %v5271
        %v5277 = vshll.u32 %v5260, 16
        %v5279 = vrot.slane %v5277, 1
        %v5280 = vsel %vm674, %v5275, %v5279
        %v5289 = vunpack.c.l.b16 %v5240
        %v5290 = vunpack.c.h.b16 %v5240
        %v5291 = vunpack.c.l.b16 %v5241
        %v5292 = vunpack.c.h.b16 %v5241
        %v5293 = vunpack.c.l.b16 %v5242
        %v5294 = vunpack.c.h.b16 %v5242
        %v5295 = vunpack.c.l.b16 %v5243
        %v5296 = vunpack.c.h.b16 %v5243
        %v5297 = vunpack.c.l.b16 %v5244
        %v5298 = vunpack.c.h.b16 %v5244
        %v5299 = vunpack.c.l.b16 %v5245
        %v5300 = vunpack.c.h.b16 %v5245
        %v5301 = vunpack.c.l.b16 %v5246
        %v5302 = vunpack.c.h.b16 %v5246
        %v5303 = vunpack.c.l.b16 %v5247
        %v5304 = vunpack.c.h.b16 %v5247
        %v5305 = vpack.c.b16 %v5293, %v5289
        %v5306 = vpack.c.b16 %v5294, %v5290
        %v5307 = vpack.c.b16 %v5295, %v5291
        %v5308 = vpack.c.b16 %v5296, %v5292
        %v5309 = vpack.c.b16 %v5301, %v5297
        %v5310 = vpack.c.b16 %v5302, %v5298
        %v5311 = vpack.c.b16 %v5303, %v5299
        %v5312 = vpack.c.b16 %v5304, %v5300
        %vm5321 = vcmask 261120
        %v5323 = vsel %vm5321, %v5272, 0
        %v5326 = vsel %vm5321, %v5280, 0
        %5328 = vmatpush.bf16.msra.mxu0 0
        %5329 = vmatpush.bf16.msra.mxu0 0
        %5330 = vmatpush.bf16.msra.mxu0 0
        %5331 = vmatpush.bf16.msra.mxu0 0
        %5332 = vmatpush.bf16.msra.mxu0 0
        %5333 = vmatpush.bf16.msra.mxu0 0
        %5334 = vmatpush.bf16.msra.mxu0 %v5309
        %5335 = vmatpush.bf16.msra.mxu0 %v5305
        %5336 = vmatmul.bf16.gmra.mxu0 %v5323
        %v5337 = vpop.f32.mrf.mxu0
        %v5338 = vadd.f32 0.0, %v5337
        %v5339 = vpop.f32.mrf.mxu0
        %v5340 = vadd.f32 0.0, %v5339
        %5341 = vmatmul.bf16.gmra.mxu0 %v5326
        %v5342 = vpop.f32.mrf.mxu0
        %v5343 = vadd.f32 0.0, %v5342
        %v5344 = vpop.f32.mrf.mxu0
        %v5345 = vadd.f32 0.0, %v5344
        %5346 = vdwg.mxu0
        %5347 = vmatpush.bf16.msra.mxu0 0
        %5348 = vmatpush.bf16.msra.mxu0 0
        %5349 = vmatpush.bf16.msra.mxu0 0
        %5350 = vmatpush.bf16.msra.mxu0 0
        %5351 = vmatpush.bf16.msra.mxu0 0
        %5352 = vmatpush.bf16.msra.mxu0 0
        %5353 = vmatpush.bf16.msra.mxu0 %v5310
        %5354 = vmatpush.bf16.msra.mxu0 %v5306
        %5355 = vmatmul.bf16.gmra.mxu0 %v5323
        %v5356 = vpop.f32.mrf.mxu0
        %v5357 = vadd.f32 0.0, %v5356
        %v5358 = vpop.f32.mrf.mxu0
        %v5359 = vadd.f32 0.0, %v5358
        %5360 = vmatmul.bf16.gmra.mxu0 %v5326
        %v5361 = vpop.f32.mrf.mxu0
        %v5362 = vadd.f32 0.0, %v5361
        %v5363 = vpop.f32.mrf.mxu0
        %v5364 = vadd.f32 0.0, %v5363
        %5365 = vdwg.mxu0
        %5366 = vmatpush.bf16.msra.mxu0 0
        %5367 = vmatpush.bf16.msra.mxu0 0
        %5368 = vmatpush.bf16.msra.mxu0 0
        %5369 = vmatpush.bf16.msra.mxu0 0
        %5370 = vmatpush.bf16.msra.mxu0 0
        %5371 = vmatpush.bf16.msra.mxu0 0
        %5372 = vmatpush.bf16.msra.mxu0 %v5311
        %5373 = vmatpush.bf16.msra.mxu0 %v5307
        %5374 = vmatmul.bf16.gmra.mxu0 %v5323
        %v5375 = vpop.f32.mrf.mxu0
        %v5376 = vadd.f32 0.0, %v5375
        %v5377 = vpop.f32.mrf.mxu0
        %v5378 = vadd.f32 0.0, %v5377
        %5379 = vmatmul.bf16.gmra.mxu0 %v5326
        %v5380 = vpop.f32.mrf.mxu0
        %v5381 = vadd.f32 0.0, %v5380
        %v5382 = vpop.f32.mrf.mxu0
        %v5383 = vadd.f32 0.0, %v5382
        %5384 = vdwg.mxu0
        %5385 = vmatpush.bf16.msra.mxu0 0
        %5386 = vmatpush.bf16.msra.mxu0 0
        %5387 = vmatpush.bf16.msra.mxu0 0
        %5388 = vmatpush.bf16.msra.mxu0 0
        %5389 = vmatpush.bf16.msra.mxu0 0
        %5390 = vmatpush.bf16.msra.mxu0 0
        %5391 = vmatpush.bf16.msra.mxu0 %v5312
        %5392 = vmatpush.bf16.msra.mxu0 %v5308
        %5393 = vmatmul.bf16.gmra.mxu0 %v5323
        %v5394 = vpop.f32.mrf.mxu0
        %v5395 = vadd.f32 0.0, %v5394
        %v5396 = vpop.f32.mrf.mxu0
        %v5397 = vadd.f32 0.0, %v5396
        %5398 = vmatmul.bf16.gmra.mxu0 %v5326
        %v5399 = vpop.f32.mrf.mxu0
        %v5400 = vadd.f32 0.0, %v5399
        %v5401 = vpop.f32.mrf.mxu0
        %v5402 = vadd.f32 0.0, %v5401
        %5403 = vdwg.mxu0
        %v5412 = vunpack.c.l.b16 %v5231
        %v5413 = vunpack.c.h.b16 %v5231
        %v5414 = vunpack.c.l.b16 %v5232
        %v5415 = vunpack.c.h.b16 %v5232
        %v5416 = vunpack.c.l.b16 %v5233
        %v5417 = vunpack.c.h.b16 %v5233
        %v5418 = vunpack.c.l.b16 %v5234
        %v5419 = vunpack.c.h.b16 %v5234
        %v5420 = vunpack.c.l.b16 %v5235
        %v5421 = vunpack.c.h.b16 %v5235
        %v5422 = vunpack.c.l.b16 %v5236
        %v5423 = vunpack.c.h.b16 %v5236
        %v5424 = vunpack.c.l.b16 %v5237
        %v5425 = vunpack.c.h.b16 %v5237
        %v5426 = vunpack.c.l.b16 %v5238
        %v5427 = vunpack.c.h.b16 %v5238
        %v5428 = vpack.c.b16 %v5416, %v5412
        %v5429 = vpack.c.b16 %v5417, %v5413
        %v5430 = vpack.c.b16 %v5418, %v5414
        %v5431 = vpack.c.b16 %v5419, %v5415
        %v5432 = vpack.c.b16 %v5424, %v5420
        %v5433 = vpack.c.b16 %v5425, %v5421
        %v5434 = vpack.c.b16 %v5426, %v5422
        %v5435 = vpack.c.b16 %v5427, %v5423
        %v5444 = vsel %vm5321, %v5258, 0
        %v5446 = vsel %vm5321, %v5259, 0
        %5448 = vmatpush.bf16.msra.mxu0 0
        %5449 = vmatpush.bf16.msra.mxu0 0
        %5450 = vmatpush.bf16.msra.mxu0 0
        %5451 = vmatpush.bf16.msra.mxu0 0
        %5452 = vmatpush.bf16.msra.mxu0 0
        %5453 = vmatpush.bf16.msra.mxu0 0
        %5454 = vmatpush.bf16.msra.mxu0 %v5432
        %5455 = vmatpush.bf16.msra.mxu0 %v5428
        %5456 = vmatmul.bf16.gmra.mxu0 %v5444
        %v5457 = vpop.f32.mrf.mxu0
        %v5458 = vadd.f32 %v5338, %v5457
        %v5459 = vpop.f32.mrf.mxu0
        %v5460 = vadd.f32 %v5340, %v5459
        %5461 = vmatmul.bf16.gmra.mxu0 %v5446
        %v5462 = vpop.f32.mrf.mxu0
        %v5463 = vadd.f32 %v5343, %v5462
        %v5464 = vpop.f32.mrf.mxu0
        %v5465 = vadd.f32 %v5345, %v5464
        %5466 = vdwg.mxu0
        %5467 = vmatpush.bf16.msra.mxu0 0
        %5468 = vmatpush.bf16.msra.mxu0 0
        %5469 = vmatpush.bf16.msra.mxu0 0
        %5470 = vmatpush.bf16.msra.mxu0 0
        %5471 = vmatpush.bf16.msra.mxu0 0
        %5472 = vmatpush.bf16.msra.mxu0 0
        %5473 = vmatpush.bf16.msra.mxu0 %v5433
        %5474 = vmatpush.bf16.msra.mxu0 %v5429
        %5475 = vmatmul.bf16.gmra.mxu0 %v5444
        %v5476 = vpop.f32.mrf.mxu0
        %v5477 = vadd.f32 %v5357, %v5476
        %v5478 = vpop.f32.mrf.mxu0
        %v5479 = vadd.f32 %v5359, %v5478
        %5480 = vmatmul.bf16.gmra.mxu0 %v5446
        %v5481 = vpop.f32.mrf.mxu0
        %v5482 = vadd.f32 %v5362, %v5481
        %v5483 = vpop.f32.mrf.mxu0
        %v5484 = vadd.f32 %v5364, %v5483
        %5485 = vdwg.mxu0
        %5486 = vmatpush.bf16.msra.mxu0 0
        %5487 = vmatpush.bf16.msra.mxu0 0
        %5488 = vmatpush.bf16.msra.mxu0 0
        %5489 = vmatpush.bf16.msra.mxu0 0
        %5490 = vmatpush.bf16.msra.mxu0 0
        %5491 = vmatpush.bf16.msra.mxu0 0
        %5492 = vmatpush.bf16.msra.mxu0 %v5434
        %5493 = vmatpush.bf16.msra.mxu0 %v5430
        %5494 = vmatmul.bf16.gmra.mxu0 %v5444
        %v5495 = vpop.f32.mrf.mxu0
        %v5496 = vadd.f32 %v5376, %v5495
        %v5497 = vpop.f32.mrf.mxu0
        %v5498 = vadd.f32 %v5378, %v5497
        %5499 = vmatmul.bf16.gmra.mxu0 %v5446
        %v5500 = vpop.f32.mrf.mxu0
        %v5501 = vadd.f32 %v5381, %v5500
        %v5502 = vpop.f32.mrf.mxu0
        %v5503 = vadd.f32 %v5383, %v5502
        %5504 = vdwg.mxu0
        %5505 = vmatpush.bf16.msra.mxu0 0
        %5506 = vmatpush.bf16.msra.mxu0 0
        %5507 = vmatpush.bf16.msra.mxu0 0
        %5508 = vmatpush.bf16.msra.mxu0 0
        %5509 = vmatpush.bf16.msra.mxu0 0
        %5510 = vmatpush.bf16.msra.mxu0 0
        %5511 = vmatpush.bf16.msra.mxu0 %v5435
        %5512 = vmatpush.bf16.msra.mxu0 %v5431
        %5513 = vmatmul.bf16.gmra.mxu0 %v5444
        %v5514 = vpop.f32.mrf.mxu0
        %v5515 = vadd.f32 %v5395, %v5514
        %v5516 = vpop.f32.mrf.mxu0
        %v5517 = vadd.f32 %v5397, %v5516
        %5518 = vmatmul.bf16.gmra.mxu0 %v5446
        %v5519 = vpop.f32.mrf.mxu0
        %v5520 = vadd.f32 %v5400, %v5519
        %v5521 = vpop.f32.mrf.mxu0
        %v5522 = vadd.f32 %v5402, %v5521
        %5523 = vdwg.mxu0
        %s5524 = scalar_lea.vmem %s9, 128
        %v5525 = vld [vmem:[%s5524] sm:$0xff]
        %v5526 = vld [vmem:[%s5524 + $0x8] sm:$0xff]
        %v5527 = vld [vmem:[%s5524 + $0x10] sm:$0xff]
        %v5528 = vld [vmem:[%s5524 + $0x18] sm:$0xff]
        %v5529 = vld [vmem:[%s5524 + $0x20] sm:$0xff]
        %v5530 = vld [vmem:[%s5524 + $0x28] sm:$0xff]
        %v5531 = vld [vmem:[%s5524 + $0x30] sm:$0xff]
        %v5532 = vld [vmem:[%s5524 + $0x38] sm:$0xff]
        %v5533 = vrot.slane %v5258, 1
        %v5534 = vrot.slane %v5259, 1
        %v5535 = vsel %vm1262, %v5533, %v5534
        %v5536 = vrot.slane %v5260, 1
        %v5537 = vsel %vm1262, %v5534, %v5536
        %v5546 = vunpack.c.l.b16 %v5525
        %v5547 = vunpack.c.h.b16 %v5525
        %v5548 = vunpack.c.l.b16 %v5526
        %v5549 = vunpack.c.h.b16 %v5526
        %v5550 = vunpack.c.l.b16 %v5527
        %v5551 = vunpack.c.h.b16 %v5527
        %v5552 = vunpack.c.l.b16 %v5528
        %v5553 = vunpack.c.h.b16 %v5528
        %v5554 = vunpack.c.l.b16 %v5529
        %v5555 = vunpack.c.h.b16 %v5529
        %v5556 = vunpack.c.l.b16 %v5530
        %v5557 = vunpack.c.h.b16 %v5530
        %v5558 = vunpack.c.l.b16 %v5531
        %v5559 = vunpack.c.h.b16 %v5531
        %v5560 = vunpack.c.l.b16 %v5532
        %v5561 = vunpack.c.h.b16 %v5532
        %v5562 = vpack.c.b16 %v5550, %v5546
        %v5563 = vpack.c.b16 %v5551, %v5547
        %v5564 = vpack.c.b16 %v5552, %v5548
        %v5565 = vpack.c.b16 %v5553, %v5549
        %v5566 = vpack.c.b16 %v5558, %v5554
        %v5567 = vpack.c.b16 %v5559, %v5555
        %v5568 = vpack.c.b16 %v5560, %v5556
        %v5569 = vpack.c.b16 %v5561, %v5557
        %v5579 = vsel %vm5321, %v5535, 0
        %v5582 = vsel %vm5321, %v5537, 0
        %5584 = vmatpush.bf16.msra.mxu0 0
        %5585 = vmatpush.bf16.msra.mxu0 0
        %5586 = vmatpush.bf16.msra.mxu0 0
        %5587 = vmatpush.bf16.msra.mxu0 0
        %5588 = vmatpush.bf16.msra.mxu0 0
        %5589 = vmatpush.bf16.msra.mxu0 0
        %5590 = vmatpush.bf16.msra.mxu0 %v5566
        %5591 = vmatpush.bf16.msra.mxu0 %v5562
        %5592 = vmatmul.bf16.gmra.mxu0 %v5579
        %v5593 = vpop.f32.mrf.mxu0
        %v5594 = vadd.f32 0.0, %v5593
        %v5595 = vpop.f32.mrf.mxu0
        %v5596 = vadd.f32 0.0, %v5595
        %5597 = vmatmul.bf16.gmra.mxu0 %v5582
        %v5598 = vpop.f32.mrf.mxu0
        %v5599 = vadd.f32 0.0, %v5598
        %v5600 = vpop.f32.mrf.mxu0
        %v5601 = vadd.f32 0.0, %v5600
        %5602 = vdwg.mxu0
        %5603 = vmatpush.bf16.msra.mxu0 0
        %5604 = vmatpush.bf16.msra.mxu0 0
        %5605 = vmatpush.bf16.msra.mxu0 0
        %5606 = vmatpush.bf16.msra.mxu0 0
        %5607 = vmatpush.bf16.msra.mxu0 0
        %5608 = vmatpush.bf16.msra.mxu0 0
        %5609 = vmatpush.bf16.msra.mxu0 %v5567
        %5610 = vmatpush.bf16.msra.mxu0 %v5563
        %5611 = vmatmul.bf16.gmra.mxu0 %v5579
        %v5612 = vpop.f32.mrf.mxu0
        %v5613 = vadd.f32 0.0, %v5612
        %v5614 = vpop.f32.mrf.mxu0
        %v5615 = vadd.f32 0.0, %v5614
        %5616 = vmatmul.bf16.gmra.mxu0 %v5582
        %v5617 = vpop.f32.mrf.mxu0
        %v5618 = vadd.f32 0.0, %v5617
        %v5619 = vpop.f32.mrf.mxu0
        %v5620 = vadd.f32 0.0, %v5619
        %5621 = vdwg.mxu0
        %5622 = vmatpush.bf16.msra.mxu0 0
        %5623 = vmatpush.bf16.msra.mxu0 0
        %5624 = vmatpush.bf16.msra.mxu0 0
        %5625 = vmatpush.bf16.msra.mxu0 0
        %5626 = vmatpush.bf16.msra.mxu0 0
        %5627 = vmatpush.bf16.msra.mxu0 0
        %5628 = vmatpush.bf16.msra.mxu0 %v5568
        %5629 = vmatpush.bf16.msra.mxu0 %v5564
        %5630 = vmatmul.bf16.gmra.mxu0 %v5579
        %v5631 = vpop.f32.mrf.mxu0
        %v5632 = vadd.f32 0.0, %v5631
        %v5633 = vpop.f32.mrf.mxu0
        %v5634 = vadd.f32 0.0, %v5633
        %5635 = vmatmul.bf16.gmra.mxu0 %v5582
        %v5636 = vpop.f32.mrf.mxu0
        %v5637 = vadd.f32 0.0, %v5636
        %v5638 = vpop.f32.mrf.mxu0
        %v5639 = vadd.f32 0.0, %v5638
        %5640 = vdwg.mxu0
        %5641 = vmatpush.bf16.msra.mxu0 0
        %5642 = vmatpush.bf16.msra.mxu0 0
        %5643 = vmatpush.bf16.msra.mxu0 0
        %5644 = vmatpush.bf16.msra.mxu0 0
        %5645 = vmatpush.bf16.msra.mxu0 0
        %5646 = vmatpush.bf16.msra.mxu0 0
        %5647 = vmatpush.bf16.msra.mxu0 %v5569
        %5648 = vmatpush.bf16.msra.mxu0 %v5565
        %5649 = vmatmul.bf16.gmra.mxu0 %v5579
        %v5650 = vpop.f32.mrf.mxu0
        %v5651 = vadd.f32 0.0, %v5650
        %v5652 = vpop.f32.mrf.mxu0
        %v5653 = vadd.f32 0.0, %v5652
        %5654 = vmatmul.bf16.gmra.mxu0 %v5582
        %v5655 = vpop.f32.mrf.mxu0
        %v5656 = vadd.f32 0.0, %v5655
        %v5657 = vpop.f32.mrf.mxu0
        %v5658 = vadd.f32 0.0, %v5657
        %5659 = vdwg.mxu0
        %v5660 = vadd.f32 %v5458, %v5594
        %v5661 = vadd.f32 %v5477, %v5613
        %v5662 = vadd.f32 %v5496, %v5632
        %v5663 = vadd.f32 %v5515, %v5651
        %v5664 = vadd.f32 %v5460, %v5596
        %v5665 = vadd.f32 %v5479, %v5615
        %v5666 = vadd.f32 %v5498, %v5634
        %v5667 = vadd.f32 %v5517, %v5653
        %v5668 = vadd.f32 %v5463, %v5599
        %v5669 = vadd.f32 %v5482, %v5618
        %v5670 = vadd.f32 %v5501, %v5637
        %v5671 = vadd.f32 %v5520, %v5656
        %v5672 = vadd.f32 %v5465, %v5601
        %v5673 = vadd.f32 %v5484, %v5620
        %v5674 = vadd.f32 %v5503, %v5639
        %v5675 = vadd.f32 %v5522, %v5658
        %s5676 = scalar_lea.vmem %s9, 192
        %v5677 = vld [vmem:[%s5676] sm:$0xff]
        %v5678 = vld [vmem:[%s5676 + $0x8] sm:$0xff]
        %v5679 = vld [vmem:[%s5676 + $0x10] sm:$0xff]
        %v5680 = vld [vmem:[%s5676 + $0x18] sm:$0xff]
        %v5681 = vld [vmem:[%s5676 + $0x20] sm:$0xff]
        %v5682 = vld [vmem:[%s5676 + $0x28] sm:$0xff]
        %v5683 = vld [vmem:[%s5676 + $0x30] sm:$0xff]
        %v5684 = vld [vmem:[%s5676 + $0x38] sm:$0xff]
        %v5685 = vpack.c.b16 %v5255, %v5254
        %v5686 = vpack.c.b16 %v5257, %v5256
        %v5695 = vunpack.c.l.b16 %v5677
        %v5696 = vunpack.c.h.b16 %v5677
        %v5697 = vunpack.c.l.b16 %v5678
        %v5698 = vunpack.c.h.b16 %v5678
        %v5699 = vunpack.c.l.b16 %v5679
        %v5700 = vunpack.c.h.b16 %v5679
        %v5701 = vunpack.c.l.b16 %v5680
        %v5702 = vunpack.c.h.b16 %v5680
        %v5703 = vunpack.c.l.b16 %v5681
        %v5704 = vunpack.c.h.b16 %v5681
        %v5705 = vunpack.c.l.b16 %v5682
        %v5706 = vunpack.c.h.b16 %v5682
        %v5707 = vunpack.c.l.b16 %v5683
        %v5708 = vunpack.c.h.b16 %v5683
        %v5709 = vunpack.c.l.b16 %v5684
        %v5710 = vunpack.c.h.b16 %v5684
        %v5711 = vpack.c.b16 %v5699, %v5695
        %v5712 = vpack.c.b16 %v5700, %v5696
        %v5713 = vpack.c.b16 %v5701, %v5697
        %v5714 = vpack.c.b16 %v5702, %v5698
        %v5715 = vpack.c.b16 %v5707, %v5703
        %v5716 = vpack.c.b16 %v5708, %v5704
        %v5717 = vpack.c.b16 %v5709, %v5705
        %v5718 = vpack.c.b16 %v5710, %v5706
        %v5728 = vsel %vm5321, %v5685, 0
        %v5731 = vsel %vm5321, %v5686, 0
        %5733 = vmatpush.bf16.msra.mxu0 0
        %5734 = vmatpush.bf16.msra.mxu0 0
        %5735 = vmatpush.bf16.msra.mxu0 0
        %5736 = vmatpush.bf16.msra.mxu0 0
        %5737 = vmatpush.bf16.msra.mxu0 0
        %5738 = vmatpush.bf16.msra.mxu0 0
        %5739 = vmatpush.bf16.msra.mxu0 %v5715
        %5740 = vmatpush.bf16.msra.mxu0 %v5711
        %5741 = vmatmul.bf16.gmra.mxu0 %v5728
        %v5742 = vpop.f32.mrf.mxu0
        %v5743 = vadd.f32 0.0, %v5742
        %v5744 = vpop.f32.mrf.mxu0
        %v5745 = vadd.f32 0.0, %v5744
        %5746 = vmatmul.bf16.gmra.mxu0 %v5731
        %v5747 = vpop.f32.mrf.mxu0
        %v5748 = vadd.f32 0.0, %v5747
        %v5749 = vpop.f32.mrf.mxu0
        %v5750 = vadd.f32 0.0, %v5749
        %5751 = vdwg.mxu0
        %5752 = vmatpush.bf16.msra.mxu0 0
        %5753 = vmatpush.bf16.msra.mxu0 0
        %5754 = vmatpush.bf16.msra.mxu0 0
        %5755 = vmatpush.bf16.msra.mxu0 0
        %5756 = vmatpush.bf16.msra.mxu0 0
        %5757 = vmatpush.bf16.msra.mxu0 0
        %5758 = vmatpush.bf16.msra.mxu0 %v5716
        %5759 = vmatpush.bf16.msra.mxu0 %v5712
        %5760 = vmatmul.bf16.gmra.mxu0 %v5728
        %v5761 = vpop.f32.mrf.mxu0
        %v5762 = vadd.f32 0.0, %v5761
        %v5763 = vpop.f32.mrf.mxu0
        %v5764 = vadd.f32 0.0, %v5763
        %5765 = vmatmul.bf16.gmra.mxu0 %v5731
        %v5766 = vpop.f32.mrf.mxu0
        %v5767 = vadd.f32 0.0, %v5766
        %v5768 = vpop.f32.mrf.mxu0
        %v5769 = vadd.f32 0.0, %v5768
        %5770 = vdwg.mxu0
        %5771 = vmatpush.bf16.msra.mxu0 0
        %5772 = vmatpush.bf16.msra.mxu0 0
        %5773 = vmatpush.bf16.msra.mxu0 0
        %5774 = vmatpush.bf16.msra.mxu0 0
        %5775 = vmatpush.bf16.msra.mxu0 0
        %5776 = vmatpush.bf16.msra.mxu0 0
        %5777 = vmatpush.bf16.msra.mxu0 %v5717
        %5778 = vmatpush.bf16.msra.mxu0 %v5713
        %5779 = vmatmul.bf16.gmra.mxu0 %v5728
        %v5780 = vpop.f32.mrf.mxu0
        %v5781 = vadd.f32 0.0, %v5780
        %v5782 = vpop.f32.mrf.mxu0
        %v5783 = vadd.f32 0.0, %v5782
        %5784 = vmatmul.bf16.gmra.mxu0 %v5731
        %v5785 = vpop.f32.mrf.mxu0
        %v5786 = vadd.f32 0.0, %v5785
        %v5787 = vpop.f32.mrf.mxu0
        %v5788 = vadd.f32 0.0, %v5787
        %5789 = vdwg.mxu0
        %5790 = vmatpush.bf16.msra.mxu0 0
        %5791 = vmatpush.bf16.msra.mxu0 0
        %5792 = vmatpush.bf16.msra.mxu0 0
        %5793 = vmatpush.bf16.msra.mxu0 0
        %5794 = vmatpush.bf16.msra.mxu0 0
        %5795 = vmatpush.bf16.msra.mxu0 0
        %5796 = vmatpush.bf16.msra.mxu0 %v5718
        %5797 = vmatpush.bf16.msra.mxu0 %v5714
        %5798 = vmatmul.bf16.gmra.mxu0 %v5728
        %v5799 = vpop.f32.mrf.mxu0
        %v5800 = vadd.f32 0.0, %v5799
        %v5801 = vpop.f32.mrf.mxu0
        %v5802 = vadd.f32 0.0, %v5801
        %5803 = vmatmul.bf16.gmra.mxu0 %v5731
        %v5804 = vpop.f32.mrf.mxu0
        %v5805 = vadd.f32 0.0, %v5804
        %v5806 = vpop.f32.mrf.mxu0
        %v5807 = vadd.f32 0.0, %v5806
        %5808 = vdwg.mxu0
        %v5809 = vadd.f32 %v5660, %v5743
        %v5810 = vadd.f32 %v5661, %v5762
        %v5811 = vadd.f32 %v5662, %v5781
        %v5812 = vadd.f32 %v5663, %v5800
        %v5813 = vadd.f32 %v5664, %v5745
        %v5814 = vadd.f32 %v5665, %v5764
        %v5815 = vadd.f32 %v5666, %v5783
        %v5816 = vadd.f32 %v5667, %v5802
        %v5817 = vadd.f32 %v5668, %v5748
        %v5818 = vadd.f32 %v5669, %v5767
        %v5819 = vadd.f32 %v5670, %v5786
        %v5820 = vadd.f32 %v5671, %v5805
        %v5821 = vadd.f32 %v5672, %v5750
        %v5822 = vadd.f32 %v5673, %v5769
        %v5823 = vadd.f32 %v5674, %v5788
        %v5824 = vadd.f32 %v5675, %v5807
        %s5825 = scalar_lea.vmem %s9, 256
        %v5826 = vld [vmem:[%s5825] sm:$0xff]
        %v5827 = vld [vmem:[%s5825 + $0x8] sm:$0xff]
        %v5828 = vld [vmem:[%s5825 + $0x10] sm:$0xff]
        %v5829 = vld [vmem:[%s5825 + $0x18] sm:$0xff]
        %v5830 = vld [vmem:[%s5825 + $0x20] sm:$0xff]
        %v5831 = vld [vmem:[%s5825 + $0x28] sm:$0xff]
        %v5832 = vld [vmem:[%s5825 + $0x30] sm:$0xff]
        %v5833 = vld [vmem:[%s5825 + $0x38] sm:$0xff]
        %v5835 = vunpack.c.l.b16 %v5229
        %v5836 = vpack.c.b16 %v5835, %v5835
        %v5837 = vshrl.u32 %v5685, 16
        %v5839 = vshll.u32 %v5685, 16
        %v5841 = vrot.slane %v5839, 1
        %v5842 = vor.u32 %v5837, %v5841
        %v5843 = vshll.u32 %v5686, 16
        %v5845 = vrot.slane %v5843, 1
        %v5846 = vsel %vm674, %v5842, %v5845
        %v5847 = vshrl.u32 %v5686, 16
        %v5849 = vor.u32 %v5847, %v5845
        %v5851 = vshll.u32 %v5836, 16
        %v5853 = vrot.slane %v5851, 1
        %v5854 = vsel %vm674, %v5849, %v5853
        %v5863 = vunpack.c.l.b16 %v5826
        %v5864 = vunpack.c.h.b16 %v5826
        %v5865 = vunpack.c.l.b16 %v5827
        %v5866 = vunpack.c.h.b16 %v5827
        %v5867 = vunpack.c.l.b16 %v5828
        %v5868 = vunpack.c.h.b16 %v5828
        %v5869 = vunpack.c.l.b16 %v5829
        %v5870 = vunpack.c.h.b16 %v5829
        %v5871 = vunpack.c.l.b16 %v5830
        %v5872 = vunpack.c.h.b16 %v5830
        %v5873 = vunpack.c.l.b16 %v5831
        %v5874 = vunpack.c.h.b16 %v5831
        %v5875 = vunpack.c.l.b16 %v5832
        %v5876 = vunpack.c.h.b16 %v5832
        %v5877 = vunpack.c.l.b16 %v5833
        %v5878 = vunpack.c.h.b16 %v5833
        %v5879 = vpack.c.b16 %v5867, %v5863
        %v5880 = vpack.c.b16 %v5868, %v5864
        %v5881 = vpack.c.b16 %v5869, %v5865
        %v5882 = vpack.c.b16 %v5870, %v5866
        %v5883 = vpack.c.b16 %v5875, %v5871
        %v5884 = vpack.c.b16 %v5876, %v5872
        %v5885 = vpack.c.b16 %v5877, %v5873
        %v5886 = vpack.c.b16 %v5878, %v5874
        %v5896 = vsel %vm5321, %v5846, 0
        %v5899 = vsel %vm5321, %v5854, 0
        %5901 = vmatpush.bf16.msra.mxu0 0
        %5902 = vmatpush.bf16.msra.mxu0 0
        %5903 = vmatpush.bf16.msra.mxu0 0
        %5904 = vmatpush.bf16.msra.mxu0 0
        %5905 = vmatpush.bf16.msra.mxu0 0
        %5906 = vmatpush.bf16.msra.mxu0 0
        %5907 = vmatpush.bf16.msra.mxu0 %v5883
        %5908 = vmatpush.bf16.msra.mxu0 %v5879
        %5909 = vmatmul.bf16.gmra.mxu0 %v5896
        %v5910 = vpop.f32.mrf.mxu0
        %v5911 = vadd.f32 0.0, %v5910
        %v5912 = vpop.f32.mrf.mxu0
        %v5913 = vadd.f32 0.0, %v5912
        %5914 = vmatmul.bf16.gmra.mxu0 %v5899
        %v5915 = vpop.f32.mrf.mxu0
        %v5916 = vadd.f32 0.0, %v5915
        %v5917 = vpop.f32.mrf.mxu0
        %v5918 = vadd.f32 0.0, %v5917
        %5919 = vdwg.mxu0
        %5920 = vmatpush.bf16.msra.mxu0 0
        %5921 = vmatpush.bf16.msra.mxu0 0
        %5922 = vmatpush.bf16.msra.mxu0 0
        %5923 = vmatpush.bf16.msra.mxu0 0
        %5924 = vmatpush.bf16.msra.mxu0 0
        %5925 = vmatpush.bf16.msra.mxu0 0
        %5926 = vmatpush.bf16.msra.mxu0 %v5884
        %5927 = vmatpush.bf16.msra.mxu0 %v5880
        %5928 = vmatmul.bf16.gmra.mxu0 %v5896
        %v5929 = vpop.f32.mrf.mxu0
        %v5930 = vadd.f32 0.0, %v5929
        %v5931 = vpop.f32.mrf.mxu0
        %v5932 = vadd.f32 0.0, %v5931
        %5933 = vmatmul.bf16.gmra.mxu0 %v5899
        %v5934 = vpop.f32.mrf.mxu0
        %v5935 = vadd.f32 0.0, %v5934
        %v5936 = vpop.f32.mrf.mxu0
        %v5937 = vadd.f32 0.0, %v5936
        %5938 = vdwg.mxu0
        %5939 = vmatpush.bf16.msra.mxu0 0
        %5940 = vmatpush.bf16.msra.mxu0 0
        %5941 = vmatpush.bf16.msra.mxu0 0
        %5942 = vmatpush.bf16.msra.mxu0 0
        %5943 = vmatpush.bf16.msra.mxu0 0
        %5944 = vmatpush.bf16.msra.mxu0 0
        %5945 = vmatpush.bf16.msra.mxu0 %v5885
        %5946 = vmatpush.bf16.msra.mxu0 %v5881
        %5947 = vmatmul.bf16.gmra.mxu0 %v5896
        %v5948 = vpop.f32.mrf.mxu0
        %v5949 = vadd.f32 0.0, %v5948
        %v5950 = vpop.f32.mrf.mxu0
        %v5951 = vadd.f32 0.0, %v5950
        %5952 = vmatmul.bf16.gmra.mxu0 %v5899
        %v5953 = vpop.f32.mrf.mxu0
        %v5954 = vadd.f32 0.0, %v5953
        %v5955 = vpop.f32.mrf.mxu0
        %v5956 = vadd.f32 0.0, %v5955
        %5957 = vdwg.mxu0
        %5958 = vmatpush.bf16.msra.mxu0 0
        %5959 = vmatpush.bf16.msra.mxu0 0
        %5960 = vmatpush.bf16.msra.mxu0 0
        %5961 = vmatpush.bf16.msra.mxu0 0
        %5962 = vmatpush.bf16.msra.mxu0 0
        %5963 = vmatpush.bf16.msra.mxu0 0
        %5964 = vmatpush.bf16.msra.mxu0 %v5886
        %5965 = vmatpush.bf16.msra.mxu0 %v5882
        %5966 = vmatmul.bf16.gmra.mxu0 %v5896
        %v5967 = vpop.f32.mrf.mxu0
        %v5968 = vadd.f32 0.0, %v5967
        %v5969 = vpop.f32.mrf.mxu0
        %v5970 = vadd.f32 0.0, %v5969
        %5971 = vmatmul.bf16.gmra.mxu0 %v5899
        %v5972 = vpop.f32.mrf.mxu0
        %v5973 = vadd.f32 0.0, %v5972
        %v5974 = vpop.f32.mrf.mxu0
        %v5975 = vadd.f32 0.0, %v5974
        %5976 = vdwg.mxu0
        %v5977 = vadd.f32 %v5809, %v5911
        %v5978 = vadd.f32 %v5810, %v5930
        %v5979 = vadd.f32 %v5811, %v5949
        %v5980 = vadd.f32 %v5812, %v5968
        %v5981 = vadd.f32 %v5813, %v5913
        %v5982 = vadd.f32 %v5814, %v5932
        %v5983 = vadd.f32 %v5815, %v5951
        %v5984 = vadd.f32 %v5816, %v5970
        %v5985 = vadd.f32 %v5817, %v5916
        %v5986 = vadd.f32 %v5818, %v5935
        %v5987 = vadd.f32 %v5819, %v5954
        %v5988 = vadd.f32 %v5820, %v5973
        %v5989 = vadd.f32 %v5821, %v5918
        %v5990 = vadd.f32 %v5822, %v5937
        %v5991 = vadd.f32 %v5823, %v5956
        %v5992 = vadd.f32 %v5824, %v5975
        %s5993 = scalar_lea.vmem %s9, 320
        %v5994 = vld [vmem:[%s5993] sm:$0xff]
        %v5995 = vld [vmem:[%s5993 + $0x8] sm:$0xff]
        %v5996 = vld [vmem:[%s5993 + $0x10] sm:$0xff]
        %v5997 = vld [vmem:[%s5993 + $0x18] sm:$0xff]
        %v5998 = vld [vmem:[%s5993 + $0x20] sm:$0xff]
        %v5999 = vld [vmem:[%s5993 + $0x28] sm:$0xff]
        %v6000 = vld [vmem:[%s5993 + $0x30] sm:$0xff]
        %v6001 = vld [vmem:[%s5993 + $0x38] sm:$0xff]
        %v6002 = vrot.slane %v5685, 1
        %v6003 = vrot.slane %v5686, 1
        %v6004 = vsel %vm1262, %v6002, %v6003
        %v6005 = vrot.slane %v5836, 1
        %v6006 = vsel %vm1262, %v6003, %v6005
        %v6015 = vunpack.c.l.b16 %v5994
        %v6016 = vunpack.c.h.b16 %v5994
        %v6017 = vunpack.c.l.b16 %v5995
        %v6018 = vunpack.c.h.b16 %v5995
        %v6019 = vunpack.c.l.b16 %v5996
        %v6020 = vunpack.c.h.b16 %v5996
        %v6021 = vunpack.c.l.b16 %v5997
        %v6022 = vunpack.c.h.b16 %v5997
        %v6023 = vunpack.c.l.b16 %v5998
        %v6024 = vunpack.c.h.b16 %v5998
        %v6025 = vunpack.c.l.b16 %v5999
        %v6026 = vunpack.c.h.b16 %v5999
        %v6027 = vunpack.c.l.b16 %v6000
        %v6028 = vunpack.c.h.b16 %v6000
        %v6029 = vunpack.c.l.b16 %v6001
        %v6030 = vunpack.c.h.b16 %v6001
        %v6031 = vpack.c.b16 %v6019, %v6015
        %v6032 = vpack.c.b16 %v6020, %v6016
        %v6033 = vpack.c.b16 %v6021, %v6017
        %v6034 = vpack.c.b16 %v6022, %v6018
        %v6035 = vpack.c.b16 %v6027, %v6023
        %v6036 = vpack.c.b16 %v6028, %v6024
        %v6037 = vpack.c.b16 %v6029, %v6025
        %v6038 = vpack.c.b16 %v6030, %v6026
        %v6048 = vsel %vm5321, %v6004, 0
        %v6051 = vsel %vm5321, %v6006, 0
        %6053 = vmatpush.bf16.msra.mxu0 0
        %6054 = vmatpush.bf16.msra.mxu0 0
        %6055 = vmatpush.bf16.msra.mxu0 0
        %6056 = vmatpush.bf16.msra.mxu0 0
        %6057 = vmatpush.bf16.msra.mxu0 0
        %6058 = vmatpush.bf16.msra.mxu0 0
        %6059 = vmatpush.bf16.msra.mxu0 %v6035
        %6060 = vmatpush.bf16.msra.mxu0 %v6031
        %6061 = vmatmul.bf16.gmra.mxu0 %v6048
        %v6062 = vpop.f32.mrf.mxu0
        %v6063 = vadd.f32 0.0, %v6062
        %v6064 = vpop.f32.mrf.mxu0
        %v6065 = vadd.f32 0.0, %v6064
        %6066 = vmatmul.bf16.gmra.mxu0 %v6051
        %v6067 = vpop.f32.mrf.mxu0
        %v6068 = vadd.f32 0.0, %v6067
        %v6069 = vpop.f32.mrf.mxu0
        %v6070 = vadd.f32 0.0, %v6069
        %6071 = vdwg.mxu0
        %6072 = vmatpush.bf16.msra.mxu0 0
        %6073 = vmatpush.bf16.msra.mxu0 0
        %6074 = vmatpush.bf16.msra.mxu0 0
        %6075 = vmatpush.bf16.msra.mxu0 0
        %6076 = vmatpush.bf16.msra.mxu0 0
        %6077 = vmatpush.bf16.msra.mxu0 0
        %6078 = vmatpush.bf16.msra.mxu0 %v6036
        %6079 = vmatpush.bf16.msra.mxu0 %v6032
        %6080 = vmatmul.bf16.gmra.mxu0 %v6048
        %v6081 = vpop.f32.mrf.mxu0
        %v6082 = vadd.f32 0.0, %v6081
        %v6083 = vpop.f32.mrf.mxu0
        %v6084 = vadd.f32 0.0, %v6083
        %6085 = vmatmul.bf16.gmra.mxu0 %v6051
        %v6086 = vpop.f32.mrf.mxu0
        %v6087 = vadd.f32 0.0, %v6086
        %v6088 = vpop.f32.mrf.mxu0
        %v6089 = vadd.f32 0.0, %v6088
        %6090 = vdwg.mxu0
        %6091 = vmatpush.bf16.msra.mxu0 0
        %6092 = vmatpush.bf16.msra.mxu0 0
        %6093 = vmatpush.bf16.msra.mxu0 0
        %6094 = vmatpush.bf16.msra.mxu0 0
        %6095 = vmatpush.bf16.msra.mxu0 0
        %6096 = vmatpush.bf16.msra.mxu0 0
        %6097 = vmatpush.bf16.msra.mxu0 %v6037
        %6098 = vmatpush.bf16.msra.mxu0 %v6033
        %6099 = vmatmul.bf16.gmra.mxu0 %v6048
        %v6100 = vpop.f32.mrf.mxu0
        %v6101 = vadd.f32 0.0, %v6100
        %v6102 = vpop.f32.mrf.mxu0
        %v6103 = vadd.f32 0.0, %v6102
        %6104 = vmatmul.bf16.gmra.mxu0 %v6051
        %v6105 = vpop.f32.mrf.mxu0
        %v6106 = vadd.f32 0.0, %v6105
        %v6107 = vpop.f32.mrf.mxu0
        %v6108 = vadd.f32 0.0, %v6107
        %6109 = vdwg.mxu0
        %6110 = vmatpush.bf16.msra.mxu0 0
        %6111 = vmatpush.bf16.msra.mxu0 0
        %6112 = vmatpush.bf16.msra.mxu0 0
        %6113 = vmatpush.bf16.msra.mxu0 0
        %6114 = vmatpush.bf16.msra.mxu0 0
        %6115 = vmatpush.bf16.msra.mxu0 0
        %6116 = vmatpush.bf16.msra.mxu0 %v6038
        %6117 = vmatpush.bf16.msra.mxu0 %v6034
        %6118 = vmatmul.bf16.gmra.mxu0 %v6048
        %v6119 = vpop.f32.mrf.mxu0
        %v6120 = vadd.f32 0.0, %v6119
        %v6121 = vpop.f32.mrf.mxu0
        %v6122 = vadd.f32 0.0, %v6121
        %6123 = vmatmul.bf16.gmra.mxu0 %v6051
        %v6124 = vpop.f32.mrf.mxu0
        %v6125 = vadd.f32 0.0, %v6124
        %v6126 = vpop.f32.mrf.mxu0
        %v6127 = vadd.f32 0.0, %v6126
        %6128 = vdwg.mxu0
        %v6129 = vadd.f32 %v5977, %v6063
        %v6130 = vadd.f32 %v5978, %v6082
        %v6131 = vadd.f32 %v5979, %v6101
        %v6132 = vadd.f32 %v5980, %v6120
        %v6133 = vadd.f32 %v5981, %v6065
        %v6134 = vadd.f32 %v5982, %v6084
        %v6135 = vadd.f32 %v5983, %v6103
        %v6136 = vadd.f32 %v5984, %v6122
        %v6137 = vadd.f32 %v5985, %v6068
        %v6138 = vadd.f32 %v5986, %v6087
        %v6139 = vadd.f32 %v5987, %v6106
        %v6140 = vadd.f32 %v5988, %v6125
        %v6141 = vadd.f32 %v5989, %v6070
        %v6142 = vadd.f32 %v5990, %v6089
        %v6143 = vadd.f32 %v5991, %v6108
        %v6144 = vadd.f32 %v5992, %v6127
        %s6145 = scalar_lea.vmem %s9, 384
        %v6146 = vld [vmem:[%s6145] sm:$0xff]
        %v6147 = vld [vmem:[%s6145 + $0x8] sm:$0xff]
        %v6148 = vld [vmem:[%s6145 + $0x10] sm:$0xff]
        %v6149 = vld [vmem:[%s6145 + $0x18] sm:$0xff]
        %v6150 = vld [vmem:[%s6145 + $0x20] sm:$0xff]
        %v6151 = vld [vmem:[%s6145 + $0x28] sm:$0xff]
        %v6152 = vld [vmem:[%s6145 + $0x30] sm:$0xff]
        %v6153 = vld [vmem:[%s6145 + $0x38] sm:$0xff]
        %v6154 = vpack.c.b16 %v5835, %v5257
        %v6163 = vunpack.c.l.b16 %v6146
        %v6164 = vunpack.c.h.b16 %v6146
        %v6165 = vunpack.c.l.b16 %v6147
        %v6166 = vunpack.c.h.b16 %v6147
        %v6167 = vunpack.c.l.b16 %v6148
        %v6168 = vunpack.c.h.b16 %v6148
        %v6169 = vunpack.c.l.b16 %v6149
        %v6170 = vunpack.c.h.b16 %v6149
        %v6171 = vunpack.c.l.b16 %v6150
        %v6172 = vunpack.c.h.b16 %v6150
        %v6173 = vunpack.c.l.b16 %v6151
        %v6174 = vunpack.c.h.b16 %v6151
        %v6175 = vunpack.c.l.b16 %v6152
        %v6176 = vunpack.c.h.b16 %v6152
        %v6177 = vunpack.c.l.b16 %v6153
        %v6178 = vunpack.c.h.b16 %v6153
        %v6179 = vpack.c.b16 %v6167, %v6163
        %v6180 = vpack.c.b16 %v6168, %v6164
        %v6181 = vpack.c.b16 %v6169, %v6165
        %v6182 = vpack.c.b16 %v6170, %v6166
        %v6183 = vpack.c.b16 %v6175, %v6171
        %v6184 = vpack.c.b16 %v6176, %v6172
        %v6185 = vpack.c.b16 %v6177, %v6173
        %v6186 = vpack.c.b16 %v6178, %v6174
        %v6196 = vsel %vm5321, %v6154, 0
        %6198 = vmatpush.bf16.msra.mxu0 0
        %6199 = vmatpush.bf16.msra.mxu0 0
        %6200 = vmatpush.bf16.msra.mxu0 0
        %6201 = vmatpush.bf16.msra.mxu0 0
        %6202 = vmatpush.bf16.msra.mxu0 0
        %6203 = vmatpush.bf16.msra.mxu0 0
        %6204 = vmatpush.bf16.msra.mxu0 %v6183
        %6205 = vmatpush.bf16.msra.mxu0 %v6179
        %6206 = vmatmul.bf16.gmra.mxu0 %v5446
        %v6207 = vpop.f32.mrf.mxu0
        %v6208 = vadd.f32 0.0, %v6207
        %v6209 = vpop.f32.mrf.mxu0
        %v6210 = vadd.f32 0.0, %v6209
        %6211 = vmatmul.bf16.gmra.mxu0 %v6196
        %v6212 = vpop.f32.mrf.mxu0
        %v6213 = vadd.f32 0.0, %v6212
        %v6214 = vpop.f32.mrf.mxu0
        %v6215 = vadd.f32 0.0, %v6214
        %6216 = vdwg.mxu0
        %6217 = vmatpush.bf16.msra.mxu0 0
        %6218 = vmatpush.bf16.msra.mxu0 0
        %6219 = vmatpush.bf16.msra.mxu0 0
        %6220 = vmatpush.bf16.msra.mxu0 0
        %6221 = vmatpush.bf16.msra.mxu0 0
        %6222 = vmatpush.bf16.msra.mxu0 0
        %6223 = vmatpush.bf16.msra.mxu0 %v6184
        %6224 = vmatpush.bf16.msra.mxu0 %v6180
        %6225 = vmatmul.bf16.gmra.mxu0 %v5446
        %v6226 = vpop.f32.mrf.mxu0
        %v6227 = vadd.f32 0.0, %v6226
        %v6228 = vpop.f32.mrf.mxu0
        %v6229 = vadd.f32 0.0, %v6228
        %6230 = vmatmul.bf16.gmra.mxu0 %v6196
        %v6231 = vpop.f32.mrf.mxu0
        %v6232 = vadd.f32 0.0, %v6231
        %v6233 = vpop.f32.mrf.mxu0
        %v6234 = vadd.f32 0.0, %v6233
        %6235 = vdwg.mxu0
        %6236 = vmatpush.bf16.msra.mxu0 0
        %6237 = vmatpush.bf16.msra.mxu0 0
        %6238 = vmatpush.bf16.msra.mxu0 0
        %6239 = vmatpush.bf16.msra.mxu0 0
        %6240 = vmatpush.bf16.msra.mxu0 0
        %6241 = vmatpush.bf16.msra.mxu0 0
        %6242 = vmatpush.bf16.msra.mxu0 %v6185
        %6243 = vmatpush.bf16.msra.mxu0 %v6181
        %6244 = vmatmul.bf16.gmra.mxu0 %v5446
        %v6245 = vpop.f32.mrf.mxu0
        %v6246 = vadd.f32 0.0, %v6245
        %v6247 = vpop.f32.mrf.mxu0
        %v6248 = vadd.f32 0.0, %v6247
        %6249 = vmatmul.bf16.gmra.mxu0 %v6196
        %v6250 = vpop.f32.mrf.mxu0
        %v6251 = vadd.f32 0.0, %v6250
        %v6252 = vpop.f32.mrf.mxu0
        %v6253 = vadd.f32 0.0, %v6252
        %6254 = vdwg.mxu0
        %6255 = vmatpush.bf16.msra.mxu0 0
        %6256 = vmatpush.bf16.msra.mxu0 0
        %6257 = vmatpush.bf16.msra.mxu0 0
        %6258 = vmatpush.bf16.msra.mxu0 0
        %6259 = vmatpush.bf16.msra.mxu0 0
        %6260 = vmatpush.bf16.msra.mxu0 0
        %6261 = vmatpush.bf16.msra.mxu0 %v6186
        %6262 = vmatpush.bf16.msra.mxu0 %v6182
        %6263 = vmatmul.bf16.gmra.mxu0 %v5446
        %v6264 = vpop.f32.mrf.mxu0
        %v6265 = vadd.f32 0.0, %v6264
        %v6266 = vpop.f32.mrf.mxu0
        %v6267 = vadd.f32 0.0, %v6266
        %6268 = vmatmul.bf16.gmra.mxu0 %v6196
        %v6269 = vpop.f32.mrf.mxu0
        %v6270 = vadd.f32 0.0, %v6269
        %v6271 = vpop.f32.mrf.mxu0
        %v6272 = vadd.f32 0.0, %v6271
        %6273 = vdwg.mxu0
        %v6274 = vadd.f32 %v6129, %v6208
        %v6275 = vadd.f32 %v6130, %v6227
        %v6276 = vadd.f32 %v6131, %v6246
        %v6277 = vadd.f32 %v6132, %v6265
        %v6278 = vadd.f32 %v6133, %v6210
        %v6279 = vadd.f32 %v6134, %v6229
        %v6280 = vadd.f32 %v6135, %v6248
        %v6281 = vadd.f32 %v6136, %v6267
        %v6282 = vadd.f32 %v6137, %v6213
        %v6283 = vadd.f32 %v6138, %v6232
        %v6284 = vadd.f32 %v6139, %v6251
        %v6285 = vadd.f32 %v6140, %v6270
        %v6286 = vadd.f32 %v6141, %v6215
        %v6287 = vadd.f32 %v6142, %v6234
        %v6288 = vadd.f32 %v6143, %v6253
        %v6289 = vadd.f32 %v6144, %v6272
        %s6290 = scalar_lea.vmem %s9, 448
        %v6291 = vld [vmem:[%s6290] sm:$0xff]
        %v6292 = vld [vmem:[%s6290 + $0x8] sm:$0xff]
        %v6293 = vld [vmem:[%s6290 + $0x10] sm:$0xff]
        %v6294 = vld [vmem:[%s6290 + $0x18] sm:$0xff]
        %v6295 = vld [vmem:[%s6290 + $0x20] sm:$0xff]
        %v6296 = vld [vmem:[%s6290 + $0x28] sm:$0xff]
        %v6297 = vld [vmem:[%s6290 + $0x30] sm:$0xff]
        %v6298 = vld [vmem:[%s6290 + $0x38] sm:$0xff]
        %v6300 = vunpack.c.l.b16 %v5230
        %v6301 = vpack.c.b16 %v6300, %v6300
        %v6302 = vshll.u32 %v6154, 16
        %v6304 = vrot.slane %v6302, 1
        %v6305 = vsel %vm674, %v5275, %v6304
        %v6306 = vshrl.u32 %v6154, 16
        %v6308 = vor.u32 %v6306, %v6304
        %v6310 = vshll.u32 %v6301, 16
        %v6312 = vrot.slane %v6310, 1
        %v6313 = vsel %vm674, %v6308, %v6312
        %v6322 = vunpack.c.l.b16 %v6291
        %v6323 = vunpack.c.h.b16 %v6291
        %v6324 = vunpack.c.l.b16 %v6292
        %v6325 = vunpack.c.h.b16 %v6292
        %v6326 = vunpack.c.l.b16 %v6293
        %v6327 = vunpack.c.h.b16 %v6293
        %v6328 = vunpack.c.l.b16 %v6294
        %v6329 = vunpack.c.h.b16 %v6294
        %v6330 = vunpack.c.l.b16 %v6295
        %v6331 = vunpack.c.h.b16 %v6295
        %v6332 = vunpack.c.l.b16 %v6296
        %v6333 = vunpack.c.h.b16 %v6296
        %v6334 = vunpack.c.l.b16 %v6297
        %v6335 = vunpack.c.h.b16 %v6297
        %v6336 = vunpack.c.l.b16 %v6298
        %v6337 = vunpack.c.h.b16 %v6298
        %v6338 = vpack.c.b16 %v6326, %v6322
        %v6339 = vpack.c.b16 %v6327, %v6323
        %v6340 = vpack.c.b16 %v6328, %v6324
        %v6341 = vpack.c.b16 %v6329, %v6325
        %v6342 = vpack.c.b16 %v6334, %v6330
        %v6343 = vpack.c.b16 %v6335, %v6331
        %v6344 = vpack.c.b16 %v6336, %v6332
        %v6345 = vpack.c.b16 %v6337, %v6333
        %v6355 = vsel %vm5321, %v6305, 0
        %v6358 = vsel %vm5321, %v6313, 0
        %6360 = vmatpush.bf16.msra.mxu0 0
        %6361 = vmatpush.bf16.msra.mxu0 0
        %6362 = vmatpush.bf16.msra.mxu0 0
        %6363 = vmatpush.bf16.msra.mxu0 0
        %6364 = vmatpush.bf16.msra.mxu0 0
        %6365 = vmatpush.bf16.msra.mxu0 0
        %6366 = vmatpush.bf16.msra.mxu0 %v6342
        %6367 = vmatpush.bf16.msra.mxu0 %v6338
        %6368 = vmatmul.bf16.gmra.mxu0 %v6355
        %v6369 = vpop.f32.mrf.mxu0
        %v6370 = vadd.f32 0.0, %v6369
        %v6371 = vpop.f32.mrf.mxu0
        %v6372 = vadd.f32 0.0, %v6371
        %6373 = vmatmul.bf16.gmra.mxu0 %v6358
        %v6374 = vpop.f32.mrf.mxu0
        %v6375 = vadd.f32 0.0, %v6374
        %v6376 = vpop.f32.mrf.mxu0
        %v6377 = vadd.f32 0.0, %v6376
        %6378 = vdwg.mxu0
        %6379 = vmatpush.bf16.msra.mxu0 0
        %6380 = vmatpush.bf16.msra.mxu0 0
        %6381 = vmatpush.bf16.msra.mxu0 0
        %6382 = vmatpush.bf16.msra.mxu0 0
        %6383 = vmatpush.bf16.msra.mxu0 0
        %6384 = vmatpush.bf16.msra.mxu0 0
        %6385 = vmatpush.bf16.msra.mxu0 %v6343
        %6386 = vmatpush.bf16.msra.mxu0 %v6339
        %6387 = vmatmul.bf16.gmra.mxu0 %v6355
        %v6388 = vpop.f32.mrf.mxu0
        %v6389 = vadd.f32 0.0, %v6388
        %v6390 = vpop.f32.mrf.mxu0
        %v6391 = vadd.f32 0.0, %v6390
        %6392 = vmatmul.bf16.gmra.mxu0 %v6358
        %v6393 = vpop.f32.mrf.mxu0
        %v6394 = vadd.f32 0.0, %v6393
        %v6395 = vpop.f32.mrf.mxu0
        %v6396 = vadd.f32 0.0, %v6395
        %6397 = vdwg.mxu0
        %6398 = vmatpush.bf16.msra.mxu0 0
        %6399 = vmatpush.bf16.msra.mxu0 0
        %6400 = vmatpush.bf16.msra.mxu0 0
        %6401 = vmatpush.bf16.msra.mxu0 0
        %6402 = vmatpush.bf16.msra.mxu0 0
        %6403 = vmatpush.bf16.msra.mxu0 0
        %6404 = vmatpush.bf16.msra.mxu0 %v6344
        %6405 = vmatpush.bf16.msra.mxu0 %v6340
        %6406 = vmatmul.bf16.gmra.mxu0 %v6355
        %v6407 = vpop.f32.mrf.mxu0
        %v6408 = vadd.f32 0.0, %v6407
        %v6409 = vpop.f32.mrf.mxu0
        %v6410 = vadd.f32 0.0, %v6409
        %6411 = vmatmul.bf16.gmra.mxu0 %v6358
        %v6412 = vpop.f32.mrf.mxu0
        %v6413 = vadd.f32 0.0, %v6412
        %v6414 = vpop.f32.mrf.mxu0
        %v6415 = vadd.f32 0.0, %v6414
        %6416 = vdwg.mxu0
        %6417 = vmatpush.bf16.msra.mxu0 0
        %6418 = vmatpush.bf16.msra.mxu0 0
        %6419 = vmatpush.bf16.msra.mxu0 0
        %6420 = vmatpush.bf16.msra.mxu0 0
        %6421 = vmatpush.bf16.msra.mxu0 0
        %6422 = vmatpush.bf16.msra.mxu0 0
        %6423 = vmatpush.bf16.msra.mxu0 %v6345
        %6424 = vmatpush.bf16.msra.mxu0 %v6341
        %6425 = vmatmul.bf16.gmra.mxu0 %v6355
        %v6426 = vpop.f32.mrf.mxu0
        %v6427 = vadd.f32 0.0, %v6426
        %v6428 = vpop.f32.mrf.mxu0
        %v6429 = vadd.f32 0.0, %v6428
        %6430 = vmatmul.bf16.gmra.mxu0 %v6358
        %v6431 = vpop.f32.mrf.mxu0
        %v6432 = vadd.f32 0.0, %v6431
        %v6433 = vpop.f32.mrf.mxu0
        %v6434 = vadd.f32 0.0, %v6433
        %6435 = vdwg.mxu0
        %v6436 = vadd.f32 %v6274, %v6370
        %v6437 = vadd.f32 %v6275, %v6389
        %v6438 = vadd.f32 %v6276, %v6408
        %v6439 = vadd.f32 %v6277, %v6427
        %v6440 = vadd.f32 %v6278, %v6372
        %v6441 = vadd.f32 %v6279, %v6391
        %v6442 = vadd.f32 %v6280, %v6410
        %v6443 = vadd.f32 %v6281, %v6429
        %v6444 = vadd.f32 %v6282, %v6375
        %v6445 = vadd.f32 %v6283, %v6394
        %v6446 = vadd.f32 %v6284, %v6413
        %v6447 = vadd.f32 %v6285, %v6432
        %v6448 = vadd.f32 %v6286, %v6377
        %v6449 = vadd.f32 %v6287, %v6396
        %v6450 = vadd.f32 %v6288, %v6415
        %v6451 = vadd.f32 %v6289, %v6434
        %s6452 = scalar_lea.vmem %s9, 512
        %v6453 = vld [vmem:[%s6452] sm:$0xff]
        %v6454 = vld [vmem:[%s6452 + $0x8] sm:$0xff]
        %v6455 = vld [vmem:[%s6452 + $0x10] sm:$0xff]
        %v6456 = vld [vmem:[%s6452 + $0x18] sm:$0xff]
        %v6457 = vld [vmem:[%s6452 + $0x20] sm:$0xff]
        %v6458 = vld [vmem:[%s6452 + $0x28] sm:$0xff]
        %v6459 = vld [vmem:[%s6452 + $0x30] sm:$0xff]
        %v6460 = vld [vmem:[%s6452 + $0x38] sm:$0xff]
        %v6461 = vrot.slane %v6154, 1
        %v6462 = vsel %vm1262, %v5534, %v6461
        %v6463 = vrot.slane %v6301, 1
        %v6464 = vsel %vm1262, %v6461, %v6463
        %v6473 = vunpack.c.l.b16 %v6453
        %v6474 = vunpack.c.h.b16 %v6453
        %v6475 = vunpack.c.l.b16 %v6454
        %v6476 = vunpack.c.h.b16 %v6454
        %v6477 = vunpack.c.l.b16 %v6455
        %v6478 = vunpack.c.h.b16 %v6455
        %v6479 = vunpack.c.l.b16 %v6456
        %v6480 = vunpack.c.h.b16 %v6456
        %v6481 = vunpack.c.l.b16 %v6457
        %v6482 = vunpack.c.h.b16 %v6457
        %v6483 = vunpack.c.l.b16 %v6458
        %v6484 = vunpack.c.h.b16 %v6458
        %v6485 = vunpack.c.l.b16 %v6459
        %v6486 = vunpack.c.h.b16 %v6459
        %v6487 = vunpack.c.l.b16 %v6460
        %v6488 = vunpack.c.h.b16 %v6460
        %v6489 = vpack.c.b16 %v6477, %v6473
        %v6490 = vpack.c.b16 %v6478, %v6474
        %v6491 = vpack.c.b16 %v6479, %v6475
        %v6492 = vpack.c.b16 %v6480, %v6476
        %v6493 = vpack.c.b16 %v6485, %v6481
        %v6494 = vpack.c.b16 %v6486, %v6482
        %v6495 = vpack.c.b16 %v6487, %v6483
        %v6496 = vpack.c.b16 %v6488, %v6484
        %v6506 = vsel %vm5321, %v6462, 0
        %v6509 = vsel %vm5321, %v6464, 0
        %6511 = vmatpush.bf16.msra.mxu0 0
        %6512 = vmatpush.bf16.msra.mxu0 0
        %6513 = vmatpush.bf16.msra.mxu0 0
        %6514 = vmatpush.bf16.msra.mxu0 0
        %6515 = vmatpush.bf16.msra.mxu0 0
        %6516 = vmatpush.bf16.msra.mxu0 0
        %6517 = vmatpush.bf16.msra.mxu0 %v6493
        %6518 = vmatpush.bf16.msra.mxu0 %v6489
        %6519 = vmatmul.bf16.gmra.mxu0 %v6506
        %v6520 = vpop.f32.mrf.mxu0
        %v6521 = vadd.f32 0.0, %v6520
        %v6522 = vpop.f32.mrf.mxu0
        %v6523 = vadd.f32 0.0, %v6522
        %6524 = vmatmul.bf16.gmra.mxu0 %v6509
        %v6525 = vpop.f32.mrf.mxu0
        %v6526 = vadd.f32 0.0, %v6525
        %v6527 = vpop.f32.mrf.mxu0
        %v6528 = vadd.f32 0.0, %v6527
        %6529 = vdwg.mxu0
        %6530 = vmatpush.bf16.msra.mxu0 0
        %6531 = vmatpush.bf16.msra.mxu0 0
        %6532 = vmatpush.bf16.msra.mxu0 0
        %6533 = vmatpush.bf16.msra.mxu0 0
        %6534 = vmatpush.bf16.msra.mxu0 0
        %6535 = vmatpush.bf16.msra.mxu0 0
        %6536 = vmatpush.bf16.msra.mxu0 %v6494
        %6537 = vmatpush.bf16.msra.mxu0 %v6490
        %6538 = vmatmul.bf16.gmra.mxu0 %v6506
        %v6539 = vpop.f32.mrf.mxu0
        %v6540 = vadd.f32 0.0, %v6539
        %v6541 = vpop.f32.mrf.mxu0
        %v6542 = vadd.f32 0.0, %v6541
        %6543 = vmatmul.bf16.gmra.mxu0 %v6509
        %v6544 = vpop.f32.mrf.mxu0
        %v6545 = vadd.f32 0.0, %v6544
        %v6546 = vpop.f32.mrf.mxu0
        %v6547 = vadd.f32 0.0, %v6546
        %6548 = vdwg.mxu0
        %6549 = vmatpush.bf16.msra.mxu0 0
        %6550 = vmatpush.bf16.msra.mxu0 0
        %6551 = vmatpush.bf16.msra.mxu0 0
        %6552 = vmatpush.bf16.msra.mxu0 0
        %6553 = vmatpush.bf16.msra.mxu0 0
        %6554 = vmatpush.bf16.msra.mxu0 0
        %6555 = vmatpush.bf16.msra.mxu0 %v6495
        %6556 = vmatpush.bf16.msra.mxu0 %v6491
        %6557 = vmatmul.bf16.gmra.mxu0 %v6506
        %v6558 = vpop.f32.mrf.mxu0
        %v6559 = vadd.f32 0.0, %v6558
        %v6560 = vpop.f32.mrf.mxu0
        %v6561 = vadd.f32 0.0, %v6560
        %6562 = vmatmul.bf16.gmra.mxu0 %v6509
        %v6563 = vpop.f32.mrf.mxu0
        %v6564 = vadd.f32 0.0, %v6563
        %v6565 = vpop.f32.mrf.mxu0
        %v6566 = vadd.f32 0.0, %v6565
        %6567 = vdwg.mxu0
        %6568 = vmatpush.bf16.msra.mxu0 0
        %6569 = vmatpush.bf16.msra.mxu0 0
        %6570 = vmatpush.bf16.msra.mxu0 0
        %6571 = vmatpush.bf16.msra.mxu0 0
        %6572 = vmatpush.bf16.msra.mxu0 0
        %6573 = vmatpush.bf16.msra.mxu0 0
        %6574 = vmatpush.bf16.msra.mxu0 %v6496
        %6575 = vmatpush.bf16.msra.mxu0 %v6492
        %6576 = vmatmul.bf16.gmra.mxu0 %v6506
        %v6577 = vpop.f32.mrf.mxu0
        %v6578 = vadd.f32 0.0, %v6577
        %v6579 = vpop.f32.mrf.mxu0
        %v6580 = vadd.f32 0.0, %v6579
        %6581 = vmatmul.bf16.gmra.mxu0 %v6509
        %v6582 = vpop.f32.mrf.mxu0
        %v6583 = vadd.f32 0.0, %v6582
        %v6584 = vpop.f32.mrf.mxu0
        %v6585 = vadd.f32 0.0, %v6584
        %6586 = vdwg.mxu0
        %v6587 = vadd.f32 %v6436, %v6521
        %v6588 = vadd.f32 %v6437, %v6540
        %v6589 = vadd.f32 %v6438, %v6559
        %v6590 = vadd.f32 %v6439, %v6578
        %v6591 = vadd.f32 %v6440, %v6523
        %v6592 = vadd.f32 %v6441, %v6542
        %v6593 = vadd.f32 %v6442, %v6561
        %v6594 = vadd.f32 %v6443, %v6580
        %v6595 = vadd.f32 %v6444, %v6526
        %v6596 = vadd.f32 %v6445, %v6545
        %v6597 = vadd.f32 %v6446, %v6564
        %v6598 = vadd.f32 %v6447, %v6583
        %v6599 = vadd.f32 %v6448, %v6528
        %v6600 = vadd.f32 %v6449, %v6547
        %v6601 = vadd.f32 %v6450, %v6566
        %v6602 = vadd.f32 %v6451, %v6585
        %v6603 = vld [vmem:[%s10] sm:$0xf]
        %v6605 = vperm.slane %v6603, 0
        %v6606 = vperm.slane %v6603, 1
        %v6607 = vperm.slane %v6603, 2
        %v6608 = vperm.slane %v6603, 3
        %v6613 = vmul.f32 %v6587, %v6605
        %v6614 = vmul.f32 %v6588, %v6606
        %v6615 = vmul.f32 %v6589, %v6607
        %v6616 = vmul.f32 %v6590, %v6608
        %v6617 = vmul.f32 %v6591, %v6605
        %v6618 = vmul.f32 %v6592, %v6606
        %v6619 = vmul.f32 %v6593, %v6607
        %v6620 = vmul.f32 %v6594, %v6608
        %v6621 = vmul.f32 %v6595, %v6605
        %v6622 = vmul.f32 %v6596, %v6606
        %v6623 = vmul.f32 %v6597, %v6607
        %v6624 = vmul.f32 %v6598, %v6608
        %v6625 = vmul.f32 %v6599, %v6605
        %v6626 = vmul.f32 %v6600, %v6606
        %v6627 = vmul.f32 %v6601, %v6607
        %v6628 = vmul.f32 %v6602, %v6608
        %v6629 = vld [vmem:[%s11] sm:$0xf]
        %v6631 = vperm.slane %v6629, 0
        %v6632 = vperm.slane %v6629, 1
        %v6633 = vperm.slane %v6629, 2
        %v6634 = vperm.slane %v6629, 3
        %v6639 = vadd.f32 %v6613, %v6631
        %v6640 = vadd.f32 %v6614, %v6632
        %v6641 = vadd.f32 %v6615, %v6633
        %v6642 = vadd.f32 %v6616, %v6634
        %v6643 = vadd.f32 %v6617, %v6631
        %v6644 = vadd.f32 %v6618, %v6632
        %v6645 = vadd.f32 %v6619, %v6633
        %v6646 = vadd.f32 %v6620, %v6634
        %v6647 = vadd.f32 %v6621, %v6631
        %v6648 = vadd.f32 %v6622, %v6632
        %v6649 = vadd.f32 %v6623, %v6633
        %v6650 = vadd.f32 %v6624, %v6634
        %v6651 = vadd.f32 %v6625, %v6631
        %v6652 = vadd.f32 %v6626, %v6632
        %v6653 = vadd.f32 %v6627, %v6633
        %v6654 = vadd.f32 %v6628, %v6634
        %v6655 = vmax.f32 %v6639, 0.0
        %v6656 = vmax.f32 %v6640, 0.0
        %v6657 = vmax.f32 %v6641, 0.0
        %v6658 = vmax.f32 %v6642, 0.0
        %v6659 = vmax.f32 %v6643, 0.0
        %v6660 = vmax.f32 %v6644, 0.0
        %v6661 = vmax.f32 %v6645, 0.0
        %v6662 = vmax.f32 %v6646, 0.0
        %v6663 = vmax.f32 %v6647, 0.0
        %v6664 = vmax.f32 %v6648, 0.0
        %v6665 = vmax.f32 %v6649, 0.0
        %v6666 = vmax.f32 %v6650, 0.0
        %v6667 = vmax.f32 %v6651, 0.0
        %v6668 = vmax.f32 %v6652, 0.0
        %v6669 = vmax.f32 %v6653, 0.0
        %v6670 = vmax.f32 %v6654, 0.0
        %v6671 = vld [vmem:[%s12] sm:$0xff]
        %v6672 = vld [vmem:[%s12 + $0x8] sm:$0xff]
        %v6673 = vld [vmem:[%s12 + $0x10] sm:$0xff]
        %v6674 = vld [vmem:[%s12 + $0x18] sm:$0xff]
        %6676 = vset.pattern.permute.xlu0 0
        %6677 = vperm.xlu0 %6676, %v6671
        %v6678 = vpop.permute.xlu0 %6677
        %6681 = vset.pattern.permute.xlu0 0
        %6682 = vperm.xlu0 %6681, %v6672
        %v6683 = vpop.permute.xlu0 %6682
        %6686 = vset.pattern.permute.xlu0 0
        %6687 = vperm.xlu0 %6686, %v6673
        %v6688 = vpop.permute.xlu0 %6687
        %6691 = vset.pattern.permute.xlu0 0
        %6692 = vperm.xlu0 %6691, %v6674
        %v6693 = vpop.permute.xlu0 %6692
        %v6695 = vmul.f32 %v6655, %v6678
        %v6696 = vmul.f32 %v6656, %v6678
        %v6697 = vmul.f32 %v6657, %v6678
        %v6698 = vmul.f32 %v6658, %v6678
        %v6699 = vmul.f32 %v6659, %v6683
        %v6700 = vmul.f32 %v6660, %v6683
        %v6701 = vmul.f32 %v6661, %v6683
        %v6702 = vmul.f32 %v6662, %v6683
        %v6703 = vmul.f32 %v6663, %v6688
        %v6704 = vmul.f32 %v6664, %v6688
        %v6705 = vmul.f32 %v6665, %v6688
        %v6706 = vmul.f32 %v6666, %v6688
        %v6707 = vmul.f32 %v6667, %v6693
        %v6708 = vmul.f32 %v6668, %v6693
        %v6709 = vmul.f32 %v6669, %v6693
        %v6710 = vmul.f32 %v6670, %v6693
        %v6711 = vadd.f32 %v6695, %v6699
        %v6712 = vadd.f32 %v6711, %v6703
        %v6713 = vadd.f32 %v6712, %v6707
        %v6714 = vrot.slane %v6713, 4
        %v6715 = vadd.f32 %v6713, %v6714
        %v6716 = vrot.slane %v6715, 2
        %v6717 = vadd.f32 %v6715, %v6716
        %v6718 = vrot.slane %v6717, 1
        %v6719 = vadd.f32 %v6717, %v6718
        %v6720 = vadd.f32 %v6696, %v6700
        %v6721 = vadd.f32 %v6720, %v6704
        %v6722 = vadd.f32 %v6721, %v6708
        %v6723 = vrot.slane %v6722, 4
        %v6724 = vadd.f32 %v6722, %v6723
        %v6725 = vrot.slane %v6724, 2
        %v6726 = vadd.f32 %v6724, %v6725
        %v6727 = vrot.slane %v6726, 1
        %v6728 = vadd.f32 %v6726, %v6727
        %v6729 = vadd.f32 %v6697, %v6701
        %v6730 = vadd.f32 %v6729, %v6705
        %v6731 = vadd.f32 %v6730, %v6709
        %v6732 = vrot.slane %v6731, 4
        %v6733 = vadd.f32 %v6731, %v6732
        %v6734 = vrot.slane %v6733, 2
        %v6735 = vadd.f32 %v6733, %v6734
        %v6736 = vrot.slane %v6735, 1
        %v6737 = vadd.f32 %v6735, %v6736
        %v6738 = vadd.f32 %v6698, %v6702
        %v6739 = vadd.f32 %v6738, %v6706
        %v6740 = vadd.f32 %v6739, %v6710
        %v6741 = vrot.slane %v6740, 4
        %v6742 = vadd.f32 %v6740, %v6741
        %v6743 = vrot.slane %v6742, 2
        %v6744 = vadd.f32 %v6742, %v6743
        %v6745 = vrot.slane %v6744, 1
        %v6746 = vadd.f32 %v6744, %v6745
        %v6747 = vmul.f32 %v6719, 0.0625
        %v6748 = vmul.f32 %v6728, 0.0625
        %v6749 = vmul.f32 %v6737, 0.0625
        %v6750 = vmul.f32 %v6746, 0.0625
        %v6751 = vpack.c.bf16 %v6747, %v6747
        %v6752 = vpack.c.bf16 %v6748, %v6748
        %v6753 = vpack.c.bf16 %v6749, %v6749
        %v6754 = vpack.c.bf16 %v6750, %v6750
        %v6755 = vld [vmem:[%s13] sm:$0xf]
        %v6756 = vld [vmem:[%s13 + $0x4] sm:$0xf]
        %v6757 = vld [vmem:[%s13 + $0x8] sm:$0xf]
        %v6758 = vld [vmem:[%s13 + $0xc] sm:$0xf]
        %v6759 = vld [vmem:[%s13 + $0x10] sm:$0xf]
        %v6760 = vld [vmem:[%s13 + $0x14] sm:$0xf]
        %v6761 = vld [vmem:[%s13 + $0x18] sm:$0xf]
        %v6762 = vld [vmem:[%s13 + $0x1c] sm:$0xf]
        %v6763 = vld [vmem:[%s13 + $0x20] sm:$0xf]
        %v6764 = vld [vmem:[%s13 + $0x24] sm:$0xf]
        %v6765 = vld [vmem:[%s13 + $0x28] sm:$0xf]
        %v6766 = vld [vmem:[%s13 + $0x2c] sm:$0xf]
        %v6767 = vld [vmem:[%s13 + $0x30] sm:$0xf]
        %v6768 = vld [vmem:[%s13 + $0x34] sm:$0xf]
        %v6769 = vld [vmem:[%s13 + $0x38] sm:$0xf]
        %v6770 = vld [vmem:[%s13 + $0x3c] sm:$0xf]
        %v6771 = vld [vmem:[%s13 + $0x40] sm:$0xf]
        %v6772 = vld [vmem:[%s13 + $0x44] sm:$0xf]
        %v6773 = vld [vmem:[%s13 + $0x48] sm:$0xf]
        %v6774 = vld [vmem:[%s13 + $0x4c] sm:$0xf]
        %v6775 = vld [vmem:[%s13 + $0x50] sm:$0xf]
        %v6776 = vld [vmem:[%s13 + $0x54] sm:$0xf]
        %v6777 = vld [vmem:[%s13 + $0x58] sm:$0xf]
        %v6778 = vld [vmem:[%s13 + $0x5c] sm:$0xf]
        %v6779 = vld [vmem:[%s13 + $0x60] sm:$0xf]
        %v6780 = vld [vmem:[%s13 + $0x64] sm:$0xf]
        %v6781 = vld [vmem:[%s13 + $0x68] sm:$0xf]
        %v6782 = vld [vmem:[%s13 + $0x6c] sm:$0xf]
        %v6783 = vld [vmem:[%s13 + $0x70] sm:$0xf]
        %v6784 = vld [vmem:[%s13 + $0x74] sm:$0xf]
        %v6785 = vld [vmem:[%s13 + $0x78] sm:$0xf]
        %v6786 = vld [vmem:[%s13 + $0x7c] sm:$0xf]
        %v6787 = vld [vmem:[%s13 + $0x80] sm:$0xf]
        %v6788 = vld [vmem:[%s13 + $0x84] sm:$0xf]
        %v6789 = vld [vmem:[%s13 + $0x88] sm:$0xf]
        %v6790 = vld [vmem:[%s13 + $0x8c] sm:$0xf]
        %v6791 = vld [vmem:[%s13 + $0x90] sm:$0xf]
        %v6792 = vld [vmem:[%s13 + $0x94] sm:$0xf]
        %v6793 = vld [vmem:[%s13 + $0x98] sm:$0xf]
        %v6794 = vld [vmem:[%s13 + $0x9c] sm:$0xf]
        %v6795 = vld [vmem:[%s13 + $0xa0] sm:$0xf]
        %v6796 = vld [vmem:[%s13 + $0xa4] sm:$0xf]
        %v6797 = vld [vmem:[%s13 + $0xa8] sm:$0xf]
        %v6798 = vld [vmem:[%s13 + $0xac] sm:$0xf]
        %v6799 = vld [vmem:[%s13 + $0xb0] sm:$0xf]
        %v6800 = vld [vmem:[%s13 + $0xb4] sm:$0xf]
        %v6801 = vld [vmem:[%s13 + $0xb8] sm:$0xf]
        %v6802 = vld [vmem:[%s13 + $0xbc] sm:$0xf]
        %v6803 = vld [vmem:[%s13 + $0xc0] sm:$0xf]
        %v6804 = vld [vmem:[%s13 + $0xc4] sm:$0xf]
        %v6805 = vld [vmem:[%s13 + $0xc8] sm:$0xf]
        %v6806 = vld [vmem:[%s13 + $0xcc] sm:$0xf]
        %v6807 = vld [vmem:[%s13 + $0xd0] sm:$0xf]
        %v6808 = vld [vmem:[%s13 + $0xd4] sm:$0xf]
        %v6809 = vld [vmem:[%s13 + $0xd8] sm:$0xf]
        %v6810 = vld [vmem:[%s13 + $0xdc] sm:$0xf]
        %v6811 = vld [vmem:[%s13 + $0xe0] sm:$0xf]
        %v6812 = vld [vmem:[%s13 + $0xe4] sm:$0xf]
        %v6813 = vld [vmem:[%s13 + $0xe8] sm:$0xf]
        %v6814 = vld [vmem:[%s13 + $0xec] sm:$0xf]
        %v6815 = vld [vmem:[%s13 + $0xf0] sm:$0xf]
        %v6816 = vld [vmem:[%s13 + $0xf4] sm:$0xf]
        %v6817 = vld [vmem:[%s13 + $0xf8] sm:$0xf]
        %v6818 = vld [vmem:[%s13 + $0xfc] sm:$0xf]
        %v6819 = vld [vmem:[%s14] sm:$0x1]
        %v6884 = vunpack.c.l.b16 %v6755
        %v6885 = vunpack.c.l.b16 %v6756
        %v6886 = vunpack.c.l.b16 %v6757
        %v6887 = vunpack.c.l.b16 %v6758
        %v6888 = vunpack.c.l.b16 %v6759
        %v6889 = vunpack.c.l.b16 %v6760
        %v6890 = vunpack.c.l.b16 %v6761
        %v6891 = vunpack.c.l.b16 %v6762
        %v6892 = vunpack.c.l.b16 %v6763
        %v6893 = vunpack.c.l.b16 %v6764
        %v6894 = vunpack.c.l.b16 %v6765
        %v6895 = vunpack.c.l.b16 %v6766
        %v6896 = vunpack.c.l.b16 %v6767
        %v6897 = vunpack.c.l.b16 %v6768
        %v6898 = vunpack.c.l.b16 %v6769
        %v6899 = vunpack.c.l.b16 %v6770
        %v6900 = vunpack.c.l.b16 %v6771
        %v6901 = vunpack.c.l.b16 %v6772
        %v6902 = vunpack.c.l.b16 %v6773
        %v6903 = vunpack.c.l.b16 %v6774
        %v6904 = vunpack.c.l.b16 %v6775
        %v6905 = vunpack.c.l.b16 %v6776
        %v6906 = vunpack.c.l.b16 %v6777
        %v6907 = vunpack.c.l.b16 %v6778
        %v6908 = vunpack.c.l.b16 %v6779
        %v6909 = vunpack.c.l.b16 %v6780
        %v6910 = vunpack.c.l.b16 %v6781
        %v6911 = vunpack.c.l.b16 %v6782
        %v6912 = vunpack.c.l.b16 %v6783
        %v6913 = vunpack.c.l.b16 %v6784
        %v6914 = vunpack.c.l.b16 %v6785
        %v6915 = vunpack.c.l.b16 %v6786
        %v6916 = vunpack.c.l.b16 %v6787
        %v6917 = vunpack.c.l.b16 %v6788
        %v6918 = vunpack.c.l.b16 %v6789
        %v6919 = vunpack.c.l.b16 %v6790
        %v6920 = vunpack.c.l.b16 %v6791
        %v6921 = vunpack.c.l.b16 %v6792
        %v6922 = vunpack.c.l.b16 %v6793
        %v6923 = vunpack.c.l.b16 %v6794
        %v6924 = vunpack.c.l.b16 %v6795
        %v6925 = vunpack.c.l.b16 %v6796
        %v6926 = vunpack.c.l.b16 %v6797
        %v6927 = vunpack.c.l.b16 %v6798
        %v6928 = vunpack.c.l.b16 %v6799
        %v6929 = vunpack.c.l.b16 %v6800
        %v6930 = vunpack.c.l.b16 %v6801
        %v6931 = vunpack.c.l.b16 %v6802
        %v6932 = vunpack.c.l.b16 %v6803
        %v6933 = vunpack.c.l.b16 %v6804
        %v6934 = vunpack.c.l.b16 %v6805
        %v6935 = vunpack.c.l.b16 %v6806
        %v6936 = vunpack.c.l.b16 %v6807
        %v6937 = vunpack.c.l.b16 %v6808
        %v6938 = vunpack.c.l.b16 %v6809
        %v6939 = vunpack.c.l.b16 %v6810
        %v6940 = vunpack.c.l.b16 %v6811
        %v6941 = vunpack.c.l.b16 %v6812
        %v6942 = vunpack.c.l.b16 %v6813
        %v6943 = vunpack.c.l.b16 %v6814
        %v6944 = vunpack.c.l.b16 %v6815
        %v6945 = vunpack.c.l.b16 %v6816
        %v6946 = vunpack.c.l.b16 %v6817
        %v6947 = vunpack.c.l.b16 %v6818
        %v6948 = vpack.c.b16 %v6885, %v6884
        %v6949 = vpack.c.b16 %v6887, %v6886
        %v6950 = vpack.c.b16 %v6889, %v6888
        %v6951 = vpack.c.b16 %v6891, %v6890
        %v6952 = vpack.c.b16 %v6893, %v6892
        %v6953 = vpack.c.b16 %v6895, %v6894
        %v6954 = vpack.c.b16 %v6897, %v6896
        %v6955 = vpack.c.b16 %v6899, %v6898
        %v6956 = vpack.c.b16 %v6901, %v6900
        %v6957 = vpack.c.b16 %v6903, %v6902
        %v6958 = vpack.c.b16 %v6905, %v6904
        %v6959 = vpack.c.b16 %v6907, %v6906
        %v6960 = vpack.c.b16 %v6909, %v6908
        %v6961 = vpack.c.b16 %v6911, %v6910
        %v6962 = vpack.c.b16 %v6913, %v6912
        %v6963 = vpack.c.b16 %v6915, %v6914
        %v6964 = vpack.c.b16 %v6917, %v6916
        %v6965 = vpack.c.b16 %v6919, %v6918
        %v6966 = vpack.c.b16 %v6921, %v6920
        %v6967 = vpack.c.b16 %v6923, %v6922
        %v6968 = vpack.c.b16 %v6925, %v6924
        %v6969 = vpack.c.b16 %v6927, %v6926
        %v6970 = vpack.c.b16 %v6929, %v6928
        %v6971 = vpack.c.b16 %v6931, %v6930
        %v6972 = vpack.c.b16 %v6933, %v6932
        %v6973 = vpack.c.b16 %v6935, %v6934
        %v6974 = vpack.c.b16 %v6937, %v6936
        %v6975 = vpack.c.b16 %v6939, %v6938
        %v6976 = vpack.c.b16 %v6941, %v6940
        %v6977 = vpack.c.b16 %v6943, %v6942
        %v6978 = vpack.c.b16 %v6945, %v6944
        %v6979 = vpack.c.b16 %v6947, %v6946
        %7012 = vmatpush.bf16.msra.mxu0 %v6955
        %7013 = vmatpush.bf16.msra.mxu0 %v6954
        %7014 = vmatpush.bf16.msra.mxu0 %v6953
        %7015 = vmatpush.bf16.msra.mxu0 %v6952
        %7016 = vmatpush.bf16.msra.mxu0 %v6951
        %7017 = vmatpush.bf16.msra.mxu0 %v6950
        %7018 = vmatpush.bf16.msra.mxu0 %v6949
        %7019 = vmatpush.bf16.msra.mxu0 %v6948
        %7020 = vmatmul.bf16.gmra.mxu0 %v6751
        %v7021 = vpop.f32.mrf.mxu0
        %v7022 = vadd.f32 %v6819, %v7021
        %v7023 = vpop.f32.mrf.mxu0
        %7024 = vdwg.mxu0
        %7025 = vmatpush.bf16.msra.mxu0 %v6963
        %7026 = vmatpush.bf16.msra.mxu0 %v6962
        %7027 = vmatpush.bf16.msra.mxu0 %v6961
        %7028 = vmatpush.bf16.msra.mxu0 %v6960
        %7029 = vmatpush.bf16.msra.mxu0 %v6959
        %7030 = vmatpush.bf16.msra.mxu0 %v6958
        %7031 = vmatpush.bf16.msra.mxu0 %v6957
        %7032 = vmatpush.bf16.msra.mxu0 %v6956
        %7033 = vmatmul.bf16.gmra.mxu0 %v6752
        %v7034 = vpop.f32.mrf.mxu0
        %v7035 = vadd.f32 %v7022, %v7034
        %v7036 = vpop.f32.mrf.mxu0
        %7037 = vdwg.mxu0
        %7038 = vmatpush.bf16.msra.mxu0 %v6971
        %7039 = vmatpush.bf16.msra.mxu0 %v6970
        %7040 = vmatpush.bf16.msra.mxu0 %v6969
        %7041 = vmatpush.bf16.msra.mxu0 %v6968
        %7042 = vmatpush.bf16.msra.mxu0 %v6967
        %7043 = vmatpush.bf16.msra.mxu0 %v6966
        %7044 = vmatpush.bf16.msra.mxu0 %v6965
        %7045 = vmatpush.bf16.msra.mxu0 %v6964
        %7046 = vmatmul.bf16.gmra.mxu0 %v6753
        %v7047 = vpop.f32.mrf.mxu0
        %v7048 = vadd.f32 %v7035, %v7047
        %v7049 = vpop.f32.mrf.mxu0
        %7050 = vdwg.mxu0
        %7051 = vmatpush.bf16.msra.mxu0 %v6979
        %7052 = vmatpush.bf16.msra.mxu0 %v6978
        %7053 = vmatpush.bf16.msra.mxu0 %v6977
        %7054 = vmatpush.bf16.msra.mxu0 %v6976
        %7055 = vmatpush.bf16.msra.mxu0 %v6975
        %7056 = vmatpush.bf16.msra.mxu0 %v6974
        %7057 = vmatpush.bf16.msra.mxu0 %v6973
        %7058 = vmatpush.bf16.msra.mxu0 %v6972
        %7059 = vmatmul.bf16.gmra.mxu0 %v6754
        %v7060 = vpop.f32.mrf.mxu0
        %v7061 = vadd.f32 %v7048, %v7060
        %v7062 = vpop.f32.mrf.mxu0
        %7063 = vdwg.mxu0
        %vm7064 = vcmask 73728
        %7065 = vst.msk [vmem:[%s486] sm:$0x1] %vm7064, %v7061
        %s7066 = sand.u32 %s357, 1
        %s7067 = scalar_lea.sflag [#allocation3], %s7066
        %s7068 = sand.u32 %s357, 1
        %s7069 = scalar_lea.vmem [#allocation2], %s7068
        // Predicated region
        $region81: #{vgg_forward_pallas.1} parent=79 // pred_check
          %p7070 = pneg %p367
        $region82: #{vgg_forward_pallas.1} parent=79 // pred_check_branch
          %7072 = sbr.rel (%p7070) target = $region84
        $region83: #{vgg_forward_pallas.1} parent=79 // pred_region
          %7074 = vsyncadd %s7067, 0
          %s7075 = scalar_lea.hbm %s15, %s29
          %s7077 = sshll.u32 %s7069, 4
          %s7078 = int_to_ptr.vmem [resolvable:$true] %s7077
          %s7079 = sshll.u32 %s7075, 4
          %s7080 = int_to_ptr.hbm [resolvable:$true] %s7079
          %7082 = dma.vmem_to_hbm [thread:$0]  %s7078, 16, %s7080, %s7067
        $region84: #{vgg_forward_pallas.1} parent=79 // pred_fallthru
          _
      $region80: #{vgg_forward_pallas.1} parent=5 // pred_fallthru
        _
      %p7083 = scmp.le.s32.totalorder 2, %s24
      // Predicated region
      $region85: #{vgg_forward_pallas.1} parent=5 // pred_check
        %p7084 = pneg %p7083
      $region86: #{vgg_forward_pallas.1} parent=5 // pred_check_branch
        %7086 = sbr.rel (%p7084) target = $region88
      $region87: #{vgg_forward_pallas.1} parent=5 // pred_region
        %s7087 = ssub.s32 %s24, 2
        // Predicated region
        $region89: #{vgg_forward_pallas.1} parent=87 // pred_check
          %p7088 = pneg %p373
        $region90: #{vgg_forward_pallas.1} parent=87 // pred_check_branch
          %7090 = sbr.rel (%p7088) target = $region92
        $region91: #{vgg_forward_pallas.1} parent=87 // pred_region
          %s7091 = sand.u32 %s358, 1
          %s7092 = scalar_lea.sflag [#allocation3], %s7091
          %s7093 = sand.u32 %s358, 1
          %s7094 = scalar_lea.vmem [#allocation2], %s7093
          %7096 = dma.done %s7092, 16
        $region92: #{vgg_forward_pallas.1} parent=87 // pred_fallthru
          _
      $region88: #{vgg_forward_pallas.1} parent=5 // pred_fallthru
        _
    $region6: #{vgg_forward_pallas.1} parent=1 // loop_footer
      %s28 = sadd.s32 1, %s24
    $region7: #{vgg_forward_pallas.1} parent=1 // loop_footer_branch
      %23 = sbr.rel target = $region3
    $region8: #{vgg_forward_pallas.1} parent=1 // loop_exit
      _
    %7097 = vsyncpa [#allocation3], 1
    %s7098 = scalar_lea.sflag [#allocation3], 1
    %7099 = vsyncpa %s7098, 1

</llo_original>
